<compile_context>
chip_gen: v7x
topology: tpu7x:2x2x1
jax: 0.10.0
libtpu: 0.0.40
codegen_flags: <defaults>
</compile_context>

<pallas_src>
import jax
import jax.numpy as jnp
from jax.experimental import pallas as pl
from jax.experimental.pallas import tpu as pltpu


# ------------------------------ fused forward -------------------------------

def aspp_forward(x_nchw, P, atrous_rates):
    N, Cin, H, W = x_nchw.shape
    Cout = P['w0'].shape[1]
    rates = tuple(int(r) for r in atrous_rates)
    R = max(rates)

    # Row tile: 8 rows (sublane aligned) -> grid has N * H/8 parallel steps.
    th = 8 if H % 8 == 0 else H
    RB = H // th
    tm = th * W

    # NHWC + zero halo of R (covers every dilation rate; extra halo is zeros).
    x = jnp.transpose(x_nchw, (0, 2, 3, 1))               # (N, H, W, Cin)
    xpad = jnp.pad(x, ((0, 0), (R, R), (R, R), (0, 0)))   # (N, H+2R, W+2R, Cin)
    Hp, Wp = H + 2 * R, W + 2 * R

    # ---- Fold BN scales into the conv weights (eval-mode BN). ----
    w0f = P['w0'] * P['s0'][None, :]                                     # (Cin, Cout)
    wdf = [P[f'w{i+1}'] * P[f's{i+1}'][None, None, None, :] for i in range(3)]
    # 1x1 branch + the center (kh=kw=1) tap of each dilated branch all read the
    # un-shifted input -> one merged (Cin, 4*Cout) matmul (wider MXU N).
    w_center = jnp.concatenate([w0f] + [w[1, 1] for w in wdf], axis=-1)  # (Cin, 4*Cout)
    off_taps = tuple((kh, kw) for kh in range(3) for kw in range(3)
                     if not (kh == 1 and kw == 1))
    w_off = jnp.stack(
        [jnp.stack([w[kh, kw] for (kh, kw) in off_taps], axis=0) for w in wdf],
        axis=0)                                                          # (3, 8, Cin, Cout)

    # Per-branch BN shifts, applied in one add on the concatenated features.
    bshift = jnp.concatenate(
        [P['b0'], P['b1'], P['b2'], P['b3']]).reshape(1, 4 * Cout)

    # Projection weight with BN scale folded in.
    wpf = P['wp'] * P['sp'][None, :]                  # (5*Cout, Cout)
    wp_main = wpf[:4 * Cout]                          # (4*Cout, Cout)
    wp_pool = wpf[4 * Cout:]                          # (Cout,  Cout)

    # GAP branch -> per-image projection bias (tiny: plain JAX is appropriate).
    hp = jax.lax.Precision.HIGHEST
    pooled = jnp.mean(x, axis=(1, 2))                                     # (N, Cin)
    p = jnp.maximum(
        jnp.dot(pooled, P['w4'] * P['s4'][None, :], precision=hp)
        + P['b4'][None, :], 0.0)                                          # (N, Cout)
    bias_img = (jnp.dot(p, wp_pool, precision=hp) + P['bp'][None, :])     # (N, Cout)
    bias_img = bias_img.reshape(N, 1, Cout)

    # ---- the fused kernel ----
    def kernel(xpad_ref, wc_ref, woff_ref, bshift_ref, wp_ref, bias_ref, o_ref):
        r = pl.program_id(1)
        row0 = pl.multiple_of(r * th, th)

        def tap(dr, dc):
            # (th, W, Cin) shifted window read from the resident padded image.
            xs = xpad_ref[pl.ds(row0 + (R + dr), th), R + dc:R + dc + W, :]
            return xs.reshape(tm, Cin)

        xc = tap(0, 0)
        # Merged center matmul: 1x1 branch + center tap of each dilated branch.
        zc = jnp.dot(xc, wc_ref[...], preferred_element_type=jnp.float32)  # (tm, 4*Cout)
        zs = [zc[:, :Cout]]                                                # 1x1 branch
        for i, d in enumerate(rates):
            zi = zc[:, (i + 1) * Cout:(i + 2) * Cout]                      # center tap
            for t, (kh, kw) in enumerate(off_taps):
                xs = tap((kh - 1) * d, (kw - 1) * d)
                zi = zi + jnp.dot(xs, woff_ref[i, t, :, :],
                                  preferred_element_type=jnp.float32)
            zs.append(zi)

        pre = jnp.concatenate(zs, axis=-1)                                 # (tm, 4*Cout)
        feats = jnp.maximum(pre + bshift_ref[...], 0.0)                    # BN shift+ReLU
        proj = jnp.dot(feats, wp_ref[...], preferred_element_type=jnp.float32)
        out = jnp.maximum(proj + bias_ref[...], 0.0)                       # (tm, Cout)

        # Lane-dense store: (th*W, Cout) -> (th, W*Cout) slab.
        out3 = out.reshape(th, W, Cout)
        o_ref[...] = jnp.concatenate(
            [out3[:, w, :] for w in range(W)], axis=-1).astype(o_ref.dtype)

    out_slab = pl.pallas_call(
        kernel,
        out_shape=jax.ShapeDtypeStruct((N, H, W * Cout), x.dtype),
        grid=(N, RB),
        in_specs=[
            pl.BlockSpec((None, Hp, Wp, Cin), lambda n, r: (n, 0, 0, 0)),
            pl.BlockSpec((Cin, 4 * Cout), lambda n, r: (0, 0)),
            pl.BlockSpec((3, 8, Cin, Cout), lambda n, r: (0, 0, 0, 0)),
            pl.BlockSpec((1, 4 * Cout), lambda n, r: (0, 0)),
            pl.BlockSpec((4 * Cout, Cout), lambda n, r: (0, 0)),
            pl.BlockSpec((None, 1, Cout), lambda n, r: (n, 0, 0)),
        ],
        out_specs=pl.BlockSpec((None, th, W * Cout), lambda n, r: (n, r, 0)),
        compiler_params=pltpu.CompilerParams(
            dimension_semantics=("parallel", "parallel")),
    )(xpad, w_center, w_off, bshift, wp_main, bias_img)

    out_nhwc = out_slab.reshape(N, H, W, Cout)
    return jnp.transpose(out_nhwc, (0, 3, 1, 2))                           # NCHW


# ------------------------------- parameters ---------------------------------

def init_params(key, in_channels, atrous_rates):
    Cin = in_channels
    Cout = in_channels // 8
    eps = 1e-5
    ks = jax.random.split(key, 18)

    def conv_w(k, shape, fan_in):
        return jax.random.normal(k, shape, jnp.float32) / jnp.sqrt(float(fan_in))

    def bn_fold(kg, kb, c):
        gamma = 0.5 + jax.random.uniform(kg, (c,), jnp.float32)
        beta = 0.1 * jax.random.normal(kb, (c,), jnp.float32)
        # TODO(synk): BatchNorm is applied in eval mode with freshly-initialised
        # running stats (mean=0, var=1) folded into per-channel scale/shift;
        # train-mode batch statistics are not reproduced.
        return gamma / jnp.sqrt(1.0 + eps), beta

    P = {}
    P['w0'] = conv_w(ks[0], (Cin, Cout), Cin)                    # b0: 1x1 conv
    P['s0'], P['b0'] = bn_fold(ks[1], ks[2], Cout)
    for i in range(3):                                           # b1..b3: dilated 3x3
        P[f'w{i+1}'] = conv_w(ks[3 + 3 * i], (3, 3, Cin, Cout), 9 * Cin)  # HWIO
        P[f's{i+1}'], P[f'b{i+1}'] = bn_fold(ks[4 + 3 * i], ks[5 + 3 * i], Cout)
    P['w4'] = conv_w(ks[12], (Cin, Cout), Cin)                   # b4: 1x1 conv on GAP
    P['s4'], P['b4'] = bn_fold(ks[13], ks[14], Cout)
    P['wp'] = conv_w(ks[15], (5 * Cout, Cout), 5 * Cout)         # project: 1x1 conv
    P['sp'], P['bp'] = bn_fold(ks[16], ks[17], Cout)
    return P


# --------------------------- pure-JAX reference -----------------------------

def ref_forward(x_nchw, P, atrous_rates):
    x = jnp.transpose(x_nchw, (0, 2, 3, 1))
    N, H, W, _ = x.shape

    def bn_relu(z, s, b):
        return jnp.maximum(z * s + b, 0.0)

    def conv1x1(inp, w):
        return jax.lax.conv_general_dilated(
            inp, w.reshape(1, 1, *w.shape), (1, 1), 'VALID',
            dimension_numbers=('NHWC', 'HWIO', 'NHWC'),
            precision=jax.lax.Precision.HIGHEST)

    feats = [bn_relu(conv1x1(x, P['w0']), P['s0'], P['b0'])]
    for i, rate in enumerate(atrous_rates):
        z = jax.lax.conv_general_dilated(
            x, P[f'w{i+1}'], (1, 1), ((rate, rate), (rate, rate)),
            rhs_dilation=(rate, rate),
            dimension_numbers=('NHWC', 'HWIO', 'NHWC'),
            precision=jax.lax.Precision.HIGHEST)
        feats.append(bn_relu(z, P[f's{i+1}'], P[f'b{i+1}']))
    pooled = jnp.mean(x, axis=(1, 2))
    p = bn_relu(jnp.dot(pooled, P['w4'], precision=jax.lax.Precision.HIGHEST),
                P['s4'], P['b4'])
    feats.append(jnp.broadcast_to(p[:, None, None, :], (N, H, W, p.shape[-1])))
    y = jnp.concatenate(feats, axis=-1)
    out = bn_relu(conv1x1(y, P['wp']), P['sp'], P['bp'])
    return jnp.transpose(out, (0, 3, 1, 2))


# ---------------------------------- main ------------------------------------

if __name__ == "__main__":
    in_channels = 64          # out_channels = in_channels // 8 = 8
    atrous_rates = (1, 2, 3)
    N, H, W = 2, 16, 16

    key = jax.random.PRNGKey(0)
    kx, kp = jax.random.split(key)
    x = jax.random.normal(kx, (N, in_channels, H, W), jnp.float32)
    P = init_params(kp, in_channels, atrous_rates)

    fwd = jax.jit(lambda inp: aspp_forward(inp, P, atrous_rates))
    out = jax.block_until_ready(fwd(x))
    assert out.shape == (N, in_channels // 8, H, W), out.shape

    ref = ref_forward(x, P, atrous_rates)
    err = float(jnp.max(jnp.abs(out - ref)))
    assert err < 2e-3, f"max abs err {err}"

    print("KERNEL_OK")
</pallas_src>

<mosaic_0001>
module attributes {stable_mosaic.version = 11 : i64} {
  func.func @kernel(%arg0: i32, %arg1: i32, %arg2: memref<1x22x22x64xf32, #tpu.memory_space<vmem>>, %arg3: memref<64x32xf32, #tpu.memory_space<vmem>>, %arg4: memref<3x8x64x8xf32, #tpu.memory_space<vmem>>, %arg5: memref<1x32xf32, #tpu.memory_space<vmem>>, %arg6: memref<32x8xf32, #tpu.memory_space<vmem>>, %arg7: memref<1x1x8xf32, #tpu.memory_space<vmem>>, %arg8: memref<1x8x128xf32, #tpu.memory_space<vmem>>) attributes {dimension_semantics = [#tpu.dimension_semantics<parallel>, #tpu.dimension_semantics<parallel>], iteration_bounds = array<i64: 2, 2>, scalar_prefetch = 0 : i64, scratch_operands = 0 : i64, tpu.core_type = #tpu.core_type<tc>, window_params = [{transform_indices = @transform_0, window_bounds = array<i64: 1, 22, 22, 64>}, {pipeline_mode = #tpu.pipeline_mode<synchronous>, transform_indices = @transform_1, window_bounds = array<i64: 64, 32>}, {pipeline_mode = #tpu.pipeline_mode<synchronous>, transform_indices = @transform_2, window_bounds = array<i64: 3, 8, 64, 8>}, {pipeline_mode = #tpu.pipeline_mode<synchronous>, transform_indices = @transform_3, window_bounds = array<i64: 1, 32>}, {pipeline_mode = #tpu.pipeline_mode<synchronous>, transform_indices = @transform_4, window_bounds = array<i64: 32, 8>}, {transform_indices = @transform_5, window_bounds = array<i64: 1, 1, 8>}, {transform_indices = @transform_6, window_bounds = array<i64: 1, 8, 128>}]} {
    %c8_i32 = arith.constant 8 : i32
    %0 = arith.muli %arg1, %c8_i32 : i32
    %1 = tpu.assume_multiple %0, 8 : i32
    %c3_i32 = arith.constant 3 : i32
    %2 = arith.addi %1, %c3_i32 : i32
    %c0 = arith.constant 0 : index
    %3 = arith.index_cast %2 : i32 to index
    %c3 = arith.constant 3 : index
    %c0_0 = arith.constant 0 : index
    %4 = vector.load %arg2[%c0, %3, %c3, %c0_0] : memref<1x22x22x64xf32, #tpu.memory_space<vmem>>, vector<1x8x16x64xf32>
    %5 = vector.shape_cast %4 : vector<1x8x16x64xf32> to vector<8x16x64xf32>
    %6 = vector.shape_cast %5 : vector<8x16x64xf32> to vector<128x64xf32>
    %c0_1 = arith.constant 0 : index
    %c0_2 = arith.constant 0 : index
    %7 = vector.load %arg3[%c0_1, %c0_2] : memref<64x32xf32, #tpu.memory_space<vmem>>, vector<64x32xf32>
    %cst = arith.constant dense<0.000000e+00> : vector<128x32xf32>
    %8 = tpu.matmul %6, %7, %cst {dimension_numbers = #tpu.dot_dimension_numbers<[1], [0], [0], [1], [0, 0, 1, 1], [], []>} : vector<128x64xf32>, vector<64x32xf32>, vector<128x32xf32> -> vector<128x32xf32>
    %9 = vector.extract_strided_slice %8 {offsets = [0, 0], sizes = [128, 8], strides = [1, 1]} : vector<128x32xf32> to vector<128x8xf32>
    %10 = vector.extract_strided_slice %8 {offsets = [0, 8], sizes = [128, 8], strides = [1, 1]} : vector<128x32xf32> to vector<128x8xf32>
    %c2_i32 = arith.constant 2 : i32
    %11 = arith.addi %1, %c2_i32 : i32
    %c0_3 = arith.constant 0 : index
    %12 = arith.index_cast %11 : i32 to index
    %c2 = arith.constant 2 : index
    %c0_4 = arith.constant 0 : index
    %13 = vector.load %arg2[%c0_3, %12, %c2, %c0_4] : memref<1x22x22x64xf32, #tpu.memory_space<vmem>>, vector<1x8x16x64xf32>
    %14 = vector.shape_cast %13 : vector<1x8x16x64xf32> to vector<8x16x64xf32>
    %15 = vector.shape_cast %14 : vector<8x16x64xf32> to vector<128x64xf32>
    %c0_5 = arith.constant 0 : index
    %c0_6 = arith.constant 0 : index
    %c0_7 = arith.constant 0 : index
    %c0_8 = arith.constant 0 : index
    %16 = vector.load %arg4[%c0_5, %c0_6, %c0_7, %c0_8] : memref<3x8x64x8xf32, #tpu.memory_space<vmem>>, vector<1x1x64x8xf32>
    %17 = vector.shape_cast %16 : vector<1x1x64x8xf32> to vector<64x8xf32>
    %cst_9 = arith.constant dense<0.000000e+00> : vector<128x8xf32>
    %18 = tpu.matmul %15, %17, %cst_9 {dimension_numbers = #tpu.dot_dimension_numbers<[1], [0], [0], [1], [0, 0, 1, 1], [], []>} : vector<128x64xf32>, vector<64x8xf32>, vector<128x8xf32> -> vector<128x8xf32>
    %19 = arith.addf %10, %18 : vector<128x8xf32>
    %c2_i32_10 = arith.constant 2 : i32
    %20 = arith.addi %1, %c2_i32_10 : i32
    %c0_11 = arith.constant 0 : index
    %21 = arith.index_cast %20 : i32 to index
    %c3_12 = arith.constant 3 : index
    %c0_13 = arith.constant 0 : index
    %22 = vector.load %arg2[%c0_11, %21, %c3_12, %c0_13] : memref<1x22x22x64xf32, #tpu.memory_space<vmem>>, vector<1x8x16x64xf32>
    %23 = vector.shape_cast %22 : vector<1x8x16x64xf32> to vector<8x16x64xf32>
    %24 = vector.shape_cast %23 : vector<8x16x64xf32> to vector<128x64xf32>
    %c0_14 = arith.constant 0 : index
    %c1 = arith.constant 1 : index
    %c0_15 = arith.constant 0 : index
    %c0_16 = arith.constant 0 : index
    %25 = vector.load %arg4[%c0_14, %c1, %c0_15, %c0_16] : memref<3x8x64x8xf32, #tpu.memory_space<vmem>>, vector<1x1x64x8xf32>
    %26 = vector.shape_cast %25 : vector<1x1x64x8xf32> to vector<64x8xf32>
    %cst_17 = arith.constant dense<0.000000e+00> : vector<128x8xf32>
    %27 = tpu.matmul %24, %26, %cst_17 {dimension_numbers = #tpu.dot_dimension_numbers<[1], [0], [0], [1], [0, 0, 1, 1], [], []>} : vector<128x64xf32>, vector<64x8xf32>, vector<128x8xf32> -> vector<128x8xf32>
    %28 = arith.addf %19, %27 : vector<128x8xf32>
    %c2_i32_18 = arith.constant 2 : i32
    %29 = arith.addi %1, %c2_i32_18 : i32
    %c0_19 = arith.constant 0 : index
    %30 = arith.index_cast %29 : i32 to index
    %c4 = arith.constant 4 : index
    %c0_20 = arith.constant 0 : index
    %31 = vector.load %arg2[%c0_19, %30, %c4, %c0_20] : memref<1x22x22x64xf32, #tpu.memory_space<vmem>>, vector<1x8x16x64xf32>
    %32 = vector.shape_cast %31 : vector<1x8x16x64xf32> to vector<8x16x64xf32>
    %33 = vector.shape_cast %32 : vector<8x16x64xf32> to vector<128x64xf32>
    %c0_21 = arith.constant 0 : index
    %c2_22 = arith.constant 2 : index
    %c0_23 = arith.constant 0 : index
    %c0_24 = arith.constant 0 : index
    %34 = vector.load %arg4[%c0_21, %c2_22, %c0_23, %c0_24] : memref<3x8x64x8xf32, #tpu.memory_space<vmem>>, vector<1x1x64x8xf32>
    %35 = vector.shape_cast %34 : vector<1x1x64x8xf32> to vector<64x8xf32>
    %cst_25 = arith.constant dense<0.000000e+00> : vector<128x8xf32>
    %36 = tpu.matmul %33, %35, %cst_25 {dimension_numbers = #tpu.dot_dimension_numbers<[1], [0], [0], [1], [0, 0, 1, 1], [], []>} : vector<128x64xf32>, vector<64x8xf32>, vector<128x8xf32> -> vector<128x8xf32>
    %37 = arith.addf %28, %36 : vector<128x8xf32>
    %c3_i32_26 = arith.constant 3 : i32
    %38 = arith.addi %1, %c3_i32_26 : i32
    %c0_27 = arith.constant 0 : index
    %39 = arith.index_cast %38 : i32 to index
    %c2_28 = arith.constant 2 : index
    %c0_29 = arith.constant 0 : index
    %40 = vector.load %arg2[%c0_27, %39, %c2_28, %c0_29] : memref<1x22x22x64xf32, #tpu.memory_space<vmem>>, vector<1x8x16x64xf32>
    %41 = vector.shape_cast %40 : vector<1x8x16x64xf32> to vector<8x16x64xf32>
    %42 = vector.shape_cast %41 : vector<8x16x64xf32> to vector<128x64xf32>
    %c0_30 = arith.constant 0 : index
    %c3_31 = arith.constant 3 : index
    %c0_32 = arith.constant 0 : index
    %c0_33 = arith.constant 0 : index
    %43 = vector.load %arg4[%c0_30, %c3_31, %c0_32, %c0_33] : memref<3x8x64x8xf32, #tpu.memory_space<vmem>>, vector<1x1x64x8xf32>
    %44 = vector.shape_cast %43 : vector<1x1x64x8xf32> to vector<64x8xf32>
    %cst_34 = arith.constant dense<0.000000e+00> : vector<128x8xf32>
    %45 = tpu.matmul %42, %44, %cst_34 {dimension_numbers = #tpu.dot_dimension_numbers<[1], [0], [0], [1], [0, 0, 1, 1], [], []>} : vector<128x64xf32>, vector<64x8xf32>, vector<128x8xf32> -> vector<128x8xf32>
    %46 = arith.addf %37, %45 : vector<128x8xf32>
    %c3_i32_35 = arith.constant 3 : i32
    %47 = arith.addi %1, %c3_i32_35 : i32
    %c0_36 = arith.constant 0 : index
    %48 = arith.index_cast %47 : i32 to index
    %c4_37 = arith.constant 4 : index
    %c0_38 = arith.constant 0 : index
    %49 = vector.load %arg2[%c0_36, %48, %c4_37, %c0_38] : memref<1x22x22x64xf32, #tpu.memory_space<vmem>>, vector<1x8x16x64xf32>
    %50 = vector.shape_cast %49 : vector<1x8x16x64xf32> to vector<8x16x64xf32>
    %51 = vector.shape_cast %50 : vector<8x16x64xf32> to vector<128x64xf32>
    %c0_39 = arith.constant 0 : index
    %c4_40 = arith.constant 4 : index
    %c0_41 = arith.constant 0 : index
    %c0_42 = arith.constant 0 : index
    %52 = vector.load %arg4[%c0_39, %c4_40, %c0_41, %c0_42] : memref<3x8x64x8xf32, #tpu.memory_space<vmem>>, vector<1x1x64x8xf32>
    %53 = vector.shape_cast %52 : vector<1x1x64x8xf32> to vector<64x8xf32>
    %cst_43 = arith.constant dense<0.000000e+00> : vector<128x8xf32>
    %54 = tpu.matmul %51, %53, %cst_43 {dimension_numbers = #tpu.dot_dimension_numbers<[1], [0], [0], [1], [0, 0, 1, 1], [], []>} : vector<128x64xf32>, vector<64x8xf32>, vector<128x8xf32> -> vector<128x8xf32>
    %55 = arith.addf %46, %54 : vector<128x8xf32>
    %c4_i32 = arith.constant 4 : i32
    %56 = arith.addi %1, %c4_i32 : i32
    %c0_44 = arith.constant 0 : index
    %57 = arith.index_cast %56 : i32 to index
    %c2_45 = arith.constant 2 : index
    %c0_46 = arith.constant 0 : index
    %58 = vector.load %arg2[%c0_44, %57, %c2_45, %c0_46] : memref<1x22x22x64xf32, #tpu.memory_space<vmem>>, vector<1x8x16x64xf32>
    %59 = vector.shape_cast %58 : vector<1x8x16x64xf32> to vector<8x16x64xf32>
    %60 = vector.shape_cast %59 : vector<8x16x64xf32> to vector<128x64xf32>
    %c0_47 = arith.constant 0 : index
    %c5 = arith.constant 5 : index
    %c0_48 = arith.constant 0 : index
    %c0_49 = arith.constant 0 : index
    %61 = vector.load %arg4[%c0_47, %c5, %c0_48, %c0_49] : memref<3x8x64x8xf32, #tpu.memory_space<vmem>>, vector<1x1x64x8xf32>
    %62 = vector.shape_cast %61 : vector<1x1x64x8xf32> to vector<64x8xf32>
    %cst_50 = arith.constant dense<0.000000e+00> : vector<128x8xf32>
    %63 = tpu.matmul %60, %62, %cst_50 {dimension_numbers = #tpu.dot_dimension_numbers<[1], [0], [0], [1], [0, 0, 1, 1], [], []>} : vector<128x64xf32>, vector<64x8xf32>, vector<128x8xf32> -> vector<128x8xf32>
    %64 = arith.addf %55, %63 : vector<128x8xf32>
    %c4_i32_51 = arith.constant 4 : i32
    %65 = arith.addi %1, %c4_i32_51 : i32
    %c0_52 = arith.constant 0 : index
    %66 = arith.index_cast %65 : i32 to index
    %c3_53 = arith.constant 3 : index
    %c0_54 = arith.constant 0 : index
    %67 = vector.load %arg2[%c0_52, %66, %c3_53, %c0_54] : memref<1x22x22x64xf32, #tpu.memory_space<vmem>>, vector<1x8x16x64xf32>
    %68 = vector.shape_cast %67 : vector<1x8x16x64xf32> to vector<8x16x64xf32>
    %69 = vector.shape_cast %68 : vector<8x16x64xf32> to vector<128x64xf32>
    %c0_55 = arith.constant 0 : index
    %c6 = arith.constant 6 : index
    %c0_56 = arith.constant 0 : index
    %c0_57 = arith.constant 0 : index
    %70 = vector.load %arg4[%c0_55, %c6, %c0_56, %c0_57] : memref<3x8x64x8xf32, #tpu.memory_space<vmem>>, vector<1x1x64x8xf32>
    %71 = vector.shape_cast %70 : vector<1x1x64x8xf32> to vector<64x8xf32>
    %cst_58 = arith.constant dense<0.000000e+00> : vector<128x8xf32>
    %72 = tpu.matmul %69, %71, %cst_58 {dimension_numbers = #tpu.dot_dimension_numbers<[1], [0], [0], [1], [0, 0, 1, 1], [], []>} : vector<128x64xf32>, vector<64x8xf32>, vector<128x8xf32> -> vector<128x8xf32>
    %73 = arith.addf %64, %72 : vector<128x8xf32>
    %c4_i32_59 = arith.constant 4 : i32
    %74 = arith.addi %1, %c4_i32_59 : i32
    %c0_60 = arith.constant 0 : index
    %75 = arith.index_cast %74 : i32 to index
    %c4_61 = arith.constant 4 : index
    %c0_62 = arith.constant 0 : index
    %76 = vector.load %arg2[%c0_60, %75, %c4_61, %c0_62] : memref<1x22x22x64xf32, #tpu.memory_space<vmem>>, vector<1x8x16x64xf32>
    %77 = vector.shape_cast %76 : vector<1x8x16x64xf32> to vector<8x16x64xf32>
    %78 = vector.shape_cast %77 : vector<8x16x64xf32> to vector<128x64xf32>
    %c0_63 = arith.constant 0 : index
    %c7 = arith.constant 7 : index
    %c0_64 = arith.constant 0 : index
    %c0_65 = arith.constant 0 : index
    %79 = vector.load %arg4[%c0_63, %c7, %c0_64, %c0_65] : memref<3x8x64x8xf32, #tpu.memory_space<vmem>>, vector<1x1x64x8xf32>
    %80 = vector.shape_cast %79 : vector<1x1x64x8xf32> to vector<64x8xf32>
    %cst_66 = arith.constant dense<0.000000e+00> : vector<128x8xf32>
    %81 = tpu.matmul %78, %80, %cst_66 {dimension_numbers = #tpu.dot_dimension_numbers<[1], [0], [0], [1], [0, 0, 1, 1], [], []>} : vector<128x64xf32>, vector<64x8xf32>, vector<128x8xf32> -> vector<128x8xf32>
    %82 = arith.addf %73, %81 : vector<128x8xf32>
    %83 = vector.extract_strided_slice %8 {offsets = [0, 16], sizes = [128, 8], strides = [1, 1]} : vector<128x32xf32> to vector<128x8xf32>
    %c1_i32 = arith.constant 1 : i32
    %84 = arith.addi %1, %c1_i32 : i32
    %c0_67 = arith.constant 0 : index
    %85 = arith.index_cast %84 : i32 to index
    %c1_68 = arith.constant 1 : index
    %c0_69 = arith.constant 0 : index
    %86 = vector.load %arg2[%c0_67, %85, %c1_68, %c0_69] : memref<1x22x22x64xf32, #tpu.memory_space<vmem>>, vector<1x8x16x64xf32>
    %87 = vector.shape_cast %86 : vector<1x8x16x64xf32> to vector<8x16x64xf32>
    %88 = vector.shape_cast %87 : vector<8x16x64xf32> to vector<128x64xf32>
    %c1_70 = arith.constant 1 : index
    %c0_71 = arith.constant 0 : index
    %c0_72 = arith.constant 0 : index
    %c0_73 = arith.constant 0 : index
    %89 = vector.load %arg4[%c1_70, %c0_71, %c0_72, %c0_73] : memref<3x8x64x8xf32, #tpu.memory_space<vmem>>, vector<1x1x64x8xf32>
    %90 = vector.shape_cast %89 : vector<1x1x64x8xf32> to vector<64x8xf32>
    %cst_74 = arith.constant dense<0.000000e+00> : vector<128x8xf32>
    %91 = tpu.matmul %88, %90, %cst_74 {dimension_numbers = #tpu.dot_dimension_numbers<[1], [0], [0], [1], [0, 0, 1, 1], [], []>} : vector<128x64xf32>, vector<64x8xf32>, vector<128x8xf32> -> vector<128x8xf32>
    %92 = arith.addf %83, %91 : vector<128x8xf32>
    %c1_i32_75 = arith.constant 1 : i32
    %93 = arith.addi %1, %c1_i32_75 : i32
    %c0_76 = arith.constant 0 : index
    %94 = arith.index_cast %93 : i32 to index
    %c3_77 = arith.constant 3 : index
    %c0_78 = arith.constant 0 : index
    %95 = vector.load %arg2[%c0_76, %94, %c3_77, %c0_78] : memref<1x22x22x64xf32, #tpu.memory_space<vmem>>, vector<1x8x16x64xf32>
    %96 = vector.shape_cast %95 : vector<1x8x16x64xf32> to vector<8x16x64xf32>
    %97 = vector.shape_cast %96 : vector<8x16x64xf32> to vector<128x64xf32>
    %c1_79 = arith.constant 1 : index
    %c1_80 = arith.constant 1 : index
    %c0_81 = arith.constant 0 : index
    %c0_82 = arith.constant 0 : index
    %98 = vector.load %arg4[%c1_79, %c1_80, %c0_81, %c0_82] : memref<3x8x64x8xf32, #tpu.memory_space<vmem>>, vector<1x1x64x8xf32>
    %99 = vector.shape_cast %98 : vector<1x1x64x8xf32> to vector<64x8xf32>
    %cst_83 = arith.constant dense<0.000000e+00> : vector<128x8xf32>
    %100 = tpu.matmul %97, %99, %cst_83 {dimension_numbers = #tpu.dot_dimension_numbers<[1], [0], [0], [1], [0, 0, 1, 1], [], []>} : vector<128x64xf32>, vector<64x8xf32>, vector<128x8xf32> -> vector<128x8xf32>
    %101 = arith.addf %92, %100 : vector<128x8xf32>
    %c1_i32_84 = arith.constant 1 : i32
    %102 = arith.addi %1, %c1_i32_84 : i32
    %c0_85 = arith.constant 0 : index
    %103 = arith.index_cast %102 : i32 to index
    %c5_86 = arith.constant 5 : index
    %c0_87 = arith.constant 0 : index
    %104 = vector.load %arg2[%c0_85, %103, %c5_86, %c0_87] : memref<1x22x22x64xf32, #tpu.memory_space<vmem>>, vector<1x8x16x64xf32>
    %105 = vector.shape_cast %104 : vector<1x8x16x64xf32> to vector<8x16x64xf32>
    %106 = vector.shape_cast %105 : vector<8x16x64xf32> to vector<128x64xf32>
    %c1_88 = arith.constant 1 : index
    %c2_89 = arith.constant 2 : index
    %c0_90 = arith.constant 0 : index
    %c0_91 = arith.constant 0 : index
    %107 = vector.load %arg4[%c1_88, %c2_89, %c0_90, %c0_91] : memref<3x8x64x8xf32, #tpu.memory_space<vmem>>, vector<1x1x64x8xf32>
    %108 = vector.shape_cast %107 : vector<1x1x64x8xf32> to vector<64x8xf32>
    %cst_92 = arith.constant dense<0.000000e+00> : vector<128x8xf32>
    %109 = tpu.matmul %106, %108, %cst_92 {dimension_numbers = #tpu.dot_dimension_numbers<[1], [0], [0], [1], [0, 0, 1, 1], [], []>} : vector<128x64xf32>, vector<64x8xf32>, vector<128x8xf32> -> vector<128x8xf32>
    %110 = arith.addf %101, %109 : vector<128x8xf32>
    %c3_i32_93 = arith.constant 3 : i32
    %111 = arith.addi %1, %c3_i32_93 : i32
    %c0_94 = arith.constant 0 : index
    %112 = arith.index_cast %111 : i32 to index
    %c1_95 = arith.constant 1 : index
    %c0_96 = arith.constant 0 : index
    %113 = vector.load %arg2[%c0_94, %112, %c1_95, %c0_96] : memref<1x22x22x64xf32, #tpu.memory_space<vmem>>, vector<1x8x16x64xf32>
    %114 = vector.shape_cast %113 : vector<1x8x16x64xf32> to vector<8x16x64xf32>
    %115 = vector.shape_cast %114 : vector<8x16x64xf32> to vector<128x64xf32>
    %c1_97 = arith.constant 1 : index
    %c3_98 = arith.constant 3 : index
    %c0_99 = arith.constant 0 : index
    %c0_100 = arith.constant 0 : index
    %116 = vector.load %arg4[%c1_97, %c3_98, %c0_99, %c0_100] : memref<3x8x64x8xf32, #tpu.memory_space<vmem>>, vector<1x1x64x8xf32>
    %117 = vector.shape_cast %116 : vector<1x1x64x8xf32> to vector<64x8xf32>
    %cst_101 = arith.constant dense<0.000000e+00> : vector<128x8xf32>
    %118 = tpu.matmul %115, %117, %cst_101 {dimension_numbers = #tpu.dot_dimension_numbers<[1], [0], [0], [1], [0, 0, 1, 1], [], []>} : vector<128x64xf32>, vector<64x8xf32>, vector<128x8xf32> -> vector<128x8xf32>
    %119 = arith.addf %110, %118 : vector<128x8xf32>
    %c3_i32_102 = arith.constant 3 : i32
    %120 = arith.addi %1, %c3_i32_102 : i32
    %c0_103 = arith.constant 0 : index
    %121 = arith.index_cast %120 : i32 to index
    %c5_104 = arith.constant 5 : index
    %c0_105 = arith.constant 0 : index
    %122 = vector.load %arg2[%c0_103, %121, %c5_104, %c0_105] : memref<1x22x22x64xf32, #tpu.memory_space<vmem>>, vector<1x8x16x64xf32>
    %123 = vector.shape_cast %122 : vector<1x8x16x64xf32> to vector<8x16x64xf32>
    %124 = vector.shape_cast %123 : vector<8x16x64xf32> to vector<128x64xf32>
    %c1_106 = arith.constant 1 : index
    %c4_107 = arith.constant 4 : index
    %c0_108 = arith.constant 0 : index
    %c0_109 = arith.constant 0 : index
    %125 = vector.load %arg4[%c1_106, %c4_107, %c0_108, %c0_109] : memref<3x8x64x8xf32, #tpu.memory_space<vmem>>, vector<1x1x64x8xf32>
    %126 = vector.shape_cast %125 : vector<1x1x64x8xf32> to vector<64x8xf32>
    %cst_110 = arith.constant dense<0.000000e+00> : vector<128x8xf32>
    %127 = tpu.matmul %124, %126, %cst_110 {dimension_numbers = #tpu.dot_dimension_numbers<[1], [0], [0], [1], [0, 0, 1, 1], [], []>} : vector<128x64xf32>, vector<64x8xf32>, vector<128x8xf32> -> vector<128x8xf32>
    %128 = arith.addf %119, %127 : vector<128x8xf32>
    %c5_i32 = arith.constant 5 : i32
    %129 = arith.addi %1, %c5_i32 : i32
    %c0_111 = arith.constant 0 : index
    %130 = arith.index_cast %129 : i32 to index
    %c1_112 = arith.constant 1 : index
    %c0_113 = arith.constant 0 : index
    %131 = vector.load %arg2[%c0_111, %130, %c1_112, %c0_113] : memref<1x22x22x64xf32, #tpu.memory_space<vmem>>, vector<1x8x16x64xf32>
    %132 = vector.shape_cast %131 : vector<1x8x16x64xf32> to vector<8x16x64xf32>
    %133 = vector.shape_cast %132 : vector<8x16x64xf32> to vector<128x64xf32>
    %c1_114 = arith.constant 1 : index
    %c5_115 = arith.constant 5 : index
    %c0_116 = arith.constant 0 : index
    %c0_117 = arith.constant 0 : index
    %134 = vector.load %arg4[%c1_114, %c5_115, %c0_116, %c0_117] : memref<3x8x64x8xf32, #tpu.memory_space<vmem>>, vector<1x1x64x8xf32>
    %135 = vector.shape_cast %134 : vector<1x1x64x8xf32> to vector<64x8xf32>
    %cst_118 = arith.constant dense<0.000000e+00> : vector<128x8xf32>
    %136 = tpu.matmul %133, %135, %cst_118 {dimension_numbers = #tpu.dot_dimension_numbers<[1], [0], [0], [1], [0, 0, 1, 1], [], []>} : vector<128x64xf32>, vector<64x8xf32>, vector<128x8xf32> -> vector<128x8xf32>
    %137 = arith.addf %128, %136 : vector<128x8xf32>
    %c5_i32_119 = arith.constant 5 : i32
    %138 = arith.addi %1, %c5_i32_119 : i32
    %c0_120 = arith.constant 0 : index
    %139 = arith.index_cast %138 : i32 to index
    %c3_121 = arith.constant 3 : index
    %c0_122 = arith.constant 0 : index
    %140 = vector.load %arg2[%c0_120, %139, %c3_121, %c0_122] : memref<1x22x22x64xf32, #tpu.memory_space<vmem>>, vector<1x8x16x64xf32>
    %141 = vector.shape_cast %140 : vector<1x8x16x64xf32> to vector<8x16x64xf32>
    %142 = vector.shape_cast %141 : vector<8x16x64xf32> to vector<128x64xf32>
    %c1_123 = arith.constant 1 : index
    %c6_124 = arith.constant 6 : index
    %c0_125 = arith.constant 0 : index
    %c0_126 = arith.constant 0 : index
    %143 = vector.load %arg4[%c1_123, %c6_124, %c0_125, %c0_126] : memref<3x8x64x8xf32, #tpu.memory_space<vmem>>, vector<1x1x64x8xf32>
    %144 = vector.shape_cast %143 : vector<1x1x64x8xf32> to vector<64x8xf32>
    %cst_127 = arith.constant dense<0.000000e+00> : vector<128x8xf32>
    %145 = tpu.matmul %142, %144, %cst_127 {dimension_numbers = #tpu.dot_dimension_numbers<[1], [0], [0], [1], [0, 0, 1, 1], [], []>} : vector<128x64xf32>, vector<64x8xf32>, vector<128x8xf32> -> vector<128x8xf32>
    %146 = arith.addf %137, %145 : vector<128x8xf32>
    %c5_i32_128 = arith.constant 5 : i32
    %147 = arith.addi %1, %c5_i32_128 : i32
    %c0_129 = arith.constant 0 : index
    %148 = arith.index_cast %147 : i32 to index
    %c5_130 = arith.constant 5 : index
    %c0_131 = arith.constant 0 : index
    %149 = vector.load %arg2[%c0_129, %148, %c5_130, %c0_131] : memref<1x22x22x64xf32, #tpu.memory_space<vmem>>, vector<1x8x16x64xf32>
    %150 = vector.shape_cast %149 : vector<1x8x16x64xf32> to vector<8x16x64xf32>
    %151 = vector.shape_cast %150 : vector<8x16x64xf32> to vector<128x64xf32>
    %c1_132 = arith.constant 1 : index
    %c7_133 = arith.constant 7 : index
    %c0_134 = arith.constant 0 : index
    %c0_135 = arith.constant 0 : index
    %152 = vector.load %arg4[%c1_132, %c7_133, %c0_134, %c0_135] : memref<3x8x64x8xf32, #tpu.memory_space<vmem>>, vector<1x1x64x8xf32>
    %153 = vector.shape_cast %152 : vector<1x1x64x8xf32> to vector<64x8xf32>
    %cst_136 = arith.constant dense<0.000000e+00> : vector<128x8xf32>
    %154 = tpu.matmul %151, %153, %cst_136 {dimension_numbers = #tpu.dot_dimension_numbers<[1], [0], [0], [1], [0, 0, 1, 1], [], []>} : vector<128x64xf32>, vector<64x8xf32>, vector<128x8xf32> -> vector<128x8xf32>
    %155 = arith.addf %146, %154 : vector<128x8xf32>
    %156 = vector.extract_strided_slice %8 {offsets = [0, 24], sizes = [128, 8], strides = [1, 1]} : vector<128x32xf32> to vector<128x8xf32>
    %c0_i32 = arith.constant 0 : i32
    %157 = arith.addi %1, %c0_i32 : i32
    %c0_137 = arith.constant 0 : index
    %158 = arith.index_cast %157 : i32 to index
    %c0_138 = arith.constant 0 : index
    %c0_139 = arith.constant 0 : index
    %159 = vector.load %arg2[%c0_137, %158, %c0_138, %c0_139] : memref<1x22x22x64xf32, #tpu.memory_space<vmem>>, vector<1x8x16x64xf32>
    %160 = vector.shape_cast %159 : vector<1x8x16x64xf32> to vector<8x16x64xf32>
    %161 = vector.shape_cast %160 : vector<8x16x64xf32> to vector<128x64xf32>
    %c2_140 = arith.constant 2 : index
    %c0_141 = arith.constant 0 : index
    %c0_142 = arith.constant 0 : index
    %c0_143 = arith.constant 0 : index
    %162 = vector.load %arg4[%c2_140, %c0_141, %c0_142, %c0_143] : memref<3x8x64x8xf32, #tpu.memory_space<vmem>>, vector<1x1x64x8xf32>
    %163 = vector.shape_cast %162 : vector<1x1x64x8xf32> to vector<64x8xf32>
    %cst_144 = arith.constant dense<0.000000e+00> : vector<128x8xf32>
    %164 = tpu.matmul %161, %163, %cst_144 {dimension_numbers = #tpu.dot_dimension_numbers<[1], [0], [0], [1], [0, 0, 1, 1], [], []>} : vector<128x64xf32>, vector<64x8xf32>, vector<128x8xf32> -> vector<128x8xf32>
    %165 = arith.addf %156, %164 : vector<128x8xf32>
    %c0_i32_145 = arith.constant 0 : i32
    %166 = arith.addi %1, %c0_i32_145 : i32
    %c0_146 = arith.constant 0 : index
    %167 = arith.index_cast %166 : i32 to index
    %c3_147 = arith.constant 3 : index
    %c0_148 = arith.constant 0 : index
    %168 = vector.load %arg2[%c0_146, %167, %c3_147, %c0_148] : memref<1x22x22x64xf32, #tpu.memory_space<vmem>>, vector<1x8x16x64xf32>
    %169 = vector.shape_cast %168 : vector<1x8x16x64xf32> to vector<8x16x64xf32>
    %170 = vector.shape_cast %169 : vector<8x16x64xf32> to vector<128x64xf32>
    %c2_149 = arith.constant 2 : index
    %c1_150 = arith.constant 1 : index
    %c0_151 = arith.constant 0 : index
    %c0_152 = arith.constant 0 : index
    %171 = vector.load %arg4[%c2_149, %c1_150, %c0_151, %c0_152] : memref<3x8x64x8xf32, #tpu.memory_space<vmem>>, vector<1x1x64x8xf32>
    %172 = vector.shape_cast %171 : vector<1x1x64x8xf32> to vector<64x8xf32>
    %cst_153 = arith.constant dense<0.000000e+00> : vector<128x8xf32>
    %173 = tpu.matmul %170, %172, %cst_153 {dimension_numbers = #tpu.dot_dimension_numbers<[1], [0], [0], [1], [0, 0, 1, 1], [], []>} : vector<128x64xf32>, vector<64x8xf32>, vector<128x8xf32> -> vector<128x8xf32>
    %174 = arith.addf %165, %173 : vector<128x8xf32>
    %c0_i32_154 = arith.constant 0 : i32
    %175 = arith.addi %1, %c0_i32_154 : i32
    %c0_155 = arith.constant 0 : index
    %176 = arith.index_cast %175 : i32 to index
    %c6_156 = arith.constant 6 : index
    %c0_157 = arith.constant 0 : index
    %177 = vector.load %arg2[%c0_155, %176, %c6_156, %c0_157] : memref<1x22x22x64xf32, #tpu.memory_space<vmem>>, vector<1x8x16x64xf32>
    %178 = vector.shape_cast %177 : vector<1x8x16x64xf32> to vector<8x16x64xf32>
    %179 = vector.shape_cast %178 : vector<8x16x64xf32> to vector<128x64xf32>
    %c2_158 = arith.constant 2 : index
    %c2_159 = arith.constant 2 : index
    %c0_160 = arith.constant 0 : index
    %c0_161 = arith.constant 0 : index
    %180 = vector.load %arg4[%c2_158, %c2_159, %c0_160, %c0_161] : memref<3x8x64x8xf32, #tpu.memory_space<vmem>>, vector<1x1x64x8xf32>
    %181 = vector.shape_cast %180 : vector<1x1x64x8xf32> to vector<64x8xf32>
    %cst_162 = arith.constant dense<0.000000e+00> : vector<128x8xf32>
    %182 = tpu.matmul %179, %181, %cst_162 {dimension_numbers = #tpu.dot_dimension_numbers<[1], [0], [0], [1], [0, 0, 1, 1], [], []>} : vector<128x64xf32>, vector<64x8xf32>, vector<128x8xf32> -> vector<128x8xf32>
    %183 = arith.addf %174, %182 : vector<128x8xf32>
    %c3_i32_163 = arith.constant 3 : i32
    %184 = arith.addi %1, %c3_i32_163 : i32
    %c0_164 = arith.constant 0 : index
    %185 = arith.index_cast %184 : i32 to index
    %c0_165 = arith.constant 0 : index
    %c0_166 = arith.constant 0 : index
    %186 = vector.load %arg2[%c0_164, %185, %c0_165, %c0_166] : memref<1x22x22x64xf32, #tpu.memory_space<vmem>>, vector<1x8x16x64xf32>
    %187 = vector.shape_cast %186 : vector<1x8x16x64xf32> to vector<8x16x64xf32>
    %188 = vector.shape_cast %187 : vector<8x16x64xf32> to vector<128x64xf32>
    %c2_167 = arith.constant 2 : index
    %c3_168 = arith.constant 3 : index
    %c0_169 = arith.constant 0 : index
    %c0_170 = arith.constant 0 : index
    %189 = vector.load %arg4[%c2_167, %c3_168, %c0_169, %c0_170] : memref<3x8x64x8xf32, #tpu.memory_space<vmem>>, vector<1x1x64x8xf32>
    %190 = vector.shape_cast %189 : vector<1x1x64x8xf32> to vector<64x8xf32>
    %cst_171 = arith.constant dense<0.000000e+00> : vector<128x8xf32>
    %191 = tpu.matmul %188, %190, %cst_171 {dimension_numbers = #tpu.dot_dimension_numbers<[1], [0], [0], [1], [0, 0, 1, 1], [], []>} : vector<128x64xf32>, vector<64x8xf32>, vector<128x8xf32> -> vector<128x8xf32>
    %192 = arith.addf %183, %191 : vector<128x8xf32>
    %c3_i32_172 = arith.constant 3 : i32
    %193 = arith.addi %1, %c3_i32_172 : i32
    %c0_173 = arith.constant 0 : index
    %194 = arith.index_cast %193 : i32 to index
    %c6_174 = arith.constant 6 : index
    %c0_175 = arith.constant 0 : index
    %195 = vector.load %arg2[%c0_173, %194, %c6_174, %c0_175] : memref<1x22x22x64xf32, #tpu.memory_space<vmem>>, vector<1x8x16x64xf32>
    %196 = vector.shape_cast %195 : vector<1x8x16x64xf32> to vector<8x16x64xf32>
    %197 = vector.shape_cast %196 : vector<8x16x64xf32> to vector<128x64xf32>
    %c2_176 = arith.constant 2 : index
    %c4_177 = arith.constant 4 : index
    %c0_178 = arith.constant 0 : index
    %c0_179 = arith.constant 0 : index
    %198 = vector.load %arg4[%c2_176, %c4_177, %c0_178, %c0_179] : memref<3x8x64x8xf32, #tpu.memory_space<vmem>>, vector<1x1x64x8xf32>
    %199 = vector.shape_cast %198 : vector<1x1x64x8xf32> to vector<64x8xf32>
    %cst_180 = arith.constant dense<0.000000e+00> : vector<128x8xf32>
    %200 = tpu.matmul %197, %199, %cst_180 {dimension_numbers = #tpu.dot_dimension_numbers<[1], [0], [0], [1], [0, 0, 1, 1], [], []>} : vector<128x64xf32>, vector<64x8xf32>, vector<128x8xf32> -> vector<128x8xf32>
    %201 = arith.addf %192, %200 : vector<128x8xf32>
    %c6_i32 = arith.constant 6 : i32
    %202 = arith.addi %1, %c6_i32 : i32
    %c0_181 = arith.constant 0 : index
    %203 = arith.index_cast %202 : i32 to index
    %c0_182 = arith.constant 0 : index
    %c0_183 = arith.constant 0 : index
    %204 = vector.load %arg2[%c0_181, %203, %c0_182, %c0_183] : memref<1x22x22x64xf32, #tpu.memory_space<vmem>>, vector<1x8x16x64xf32>
    %205 = vector.shape_cast %204 : vector<1x8x16x64xf32> to vector<8x16x64xf32>
    %206 = vector.shape_cast %205 : vector<8x16x64xf32> to vector<128x64xf32>
    %c2_184 = arith.constant 2 : index
    %c5_185 = arith.constant 5 : index
    %c0_186 = arith.constant 0 : index
    %c0_187 = arith.constant 0 : index
    %207 = vector.load %arg4[%c2_184, %c5_185, %c0_186, %c0_187] : memref<3x8x64x8xf32, #tpu.memory_space<vmem>>, vector<1x1x64x8xf32>
    %208 = vector.shape_cast %207 : vector<1x1x64x8xf32> to vector<64x8xf32>
    %cst_188 = arith.constant dense<0.000000e+00> : vector<128x8xf32>
    %209 = tpu.matmul %206, %208, %cst_188 {dimension_numbers = #tpu.dot_dimension_numbers<[1], [0], [0], [1], [0, 0, 1, 1], [], []>} : vector<128x64xf32>, vector<64x8xf32>, vector<128x8xf32> -> vector<128x8xf32>
    %210 = arith.addf %201, %209 : vector<128x8xf32>
    %c6_i32_189 = arith.constant 6 : i32
    %211 = arith.addi %1, %c6_i32_189 : i32
    %c0_190 = arith.constant 0 : index
    %212 = arith.index_cast %211 : i32 to index
    %c3_191 = arith.constant 3 : index
    %c0_192 = arith.constant 0 : index
    %213 = vector.load %arg2[%c0_190, %212, %c3_191, %c0_192] : memref<1x22x22x64xf32, #tpu.memory_space<vmem>>, vector<1x8x16x64xf32>
    %214 = vector.shape_cast %213 : vector<1x8x16x64xf32> to vector<8x16x64xf32>
    %215 = vector.shape_cast %214 : vector<8x16x64xf32> to vector<128x64xf32>
    %c2_193 = arith.constant 2 : index
    %c6_194 = arith.constant 6 : index
    %c0_195 = arith.constant 0 : index
    %c0_196 = arith.constant 0 : index
    %216 = vector.load %arg4[%c2_193, %c6_194, %c0_195, %c0_196] : memref<3x8x64x8xf32, #tpu.memory_space<vmem>>, vector<1x1x64x8xf32>
    %217 = vector.shape_cast %216 : vector<1x1x64x8xf32> to vector<64x8xf32>
    %cst_197 = arith.constant dense<0.000000e+00> : vector<128x8xf32>
    %218 = tpu.matmul %215, %217, %cst_197 {dimension_numbers = #tpu.dot_dimension_numbers<[1], [0], [0], [1], [0, 0, 1, 1], [], []>} : vector<128x64xf32>, vector<64x8xf32>, vector<128x8xf32> -> vector<128x8xf32>
    %219 = arith.addf %210, %218 : vector<128x8xf32>
    %c6_i32_198 = arith.constant 6 : i32
    %220 = arith.addi %1, %c6_i32_198 : i32
    %c0_199 = arith.constant 0 : index
    %221 = arith.index_cast %220 : i32 to index
    %c6_200 = arith.constant 6 : index
    %c0_201 = arith.constant 0 : index
    %222 = vector.load %arg2[%c0_199, %221, %c6_200, %c0_201] : memref<1x22x22x64xf32, #tpu.memory_space<vmem>>, vector<1x8x16x64xf32>
    %223 = vector.shape_cast %222 : vector<1x8x16x64xf32> to vector<8x16x64xf32>
    %224 = vector.shape_cast %223 : vector<8x16x64xf32> to vector<128x64xf32>
    %c2_202 = arith.constant 2 : index
    %c7_203 = arith.constant 7 : index
    %c0_204 = arith.constant 0 : index
    %c0_205 = arith.constant 0 : index
    %225 = vector.load %arg4[%c2_202, %c7_203, %c0_204, %c0_205] : memref<3x8x64x8xf32, #tpu.memory_space<vmem>>, vector<1x1x64x8xf32>
    %226 = vector.shape_cast %225 : vector<1x1x64x8xf32> to vector<64x8xf32>
    %cst_206 = arith.constant dense<0.000000e+00> : vector<128x8xf32>
    %227 = tpu.matmul %224, %226, %cst_206 {dimension_numbers = #tpu.dot_dimension_numbers<[1], [0], [0], [1], [0, 0, 1, 1], [], []>} : vector<128x64xf32>, vector<64x8xf32>, vector<128x8xf32> -> vector<128x8xf32>
    %228 = arith.addf %219, %227 : vector<128x8xf32>
    %229 = tpu.concatenate %9, %82, %155, %228 in 1 : vector<128x8xf32>, vector<128x8xf32>, vector<128x8xf32>, vector<128x8xf32> -> vector<128x32xf32>
    %c0_207 = arith.constant 0 : index
    %c0_208 = arith.constant 0 : index
    %230 = vector.load %arg5[%c0_207, %c0_208] : memref<1x32xf32, #tpu.memory_space<vmem>>, vector<1x32xf32>
    %231 = vector.broadcast %230 : vector<1x32xf32> to vector<128x32xf32>
    %232 = arith.addf %229, %231 : vector<128x32xf32>
    %cst_209 = arith.constant 0.000000e+00 : f32
    %233 = vector.broadcast %cst_209 : f32 to vector<128x32xf32>
    %234 = arith.maximumf %232, %233 : vector<128x32xf32>
    %c0_210 = arith.constant 0 : index
    %c0_211 = arith.constant 0 : index
    %235 = vector.load %arg6[%c0_210, %c0_211] : memref<32x8xf32, #tpu.memory_space<vmem>>, vector<32x8xf32>
    %cst_212 = arith.constant dense<0.000000e+00> : vector<128x8xf32>
    %236 = tpu.matmul %234, %235, %cst_212 {dimension_numbers = #tpu.dot_dimension_numbers<[1], [0], [0], [1], [0, 0, 1, 1], [], []>} : vector<128x32xf32>, vector<32x8xf32>, vector<128x8xf32> -> vector<128x8xf32>
    %c0_213 = arith.constant 0 : index
    %c0_214 = arith.constant 0 : index
    %c0_215 = arith.constant 0 : index
    %237 = vector.load %arg7[%c0_213, %c0_214, %c0_215] : memref<1x1x8xf32, #tpu.memory_space<vmem>>, vector<1x1x8xf32>
    %238 = vector.shape_cast %237 : vector<1x1x8xf32> to vector<1x8xf32>
    %239 = vector.broadcast %238 : vector<1x8xf32> to vector<128x8xf32>
    %240 = arith.addf %236, %239 : vector<128x8xf32>
    %cst_216 = arith.constant 0.000000e+00 : f32
    %241 = vector.broadcast %cst_216 : f32 to vector<128x8xf32>
    %242 = arith.maximumf %240, %241 : vector<128x8xf32>
    %243 = vector.shape_cast %242 : vector<128x8xf32> to vector<8x16x8xf32>
    %244 = vector.extract_strided_slice %243 {offsets = [0, 0, 0], sizes = [8, 1, 8], strides = [1, 1, 1]} : vector<8x16x8xf32> to vector<8x1x8xf32>
    %245 = vector.shape_cast %244 : vector<8x1x8xf32> to vector<8x8xf32>
    %246 = vector.extract_strided_slice %243 {offsets = [0, 1, 0], sizes = [8, 1, 8], strides = [1, 1, 1]} : vector<8x16x8xf32> to vector<8x1x8xf32>
    %247 = vector.shape_cast %246 : vector<8x1x8xf32> to vector<8x8xf32>
    %248 = vector.extract_strided_slice %243 {offsets = [0, 2, 0], sizes = [8, 1, 8], strides = [1, 1, 1]} : vector<8x16x8xf32> to vector<8x1x8xf32>
    %249 = vector.shape_cast %248 : vector<8x1x8xf32> to vector<8x8xf32>
    %250 = vector.extract_strided_slice %243 {offsets = [0, 3, 0], sizes = [8, 1, 8], strides = [1, 1, 1]} : vector<8x16x8xf32> to vector<8x1x8xf32>
    %251 = vector.shape_cast %250 : vector<8x1x8xf32> to vector<8x8xf32>
    %252 = vector.extract_strided_slice %243 {offsets = [0, 4, 0], sizes = [8, 1, 8], strides = [1, 1, 1]} : vector<8x16x8xf32> to vector<8x1x8xf32>
    %253 = vector.shape_cast %252 : vector<8x1x8xf32> to vector<8x8xf32>
    %254 = vector.extract_strided_slice %243 {offsets = [0, 5, 0], sizes = [8, 1, 8], strides = [1, 1, 1]} : vector<8x16x8xf32> to vector<8x1x8xf32>
    %255 = vector.shape_cast %254 : vector<8x1x8xf32> to vector<8x8xf32>
    %256 = vector.extract_strided_slice %243 {offsets = [0, 6, 0], sizes = [8, 1, 8], strides = [1, 1, 1]} : vector<8x16x8xf32> to vector<8x1x8xf32>
    %257 = vector.shape_cast %256 : vector<8x1x8xf32> to vector<8x8xf32>
    %258 = vector.extract_strided_slice %243 {offsets = [0, 7, 0], sizes = [8, 1, 8], strides = [1, 1, 1]} : vector<8x16x8xf32> to vector<8x1x8xf32>
    %259 = vector.shape_cast %258 : vector<8x1x8xf32> to vector<8x8xf32>
    %260 = vector.extract_strided_slice %243 {offsets = [0, 8, 0], sizes = [8, 1, 8], strides = [1, 1, 1]} : vector<8x16x8xf32> to vector<8x1x8xf32>
    %261 = vector.shape_cast %260 : vector<8x1x8xf32> to vector<8x8xf32>
    %262 = vector.extract_strided_slice %243 {offsets = [0, 9, 0], sizes = [8, 1, 8], strides = [1, 1, 1]} : vector<8x16x8xf32> to vector<8x1x8xf32>
    %263 = vector.shape_cast %262 : vector<8x1x8xf32> to vector<8x8xf32>
    %264 = vector.extract_strided_slice %243 {offsets = [0, 10, 0], sizes = [8, 1, 8], strides = [1, 1, 1]} : vector<8x16x8xf32> to vector<8x1x8xf32>
    %265 = vector.shape_cast %264 : vector<8x1x8xf32> to vector<8x8xf32>
    %266 = vector.extract_strided_slice %243 {offsets = [0, 11, 0], sizes = [8, 1, 8], strides = [1, 1, 1]} : vector<8x16x8xf32> to vector<8x1x8xf32>
    %267 = vector.shape_cast %266 : vector<8x1x8xf32> to vector<8x8xf32>
    %268 = vector.extract_strided_slice %243 {offsets = [0, 12, 0], sizes = [8, 1, 8], strides = [1, 1, 1]} : vector<8x16x8xf32> to vector<8x1x8xf32>
    %269 = vector.shape_cast %268 : vector<8x1x8xf32> to vector<8x8xf32>
    %270 = vector.extract_strided_slice %243 {offsets = [0, 13, 0], sizes = [8, 1, 8], strides = [1, 1, 1]} : vector<8x16x8xf32> to vector<8x1x8xf32>
    %271 = vector.shape_cast %270 : vector<8x1x8xf32> to vector<8x8xf32>
    %272 = vector.extract_strided_slice %243 {offsets = [0, 14, 0], sizes = [8, 1, 8], strides = [1, 1, 1]} : vector<8x16x8xf32> to vector<8x1x8xf32>
    %273 = vector.shape_cast %272 : vector<8x1x8xf32> to vector<8x8xf32>
    %274 = vector.extract_strided_slice %243 {offsets = [0, 15, 0], sizes = [8, 1, 8], strides = [1, 1, 1]} : vector<8x16x8xf32> to vector<8x1x8xf32>
    %275 = vector.shape_cast %274 : vector<8x1x8xf32> to vector<8x8xf32>
    %276 = tpu.concatenate %245, %247, %249, %251, %253, %255, %257, %259, %261, %263, %265, %267, %269, %271, %273, %275 in 1 : vector<8x8xf32>, vector<8x8xf32>, vector<8x8xf32>, vector<8x8xf32>, vector<8x8xf32>, vector<8x8xf32>, vector<8x8xf32>, vector<8x8xf32>, vector<8x8xf32>, vector<8x8xf32>, vector<8x8xf32>, vector<8x8xf32>, vector<8x8xf32>, vector<8x8xf32>, vector<8x8xf32>, vector<8x8xf32> -> vector<8x128xf32>
    %c0_217 = arith.constant 0 : index
    %c0_218 = arith.constant 0 : index
    %c0_219 = arith.constant 0 : index
    %277 = vector.load %arg8[%c0_217, %c0_218, %c0_219] : memref<1x8x128xf32, #tpu.memory_space<vmem>>, vector<1x8x128xf32>
    %278 = vector.shape_cast %277 : vector<1x8x128xf32> to vector<8x128xf32>
    %279 = vector.shape_cast %276 : vector<8x128xf32> to vector<1x8x128xf32>
    tpu.vector_store %arg8[%c0_217, %c0_218, %c0_219], %279 {strides = array<i32>} : memref<1x8x128xf32, #tpu.memory_space<vmem>>, vector<1x8x128xf32>,
    return
  }
  func.func @transform_0(%arg0: i32, %arg1: i32) -> (i32, i32, i32, i32) {
    %c0_i32 = arith.constant 0 : i32
    %c0_i32_0 = arith.constant 0 : i32
    %c0_i32_1 = arith.constant 0 : i32
    %c0_i32_2 = arith.constant 0 : i32
    return %arg0, %c0_i32, %c0_i32_0, %c0_i32_1 : i32, i32, i32, i32
  }
  func.func @transform_1(%arg0: i32, %arg1: i32) -> (i32, i32) {
    %c0_i32 = arith.constant 0 : i32
    %c0_i32_0 = arith.constant 0 : i32
    %c0_i32_1 = arith.constant 0 : i32
    return %c0_i32, %c0_i32_0 : i32, i32
  }
  func.func @transform_2(%arg0: i32, %arg1: i32) -> (i32, i32, i32, i32) {
    %c0_i32 = arith.constant 0 : i32
    %c0_i32_0 = arith.constant 0 : i32
    %c0_i32_1 = arith.constant 0 : i32
    %c0_i32_2 = arith.constant 0 : i32
    %c0_i32_3 = arith.constant 0 : i32
    return %c0_i32, %c0_i32_0, %c0_i32_1, %c0_i32_2 : i32, i32, i32, i32
  }
  func.func @transform_3(%arg0: i32, %arg1: i32) -> (i32, i32) {
    %c0_i32 = arith.constant 0 : i32
    %c0_i32_0 = arith.constant 0 : i32
    %c0_i32_1 = arith.constant 0 : i32
    return %c0_i32, %c0_i32_0 : i32, i32
  }
  func.func @transform_4(%arg0: i32, %arg1: i32) -> (i32, i32) {
    %c0_i32 = arith.constant 0 : i32
    %c0_i32_0 = arith.constant 0 : i32
    %c0_i32_1 = arith.constant 0 : i32
    return %c0_i32, %c0_i32_0 : i32, i32
  }
  func.func @transform_5(%arg0: i32, %arg1: i32) -> (i32, i32, i32) {
    %c0_i32 = arith.constant 0 : i32
    %c0_i32_0 = arith.constant 0 : i32
    %c0_i32_1 = arith.constant 0 : i32
    return %arg0, %c0_i32, %c0_i32_0 : i32, i32, i32
  }
  func.func @transform_6(%arg0: i32, %arg1: i32) -> (i32, i32, i32) {
    %c0_i32 = arith.constant 0 : i32
    %c0_i32_0 = arith.constant 0 : i32
    return %arg0, %arg1, %c0_i32 : i32, i32, i32
  }
}

</mosaic_0001>

<llo_original>
// kernel: _lambda_.1
$region0: #{_lambda_.1}
  #allocation0 [shape = 'u32[]', space=smem, size = 0x4, offset = 0x4, fixed_abs, tag = 'smem constant byte address 0x4 - core index']
  #allocation1 [shape = 'u32[144,128]{1,0:T(1,128)}', space=vmem, size = 0x12000, scoped, tag = 'internal scratch']
  %s0 = inlined_call_operand.vmem [shape: f32[2,22,22,64], index: 0, kind: input, shape index: {}]
  %s1 = inlined_call_operand.vmem [shape: f32[64,32], index: 1, kind: input, shape index: {}]
  %s2 = inlined_call_operand.vmem [shape: f32[3,8,64,8], index: 2, kind: input, shape index: {}]
  %s3 = inlined_call_operand.hbm [shape: f32[1,32], index: 3, kind: input, shape index: {}]
  %s4 = inlined_call_operand.hbm [shape: f32[32,8], index: 4, kind: input, shape index: {}]
  %s5 = inlined_call_operand.vmem [shape: f32[2,1,8], index: 5, kind: input, shape index: {}]
  %s6 = inlined_call_operand.vmem [shape: f32[2,16,128], index: 6, kind: output, shape index: {}]
  %s7 = sld [smem:[#allocation0]]
  $region65: #{_lambda_.1} parent=0
    _
  %s9 = ssub.s32 1, %s7
  %s10 = scalar_select 0, %s9, %s7
  $region1: #{_lambda_.1} parent=0
    #allocation2 [shape = 'u8[512]{0}', space=vmem, size = 0x400, scoped, tag = 'input window, operand 3, single buffered']
    #allocation3 [shape = 's32[2]{0}', space=sflag, size = 0x8, scoped, tag = 'scoped memory for _lambda_.1']
    #allocation4 [shape = 'u8[16384]{0}', space=vmem, size = 0x4000, scoped, tag = 'input window, operand 4, single buffered']
    #allocation5 [shape = 's32[1]{0}', space=sflag, size = 0x4, scoped, tag = 'scoped memory for _lambda_.1']
    %11 = vsyncpa [#allocation3], 0
    %12 = vsyncpa [#allocation5], 0
    loop: start=0, step=1, limit=6
    $region2: #{_lambda_.1} parent=1 // loop_pre_header
      _
    $region3: #{_lambda_.1} parent=1 // loop_header
      %s14 = sphi 0, %s18
      %p15 = scmp.ge.s32.totalorder %s14, 6
      %s21 = sphi 0, %s33
      %s22 = sphi 0, %s29
      %s23 = sphi 0, %s21
      %s24 = sphi 0, %s22
      %s25 = sphi 0, %s23
      %s26 = sphi 0, %s24
      %s36 = sphi 0, %s38
      %s39 = sphi 0, %s36
      %s40 = sphi 0, %s39
      %s56 = sphi 0, %s40
      %s60 = sphi 0, %s60
      %s62 = sphi 0, %s60
      %s63 = sphi 0, %s62
      %s77 = sphi 0, %s63
      %s81 = sphi 0, %s81
      %s83 = sphi 0, %s81
      %s84 = sphi 0, %s83
      %s98 = sphi 0, %s84
      %s102 = sphi 0, %s102
      %s104 = sphi 0, %s102
      %s105 = sphi 0, %s104
      %s119 = sphi 0, %s105
      %s123 = sphi 0, %s123
      %s125 = sphi 0, %s123
      %s126 = sphi 0, %s125
      %s140 = sphi 0, %s126
      %s146 = sphi 0, %s148
      %s149 = sphi 0, %s146
      %s150 = sphi 0, %s149
      %s166 = sphi 0, %s150
      %s174 = sphi 0, %s176
      %s177 = sphi 0, %s174
      %s178 = sphi 0, %s177
      %s194 = sphi 0, %s178
    $region4: #{_lambda_.1} parent=1 // loop_header_branch
      %17 = sbr.rel (%p15) target = $region8
    $region5: #{_lambda_.1} parent=1 // loop_body
      %s19 = ssub.s32 %s14, 1
      %s20 = ssub.s32 %s14, 2
      %s27 = sadd.s32 1, %s22
      %p28 = scmp.ge.s32.totalorder %s27, 2
      %s29 = scalar_select %p28, 0, %s27
      %s30 = sadd.s32 1, %s21
      %s31 = scalar_select %p28, %s30, %s21
      %p32 = scmp.ge.s32.totalorder %s31, 2
      %s33 = scalar_select %p32, 0, %s31
      %s34 = ssub.s32 %s21, %s33
      %p35 = scmp.eq.s32.totalorder %s34, 0
      %s37 = sadd.s32 %s36, 1
      %s38 = scalar_select %p35, %s36, %s37
      %p41 = pneg %p35
      %p42 = scmp.eq.s32.totalorder %s14, 3
      %p43 = por %p41, %p42
      %p44 = scmp.ne.s32.totalorder %s36, %s39
      %p45 = scmp.eq.s32.totalorder %s14, 0
      %p46 = por %p44, %p45
      %p47 = scmp.ne.s32.totalorder %s36, %s39
      %p48 = scmp.eq.s32.totalorder %s19, 3
      %p49 = por %p47, %p48
      %p50 = scmp.ne.s32.totalorder %s39, %s40
      %p51 = scmp.eq.s32.totalorder %s19, 0
      %p52 = por %p50, %p51
      %p53 = scmp.ne.s32.totalorder %s39, %s40
      %p54 = scmp.eq.s32.totalorder %s20, 3
      %p55 = por %p53, %p54
      %p57 = scmp.ne.s32.totalorder %s40, %s56
      %p58 = scmp.eq.s32.totalorder %s20, 0
      %p59 = por %p57, %p58
      %s61 = sadd.s32 %s60, 1
      %p64 = scmp.eq.s32.totalorder %s14, 3
      %p65 = scmp.ne.s32.totalorder %s60, %s62
      %p66 = scmp.eq.s32.totalorder %s14, 0
      %p67 = por %p65, %p66
      %p68 = scmp.ne.s32.totalorder %s60, %s62
      %p69 = scmp.eq.s32.totalorder %s19, 3
      %p70 = por %p68, %p69
      %p71 = scmp.ne.s32.totalorder %s62, %s63
      %p72 = scmp.eq.s32.totalorder %s19, 0
      %p73 = por %p71, %p72
      %p74 = scmp.ne.s32.totalorder %s62, %s63
      %p75 = scmp.eq.s32.totalorder %s20, 3
      %p76 = por %p74, %p75
      %p78 = scmp.ne.s32.totalorder %s63, %s77
      %p79 = scmp.eq.s32.totalorder %s20, 0
      %p80 = por %p78, %p79
      %s82 = sadd.s32 %s81, 1
      %p85 = scmp.eq.s32.totalorder %s14, 3
      %p86 = scmp.ne.s32.totalorder %s81, %s83
      %p87 = scmp.eq.s32.totalorder %s14, 0
      %p88 = por %p86, %p87
      %p89 = scmp.ne.s32.totalorder %s81, %s83
      %p90 = scmp.eq.s32.totalorder %s19, 3
      %p91 = por %p89, %p90
      %p92 = scmp.ne.s32.totalorder %s83, %s84
      %p93 = scmp.eq.s32.totalorder %s19, 0
      %p94 = por %p92, %p93
      %p95 = scmp.ne.s32.totalorder %s83, %s84
      %p96 = scmp.eq.s32.totalorder %s20, 3
      %p97 = por %p95, %p96
      %p99 = scmp.ne.s32.totalorder %s84, %s98
      %p100 = scmp.eq.s32.totalorder %s20, 0
      %p101 = por %p99, %p100
      %s103 = sadd.s32 %s102, 1
      %p106 = scmp.eq.s32.totalorder %s14, 3
      %p107 = scmp.ne.s32.totalorder %s102, %s104
      %p108 = scmp.eq.s32.totalorder %s14, 0
      %p109 = por %p107, %p108
      %p110 = scmp.ne.s32.totalorder %s102, %s104
      %p111 = scmp.eq.s32.totalorder %s19, 3
      %p112 = por %p110, %p111
      %p113 = scmp.ne.s32.totalorder %s104, %s105
      %p114 = scmp.eq.s32.totalorder %s19, 0
      %p115 = por %p113, %p114
      %p116 = scmp.ne.s32.totalorder %s104, %s105
      %p117 = scmp.eq.s32.totalorder %s20, 3
      %p118 = por %p116, %p117
      %p120 = scmp.ne.s32.totalorder %s105, %s119
      %p121 = scmp.eq.s32.totalorder %s20, 0
      %p122 = por %p120, %p121
      %s124 = sadd.s32 %s123, 1
      %p127 = scmp.eq.s32.totalorder %s14, 3
      %p128 = scmp.ne.s32.totalorder %s123, %s125
      %p129 = scmp.eq.s32.totalorder %s14, 0
      %p130 = por %p128, %p129
      %p131 = scmp.ne.s32.totalorder %s123, %s125
      %p132 = scmp.eq.s32.totalorder %s19, 3
      %p133 = por %p131, %p132
      %p134 = scmp.ne.s32.totalorder %s125, %s126
      %p135 = scmp.eq.s32.totalorder %s19, 0
      %p136 = por %p134, %p135
      %p137 = scmp.ne.s32.totalorder %s125, %s126
      %p138 = scmp.eq.s32.totalorder %s20, 3
      %p139 = por %p137, %p138
      %p141 = scmp.ne.s32.totalorder %s126, %s140
      %p142 = scmp.eq.s32.totalorder %s20, 0
      %p143 = por %p141, %p142
      %s144 = ssub.s32 %s21, %s33
      %p145 = scmp.eq.s32.totalorder %s144, 0
      %s147 = sadd.s32 %s146, 1
      %s148 = scalar_select %p145, %s146, %s147
      %p151 = pneg %p145
      %p152 = scmp.eq.s32.totalorder %s14, 3
      %p153 = por %p151, %p152
      %p154 = scmp.ne.s32.totalorder %s146, %s149
      %p155 = scmp.eq.s32.totalorder %s14, 0
      %p156 = por %p154, %p155
      %p157 = scmp.ne.s32.totalorder %s146, %s149
      %p158 = scmp.eq.s32.totalorder %s19, 3
      %p159 = por %p157, %p158
      %p160 = scmp.ne.s32.totalorder %s149, %s150
      %p161 = scmp.eq.s32.totalorder %s19, 0
      %p162 = por %p160, %p161
      %p163 = scmp.ne.s32.totalorder %s149, %s150
      %p164 = scmp.eq.s32.totalorder %s20, 3
      %p165 = por %p163, %p164
      %p167 = scmp.ne.s32.totalorder %s150, %s166
      %p168 = scmp.eq.s32.totalorder %s20, 0
      %p169 = por %p167, %p168
      %s170 = ssub.s32 %s21, %s33
      %s171 = ssub.s32 %s22, %s29
      %s172 = sor.u32 %s170, %s171
      %p173 = scmp.eq.s32.totalorder %s172, 0
      %s175 = sadd.s32 %s174, 1
      %s176 = scalar_select %p173, %s174, %s175
      %p179 = pneg %p173
      %p180 = scmp.eq.s32.totalorder %s14, 3
      %p181 = por %p179, %p180
      %p182 = scmp.ne.s32.totalorder %s174, %s177
      %p183 = scmp.eq.s32.totalorder %s14, 0
      %p184 = por %p182, %p183
      %p185 = scmp.ne.s32.totalorder %s174, %s177
      %p186 = scmp.eq.s32.totalorder %s19, 3
      %p187 = por %p185, %p186
      %p188 = scmp.ne.s32.totalorder %s177, %s178
      %p189 = scmp.eq.s32.totalorder %s19, 0
      %p190 = por %p188, %p189
      %p191 = scmp.ne.s32.totalorder %s177, %s178
      %p192 = scmp.eq.s32.totalorder %s20, 3
      %p193 = por %p191, %p192
      %p195 = scmp.ne.s32.totalorder %s178, %s194
      %p196 = scmp.eq.s32.totalorder %s20, 0
      %p197 = por %p195, %p196
      %p198 = scmp.le.s32.totalorder 1, %s14
      %p199 = scmp.lt.s32.totalorder %s14, 5
      %p200 = pnand %p198, %p199
      %p201 = pneg %p200
      // Predicated region
      $region9: #{_lambda_.1} parent=5 // pred_check
        _
      $region10: #{_lambda_.1} parent=5 // pred_check_branch
        %203 = sbr.rel (%p200) target = $region12
      $region11: #{_lambda_.1} parent=5 // pred_region
        %s204 = ssub.s32 %s14, 1
        // Predicated region
        $region13: #{_lambda_.1} parent=11 // pred_check
          %p205 = pneg %p73
        $region14: #{_lambda_.1} parent=11 // pred_check_branch
          %207 = sbr.rel (%p205) target = $region16
        $region15: #{_lambda_.1} parent=11 // pred_region
          _
        $region16: #{_lambda_.1} parent=11 // pred_fallthru
          _
        // Predicated region
        $region17: #{_lambda_.1} parent=11 // pred_check
          %p208 = pneg %p94
        $region18: #{_lambda_.1} parent=11 // pred_check_branch
          %210 = sbr.rel (%p208) target = $region20
        $region19: #{_lambda_.1} parent=11 // pred_region
          _
        $region20: #{_lambda_.1} parent=11 // pred_fallthru
          _
        // Predicated region
        $region21: #{_lambda_.1} parent=11 // pred_check
          %p211 = pneg %p115
        $region22: #{_lambda_.1} parent=11 // pred_check_branch
          %213 = sbr.rel (%p211) target = $region24
        $region23: #{_lambda_.1} parent=11 // pred_region
          %s215 = ssub.s32 16, 16
          %216 = vsyncadd [#allocation3], %s215
          %s218 = sshll.u32 [#allocation2], 4
          %s219 = int_to_ptr.vmem [resolvable:$true] %s218
          %221 = dma.hbm_to_vmem [thread:$0]  %s3, 16, %s219, [#allocation3]
        $region24: #{_lambda_.1} parent=11 // pred_fallthru
          _
        // Predicated region
        $region25: #{_lambda_.1} parent=11 // pred_check
          %p222 = pneg %p136
        $region26: #{_lambda_.1} parent=11 // pred_check_branch
          %224 = sbr.rel (%p222) target = $region28
        $region27: #{_lambda_.1} parent=11 // pred_region
          %s226 = ssub.s32 512, 512
          %227 = vsyncadd [#allocation5], %s226
          %s228 = sshll.u32 [#allocation4], 4
          %s229 = int_to_ptr.vmem [resolvable:$true] %s228
          %234 = dma.hbm_to_vmem [thread:$0]  %s4, 512, %s229, [#allocation5], 128, 128, 8
        $region28: #{_lambda_.1} parent=11 // pred_fallthru
          _
      $region12: #{_lambda_.1} parent=5 // pred_fallthru
        _
      %p235 = scmp.lt.s32.totalorder %s14, 4
      // Predicated region
      $region29: #{_lambda_.1} parent=5 // pred_check
        %p236 = pneg %p235
      $region30: #{_lambda_.1} parent=5 // pred_check_branch
        %238 = sbr.rel (%p236) target = $region32
      $region31: #{_lambda_.1} parent=5 // pred_region
        // Predicated region
        $region33: #{_lambda_.1} parent=31 // pred_check
          %p239 = pneg %p46
        $region34: #{_lambda_.1} parent=31 // pred_check_branch
          %241 = sbr.rel (%p239) target = $region36
        $region35: #{_lambda_.1} parent=31 // pred_region
          %p242 = scmp.lt.s32.totalorder %s21, 1
          %s243 = scalar_select %p242, %s21, 1
          %s244 = smul.addr %s243, 66
          %s245 = smul.addr %s244, 8
          %s246 = scalar_lea.vmem %s0, %s245
        $region36: #{_lambda_.1} parent=31 // pred_fallthru
          _
        // Predicated region
        $region37: #{_lambda_.1} parent=31 // pred_check
          %p247 = pneg %p156
        $region38: #{_lambda_.1} parent=31 // pred_check_branch
          %249 = sbr.rel (%p247) target = $region40
        $region39: #{_lambda_.1} parent=31 // pred_region
          %p250 = scmp.lt.s32.totalorder %s21, 1
          %s251 = scalar_select %p250, %s21, 1
          %s252 = scalar_lea.vmem %s5, %s251
        $region40: #{_lambda_.1} parent=31 // pred_fallthru
          _
      $region32: #{_lambda_.1} parent=5 // pred_fallthru
        _
      %p253 = scmp.le.s32.totalorder 1, %s14
      %p254 = scmp.lt.s32.totalorder %s14, 5
      %p255 = pnand %p253, %p254
      %p256 = pneg %p255
      // Predicated region
      $region41: #{_lambda_.1} parent=5 // pred_check
        _
      $region42: #{_lambda_.1} parent=5 // pred_check_branch
        %258 = sbr.rel (%p255) target = $region44
      $region43: #{_lambda_.1} parent=5 // pred_region
        %s259 = ssub.s32 %s14, 1
        // Predicated region
        $region45: #{_lambda_.1} parent=43 // pred_check
          %p260 = pneg %p115
        $region46: #{_lambda_.1} parent=43 // pred_check_branch
          %262 = sbr.rel (%p260) target = $region48
        $region47: #{_lambda_.1} parent=43 // pred_region
          %263 = dma.done [#allocation3], 16
        $region48: #{_lambda_.1} parent=43 // pred_fallthru
          _
        // Predicated region
        $region49: #{_lambda_.1} parent=43 // pred_check
          %p264 = pneg %p136
        $region50: #{_lambda_.1} parent=43 // pred_check_branch
          %266 = sbr.rel (%p264) target = $region52
        $region51: #{_lambda_.1} parent=43 // pred_region
          %267 = dma.done [#allocation5], 512
        $region52: #{_lambda_.1} parent=43 // pred_fallthru
          _
        %p268 = scmp.lt.s32.totalorder %s23, 1
        %s269 = scalar_select %p268, %s23, 1
        %s270 = smul.addr %s269, 66
        %s271 = smul.addr %s270, 8
        %s272 = scalar_lea.vmem %s0, %s271
        %p273 = pneg %p52
        %p274 = pneg %p49
        %p275 = pneg %p73
        %p276 = pneg %p70
        %p277 = pneg %p94
        %p278 = pneg %p91
        %p279 = pneg %p115
        %p280 = pneg %p112
        %p281 = pneg %p136
        %p282 = pneg %p133
        %p283 = scmp.lt.s32.totalorder %s23, 1
        %s284 = scalar_select %p283, %s23, 1
        %s285 = scalar_lea.vmem %s5, %s284
        %p286 = pneg %p162
        %p287 = pneg %p159
        %p288 = pneg %p190
        %p289 = pneg %p187
        %p290 = scmp.lt.s32.totalorder %s23, 1
        %s291 = scalar_select %p290, %s23, 1
        %p292 = scmp.lt.s32.totalorder %s24, 1
        %s293 = scalar_select %p292, %s24, 1
        %s294 = smul.addr %s291, 2
        %s295 = sadd.s32 %s293, %s294
        %s296 = smul.addr %s295, 8
        %s297 = scalar_lea.vmem %s6, %s296
        %p298 = scmp.lt.s32.totalorder %s23, 1
        %s299 = scalar_select %p298, %s23, 1
        %s300 = smul.addr %s299, 66
        %s301 = smul.addr %s300, 8
        %s302 = scalar_lea.vmem %s0, %s301
        %p303 = scmp.lt.s32.totalorder %s23, 1
        %s304 = scalar_select %p303, %s23, 1
        %s305 = scalar_lea.vmem %s5, %s304
        %p306 = scmp.lt.s32.totalorder %s23, 1
        %s307 = scalar_select %p306, %s23, 1
        %p308 = scmp.lt.s32.totalorder %s24, 1
        %s309 = scalar_select %p308, %s24, 1
        %s310 = smul.addr %s307, 2
        %s311 = sadd.s32 %s309, %s310
        %s312 = smul.addr %s311, 8
        %s313 = scalar_lea.vmem %s6, %s312
        %s314 = smul.u32 %s24, 8
        %s315 = sadd.s32 %s314, 3
        %s316 = smul.u32 %s315, 24
        %s317 = scalar_lea.vmem %s302, %s316
        %v318 = vld [vmem:[%s317 + $0x3] sm:$0xff]
        %v319 = vld [vmem:[%s317 + $0xb] sm:$0xff]
        %v320 = vld [vmem:[%s317 + $0x1b] sm:$0xff]
        %v321 = vld [vmem:[%s317 + $0x23] sm:$0xff]
        %v322 = vld [vmem:[%s317 + $0x33] sm:$0xff]
        %v323 = vld [vmem:[%s317 + $0x3b] sm:$0xff]
        %v324 = vld [vmem:[%s317 + $0x4b] sm:$0xff]
        %v325 = vld [vmem:[%s317 + $0x53] sm:$0xff]
        %v326 = vld [vmem:[%s317 + $0x63] sm:$0xff]
        %v327 = vld [vmem:[%s317 + $0x6b] sm:$0xff]
        %v328 = vld [vmem:[%s317 + $0x7b] sm:$0xff]
        %v329 = vld [vmem:[%s317 + $0x83] sm:$0xff]
        %v330 = vld [vmem:[%s317 + $0x93] sm:$0xff]
        %v331 = vld [vmem:[%s317 + $0x9b] sm:$0xff]
        %v332 = vld [vmem:[%s317 + $0xab] sm:$0xff]
        %v333 = vld [vmem:[%s317 + $0xb3] sm:$0xff]
        %v334 = vld [vmem:[%s1] sm:$0xff]
        %v335 = vld [vmem:[%s1 + $0x8] sm:$0xff]
        %v336 = vld [vmem:[%s1 + $0x10] sm:$0xff]
        %v337 = vld [vmem:[%s1 + $0x18] sm:$0xff]
        %v338 = vld [vmem:[%s1 + $0x20] sm:$0xff]
        %v339 = vld [vmem:[%s1 + $0x28] sm:$0xff]
        %v340 = vld [vmem:[%s1 + $0x30] sm:$0xff]
        %v341 = vld [vmem:[%s1 + $0x38] sm:$0xff]
        %vm342 = vcmask 523264
        %v344 = vsel %vm342, %v318, 0
        %v347 = vsel %vm342, %v319, 0
        %v350 = vsel %vm342, %v320, 0
        %v353 = vsel %vm342, %v321, 0
        %v356 = vsel %vm342, %v322, 0
        %v359 = vsel %vm342, %v323, 0
        %v362 = vsel %vm342, %v324, 0
        %v365 = vsel %vm342, %v325, 0
        %v368 = vsel %vm342, %v326, 0
        %v371 = vsel %vm342, %v327, 0
        %v374 = vsel %vm342, %v328, 0
        %v377 = vsel %vm342, %v329, 0
        %v380 = vsel %vm342, %v330, 0
        %v383 = vsel %vm342, %v331, 0
        %v386 = vsel %vm342, %v332, 0
        %v389 = vsel %vm342, %v333, 0
        %391 = vmatprep.subr.mxu0 0.0
        %392 = vmatpush1.msra.mxu0 %v334
        %393 = vmatprep.subr.mxu0 0.0
        %394 = vmatpush1.msra.mxu0 %v335
        %395 = vmatprep.subr.mxu0 0.0
        %396 = vmatpush1.msra.mxu0 %v336
        %397 = vmatprep.subr.mxu0 0.0
        %398 = vmatpush1.msra.mxu0 %v337
        %399 = vmatprep.subr.mxu0 0.0
        %400 = vmatpush1.msra.mxu0 %v338
        %401 = vmatprep.subr.mxu0 0.0
        %402 = vmatpush1.msra.mxu0 %v339
        %403 = vmatprep.subr.mxu0 0.0
        %404 = vmatpush1.msra.mxu0 %v340
        %405 = vmatprep.subr.mxu0 0.0
        %406 = vmatpush1.msra.mxu0 %v341
        %407 = vmatprep.subr.mxu0 0.0
        %408 = vmatpush1.msra.mxu0 0.0
        %409 = vmatprep.subr.mxu0 0.0
        %410 = vmatpush1.msra.mxu0 0.0
        %411 = vmatprep.subr.mxu0 0.0
        %412 = vmatpush1.msra.mxu0 0.0
        %413 = vmatprep.subr.mxu0 0.0
        %414 = vmatpush1.msra.mxu0 0.0
        %415 = vmatprep.subr.mxu0 0.0
        %416 = vmatpush1.msra.mxu0 0.0
        %417 = vmatprep.subr.mxu0 0.0
        %418 = vmatpush1.msra.mxu0 0.0
        %419 = vmatprep.subr.mxu0 0.0
        %420 = vmatpush1.msra.mxu0 0.0
        %421 = vmatprep.subr.mxu0 0.0
        %422 = vmatpush1.msra.mxu0 0.0
        %423 = vmatprep.subr.mxu0 0.0
        %424 = vmatpush1.msra.mxu0 0.0
        %425 = vmatprep.subr.mxu0 0.0
        %426 = vmatpush1.msra.mxu0 0.0
        %427 = vmatprep.subr.mxu0 0.0
        %428 = vmatpush1.msra.mxu0 0.0
        %429 = vmatprep.subr.mxu0 0.0
        %430 = vmatpush1.msra.mxu0 0.0
        %431 = vmatprep.subr.mxu0 0.0
        %432 = vmatpush1.msra.mxu0 0.0
        %433 = vmatprep.subr.mxu0 0.0
        %434 = vmatpush1.msra.mxu0 0.0
        %435 = vmatprep.subr.mxu0 0.0
        %436 = vmatpush1.msra.mxu0 0.0
        %437 = vmatprep.subr.mxu0 0.0
        %438 = vmatpush1.msra.mxu0 0.0
        %439 = vmatprep.subr.mxu0 0.0
        %440 = vmatpush1.msra.mxu0 0.0
        %441 = vmatprep.subr.mxu0 0.0
        %442 = vmatpush1.msra.mxu0 0.0
        %443 = vmatprep.subr.mxu0 0.0
        %444 = vmatpush1.msra.mxu0 0.0
        %445 = vmatprep.subr.mxu0 0.0
        %446 = vmatpush1.msra.mxu0 0.0
        %447 = vmatprep.subr.mxu0 0.0
        %448 = vmatpush1.msra.mxu0 0.0
        %449 = vmatprep.subr.mxu0 0.0
        %450 = vmatpush1.msra.mxu0 0.0
        %451 = vmatprep.subr.mxu0 0.0
        %452 = vmatpush1.msra.mxu0 0.0
        %453 = vmatprep.subr.mxu0 0.0
        %454 = vmatpush1.msra.mxu0 0.0
        %455 = vmatprep.mubr.f32.mxu0 0.0
        %456 = vmatmul.mubr.f32.gmra.mrb[0].mxu0 %v344
        %v457 = vpop.f32.mrb[0].mxu0
        %v458 = vadd.f32 0.0, %v457
        %v459 = vpop.f32.mrb[0].mxu0
        %460 = vmatprep.mubr.f32.mxu0 0.0
        %461 = vmatmul.mubr.f32.gmra.mrb[0].mxu0 %v347
        %v462 = vpop.f32.mrb[0].mxu0
        %v463 = vadd.f32 0.0, %v462
        %v464 = vpop.f32.mrb[0].mxu0
        %465 = vmatprep.mubr.f32.mxu0 0.0
        %466 = vmatmul.mubr.f32.gmra.mrb[0].mxu0 %v350
        %v467 = vpop.f32.mrb[0].mxu0
        %v468 = vadd.f32 0.0, %v467
        %v469 = vpop.f32.mrb[0].mxu0
        %470 = vmatprep.mubr.f32.mxu0 0.0
        %471 = vmatmul.mubr.f32.gmra.mrb[0].mxu0 %v353
        %v472 = vpop.f32.mrb[0].mxu0
        %v473 = vadd.f32 0.0, %v472
        %v474 = vpop.f32.mrb[0].mxu0
        %475 = vmatprep.mubr.f32.mxu0 0.0
        %476 = vmatmul.mubr.f32.gmra.mrb[0].mxu0 %v356
        %v477 = vpop.f32.mrb[0].mxu0
        %v478 = vadd.f32 0.0, %v477
        %v479 = vpop.f32.mrb[0].mxu0
        %480 = vmatprep.mubr.f32.mxu0 0.0
        %481 = vmatmul.mubr.f32.gmra.mrb[0].mxu0 %v359
        %v482 = vpop.f32.mrb[0].mxu0
        %v483 = vadd.f32 0.0, %v482
        %v484 = vpop.f32.mrb[0].mxu0
        %485 = vmatprep.mubr.f32.mxu0 0.0
        %486 = vmatmul.mubr.f32.gmra.mrb[0].mxu0 %v362
        %v487 = vpop.f32.mrb[0].mxu0
        %v488 = vadd.f32 0.0, %v487
        %v489 = vpop.f32.mrb[0].mxu0
        %490 = vmatprep.mubr.f32.mxu0 0.0
        %491 = vmatmul.mubr.f32.gmra.mrb[0].mxu0 %v365
        %v492 = vpop.f32.mrb[0].mxu0
        %v493 = vadd.f32 0.0, %v492
        %v494 = vpop.f32.mrb[0].mxu0
        %495 = vmatprep.mubr.f32.mxu0 0.0
        %496 = vmatmul.mubr.f32.gmra.mrb[0].mxu0 %v368
        %v497 = vpop.f32.mrb[0].mxu0
        %v498 = vadd.f32 0.0, %v497
        %v499 = vpop.f32.mrb[0].mxu0
        %500 = vmatprep.mubr.f32.mxu0 0.0
        %501 = vmatmul.mubr.f32.gmra.mrb[0].mxu0 %v371
        %v502 = vpop.f32.mrb[0].mxu0
        %v503 = vadd.f32 0.0, %v502
        %v504 = vpop.f32.mrb[0].mxu0
        %505 = vmatprep.mubr.f32.mxu0 0.0
        %506 = vmatmul.mubr.f32.gmra.mrb[0].mxu0 %v374
        %v507 = vpop.f32.mrb[0].mxu0
        %v508 = vadd.f32 0.0, %v507
        %v509 = vpop.f32.mrb[0].mxu0
        %510 = vmatprep.mubr.f32.mxu0 0.0
        %511 = vmatmul.mubr.f32.gmra.mrb[0].mxu0 %v377
        %v512 = vpop.f32.mrb[0].mxu0
        %v513 = vadd.f32 0.0, %v512
        %v514 = vpop.f32.mrb[0].mxu0
        %515 = vmatprep.mubr.f32.mxu0 0.0
        %516 = vmatmul.mubr.f32.gmra.mrb[0].mxu0 %v380
        %v517 = vpop.f32.mrb[0].mxu0
        %v518 = vadd.f32 0.0, %v517
        %v519 = vpop.f32.mrb[0].mxu0
        %520 = vmatprep.mubr.f32.mxu0 0.0
        %521 = vmatmul.mubr.f32.gmra.mrb[0].mxu0 %v383
        %v522 = vpop.f32.mrb[0].mxu0
        %v523 = vadd.f32 0.0, %v522
        %v524 = vpop.f32.mrb[0].mxu0
        %525 = vmatprep.mubr.f32.mxu0 0.0
        %526 = vmatmul.mubr.f32.gmra.mrb[0].mxu0 %v386
        %v527 = vpop.f32.mrb[0].mxu0
        %v528 = vadd.f32 0.0, %v527
        %v529 = vpop.f32.mrb[0].mxu0
        %530 = vmatprep.mubr.f32.mxu0 0.0
        %531 = vmatmul.mubr.f32.gmra.mrb[0].mxu0 %v389
        %v532 = vpop.f32.mrb[0].mxu0
        %v533 = vadd.f32 0.0, %v532
        %v534 = vpop.f32.mrb[0].mxu0
        %535 = vdwg.mxu0
        %s536 = sadd.s32 %s314, 2
        %s537 = smul.u32 %s536, 24
        %s538 = scalar_lea.vmem %s302, %s537
        %v539 = vld [vmem:[%s538 + $0x2] sm:$0xff]
        %v540 = vld [vmem:[%s538 + $0xa] sm:$0xff]
        %v541 = vld [vmem:[%s538 + $0x1a] sm:$0xff]
        %v542 = vld [vmem:[%s538 + $0x22] sm:$0xff]
        %v543 = vld [vmem:[%s538 + $0x32] sm:$0xff]
        %v544 = vld [vmem:[%s538 + $0x3a] sm:$0xff]
        %v545 = vld [vmem:[%s538 + $0x4a] sm:$0xff]
        %v546 = vld [vmem:[%s538 + $0x52] sm:$0xff]
        %v547 = vld [vmem:[%s538 + $0x62] sm:$0xff]
        %v548 = vld [vmem:[%s538 + $0x6a] sm:$0xff]
        %v549 = vld [vmem:[%s538 + $0x7a] sm:$0xff]
        %v550 = vld [vmem:[%s538 + $0x82] sm:$0xff]
        %v551 = vld [vmem:[%s538 + $0x92] sm:$0xff]
        %v552 = vld [vmem:[%s538 + $0x9a] sm:$0xff]
        %v553 = vld [vmem:[%s538 + $0xaa] sm:$0xff]
        %v554 = vld [vmem:[%s538 + $0xb2] sm:$0xff]
        %v555 = vld [vmem:[%s2] sm:$0xff]
        %v556 = vld [vmem:[%s2 + $0x8] sm:$0xff]
        %v557 = vld [vmem:[%s2 + $0x10] sm:$0xff]
        %v558 = vld [vmem:[%s2 + $0x18] sm:$0xff]
        %v559 = vld [vmem:[%s2 + $0x20] sm:$0xff]
        %v560 = vld [vmem:[%s2 + $0x28] sm:$0xff]
        %v561 = vld [vmem:[%s2 + $0x30] sm:$0xff]
        %v562 = vld [vmem:[%s2 + $0x38] sm:$0xff]
        %v564 = vsel %vm342, %v539, 0
        %v567 = vsel %vm342, %v540, 0
        %v570 = vsel %vm342, %v541, 0
        %v573 = vsel %vm342, %v542, 0
        %v576 = vsel %vm342, %v543, 0
        %v579 = vsel %vm342, %v544, 0
        %v582 = vsel %vm342, %v545, 0
        %v585 = vsel %vm342, %v546, 0
        %v588 = vsel %vm342, %v547, 0
        %v591 = vsel %vm342, %v548, 0
        %v594 = vsel %vm342, %v549, 0
        %v597 = vsel %vm342, %v550, 0
        %v600 = vsel %vm342, %v551, 0
        %v603 = vsel %vm342, %v552, 0
        %v606 = vsel %vm342, %v553, 0
        %v609 = vsel %vm342, %v554, 0
        %611 = vmatprep.subr.mxu0 0.0
        %612 = vmatpush1.msra.mxu0 %v555
        %613 = vmatprep.subr.mxu0 0.0
        %614 = vmatpush1.msra.mxu0 %v556
        %615 = vmatprep.subr.mxu0 0.0
        %616 = vmatpush1.msra.mxu0 %v557
        %617 = vmatprep.subr.mxu0 0.0
        %618 = vmatpush1.msra.mxu0 %v558
        %619 = vmatprep.subr.mxu0 0.0
        %620 = vmatpush1.msra.mxu0 %v559
        %621 = vmatprep.subr.mxu0 0.0
        %622 = vmatpush1.msra.mxu0 %v560
        %623 = vmatprep.subr.mxu0 0.0
        %624 = vmatpush1.msra.mxu0 %v561
        %625 = vmatprep.subr.mxu0 0.0
        %626 = vmatpush1.msra.mxu0 %v562
        %627 = vmatprep.subr.mxu0 0.0
        %628 = vmatpush1.msra.mxu0 0.0
        %629 = vmatprep.subr.mxu0 0.0
        %630 = vmatpush1.msra.mxu0 0.0
        %631 = vmatprep.subr.mxu0 0.0
        %632 = vmatpush1.msra.mxu0 0.0
        %633 = vmatprep.subr.mxu0 0.0
        %634 = vmatpush1.msra.mxu0 0.0
        %635 = vmatprep.subr.mxu0 0.0
        %636 = vmatpush1.msra.mxu0 0.0
        %637 = vmatprep.subr.mxu0 0.0
        %638 = vmatpush1.msra.mxu0 0.0
        %639 = vmatprep.subr.mxu0 0.0
        %640 = vmatpush1.msra.mxu0 0.0
        %641 = vmatprep.subr.mxu0 0.0
        %642 = vmatpush1.msra.mxu0 0.0
        %643 = vmatprep.subr.mxu0 0.0
        %644 = vmatpush1.msra.mxu0 0.0
        %645 = vmatprep.subr.mxu0 0.0
        %646 = vmatpush1.msra.mxu0 0.0
        %647 = vmatprep.subr.mxu0 0.0
        %648 = vmatpush1.msra.mxu0 0.0
        %649 = vmatprep.subr.mxu0 0.0
        %650 = vmatpush1.msra.mxu0 0.0
        %651 = vmatprep.subr.mxu0 0.0
        %652 = vmatpush1.msra.mxu0 0.0
        %653 = vmatprep.subr.mxu0 0.0
        %654 = vmatpush1.msra.mxu0 0.0
        %655 = vmatprep.subr.mxu0 0.0
        %656 = vmatpush1.msra.mxu0 0.0
        %657 = vmatprep.subr.mxu0 0.0
        %658 = vmatpush1.msra.mxu0 0.0
        %659 = vmatprep.subr.mxu0 0.0
        %660 = vmatpush1.msra.mxu0 0.0
        %661 = vmatprep.subr.mxu0 0.0
        %662 = vmatpush1.msra.mxu0 0.0
        %663 = vmatprep.subr.mxu0 0.0
        %664 = vmatpush1.msra.mxu0 0.0
        %665 = vmatprep.subr.mxu0 0.0
        %666 = vmatpush1.msra.mxu0 0.0
        %667 = vmatprep.subr.mxu0 0.0
        %668 = vmatpush1.msra.mxu0 0.0
        %669 = vmatprep.subr.mxu0 0.0
        %670 = vmatpush1.msra.mxu0 0.0
        %671 = vmatprep.subr.mxu0 0.0
        %672 = vmatpush1.msra.mxu0 0.0
        %673 = vmatprep.subr.mxu0 0.0
        %674 = vmatpush1.msra.mxu0 0.0
        %675 = vmatprep.mubr.f32.mxu0 0.0
        %676 = vmatmul.mubr.f32.gmra.mrb[0].mxu0 %v564
        %v677 = vpop.f32.mrb[0].mxu0
        %v678 = vadd.f32 0.0, %v677
        %v679 = vpop.f32.mrb[0].mxu0
        %680 = vmatprep.mubr.f32.mxu0 0.0
        %681 = vmatmul.mubr.f32.gmra.mrb[0].mxu0 %v567
        %v682 = vpop.f32.mrb[0].mxu0
        %v683 = vadd.f32 0.0, %v682
        %v684 = vpop.f32.mrb[0].mxu0
        %685 = vmatprep.mubr.f32.mxu0 0.0
        %686 = vmatmul.mubr.f32.gmra.mrb[0].mxu0 %v570
        %v687 = vpop.f32.mrb[0].mxu0
        %v688 = vadd.f32 0.0, %v687
        %v689 = vpop.f32.mrb[0].mxu0
        %690 = vmatprep.mubr.f32.mxu0 0.0
        %691 = vmatmul.mubr.f32.gmra.mrb[0].mxu0 %v573
        %v692 = vpop.f32.mrb[0].mxu0
        %v693 = vadd.f32 0.0, %v692
        %v694 = vpop.f32.mrb[0].mxu0
        %695 = vmatprep.mubr.f32.mxu0 0.0
        %696 = vmatmul.mubr.f32.gmra.mrb[0].mxu0 %v576
        %v697 = vpop.f32.mrb[0].mxu0
        %v698 = vadd.f32 0.0, %v697
        %v699 = vpop.f32.mrb[0].mxu0
        %700 = vmatprep.mubr.f32.mxu0 0.0
        %701 = vmatmul.mubr.f32.gmra.mrb[0].mxu0 %v579
        %v702 = vpop.f32.mrb[0].mxu0
        %v703 = vadd.f32 0.0, %v702
        %v704 = vpop.f32.mrb[0].mxu0
        %705 = vmatprep.mubr.f32.mxu0 0.0
        %706 = vmatmul.mubr.f32.gmra.mrb[0].mxu0 %v582
        %v707 = vpop.f32.mrb[0].mxu0
        %v708 = vadd.f32 0.0, %v707
        %v709 = vpop.f32.mrb[0].mxu0
        %710 = vmatprep.mubr.f32.mxu0 0.0
        %711 = vmatmul.mubr.f32.gmra.mrb[0].mxu0 %v585
        %v712 = vpop.f32.mrb[0].mxu0
        %v713 = vadd.f32 0.0, %v712
        %v714 = vpop.f32.mrb[0].mxu0
        %715 = vmatprep.mubr.f32.mxu0 0.0
        %716 = vmatmul.mubr.f32.gmra.mrb[0].mxu0 %v588
        %v717 = vpop.f32.mrb[0].mxu0
        %v718 = vadd.f32 0.0, %v717
        %v719 = vpop.f32.mrb[0].mxu0
        %720 = vmatprep.mubr.f32.mxu0 0.0
        %721 = vmatmul.mubr.f32.gmra.mrb[0].mxu0 %v591
        %v722 = vpop.f32.mrb[0].mxu0
        %v723 = vadd.f32 0.0, %v722
        %v724 = vpop.f32.mrb[0].mxu0
        %725 = vmatprep.mubr.f32.mxu0 0.0
        %726 = vmatmul.mubr.f32.gmra.mrb[0].mxu0 %v594
        %v727 = vpop.f32.mrb[0].mxu0
        %v728 = vadd.f32 0.0, %v727
        %v729 = vpop.f32.mrb[0].mxu0
        %730 = vmatprep.mubr.f32.mxu0 0.0
        %731 = vmatmul.mubr.f32.gmra.mrb[0].mxu0 %v597
        %v732 = vpop.f32.mrb[0].mxu0
        %v733 = vadd.f32 0.0, %v732
        %v734 = vpop.f32.mrb[0].mxu0
        %735 = vmatprep.mubr.f32.mxu0 0.0
        %736 = vmatmul.mubr.f32.gmra.mrb[0].mxu0 %v600
        %v737 = vpop.f32.mrb[0].mxu0
        %v738 = vadd.f32 0.0, %v737
        %v739 = vpop.f32.mrb[0].mxu0
        %740 = vmatprep.mubr.f32.mxu0 0.0
        %741 = vmatmul.mubr.f32.gmra.mrb[0].mxu0 %v603
        %v742 = vpop.f32.mrb[0].mxu0
        %v743 = vadd.f32 0.0, %v742
        %v744 = vpop.f32.mrb[0].mxu0
        %745 = vmatprep.mubr.f32.mxu0 0.0
        %746 = vmatmul.mubr.f32.gmra.mrb[0].mxu0 %v606
        %v747 = vpop.f32.mrb[0].mxu0
        %v748 = vadd.f32 0.0, %v747
        %v749 = vpop.f32.mrb[0].mxu0
        %750 = vmatprep.mubr.f32.mxu0 0.0
        %751 = vmatmul.mubr.f32.gmra.mrb[0].mxu0 %v609
        %v752 = vpop.f32.mrb[0].mxu0
        %v753 = vadd.f32 0.0, %v752
        %v754 = vpop.f32.mrb[0].mxu0
        %755 = vdwg.mxu0
        %772 = vrot.lane.b32.xlu0 %v678, 8
        %v773 = vpop.permute.xlu0 %772
        %774 = vrot.lane.b32.xlu0 %v683, 8
        %v775 = vpop.permute.xlu0 %774
        %776 = vrot.lane.b32.xlu0 %v688, 8
        %v777 = vpop.permute.xlu0 %776
        %778 = vrot.lane.b32.xlu0 %v693, 8
        %v779 = vpop.permute.xlu0 %778
        %780 = vrot.lane.b32.xlu0 %v698, 8
        %v781 = vpop.permute.xlu0 %780
        %782 = vrot.lane.b32.xlu0 %v703, 8
        %v783 = vpop.permute.xlu0 %782
        %784 = vrot.lane.b32.xlu0 %v708, 8
        %v785 = vpop.permute.xlu0 %784
        %786 = vrot.lane.b32.xlu0 %v713, 8
        %v787 = vpop.permute.xlu0 %786
        %788 = vrot.lane.b32.xlu0 %v718, 8
        %v789 = vpop.permute.xlu0 %788
        %790 = vrot.lane.b32.xlu0 %v723, 8
        %v791 = vpop.permute.xlu0 %790
        %792 = vrot.lane.b32.xlu0 %v728, 8
        %v793 = vpop.permute.xlu0 %792
        %794 = vrot.lane.b32.xlu0 %v733, 8
        %v795 = vpop.permute.xlu0 %794
        %796 = vrot.lane.b32.xlu0 %v738, 8
        %v797 = vpop.permute.xlu0 %796
        %798 = vrot.lane.b32.xlu0 %v743, 8
        %v799 = vpop.permute.xlu0 %798
        %800 = vrot.lane.b32.xlu0 %v748, 8
        %v801 = vpop.permute.xlu0 %800
        %802 = vrot.lane.b32.xlu0 %v753, 8
        %v803 = vpop.permute.xlu0 %802
        %v820 = vadd.f32 %v458, %v773
        %v821 = vadd.f32 %v463, %v775
        %v822 = vadd.f32 %v468, %v777
        %v823 = vadd.f32 %v473, %v779
        %v824 = vadd.f32 %v478, %v781
        %v825 = vadd.f32 %v483, %v783
        %v826 = vadd.f32 %v488, %v785
        %v827 = vadd.f32 %v493, %v787
        %v828 = vadd.f32 %v498, %v789
        %v829 = vadd.f32 %v503, %v791
        %v830 = vadd.f32 %v508, %v793
        %v831 = vadd.f32 %v513, %v795
        %v832 = vadd.f32 %v518, %v797
        %v833 = vadd.f32 %v523, %v799
        %v834 = vadd.f32 %v528, %v801
        %v835 = vadd.f32 %v533, %v803
        %v836 = vld [vmem:[%s538 + $0x3] sm:$0xff]
        %v837 = vld [vmem:[%s538 + $0xb] sm:$0xff]
        %v838 = vld [vmem:[%s538 + $0x1b] sm:$0xff]
        %v839 = vld [vmem:[%s538 + $0x23] sm:$0xff]
        %v840 = vld [vmem:[%s538 + $0x33] sm:$0xff]
        %v841 = vld [vmem:[%s538 + $0x3b] sm:$0xff]
        %v842 = vld [vmem:[%s538 + $0x4b] sm:$0xff]
        %v843 = vld [vmem:[%s538 + $0x53] sm:$0xff]
        %v844 = vld [vmem:[%s538 + $0x63] sm:$0xff]
        %v845 = vld [vmem:[%s538 + $0x6b] sm:$0xff]
        %v846 = vld [vmem:[%s538 + $0x7b] sm:$0xff]
        %v847 = vld [vmem:[%s538 + $0x83] sm:$0xff]
        %v848 = vld [vmem:[%s538 + $0x93] sm:$0xff]
        %v849 = vld [vmem:[%s538 + $0x9b] sm:$0xff]
        %v850 = vld [vmem:[%s538 + $0xab] sm:$0xff]
        %v851 = vld [vmem:[%s538 + $0xb3] sm:$0xff]
        %s852 = scalar_lea.vmem %s2, 64
        %v853 = vld [vmem:[%s852] sm:$0xff]
        %v854 = vld [vmem:[%s852 + $0x8] sm:$0xff]
        %v855 = vld [vmem:[%s852 + $0x10] sm:$0xff]
        %v856 = vld [vmem:[%s852 + $0x18] sm:$0xff]
        %v857 = vld [vmem:[%s852 + $0x20] sm:$0xff]
        %v858 = vld [vmem:[%s852 + $0x28] sm:$0xff]
        %v859 = vld [vmem:[%s852 + $0x30] sm:$0xff]
        %v860 = vld [vmem:[%s852 + $0x38] sm:$0xff]
        %v862 = vsel %vm342, %v836, 0
        %v865 = vsel %vm342, %v837, 0
        %v868 = vsel %vm342, %v838, 0
        %v871 = vsel %vm342, %v839, 0
        %v874 = vsel %vm342, %v840, 0
        %v877 = vsel %vm342, %v841, 0
        %v880 = vsel %vm342, %v842, 0
        %v883 = vsel %vm342, %v843, 0
        %v886 = vsel %vm342, %v844, 0
        %v889 = vsel %vm342, %v845, 0
        %v892 = vsel %vm342, %v846, 0
        %v895 = vsel %vm342, %v847, 0
        %v898 = vsel %vm342, %v848, 0
        %v901 = vsel %vm342, %v849, 0
        %v904 = vsel %vm342, %v850, 0
        %v907 = vsel %vm342, %v851, 0
        %909 = vmatprep.subr.mxu0 0.0
        %910 = vmatpush1.msra.mxu0 %v853
        %911 = vmatprep.subr.mxu0 0.0
        %912 = vmatpush1.msra.mxu0 %v854
        %913 = vmatprep.subr.mxu0 0.0
        %914 = vmatpush1.msra.mxu0 %v855
        %915 = vmatprep.subr.mxu0 0.0
        %916 = vmatpush1.msra.mxu0 %v856
        %917 = vmatprep.subr.mxu0 0.0
        %918 = vmatpush1.msra.mxu0 %v857
        %919 = vmatprep.subr.mxu0 0.0
        %920 = vmatpush1.msra.mxu0 %v858
        %921 = vmatprep.subr.mxu0 0.0
        %922 = vmatpush1.msra.mxu0 %v859
        %923 = vmatprep.subr.mxu0 0.0
        %924 = vmatpush1.msra.mxu0 %v860
        %925 = vmatprep.subr.mxu0 0.0
        %926 = vmatpush1.msra.mxu0 0.0
        %927 = vmatprep.subr.mxu0 0.0
        %928 = vmatpush1.msra.mxu0 0.0
        %929 = vmatprep.subr.mxu0 0.0
        %930 = vmatpush1.msra.mxu0 0.0
        %931 = vmatprep.subr.mxu0 0.0
        %932 = vmatpush1.msra.mxu0 0.0
        %933 = vmatprep.subr.mxu0 0.0
        %934 = vmatpush1.msra.mxu0 0.0
        %935 = vmatprep.subr.mxu0 0.0
        %936 = vmatpush1.msra.mxu0 0.0
        %937 = vmatprep.subr.mxu0 0.0
        %938 = vmatpush1.msra.mxu0 0.0
        %939 = vmatprep.subr.mxu0 0.0
        %940 = vmatpush1.msra.mxu0 0.0
        %941 = vmatprep.subr.mxu0 0.0
        %942 = vmatpush1.msra.mxu0 0.0
        %943 = vmatprep.subr.mxu0 0.0
        %944 = vmatpush1.msra.mxu0 0.0
        %945 = vmatprep.subr.mxu0 0.0
        %946 = vmatpush1.msra.mxu0 0.0
        %947 = vmatprep.subr.mxu0 0.0
        %948 = vmatpush1.msra.mxu0 0.0
        %949 = vmatprep.subr.mxu0 0.0
        %950 = vmatpush1.msra.mxu0 0.0
        %951 = vmatprep.subr.mxu0 0.0
        %952 = vmatpush1.msra.mxu0 0.0
        %953 = vmatprep.subr.mxu0 0.0
        %954 = vmatpush1.msra.mxu0 0.0
        %955 = vmatprep.subr.mxu0 0.0
        %956 = vmatpush1.msra.mxu0 0.0
        %957 = vmatprep.subr.mxu0 0.0
        %958 = vmatpush1.msra.mxu0 0.0
        %959 = vmatprep.subr.mxu0 0.0
        %960 = vmatpush1.msra.mxu0 0.0
        %961 = vmatprep.subr.mxu0 0.0
        %962 = vmatpush1.msra.mxu0 0.0
        %963 = vmatprep.subr.mxu0 0.0
        %964 = vmatpush1.msra.mxu0 0.0
        %965 = vmatprep.subr.mxu0 0.0
        %966 = vmatpush1.msra.mxu0 0.0
        %967 = vmatprep.subr.mxu0 0.0
        %968 = vmatpush1.msra.mxu0 0.0
        %969 = vmatprep.subr.mxu0 0.0
        %970 = vmatpush1.msra.mxu0 0.0
        %971 = vmatprep.subr.mxu0 0.0
        %972 = vmatpush1.msra.mxu0 0.0
        %973 = vmatprep.mubr.f32.mxu0 0.0
        %974 = vmatmul.mubr.f32.gmra.mrb[0].mxu0 %v862
        %v975 = vpop.f32.mrb[0].mxu0
        %v976 = vadd.f32 0.0, %v975
        %v977 = vpop.f32.mrb[0].mxu0
        %978 = vmatprep.mubr.f32.mxu0 0.0
        %979 = vmatmul.mubr.f32.gmra.mrb[0].mxu0 %v865
        %v980 = vpop.f32.mrb[0].mxu0
        %v981 = vadd.f32 0.0, %v980
        %v982 = vpop.f32.mrb[0].mxu0
        %983 = vmatprep.mubr.f32.mxu0 0.0
        %984 = vmatmul.mubr.f32.gmra.mrb[0].mxu0 %v868
        %v985 = vpop.f32.mrb[0].mxu0
        %v986 = vadd.f32 0.0, %v985
        %v987 = vpop.f32.mrb[0].mxu0
        %988 = vmatprep.mubr.f32.mxu0 0.0
        %989 = vmatmul.mubr.f32.gmra.mrb[0].mxu0 %v871
        %v990 = vpop.f32.mrb[0].mxu0
        %v991 = vadd.f32 0.0, %v990
        %v992 = vpop.f32.mrb[0].mxu0
        %993 = vmatprep.mubr.f32.mxu0 0.0
        %994 = vmatmul.mubr.f32.gmra.mrb[0].mxu0 %v874
        %v995 = vpop.f32.mrb[0].mxu0
        %v996 = vadd.f32 0.0, %v995
        %v997 = vpop.f32.mrb[0].mxu0
        %998 = vmatprep.mubr.f32.mxu0 0.0
        %999 = vmatmul.mubr.f32.gmra.mrb[0].mxu0 %v877
        %v1000 = vpop.f32.mrb[0].mxu0
        %v1001 = vadd.f32 0.0, %v1000
        %v1002 = vpop.f32.mrb[0].mxu0
        %1003 = vmatprep.mubr.f32.mxu0 0.0
        %1004 = vmatmul.mubr.f32.gmra.mrb[0].mxu0 %v880
        %v1005 = vpop.f32.mrb[0].mxu0
        %v1006 = vadd.f32 0.0, %v1005
        %v1007 = vpop.f32.mrb[0].mxu0
        %1008 = vmatprep.mubr.f32.mxu0 0.0
        %1009 = vmatmul.mubr.f32.gmra.mrb[0].mxu0 %v883
        %v1010 = vpop.f32.mrb[0].mxu0
        %v1011 = vadd.f32 0.0, %v1010
        %v1012 = vpop.f32.mrb[0].mxu0
        %1013 = vmatprep.mubr.f32.mxu0 0.0
        %1014 = vmatmul.mubr.f32.gmra.mrb[0].mxu0 %v886
        %v1015 = vpop.f32.mrb[0].mxu0
        %v1016 = vadd.f32 0.0, %v1015
        %v1017 = vpop.f32.mrb[0].mxu0
        %1018 = vmatprep.mubr.f32.mxu0 0.0
        %1019 = vmatmul.mubr.f32.gmra.mrb[0].mxu0 %v889
        %v1020 = vpop.f32.mrb[0].mxu0
        %v1021 = vadd.f32 0.0, %v1020
        %v1022 = vpop.f32.mrb[0].mxu0
        %1023 = vmatprep.mubr.f32.mxu0 0.0
        %1024 = vmatmul.mubr.f32.gmra.mrb[0].mxu0 %v892
        %v1025 = vpop.f32.mrb[0].mxu0
        %v1026 = vadd.f32 0.0, %v1025
        %v1027 = vpop.f32.mrb[0].mxu0
        %1028 = vmatprep.mubr.f32.mxu0 0.0
        %1029 = vmatmul.mubr.f32.gmra.mrb[0].mxu0 %v895
        %v1030 = vpop.f32.mrb[0].mxu0
        %v1031 = vadd.f32 0.0, %v1030
        %v1032 = vpop.f32.mrb[0].mxu0
        %1033 = vmatprep.mubr.f32.mxu0 0.0
        %1034 = vmatmul.mubr.f32.gmra.mrb[0].mxu0 %v898
        %v1035 = vpop.f32.mrb[0].mxu0
        %v1036 = vadd.f32 0.0, %v1035
        %v1037 = vpop.f32.mrb[0].mxu0
        %1038 = vmatprep.mubr.f32.mxu0 0.0
        %1039 = vmatmul.mubr.f32.gmra.mrb[0].mxu0 %v901
        %v1040 = vpop.f32.mrb[0].mxu0
        %v1041 = vadd.f32 0.0, %v1040
        %v1042 = vpop.f32.mrb[0].mxu0
        %1043 = vmatprep.mubr.f32.mxu0 0.0
        %1044 = vmatmul.mubr.f32.gmra.mrb[0].mxu0 %v904
        %v1045 = vpop.f32.mrb[0].mxu0
        %v1046 = vadd.f32 0.0, %v1045
        %v1047 = vpop.f32.mrb[0].mxu0
        %1048 = vmatprep.mubr.f32.mxu0 0.0
        %1049 = vmatmul.mubr.f32.gmra.mrb[0].mxu0 %v907
        %v1050 = vpop.f32.mrb[0].mxu0
        %v1051 = vadd.f32 0.0, %v1050
        %v1052 = vpop.f32.mrb[0].mxu0
        %1053 = vdwg.mxu0
        %1070 = vrot.lane.b32.xlu0 %v976, 8
        %v1071 = vpop.permute.xlu0 %1070
        %1072 = vrot.lane.b32.xlu0 %v981, 8
        %v1073 = vpop.permute.xlu0 %1072
        %1074 = vrot.lane.b32.xlu0 %v986, 8
        %v1075 = vpop.permute.xlu0 %1074
        %1076 = vrot.lane.b32.xlu0 %v991, 8
        %v1077 = vpop.permute.xlu0 %1076
        %1078 = vrot.lane.b32.xlu0 %v996, 8
        %v1079 = vpop.permute.xlu0 %1078
        %1080 = vrot.lane.b32.xlu0 %v1001, 8
        %v1081 = vpop.permute.xlu0 %1080
        %1082 = vrot.lane.b32.xlu0 %v1006, 8
        %v1083 = vpop.permute.xlu0 %1082
        %1084 = vrot.lane.b32.xlu0 %v1011, 8
        %v1085 = vpop.permute.xlu0 %1084
        %1086 = vrot.lane.b32.xlu0 %v1016, 8
        %v1087 = vpop.permute.xlu0 %1086
        %1088 = vrot.lane.b32.xlu0 %v1021, 8
        %v1089 = vpop.permute.xlu0 %1088
        %1090 = vrot.lane.b32.xlu0 %v1026, 8
        %v1091 = vpop.permute.xlu0 %1090
        %1092 = vrot.lane.b32.xlu0 %v1031, 8
        %v1093 = vpop.permute.xlu0 %1092
        %1094 = vrot.lane.b32.xlu0 %v1036, 8
        %v1095 = vpop.permute.xlu0 %1094
        %1096 = vrot.lane.b32.xlu0 %v1041, 8
        %v1097 = vpop.permute.xlu0 %1096
        %1098 = vrot.lane.b32.xlu0 %v1046, 8
        %v1099 = vpop.permute.xlu0 %1098
        %1100 = vrot.lane.b32.xlu0 %v1051, 8
        %v1101 = vpop.permute.xlu0 %1100
        %v1118 = vadd.f32 %v820, %v1071
        %v1119 = vadd.f32 %v821, %v1073
        %v1120 = vadd.f32 %v822, %v1075
        %v1121 = vadd.f32 %v823, %v1077
        %v1122 = vadd.f32 %v824, %v1079
        %v1123 = vadd.f32 %v825, %v1081
        %v1124 = vadd.f32 %v826, %v1083
        %v1125 = vadd.f32 %v827, %v1085
        %v1126 = vadd.f32 %v828, %v1087
        %v1127 = vadd.f32 %v829, %v1089
        %v1128 = vadd.f32 %v830, %v1091
        %v1129 = vadd.f32 %v831, %v1093
        %v1130 = vadd.f32 %v832, %v1095
        %v1131 = vadd.f32 %v833, %v1097
        %v1132 = vadd.f32 %v834, %v1099
        %v1133 = vadd.f32 %v835, %v1101
        %v1134 = vld [vmem:[%s538 + $0x4] sm:$0xff]
        %v1135 = vld [vmem:[%s538 + $0xc] sm:$0xff]
        %v1136 = vld [vmem:[%s538 + $0x1c] sm:$0xff]
        %v1137 = vld [vmem:[%s538 + $0x24] sm:$0xff]
        %v1138 = vld [vmem:[%s538 + $0x34] sm:$0xff]
        %v1139 = vld [vmem:[%s538 + $0x3c] sm:$0xff]
        %v1140 = vld [vmem:[%s538 + $0x4c] sm:$0xff]
        %v1141 = vld [vmem:[%s538 + $0x54] sm:$0xff]
        %v1142 = vld [vmem:[%s538 + $0x64] sm:$0xff]
        %v1143 = vld [vmem:[%s538 + $0x6c] sm:$0xff]
        %v1144 = vld [vmem:[%s538 + $0x7c] sm:$0xff]
        %v1145 = vld [vmem:[%s538 + $0x84] sm:$0xff]
        %v1146 = vld [vmem:[%s538 + $0x94] sm:$0xff]
        %v1147 = vld [vmem:[%s538 + $0x9c] sm:$0xff]
        %v1148 = vld [vmem:[%s538 + $0xac] sm:$0xff]
        %v1149 = vld [vmem:[%s538 + $0xb4] sm:$0xff]
        %s1150 = scalar_lea.vmem %s2, 128
        %v1151 = vld [vmem:[%s1150] sm:$0xff]
        %v1152 = vld [vmem:[%s1150 + $0x8] sm:$0xff]
        %v1153 = vld [vmem:[%s1150 + $0x10] sm:$0xff]
        %v1154 = vld [vmem:[%s1150 + $0x18] sm:$0xff]
        %v1155 = vld [vmem:[%s1150 + $0x20] sm:$0xff]
        %v1156 = vld [vmem:[%s1150 + $0x28] sm:$0xff]
        %v1157 = vld [vmem:[%s1150 + $0x30] sm:$0xff]
        %v1158 = vld [vmem:[%s1150 + $0x38] sm:$0xff]
        %v1160 = vsel %vm342, %v1134, 0
        %v1163 = vsel %vm342, %v1135, 0
        %v1166 = vsel %vm342, %v1136, 0
        %v1169 = vsel %vm342, %v1137, 0
        %v1172 = vsel %vm342, %v1138, 0
        %v1175 = vsel %vm342, %v1139, 0
        %v1178 = vsel %vm342, %v1140, 0
        %v1181 = vsel %vm342, %v1141, 0
        %v1184 = vsel %vm342, %v1142, 0
        %v1187 = vsel %vm342, %v1143, 0
        %v1190 = vsel %vm342, %v1144, 0
        %v1193 = vsel %vm342, %v1145, 0
        %v1196 = vsel %vm342, %v1146, 0
        %v1199 = vsel %vm342, %v1147, 0
        %v1202 = vsel %vm342, %v1148, 0
        %v1205 = vsel %vm342, %v1149, 0
        %1207 = vmatprep.subr.mxu0 0.0
        %1208 = vmatpush1.msra.mxu0 %v1151
        %1209 = vmatprep.subr.mxu0 0.0
        %1210 = vmatpush1.msra.mxu0 %v1152
        %1211 = vmatprep.subr.mxu0 0.0
        %1212 = vmatpush1.msra.mxu0 %v1153
        %1213 = vmatprep.subr.mxu0 0.0
        %1214 = vmatpush1.msra.mxu0 %v1154
        %1215 = vmatprep.subr.mxu0 0.0
        %1216 = vmatpush1.msra.mxu0 %v1155
        %1217 = vmatprep.subr.mxu0 0.0
        %1218 = vmatpush1.msra.mxu0 %v1156
        %1219 = vmatprep.subr.mxu0 0.0
        %1220 = vmatpush1.msra.mxu0 %v1157
        %1221 = vmatprep.subr.mxu0 0.0
        %1222 = vmatpush1.msra.mxu0 %v1158
        %1223 = vmatprep.subr.mxu0 0.0
        %1224 = vmatpush1.msra.mxu0 0.0
        %1225 = vmatprep.subr.mxu0 0.0
        %1226 = vmatpush1.msra.mxu0 0.0
        %1227 = vmatprep.subr.mxu0 0.0
        %1228 = vmatpush1.msra.mxu0 0.0
        %1229 = vmatprep.subr.mxu0 0.0
        %1230 = vmatpush1.msra.mxu0 0.0
        %1231 = vmatprep.subr.mxu0 0.0
        %1232 = vmatpush1.msra.mxu0 0.0
        %1233 = vmatprep.subr.mxu0 0.0
        %1234 = vmatpush1.msra.mxu0 0.0
        %1235 = vmatprep.subr.mxu0 0.0
        %1236 = vmatpush1.msra.mxu0 0.0
        %1237 = vmatprep.subr.mxu0 0.0
        %1238 = vmatpush1.msra.mxu0 0.0
        %1239 = vmatprep.subr.mxu0 0.0
        %1240 = vmatpush1.msra.mxu0 0.0
        %1241 = vmatprep.subr.mxu0 0.0
        %1242 = vmatpush1.msra.mxu0 0.0
        %1243 = vmatprep.subr.mxu0 0.0
        %1244 = vmatpush1.msra.mxu0 0.0
        %1245 = vmatprep.subr.mxu0 0.0
        %1246 = vmatpush1.msra.mxu0 0.0
        %1247 = vmatprep.subr.mxu0 0.0
        %1248 = vmatpush1.msra.mxu0 0.0
        %1249 = vmatprep.subr.mxu0 0.0
        %1250 = vmatpush1.msra.mxu0 0.0
        %1251 = vmatprep.subr.mxu0 0.0
        %1252 = vmatpush1.msra.mxu0 0.0
        %1253 = vmatprep.subr.mxu0 0.0
        %1254 = vmatpush1.msra.mxu0 0.0
        %1255 = vmatprep.subr.mxu0 0.0
        %1256 = vmatpush1.msra.mxu0 0.0
        %1257 = vmatprep.subr.mxu0 0.0
        %1258 = vmatpush1.msra.mxu0 0.0
        %1259 = vmatprep.subr.mxu0 0.0
        %1260 = vmatpush1.msra.mxu0 0.0
        %1261 = vmatprep.subr.mxu0 0.0
        %1262 = vmatpush1.msra.mxu0 0.0
        %1263 = vmatprep.subr.mxu0 0.0
        %1264 = vmatpush1.msra.mxu0 0.0
        %1265 = vmatprep.subr.mxu0 0.0
        %1266 = vmatpush1.msra.mxu0 0.0
        %1267 = vmatprep.subr.mxu0 0.0
        %1268 = vmatpush1.msra.mxu0 0.0
        %1269 = vmatprep.subr.mxu0 0.0
        %1270 = vmatpush1.msra.mxu0 0.0
        %1271 = vmatprep.mubr.f32.mxu0 0.0
        %1272 = vmatmul.mubr.f32.gmra.mrb[0].mxu0 %v1160
        %v1273 = vpop.f32.mrb[0].mxu0
        %v1274 = vadd.f32 0.0, %v1273
        %v1275 = vpop.f32.mrb[0].mxu0
        %1276 = vmatprep.mubr.f32.mxu0 0.0
        %1277 = vmatmul.mubr.f32.gmra.mrb[0].mxu0 %v1163
        %v1278 = vpop.f32.mrb[0].mxu0
        %v1279 = vadd.f32 0.0, %v1278
        %v1280 = vpop.f32.mrb[0].mxu0
        %1281 = vmatprep.mubr.f32.mxu0 0.0
        %1282 = vmatmul.mubr.f32.gmra.mrb[0].mxu0 %v1166
        %v1283 = vpop.f32.mrb[0].mxu0
        %v1284 = vadd.f32 0.0, %v1283
        %v1285 = vpop.f32.mrb[0].mxu0
        %1286 = vmatprep.mubr.f32.mxu0 0.0
        %1287 = vmatmul.mubr.f32.gmra.mrb[0].mxu0 %v1169
        %v1288 = vpop.f32.mrb[0].mxu0
        %v1289 = vadd.f32 0.0, %v1288
        %v1290 = vpop.f32.mrb[0].mxu0
        %1291 = vmatprep.mubr.f32.mxu0 0.0
        %1292 = vmatmul.mubr.f32.gmra.mrb[0].mxu0 %v1172
        %v1293 = vpop.f32.mrb[0].mxu0
        %v1294 = vadd.f32 0.0, %v1293
        %v1295 = vpop.f32.mrb[0].mxu0
        %1296 = vmatprep.mubr.f32.mxu0 0.0
        %1297 = vmatmul.mubr.f32.gmra.mrb[0].mxu0 %v1175
        %v1298 = vpop.f32.mrb[0].mxu0
        %v1299 = vadd.f32 0.0, %v1298
        %v1300 = vpop.f32.mrb[0].mxu0
        %1301 = vmatprep.mubr.f32.mxu0 0.0
        %1302 = vmatmul.mubr.f32.gmra.mrb[0].mxu0 %v1178
        %v1303 = vpop.f32.mrb[0].mxu0
        %v1304 = vadd.f32 0.0, %v1303
        %v1305 = vpop.f32.mrb[0].mxu0
        %1306 = vmatprep.mubr.f32.mxu0 0.0
        %1307 = vmatmul.mubr.f32.gmra.mrb[0].mxu0 %v1181
        %v1308 = vpop.f32.mrb[0].mxu0
        %v1309 = vadd.f32 0.0, %v1308
        %v1310 = vpop.f32.mrb[0].mxu0
        %1311 = vmatprep.mubr.f32.mxu0 0.0
        %1312 = vmatmul.mubr.f32.gmra.mrb[0].mxu0 %v1184
        %v1313 = vpop.f32.mrb[0].mxu0
        %v1314 = vadd.f32 0.0, %v1313
        %v1315 = vpop.f32.mrb[0].mxu0
        %1316 = vmatprep.mubr.f32.mxu0 0.0
        %1317 = vmatmul.mubr.f32.gmra.mrb[0].mxu0 %v1187
        %v1318 = vpop.f32.mrb[0].mxu0
        %v1319 = vadd.f32 0.0, %v1318
        %v1320 = vpop.f32.mrb[0].mxu0
        %1321 = vmatprep.mubr.f32.mxu0 0.0
        %1322 = vmatmul.mubr.f32.gmra.mrb[0].mxu0 %v1190
        %v1323 = vpop.f32.mrb[0].mxu0
        %v1324 = vadd.f32 0.0, %v1323
        %v1325 = vpop.f32.mrb[0].mxu0
        %1326 = vmatprep.mubr.f32.mxu0 0.0
        %1327 = vmatmul.mubr.f32.gmra.mrb[0].mxu0 %v1193
        %v1328 = vpop.f32.mrb[0].mxu0
        %v1329 = vadd.f32 0.0, %v1328
        %v1330 = vpop.f32.mrb[0].mxu0
        %1331 = vmatprep.mubr.f32.mxu0 0.0
        %1332 = vmatmul.mubr.f32.gmra.mrb[0].mxu0 %v1196
        %v1333 = vpop.f32.mrb[0].mxu0
        %v1334 = vadd.f32 0.0, %v1333
        %v1335 = vpop.f32.mrb[0].mxu0
        %1336 = vmatprep.mubr.f32.mxu0 0.0
        %1337 = vmatmul.mubr.f32.gmra.mrb[0].mxu0 %v1199
        %v1338 = vpop.f32.mrb[0].mxu0
        %v1339 = vadd.f32 0.0, %v1338
        %v1340 = vpop.f32.mrb[0].mxu0
        %1341 = vmatprep.mubr.f32.mxu0 0.0
        %1342 = vmatmul.mubr.f32.gmra.mrb[0].mxu0 %v1202
        %v1343 = vpop.f32.mrb[0].mxu0
        %v1344 = vadd.f32 0.0, %v1343
        %v1345 = vpop.f32.mrb[0].mxu0
        %1346 = vmatprep.mubr.f32.mxu0 0.0
        %1347 = vmatmul.mubr.f32.gmra.mrb[0].mxu0 %v1205
        %v1348 = vpop.f32.mrb[0].mxu0
        %v1349 = vadd.f32 0.0, %v1348
        %v1350 = vpop.f32.mrb[0].mxu0
        %1351 = vdwg.mxu0
        %1368 = vrot.lane.b32.xlu0 %v1274, 8
        %v1369 = vpop.permute.xlu0 %1368
        %1370 = vrot.lane.b32.xlu0 %v1279, 8
        %v1371 = vpop.permute.xlu0 %1370
        %1372 = vrot.lane.b32.xlu0 %v1284, 8
        %v1373 = vpop.permute.xlu0 %1372
        %1374 = vrot.lane.b32.xlu0 %v1289, 8
        %v1375 = vpop.permute.xlu0 %1374
        %1376 = vrot.lane.b32.xlu0 %v1294, 8
        %v1377 = vpop.permute.xlu0 %1376
        %1378 = vrot.lane.b32.xlu0 %v1299, 8
        %v1379 = vpop.permute.xlu0 %1378
        %1380 = vrot.lane.b32.xlu0 %v1304, 8
        %v1381 = vpop.permute.xlu0 %1380
        %1382 = vrot.lane.b32.xlu0 %v1309, 8
        %v1383 = vpop.permute.xlu0 %1382
        %1384 = vrot.lane.b32.xlu0 %v1314, 8
        %v1385 = vpop.permute.xlu0 %1384
        %1386 = vrot.lane.b32.xlu0 %v1319, 8
        %v1387 = vpop.permute.xlu0 %1386
        %1388 = vrot.lane.b32.xlu0 %v1324, 8
        %v1389 = vpop.permute.xlu0 %1388
        %1390 = vrot.lane.b32.xlu0 %v1329, 8
        %v1391 = vpop.permute.xlu0 %1390
        %1392 = vrot.lane.b32.xlu0 %v1334, 8
        %v1393 = vpop.permute.xlu0 %1392
        %1394 = vrot.lane.b32.xlu0 %v1339, 8
        %v1395 = vpop.permute.xlu0 %1394
        %1396 = vrot.lane.b32.xlu0 %v1344, 8
        %v1397 = vpop.permute.xlu0 %1396
        %1398 = vrot.lane.b32.xlu0 %v1349, 8
        %v1399 = vpop.permute.xlu0 %1398
        %v1416 = vadd.f32 %v1118, %v1369
        %v1417 = vadd.f32 %v1119, %v1371
        %v1418 = vadd.f32 %v1120, %v1373
        %v1419 = vadd.f32 %v1121, %v1375
        %v1420 = vadd.f32 %v1122, %v1377
        %v1421 = vadd.f32 %v1123, %v1379
        %v1422 = vadd.f32 %v1124, %v1381
        %v1423 = vadd.f32 %v1125, %v1383
        %v1424 = vadd.f32 %v1126, %v1385
        %v1425 = vadd.f32 %v1127, %v1387
        %v1426 = vadd.f32 %v1128, %v1389
        %v1427 = vadd.f32 %v1129, %v1391
        %v1428 = vadd.f32 %v1130, %v1393
        %v1429 = vadd.f32 %v1131, %v1395
        %v1430 = vadd.f32 %v1132, %v1397
        %v1431 = vadd.f32 %v1133, %v1399
        %v1432 = vld [vmem:[%s317 + $0x2] sm:$0xff]
        %v1433 = vld [vmem:[%s317 + $0xa] sm:$0xff]
        %v1434 = vld [vmem:[%s317 + $0x1a] sm:$0xff]
        %v1435 = vld [vmem:[%s317 + $0x22] sm:$0xff]
        %v1436 = vld [vmem:[%s317 + $0x32] sm:$0xff]
        %v1437 = vld [vmem:[%s317 + $0x3a] sm:$0xff]
        %v1438 = vld [vmem:[%s317 + $0x4a] sm:$0xff]
        %v1439 = vld [vmem:[%s317 + $0x52] sm:$0xff]
        %v1440 = vld [vmem:[%s317 + $0x62] sm:$0xff]
        %v1441 = vld [vmem:[%s317 + $0x6a] sm:$0xff]
        %v1442 = vld [vmem:[%s317 + $0x7a] sm:$0xff]
        %v1443 = vld [vmem:[%s317 + $0x82] sm:$0xff]
        %v1444 = vld [vmem:[%s317 + $0x92] sm:$0xff]
        %v1445 = vld [vmem:[%s317 + $0x9a] sm:$0xff]
        %v1446 = vld [vmem:[%s317 + $0xaa] sm:$0xff]
        %v1447 = vld [vmem:[%s317 + $0xb2] sm:$0xff]
        %s1448 = scalar_lea.vmem %s2, 192
        %v1449 = vld [vmem:[%s1448] sm:$0xff]
        %v1450 = vld [vmem:[%s1448 + $0x8] sm:$0xff]
        %v1451 = vld [vmem:[%s1448 + $0x10] sm:$0xff]
        %v1452 = vld [vmem:[%s1448 + $0x18] sm:$0xff]
        %v1453 = vld [vmem:[%s1448 + $0x20] sm:$0xff]
        %v1454 = vld [vmem:[%s1448 + $0x28] sm:$0xff]
        %v1455 = vld [vmem:[%s1448 + $0x30] sm:$0xff]
        %v1456 = vld [vmem:[%s1448 + $0x38] sm:$0xff]
        %v1458 = vsel %vm342, %v1432, 0
        %v1461 = vsel %vm342, %v1433, 0
        %v1464 = vsel %vm342, %v1434, 0
        %v1467 = vsel %vm342, %v1435, 0
        %v1470 = vsel %vm342, %v1436, 0
        %v1473 = vsel %vm342, %v1437, 0
        %v1476 = vsel %vm342, %v1438, 0
        %v1479 = vsel %vm342, %v1439, 0
        %v1482 = vsel %vm342, %v1440, 0
        %v1485 = vsel %vm342, %v1441, 0
        %v1488 = vsel %vm342, %v1442, 0
        %v1491 = vsel %vm342, %v1443, 0
        %v1494 = vsel %vm342, %v1444, 0
        %v1497 = vsel %vm342, %v1445, 0
        %v1500 = vsel %vm342, %v1446, 0
        %v1503 = vsel %vm342, %v1447, 0
        %1505 = vmatprep.subr.mxu0 0.0
        %1506 = vmatpush1.msra.mxu0 %v1449
        %1507 = vmatprep.subr.mxu0 0.0
        %1508 = vmatpush1.msra.mxu0 %v1450
        %1509 = vmatprep.subr.mxu0 0.0
        %1510 = vmatpush1.msra.mxu0 %v1451
        %1511 = vmatprep.subr.mxu0 0.0
        %1512 = vmatpush1.msra.mxu0 %v1452
        %1513 = vmatprep.subr.mxu0 0.0
        %1514 = vmatpush1.msra.mxu0 %v1453
        %1515 = vmatprep.subr.mxu0 0.0
        %1516 = vmatpush1.msra.mxu0 %v1454
        %1517 = vmatprep.subr.mxu0 0.0
        %1518 = vmatpush1.msra.mxu0 %v1455
        %1519 = vmatprep.subr.mxu0 0.0
        %1520 = vmatpush1.msra.mxu0 %v1456
        %1521 = vmatprep.subr.mxu0 0.0
        %1522 = vmatpush1.msra.mxu0 0.0
        %1523 = vmatprep.subr.mxu0 0.0
        %1524 = vmatpush1.msra.mxu0 0.0
        %1525 = vmatprep.subr.mxu0 0.0
        %1526 = vmatpush1.msra.mxu0 0.0
        %1527 = vmatprep.subr.mxu0 0.0
        %1528 = vmatpush1.msra.mxu0 0.0
        %1529 = vmatprep.subr.mxu0 0.0
        %1530 = vmatpush1.msra.mxu0 0.0
        %1531 = vmatprep.subr.mxu0 0.0
        %1532 = vmatpush1.msra.mxu0 0.0
        %1533 = vmatprep.subr.mxu0 0.0
        %1534 = vmatpush1.msra.mxu0 0.0
        %1535 = vmatprep.subr.mxu0 0.0
        %1536 = vmatpush1.msra.mxu0 0.0
        %1537 = vmatprep.subr.mxu0 0.0
        %1538 = vmatpush1.msra.mxu0 0.0
        %1539 = vmatprep.subr.mxu0 0.0
        %1540 = vmatpush1.msra.mxu0 0.0
        %1541 = vmatprep.subr.mxu0 0.0
        %1542 = vmatpush1.msra.mxu0 0.0
        %1543 = vmatprep.subr.mxu0 0.0
        %1544 = vmatpush1.msra.mxu0 0.0
        %1545 = vmatprep.subr.mxu0 0.0
        %1546 = vmatpush1.msra.mxu0 0.0
        %1547 = vmatprep.subr.mxu0 0.0
        %1548 = vmatpush1.msra.mxu0 0.0
        %1549 = vmatprep.subr.mxu0 0.0
        %1550 = vmatpush1.msra.mxu0 0.0
        %1551 = vmatprep.subr.mxu0 0.0
        %1552 = vmatpush1.msra.mxu0 0.0
        %1553 = vmatprep.subr.mxu0 0.0
        %1554 = vmatpush1.msra.mxu0 0.0
        %1555 = vmatprep.subr.mxu0 0.0
        %1556 = vmatpush1.msra.mxu0 0.0
        %1557 = vmatprep.subr.mxu0 0.0
        %1558 = vmatpush1.msra.mxu0 0.0
        %1559 = vmatprep.subr.mxu0 0.0
        %1560 = vmatpush1.msra.mxu0 0.0
        %1561 = vmatprep.subr.mxu0 0.0
        %1562 = vmatpush1.msra.mxu0 0.0
        %1563 = vmatprep.subr.mxu0 0.0
        %1564 = vmatpush1.msra.mxu0 0.0
        %1565 = vmatprep.subr.mxu0 0.0
        %1566 = vmatpush1.msra.mxu0 0.0
        %1567 = vmatprep.subr.mxu0 0.0
        %1568 = vmatpush1.msra.mxu0 0.0
        %1569 = vmatprep.mubr.f32.mxu0 0.0
        %1570 = vmatmul.mubr.f32.gmra.mrb[0].mxu0 %v1458
        %v1571 = vpop.f32.mrb[0].mxu0
        %v1572 = vadd.f32 0.0, %v1571
        %v1573 = vpop.f32.mrb[0].mxu0
        %1574 = vmatprep.mubr.f32.mxu0 0.0
        %1575 = vmatmul.mubr.f32.gmra.mrb[0].mxu0 %v1461
        %v1576 = vpop.f32.mrb[0].mxu0
        %v1577 = vadd.f32 0.0, %v1576
        %v1578 = vpop.f32.mrb[0].mxu0
        %1579 = vmatprep.mubr.f32.mxu0 0.0
        %1580 = vmatmul.mubr.f32.gmra.mrb[0].mxu0 %v1464
        %v1581 = vpop.f32.mrb[0].mxu0
        %v1582 = vadd.f32 0.0, %v1581
        %v1583 = vpop.f32.mrb[0].mxu0
        %1584 = vmatprep.mubr.f32.mxu0 0.0
        %1585 = vmatmul.mubr.f32.gmra.mrb[0].mxu0 %v1467
        %v1586 = vpop.f32.mrb[0].mxu0
        %v1587 = vadd.f32 0.0, %v1586
        %v1588 = vpop.f32.mrb[0].mxu0
        %1589 = vmatprep.mubr.f32.mxu0 0.0
        %1590 = vmatmul.mubr.f32.gmra.mrb[0].mxu0 %v1470
        %v1591 = vpop.f32.mrb[0].mxu0
        %v1592 = vadd.f32 0.0, %v1591
        %v1593 = vpop.f32.mrb[0].mxu0
        %1594 = vmatprep.mubr.f32.mxu0 0.0
        %1595 = vmatmul.mubr.f32.gmra.mrb[0].mxu0 %v1473
        %v1596 = vpop.f32.mrb[0].mxu0
        %v1597 = vadd.f32 0.0, %v1596
        %v1598 = vpop.f32.mrb[0].mxu0
        %1599 = vmatprep.mubr.f32.mxu0 0.0
        %1600 = vmatmul.mubr.f32.gmra.mrb[0].mxu0 %v1476
        %v1601 = vpop.f32.mrb[0].mxu0
        %v1602 = vadd.f32 0.0, %v1601
        %v1603 = vpop.f32.mrb[0].mxu0
        %1604 = vmatprep.mubr.f32.mxu0 0.0
        %1605 = vmatmul.mubr.f32.gmra.mrb[0].mxu0 %v1479
        %v1606 = vpop.f32.mrb[0].mxu0
        %v1607 = vadd.f32 0.0, %v1606
        %v1608 = vpop.f32.mrb[0].mxu0
        %1609 = vmatprep.mubr.f32.mxu0 0.0
        %1610 = vmatmul.mubr.f32.gmra.mrb[0].mxu0 %v1482
        %v1611 = vpop.f32.mrb[0].mxu0
        %v1612 = vadd.f32 0.0, %v1611
        %v1613 = vpop.f32.mrb[0].mxu0
        %1614 = vmatprep.mubr.f32.mxu0 0.0
        %1615 = vmatmul.mubr.f32.gmra.mrb[0].mxu0 %v1485
        %v1616 = vpop.f32.mrb[0].mxu0
        %v1617 = vadd.f32 0.0, %v1616
        %v1618 = vpop.f32.mrb[0].mxu0
        %1619 = vmatprep.mubr.f32.mxu0 0.0
        %1620 = vmatmul.mubr.f32.gmra.mrb[0].mxu0 %v1488
        %v1621 = vpop.f32.mrb[0].mxu0
        %v1622 = vadd.f32 0.0, %v1621
        %v1623 = vpop.f32.mrb[0].mxu0
        %1624 = vmatprep.mubr.f32.mxu0 0.0
        %1625 = vmatmul.mubr.f32.gmra.mrb[0].mxu0 %v1491
        %v1626 = vpop.f32.mrb[0].mxu0
        %v1627 = vadd.f32 0.0, %v1626
        %v1628 = vpop.f32.mrb[0].mxu0
        %1629 = vmatprep.mubr.f32.mxu0 0.0
        %1630 = vmatmul.mubr.f32.gmra.mrb[0].mxu0 %v1494
        %v1631 = vpop.f32.mrb[0].mxu0
        %v1632 = vadd.f32 0.0, %v1631
        %v1633 = vpop.f32.mrb[0].mxu0
        %1634 = vmatprep.mubr.f32.mxu0 0.0
        %1635 = vmatmul.mubr.f32.gmra.mrb[0].mxu0 %v1497
        %v1636 = vpop.f32.mrb[0].mxu0
        %v1637 = vadd.f32 0.0, %v1636
        %v1638 = vpop.f32.mrb[0].mxu0
        %1639 = vmatprep.mubr.f32.mxu0 0.0
        %1640 = vmatmul.mubr.f32.gmra.mrb[0].mxu0 %v1500
        %v1641 = vpop.f32.mrb[0].mxu0
        %v1642 = vadd.f32 0.0, %v1641
        %v1643 = vpop.f32.mrb[0].mxu0
        %1644 = vmatprep.mubr.f32.mxu0 0.0
        %1645 = vmatmul.mubr.f32.gmra.mrb[0].mxu0 %v1503
        %v1646 = vpop.f32.mrb[0].mxu0
        %v1647 = vadd.f32 0.0, %v1646
        %v1648 = vpop.f32.mrb[0].mxu0
        %1649 = vdwg.mxu0
        %1666 = vrot.lane.b32.xlu0 %v1572, 8
        %v1667 = vpop.permute.xlu0 %1666
        %1668 = vrot.lane.b32.xlu0 %v1577, 8
        %v1669 = vpop.permute.xlu0 %1668
        %1670 = vrot.lane.b32.xlu0 %v1582, 8
        %v1671 = vpop.permute.xlu0 %1670
        %1672 = vrot.lane.b32.xlu0 %v1587, 8
        %v1673 = vpop.permute.xlu0 %1672
        %1674 = vrot.lane.b32.xlu0 %v1592, 8
        %v1675 = vpop.permute.xlu0 %1674
        %1676 = vrot.lane.b32.xlu0 %v1597, 8
        %v1677 = vpop.permute.xlu0 %1676
        %1678 = vrot.lane.b32.xlu0 %v1602, 8
        %v1679 = vpop.permute.xlu0 %1678
        %1680 = vrot.lane.b32.xlu0 %v1607, 8
        %v1681 = vpop.permute.xlu0 %1680
        %1682 = vrot.lane.b32.xlu0 %v1612, 8
        %v1683 = vpop.permute.xlu0 %1682
        %1684 = vrot.lane.b32.xlu0 %v1617, 8
        %v1685 = vpop.permute.xlu0 %1684
        %1686 = vrot.lane.b32.xlu0 %v1622, 8
        %v1687 = vpop.permute.xlu0 %1686
        %1688 = vrot.lane.b32.xlu0 %v1627, 8
        %v1689 = vpop.permute.xlu0 %1688
        %1690 = vrot.lane.b32.xlu0 %v1632, 8
        %v1691 = vpop.permute.xlu0 %1690
        %1692 = vrot.lane.b32.xlu0 %v1637, 8
        %v1693 = vpop.permute.xlu0 %1692
        %1694 = vrot.lane.b32.xlu0 %v1642, 8
        %v1695 = vpop.permute.xlu0 %1694
        %1696 = vrot.lane.b32.xlu0 %v1647, 8
        %v1697 = vpop.permute.xlu0 %1696
        %v1714 = vadd.f32 %v1416, %v1667
        %v1715 = vadd.f32 %v1417, %v1669
        %v1716 = vadd.f32 %v1418, %v1671
        %v1717 = vadd.f32 %v1419, %v1673
        %v1718 = vadd.f32 %v1420, %v1675
        %v1719 = vadd.f32 %v1421, %v1677
        %v1720 = vadd.f32 %v1422, %v1679
        %v1721 = vadd.f32 %v1423, %v1681
        %v1722 = vadd.f32 %v1424, %v1683
        %v1723 = vadd.f32 %v1425, %v1685
        %v1724 = vadd.f32 %v1426, %v1687
        %v1725 = vadd.f32 %v1427, %v1689
        %v1726 = vadd.f32 %v1428, %v1691
        %v1727 = vadd.f32 %v1429, %v1693
        %v1728 = vadd.f32 %v1430, %v1695
        %v1729 = vadd.f32 %v1431, %v1697
        %v1730 = vld [vmem:[%s317 + $0x4] sm:$0xff]
        %v1731 = vld [vmem:[%s317 + $0xc] sm:$0xff]
        %v1732 = vld [vmem:[%s317 + $0x1c] sm:$0xff]
        %v1733 = vld [vmem:[%s317 + $0x24] sm:$0xff]
        %v1734 = vld [vmem:[%s317 + $0x34] sm:$0xff]
        %v1735 = vld [vmem:[%s317 + $0x3c] sm:$0xff]
        %v1736 = vld [vmem:[%s317 + $0x4c] sm:$0xff]
        %v1737 = vld [vmem:[%s317 + $0x54] sm:$0xff]
        %v1738 = vld [vmem:[%s317 + $0x64] sm:$0xff]
        %v1739 = vld [vmem:[%s317 + $0x6c] sm:$0xff]
        %v1740 = vld [vmem:[%s317 + $0x7c] sm:$0xff]
        %v1741 = vld [vmem:[%s317 + $0x84] sm:$0xff]
        %v1742 = vld [vmem:[%s317 + $0x94] sm:$0xff]
        %v1743 = vld [vmem:[%s317 + $0x9c] sm:$0xff]
        %v1744 = vld [vmem:[%s317 + $0xac] sm:$0xff]
        %v1745 = vld [vmem:[%s317 + $0xb4] sm:$0xff]
        %s1746 = scalar_lea.vmem %s2, 256
        %v1747 = vld [vmem:[%s1746] sm:$0xff]
        %v1748 = vld [vmem:[%s1746 + $0x8] sm:$0xff]
        %v1749 = vld [vmem:[%s1746 + $0x10] sm:$0xff]
        %v1750 = vld [vmem:[%s1746 + $0x18] sm:$0xff]
        %v1751 = vld [vmem:[%s1746 + $0x20] sm:$0xff]
        %v1752 = vld [vmem:[%s1746 + $0x28] sm:$0xff]
        %v1753 = vld [vmem:[%s1746 + $0x30] sm:$0xff]
        %v1754 = vld [vmem:[%s1746 + $0x38] sm:$0xff]
        %v1756 = vsel %vm342, %v1730, 0
        %v1759 = vsel %vm342, %v1731, 0
        %v1762 = vsel %vm342, %v1732, 0
        %v1765 = vsel %vm342, %v1733, 0
        %v1768 = vsel %vm342, %v1734, 0
        %v1771 = vsel %vm342, %v1735, 0
        %v1774 = vsel %vm342, %v1736, 0
        %v1777 = vsel %vm342, %v1737, 0
        %v1780 = vsel %vm342, %v1738, 0
        %v1783 = vsel %vm342, %v1739, 0
        %v1786 = vsel %vm342, %v1740, 0
        %v1789 = vsel %vm342, %v1741, 0
        %v1792 = vsel %vm342, %v1742, 0
        %v1795 = vsel %vm342, %v1743, 0
        %v1798 = vsel %vm342, %v1744, 0
        %v1801 = vsel %vm342, %v1745, 0
        %1803 = vmatprep.subr.mxu0 0.0
        %1804 = vmatpush1.msra.mxu0 %v1747
        %1805 = vmatprep.subr.mxu0 0.0
        %1806 = vmatpush1.msra.mxu0 %v1748
        %1807 = vmatprep.subr.mxu0 0.0
        %1808 = vmatpush1.msra.mxu0 %v1749
        %1809 = vmatprep.subr.mxu0 0.0
        %1810 = vmatpush1.msra.mxu0 %v1750
        %1811 = vmatprep.subr.mxu0 0.0
        %1812 = vmatpush1.msra.mxu0 %v1751
        %1813 = vmatprep.subr.mxu0 0.0
        %1814 = vmatpush1.msra.mxu0 %v1752
        %1815 = vmatprep.subr.mxu0 0.0
        %1816 = vmatpush1.msra.mxu0 %v1753
        %1817 = vmatprep.subr.mxu0 0.0
        %1818 = vmatpush1.msra.mxu0 %v1754
        %1819 = vmatprep.subr.mxu0 0.0
        %1820 = vmatpush1.msra.mxu0 0.0
        %1821 = vmatprep.subr.mxu0 0.0
        %1822 = vmatpush1.msra.mxu0 0.0
        %1823 = vmatprep.subr.mxu0 0.0
        %1824 = vmatpush1.msra.mxu0 0.0
        %1825 = vmatprep.subr.mxu0 0.0
        %1826 = vmatpush1.msra.mxu0 0.0
        %1827 = vmatprep.subr.mxu0 0.0
        %1828 = vmatpush1.msra.mxu0 0.0
        %1829 = vmatprep.subr.mxu0 0.0
        %1830 = vmatpush1.msra.mxu0 0.0
        %1831 = vmatprep.subr.mxu0 0.0
        %1832 = vmatpush1.msra.mxu0 0.0
        %1833 = vmatprep.subr.mxu0 0.0
        %1834 = vmatpush1.msra.mxu0 0.0
        %1835 = vmatprep.subr.mxu0 0.0
        %1836 = vmatpush1.msra.mxu0 0.0
        %1837 = vmatprep.subr.mxu0 0.0
        %1838 = vmatpush1.msra.mxu0 0.0
        %1839 = vmatprep.subr.mxu0 0.0
        %1840 = vmatpush1.msra.mxu0 0.0
        %1841 = vmatprep.subr.mxu0 0.0
        %1842 = vmatpush1.msra.mxu0 0.0
        %1843 = vmatprep.subr.mxu0 0.0
        %1844 = vmatpush1.msra.mxu0 0.0
        %1845 = vmatprep.subr.mxu0 0.0
        %1846 = vmatpush1.msra.mxu0 0.0
        %1847 = vmatprep.subr.mxu0 0.0
        %1848 = vmatpush1.msra.mxu0 0.0
        %1849 = vmatprep.subr.mxu0 0.0
        %1850 = vmatpush1.msra.mxu0 0.0
        %1851 = vmatprep.subr.mxu0 0.0
        %1852 = vmatpush1.msra.mxu0 0.0
        %1853 = vmatprep.subr.mxu0 0.0
        %1854 = vmatpush1.msra.mxu0 0.0
        %1855 = vmatprep.subr.mxu0 0.0
        %1856 = vmatpush1.msra.mxu0 0.0
        %1857 = vmatprep.subr.mxu0 0.0
        %1858 = vmatpush1.msra.mxu0 0.0
        %1859 = vmatprep.subr.mxu0 0.0
        %1860 = vmatpush1.msra.mxu0 0.0
        %1861 = vmatprep.subr.mxu0 0.0
        %1862 = vmatpush1.msra.mxu0 0.0
        %1863 = vmatprep.subr.mxu0 0.0
        %1864 = vmatpush1.msra.mxu0 0.0
        %1865 = vmatprep.subr.mxu0 0.0
        %1866 = vmatpush1.msra.mxu0 0.0
        %1867 = vmatprep.mubr.f32.mxu0 0.0
        %1868 = vmatmul.mubr.f32.gmra.mrb[0].mxu0 %v1756
        %v1869 = vpop.f32.mrb[0].mxu0
        %v1870 = vadd.f32 0.0, %v1869
        %v1871 = vpop.f32.mrb[0].mxu0
        %1872 = vmatprep.mubr.f32.mxu0 0.0
        %1873 = vmatmul.mubr.f32.gmra.mrb[0].mxu0 %v1759
        %v1874 = vpop.f32.mrb[0].mxu0
        %v1875 = vadd.f32 0.0, %v1874
        %v1876 = vpop.f32.mrb[0].mxu0
        %1877 = vmatprep.mubr.f32.mxu0 0.0
        %1878 = vmatmul.mubr.f32.gmra.mrb[0].mxu0 %v1762
        %v1879 = vpop.f32.mrb[0].mxu0
        %v1880 = vadd.f32 0.0, %v1879
        %v1881 = vpop.f32.mrb[0].mxu0
        %1882 = vmatprep.mubr.f32.mxu0 0.0
        %1883 = vmatmul.mubr.f32.gmra.mrb[0].mxu0 %v1765
        %v1884 = vpop.f32.mrb[0].mxu0
        %v1885 = vadd.f32 0.0, %v1884
        %v1886 = vpop.f32.mrb[0].mxu0
        %1887 = vmatprep.mubr.f32.mxu0 0.0
        %1888 = vmatmul.mubr.f32.gmra.mrb[0].mxu0 %v1768
        %v1889 = vpop.f32.mrb[0].mxu0
        %v1890 = vadd.f32 0.0, %v1889
        %v1891 = vpop.f32.mrb[0].mxu0
        %1892 = vmatprep.mubr.f32.mxu0 0.0
        %1893 = vmatmul.mubr.f32.gmra.mrb[0].mxu0 %v1771
        %v1894 = vpop.f32.mrb[0].mxu0
        %v1895 = vadd.f32 0.0, %v1894
        %v1896 = vpop.f32.mrb[0].mxu0
        %1897 = vmatprep.mubr.f32.mxu0 0.0
        %1898 = vmatmul.mubr.f32.gmra.mrb[0].mxu0 %v1774
        %v1899 = vpop.f32.mrb[0].mxu0
        %v1900 = vadd.f32 0.0, %v1899
        %v1901 = vpop.f32.mrb[0].mxu0
        %1902 = vmatprep.mubr.f32.mxu0 0.0
        %1903 = vmatmul.mubr.f32.gmra.mrb[0].mxu0 %v1777
        %v1904 = vpop.f32.mrb[0].mxu0
        %v1905 = vadd.f32 0.0, %v1904
        %v1906 = vpop.f32.mrb[0].mxu0
        %1907 = vmatprep.mubr.f32.mxu0 0.0
        %1908 = vmatmul.mubr.f32.gmra.mrb[0].mxu0 %v1780
        %v1909 = vpop.f32.mrb[0].mxu0
        %v1910 = vadd.f32 0.0, %v1909
        %v1911 = vpop.f32.mrb[0].mxu0
        %1912 = vmatprep.mubr.f32.mxu0 0.0
        %1913 = vmatmul.mubr.f32.gmra.mrb[0].mxu0 %v1783
        %v1914 = vpop.f32.mrb[0].mxu0
        %v1915 = vadd.f32 0.0, %v1914
        %v1916 = vpop.f32.mrb[0].mxu0
        %1917 = vmatprep.mubr.f32.mxu0 0.0
        %1918 = vmatmul.mubr.f32.gmra.mrb[0].mxu0 %v1786
        %v1919 = vpop.f32.mrb[0].mxu0
        %v1920 = vadd.f32 0.0, %v1919
        %v1921 = vpop.f32.mrb[0].mxu0
        %1922 = vmatprep.mubr.f32.mxu0 0.0
        %1923 = vmatmul.mubr.f32.gmra.mrb[0].mxu0 %v1789
        %v1924 = vpop.f32.mrb[0].mxu0
        %v1925 = vadd.f32 0.0, %v1924
        %v1926 = vpop.f32.mrb[0].mxu0
        %1927 = vmatprep.mubr.f32.mxu0 0.0
        %1928 = vmatmul.mubr.f32.gmra.mrb[0].mxu0 %v1792
        %v1929 = vpop.f32.mrb[0].mxu0
        %v1930 = vadd.f32 0.0, %v1929
        %v1931 = vpop.f32.mrb[0].mxu0
        %1932 = vmatprep.mubr.f32.mxu0 0.0
        %1933 = vmatmul.mubr.f32.gmra.mrb[0].mxu0 %v1795
        %v1934 = vpop.f32.mrb[0].mxu0
        %v1935 = vadd.f32 0.0, %v1934
        %v1936 = vpop.f32.mrb[0].mxu0
        %1937 = vmatprep.mubr.f32.mxu0 0.0
        %1938 = vmatmul.mubr.f32.gmra.mrb[0].mxu0 %v1798
        %v1939 = vpop.f32.mrb[0].mxu0
        %v1940 = vadd.f32 0.0, %v1939
        %v1941 = vpop.f32.mrb[0].mxu0
        %1942 = vmatprep.mubr.f32.mxu0 0.0
        %1943 = vmatmul.mubr.f32.gmra.mrb[0].mxu0 %v1801
        %v1944 = vpop.f32.mrb[0].mxu0
        %v1945 = vadd.f32 0.0, %v1944
        %v1946 = vpop.f32.mrb[0].mxu0
        %1947 = vdwg.mxu0
        %1964 = vrot.lane.b32.xlu0 %v1870, 8
        %v1965 = vpop.permute.xlu0 %1964
        %1966 = vrot.lane.b32.xlu0 %v1875, 8
        %v1967 = vpop.permute.xlu0 %1966
        %1968 = vrot.lane.b32.xlu0 %v1880, 8
        %v1969 = vpop.permute.xlu0 %1968
        %1970 = vrot.lane.b32.xlu0 %v1885, 8
        %v1971 = vpop.permute.xlu0 %1970
        %1972 = vrot.lane.b32.xlu0 %v1890, 8
        %v1973 = vpop.permute.xlu0 %1972
        %1974 = vrot.lane.b32.xlu0 %v1895, 8
        %v1975 = vpop.permute.xlu0 %1974
        %1976 = vrot.lane.b32.xlu0 %v1900, 8
        %v1977 = vpop.permute.xlu0 %1976
        %1978 = vrot.lane.b32.xlu0 %v1905, 8
        %v1979 = vpop.permute.xlu0 %1978
        %1980 = vrot.lane.b32.xlu0 %v1910, 8
        %v1981 = vpop.permute.xlu0 %1980
        %1982 = vrot.lane.b32.xlu0 %v1915, 8
        %v1983 = vpop.permute.xlu0 %1982
        %1984 = vrot.lane.b32.xlu0 %v1920, 8
        %v1985 = vpop.permute.xlu0 %1984
        %1986 = vrot.lane.b32.xlu0 %v1925, 8
        %v1987 = vpop.permute.xlu0 %1986
        %1988 = vrot.lane.b32.xlu0 %v1930, 8
        %v1989 = vpop.permute.xlu0 %1988
        %1990 = vrot.lane.b32.xlu0 %v1935, 8
        %v1991 = vpop.permute.xlu0 %1990
        %1992 = vrot.lane.b32.xlu0 %v1940, 8
        %v1993 = vpop.permute.xlu0 %1992
        %1994 = vrot.lane.b32.xlu0 %v1945, 8
        %v1995 = vpop.permute.xlu0 %1994
        %v2012 = vadd.f32 %v1714, %v1965
        %v2013 = vadd.f32 %v1715, %v1967
        %v2014 = vadd.f32 %v1716, %v1969
        %v2015 = vadd.f32 %v1717, %v1971
        %v2016 = vadd.f32 %v1718, %v1973
        %v2017 = vadd.f32 %v1719, %v1975
        %v2018 = vadd.f32 %v1720, %v1977
        %v2019 = vadd.f32 %v1721, %v1979
        %v2020 = vadd.f32 %v1722, %v1981
        %v2021 = vadd.f32 %v1723, %v1983
        %v2022 = vadd.f32 %v1724, %v1985
        %v2023 = vadd.f32 %v1725, %v1987
        %v2024 = vadd.f32 %v1726, %v1989
        %v2025 = vadd.f32 %v1727, %v1991
        %v2026 = vadd.f32 %v1728, %v1993
        %v2027 = vadd.f32 %v1729, %v1995
        %s2028 = sadd.s32 %s314, 4
        %s2029 = smul.u32 %s2028, 24
        %s2030 = scalar_lea.vmem %s302, %s2029
        %v2031 = vld [vmem:[%s2030 + $0x2] sm:$0xff]
        %v2032 = vld [vmem:[%s2030 + $0xa] sm:$0xff]
        %v2033 = vld [vmem:[%s2030 + $0x1a] sm:$0xff]
        %v2034 = vld [vmem:[%s2030 + $0x22] sm:$0xff]
        %v2035 = vld [vmem:[%s2030 + $0x32] sm:$0xff]
        %v2036 = vld [vmem:[%s2030 + $0x3a] sm:$0xff]
        %v2037 = vld [vmem:[%s2030 + $0x4a] sm:$0xff]
        %v2038 = vld [vmem:[%s2030 + $0x52] sm:$0xff]
        %v2039 = vld [vmem:[%s2030 + $0x62] sm:$0xff]
        %v2040 = vld [vmem:[%s2030 + $0x6a] sm:$0xff]
        %v2041 = vld [vmem:[%s2030 + $0x7a] sm:$0xff]
        %v2042 = vld [vmem:[%s2030 + $0x82] sm:$0xff]
        %v2043 = vld [vmem:[%s2030 + $0x92] sm:$0xff]
        %v2044 = vld [vmem:[%s2030 + $0x9a] sm:$0xff]
        %v2045 = vld [vmem:[%s2030 + $0xaa] sm:$0xff]
        %v2046 = vld [vmem:[%s2030 + $0xb2] sm:$0xff]
        %s2047 = scalar_lea.vmem %s2, 320
        %v2048 = vld [vmem:[%s2047] sm:$0xff]
        %v2049 = vld [vmem:[%s2047 + $0x8] sm:$0xff]
        %v2050 = vld [vmem:[%s2047 + $0x10] sm:$0xff]
        %v2051 = vld [vmem:[%s2047 + $0x18] sm:$0xff]
        %v2052 = vld [vmem:[%s2047 + $0x20] sm:$0xff]
        %v2053 = vld [vmem:[%s2047 + $0x28] sm:$0xff]
        %v2054 = vld [vmem:[%s2047 + $0x30] sm:$0xff]
        %v2055 = vld [vmem:[%s2047 + $0x38] sm:$0xff]
        %v2057 = vsel %vm342, %v2031, 0
        %v2060 = vsel %vm342, %v2032, 0
        %v2063 = vsel %vm342, %v2033, 0
        %v2066 = vsel %vm342, %v2034, 0
        %v2069 = vsel %vm342, %v2035, 0
        %v2072 = vsel %vm342, %v2036, 0
        %v2075 = vsel %vm342, %v2037, 0
        %v2078 = vsel %vm342, %v2038, 0
        %v2081 = vsel %vm342, %v2039, 0
        %v2084 = vsel %vm342, %v2040, 0
        %v2087 = vsel %vm342, %v2041, 0
        %v2090 = vsel %vm342, %v2042, 0
        %v2093 = vsel %vm342, %v2043, 0
        %v2096 = vsel %vm342, %v2044, 0
        %v2099 = vsel %vm342, %v2045, 0
        %v2102 = vsel %vm342, %v2046, 0
        %2104 = vmatprep.subr.mxu0 0.0
        %2105 = vmatpush1.msra.mxu0 %v2048
        %2106 = vmatprep.subr.mxu0 0.0
        %2107 = vmatpush1.msra.mxu0 %v2049
        %2108 = vmatprep.subr.mxu0 0.0
        %2109 = vmatpush1.msra.mxu0 %v2050
        %2110 = vmatprep.subr.mxu0 0.0
        %2111 = vmatpush1.msra.mxu0 %v2051
        %2112 = vmatprep.subr.mxu0 0.0
        %2113 = vmatpush1.msra.mxu0 %v2052
        %2114 = vmatprep.subr.mxu0 0.0
        %2115 = vmatpush1.msra.mxu0 %v2053
        %2116 = vmatprep.subr.mxu0 0.0
        %2117 = vmatpush1.msra.mxu0 %v2054
        %2118 = vmatprep.subr.mxu0 0.0
        %2119 = vmatpush1.msra.mxu0 %v2055
        %2120 = vmatprep.subr.mxu0 0.0
        %2121 = vmatpush1.msra.mxu0 0.0
        %2122 = vmatprep.subr.mxu0 0.0
        %2123 = vmatpush1.msra.mxu0 0.0
        %2124 = vmatprep.subr.mxu0 0.0
        %2125 = vmatpush1.msra.mxu0 0.0
        %2126 = vmatprep.subr.mxu0 0.0
        %2127 = vmatpush1.msra.mxu0 0.0
        %2128 = vmatprep.subr.mxu0 0.0
        %2129 = vmatpush1.msra.mxu0 0.0
        %2130 = vmatprep.subr.mxu0 0.0
        %2131 = vmatpush1.msra.mxu0 0.0
        %2132 = vmatprep.subr.mxu0 0.0
        %2133 = vmatpush1.msra.mxu0 0.0
        %2134 = vmatprep.subr.mxu0 0.0
        %2135 = vmatpush1.msra.mxu0 0.0
        %2136 = vmatprep.subr.mxu0 0.0
        %2137 = vmatpush1.msra.mxu0 0.0
        %2138 = vmatprep.subr.mxu0 0.0
        %2139 = vmatpush1.msra.mxu0 0.0
        %2140 = vmatprep.subr.mxu0 0.0
        %2141 = vmatpush1.msra.mxu0 0.0
        %2142 = vmatprep.subr.mxu0 0.0
        %2143 = vmatpush1.msra.mxu0 0.0
        %2144 = vmatprep.subr.mxu0 0.0
        %2145 = vmatpush1.msra.mxu0 0.0
        %2146 = vmatprep.subr.mxu0 0.0
        %2147 = vmatpush1.msra.mxu0 0.0
        %2148 = vmatprep.subr.mxu0 0.0
        %2149 = vmatpush1.msra.mxu0 0.0
        %2150 = vmatprep.subr.mxu0 0.0
        %2151 = vmatpush1.msra.mxu0 0.0
        %2152 = vmatprep.subr.mxu0 0.0
        %2153 = vmatpush1.msra.mxu0 0.0
        %2154 = vmatprep.subr.mxu0 0.0
        %2155 = vmatpush1.msra.mxu0 0.0
        %2156 = vmatprep.subr.mxu0 0.0
        %2157 = vmatpush1.msra.mxu0 0.0
        %2158 = vmatprep.subr.mxu0 0.0
        %2159 = vmatpush1.msra.mxu0 0.0
        %2160 = vmatprep.subr.mxu0 0.0
        %2161 = vmatpush1.msra.mxu0 0.0
        %2162 = vmatprep.subr.mxu0 0.0
        %2163 = vmatpush1.msra.mxu0 0.0
        %2164 = vmatprep.subr.mxu0 0.0
        %2165 = vmatpush1.msra.mxu0 0.0
        %2166 = vmatprep.subr.mxu0 0.0
        %2167 = vmatpush1.msra.mxu0 0.0
        %2168 = vmatprep.mubr.f32.mxu0 0.0
        %2169 = vmatmul.mubr.f32.gmra.mrb[0].mxu0 %v2057
        %v2170 = vpop.f32.mrb[0].mxu0
        %v2171 = vadd.f32 0.0, %v2170
        %v2172 = vpop.f32.mrb[0].mxu0
        %2173 = vmatprep.mubr.f32.mxu0 0.0
        %2174 = vmatmul.mubr.f32.gmra.mrb[0].mxu0 %v2060
        %v2175 = vpop.f32.mrb[0].mxu0
        %v2176 = vadd.f32 0.0, %v2175
        %v2177 = vpop.f32.mrb[0].mxu0
        %2178 = vmatprep.mubr.f32.mxu0 0.0
        %2179 = vmatmul.mubr.f32.gmra.mrb[0].mxu0 %v2063
        %v2180 = vpop.f32.mrb[0].mxu0
        %v2181 = vadd.f32 0.0, %v2180
        %v2182 = vpop.f32.mrb[0].mxu0
        %2183 = vmatprep.mubr.f32.mxu0 0.0
        %2184 = vmatmul.mubr.f32.gmra.mrb[0].mxu0 %v2066
        %v2185 = vpop.f32.mrb[0].mxu0
        %v2186 = vadd.f32 0.0, %v2185
        %v2187 = vpop.f32.mrb[0].mxu0
        %2188 = vmatprep.mubr.f32.mxu0 0.0
        %2189 = vmatmul.mubr.f32.gmra.mrb[0].mxu0 %v2069
        %v2190 = vpop.f32.mrb[0].mxu0
        %v2191 = vadd.f32 0.0, %v2190
        %v2192 = vpop.f32.mrb[0].mxu0
        %2193 = vmatprep.mubr.f32.mxu0 0.0
        %2194 = vmatmul.mubr.f32.gmra.mrb[0].mxu0 %v2072
        %v2195 = vpop.f32.mrb[0].mxu0
        %v2196 = vadd.f32 0.0, %v2195
        %v2197 = vpop.f32.mrb[0].mxu0
        %2198 = vmatprep.mubr.f32.mxu0 0.0
        %2199 = vmatmul.mubr.f32.gmra.mrb[0].mxu0 %v2075
        %v2200 = vpop.f32.mrb[0].mxu0
        %v2201 = vadd.f32 0.0, %v2200
        %v2202 = vpop.f32.mrb[0].mxu0
        %2203 = vmatprep.mubr.f32.mxu0 0.0
        %2204 = vmatmul.mubr.f32.gmra.mrb[0].mxu0 %v2078
        %v2205 = vpop.f32.mrb[0].mxu0
        %v2206 = vadd.f32 0.0, %v2205
        %v2207 = vpop.f32.mrb[0].mxu0
        %2208 = vmatprep.mubr.f32.mxu0 0.0
        %2209 = vmatmul.mubr.f32.gmra.mrb[0].mxu0 %v2081
        %v2210 = vpop.f32.mrb[0].mxu0
        %v2211 = vadd.f32 0.0, %v2210
        %v2212 = vpop.f32.mrb[0].mxu0
        %2213 = vmatprep.mubr.f32.mxu0 0.0
        %2214 = vmatmul.mubr.f32.gmra.mrb[0].mxu0 %v2084
        %v2215 = vpop.f32.mrb[0].mxu0
        %v2216 = vadd.f32 0.0, %v2215
        %v2217 = vpop.f32.mrb[0].mxu0
        %2218 = vmatprep.mubr.f32.mxu0 0.0
        %2219 = vmatmul.mubr.f32.gmra.mrb[0].mxu0 %v2087
        %v2220 = vpop.f32.mrb[0].mxu0
        %v2221 = vadd.f32 0.0, %v2220
        %v2222 = vpop.f32.mrb[0].mxu0
        %2223 = vmatprep.mubr.f32.mxu0 0.0
        %2224 = vmatmul.mubr.f32.gmra.mrb[0].mxu0 %v2090
        %v2225 = vpop.f32.mrb[0].mxu0
        %v2226 = vadd.f32 0.0, %v2225
        %v2227 = vpop.f32.mrb[0].mxu0
        %2228 = vmatprep.mubr.f32.mxu0 0.0
        %2229 = vmatmul.mubr.f32.gmra.mrb[0].mxu0 %v2093
        %v2230 = vpop.f32.mrb[0].mxu0
        %v2231 = vadd.f32 0.0, %v2230
        %v2232 = vpop.f32.mrb[0].mxu0
        %2233 = vmatprep.mubr.f32.mxu0 0.0
        %2234 = vmatmul.mubr.f32.gmra.mrb[0].mxu0 %v2096
        %v2235 = vpop.f32.mrb[0].mxu0
        %v2236 = vadd.f32 0.0, %v2235
        %v2237 = vpop.f32.mrb[0].mxu0
        %2238 = vmatprep.mubr.f32.mxu0 0.0
        %2239 = vmatmul.mubr.f32.gmra.mrb[0].mxu0 %v2099
        %v2240 = vpop.f32.mrb[0].mxu0
        %v2241 = vadd.f32 0.0, %v2240
        %v2242 = vpop.f32.mrb[0].mxu0
        %2243 = vmatprep.mubr.f32.mxu0 0.0
        %2244 = vmatmul.mubr.f32.gmra.mrb[0].mxu0 %v2102
        %v2245 = vpop.f32.mrb[0].mxu0
        %v2246 = vadd.f32 0.0, %v2245
        %v2247 = vpop.f32.mrb[0].mxu0
        %2248 = vdwg.mxu0
        %2265 = vrot.lane.b32.xlu0 %v2171, 8
        %v2266 = vpop.permute.xlu0 %2265
        %2267 = vrot.lane.b32.xlu0 %v2176, 8
        %v2268 = vpop.permute.xlu0 %2267
        %2269 = vrot.lane.b32.xlu0 %v2181, 8
        %v2270 = vpop.permute.xlu0 %2269
        %2271 = vrot.lane.b32.xlu0 %v2186, 8
        %v2272 = vpop.permute.xlu0 %2271
        %2273 = vrot.lane.b32.xlu0 %v2191, 8
        %v2274 = vpop.permute.xlu0 %2273
        %2275 = vrot.lane.b32.xlu0 %v2196, 8
        %v2276 = vpop.permute.xlu0 %2275
        %2277 = vrot.lane.b32.xlu0 %v2201, 8
        %v2278 = vpop.permute.xlu0 %2277
        %2279 = vrot.lane.b32.xlu0 %v2206, 8
        %v2280 = vpop.permute.xlu0 %2279
        %2281 = vrot.lane.b32.xlu0 %v2211, 8
        %v2282 = vpop.permute.xlu0 %2281
        %2283 = vrot.lane.b32.xlu0 %v2216, 8
        %v2284 = vpop.permute.xlu0 %2283
        %2285 = vrot.lane.b32.xlu0 %v2221, 8
        %v2286 = vpop.permute.xlu0 %2285
        %2287 = vrot.lane.b32.xlu0 %v2226, 8
        %v2288 = vpop.permute.xlu0 %2287
        %2289 = vrot.lane.b32.xlu0 %v2231, 8
        %v2290 = vpop.permute.xlu0 %2289
        %2291 = vrot.lane.b32.xlu0 %v2236, 8
        %v2292 = vpop.permute.xlu0 %2291
        %2293 = vrot.lane.b32.xlu0 %v2241, 8
        %v2294 = vpop.permute.xlu0 %2293
        %2295 = vrot.lane.b32.xlu0 %v2246, 8
        %v2296 = vpop.permute.xlu0 %2295
        %v2313 = vadd.f32 %v2012, %v2266
        %v2314 = vadd.f32 %v2013, %v2268
        %v2315 = vadd.f32 %v2014, %v2270
        %v2316 = vadd.f32 %v2015, %v2272
        %v2317 = vadd.f32 %v2016, %v2274
        %v2318 = vadd.f32 %v2017, %v2276
        %v2319 = vadd.f32 %v2018, %v2278
        %v2320 = vadd.f32 %v2019, %v2280
        %v2321 = vadd.f32 %v2020, %v2282
        %v2322 = vadd.f32 %v2021, %v2284
        %v2323 = vadd.f32 %v2022, %v2286
        %v2324 = vadd.f32 %v2023, %v2288
        %v2325 = vadd.f32 %v2024, %v2290
        %v2326 = vadd.f32 %v2025, %v2292
        %v2327 = vadd.f32 %v2026, %v2294
        %v2328 = vadd.f32 %v2027, %v2296
        %v2329 = vld [vmem:[%s2030 + $0x3] sm:$0xff]
        %v2330 = vld [vmem:[%s2030 + $0xb] sm:$0xff]
        %v2331 = vld [vmem:[%s2030 + $0x1b] sm:$0xff]
        %v2332 = vld [vmem:[%s2030 + $0x23] sm:$0xff]
        %v2333 = vld [vmem:[%s2030 + $0x33] sm:$0xff]
        %v2334 = vld [vmem:[%s2030 + $0x3b] sm:$0xff]
        %v2335 = vld [vmem:[%s2030 + $0x4b] sm:$0xff]
        %v2336 = vld [vmem:[%s2030 + $0x53] sm:$0xff]
        %v2337 = vld [vmem:[%s2030 + $0x63] sm:$0xff]
        %v2338 = vld [vmem:[%s2030 + $0x6b] sm:$0xff]
        %v2339 = vld [vmem:[%s2030 + $0x7b] sm:$0xff]
        %v2340 = vld [vmem:[%s2030 + $0x83] sm:$0xff]
        %v2341 = vld [vmem:[%s2030 + $0x93] sm:$0xff]
        %v2342 = vld [vmem:[%s2030 + $0x9b] sm:$0xff]
        %v2343 = vld [vmem:[%s2030 + $0xab] sm:$0xff]
        %v2344 = vld [vmem:[%s2030 + $0xb3] sm:$0xff]
        %s2345 = scalar_lea.vmem %s2, 384
        %v2346 = vld [vmem:[%s2345] sm:$0xff]
        %v2347 = vld [vmem:[%s2345 + $0x8] sm:$0xff]
        %v2348 = vld [vmem:[%s2345 + $0x10] sm:$0xff]
        %v2349 = vld [vmem:[%s2345 + $0x18] sm:$0xff]
        %v2350 = vld [vmem:[%s2345 + $0x20] sm:$0xff]
        %v2351 = vld [vmem:[%s2345 + $0x28] sm:$0xff]
        %v2352 = vld [vmem:[%s2345 + $0x30] sm:$0xff]
        %v2353 = vld [vmem:[%s2345 + $0x38] sm:$0xff]
        %v2355 = vsel %vm342, %v2329, 0
        %v2358 = vsel %vm342, %v2330, 0
        %v2361 = vsel %vm342, %v2331, 0
        %v2364 = vsel %vm342, %v2332, 0
        %v2367 = vsel %vm342, %v2333, 0
        %v2370 = vsel %vm342, %v2334, 0
        %v2373 = vsel %vm342, %v2335, 0
        %v2376 = vsel %vm342, %v2336, 0
        %v2379 = vsel %vm342, %v2337, 0
        %v2382 = vsel %vm342, %v2338, 0
        %v2385 = vsel %vm342, %v2339, 0
        %v2388 = vsel %vm342, %v2340, 0
        %v2391 = vsel %vm342, %v2341, 0
        %v2394 = vsel %vm342, %v2342, 0
        %v2397 = vsel %vm342, %v2343, 0
        %v2400 = vsel %vm342, %v2344, 0
        %2402 = vmatprep.subr.mxu0 0.0
        %2403 = vmatpush1.msra.mxu0 %v2346
        %2404 = vmatprep.subr.mxu0 0.0
        %2405 = vmatpush1.msra.mxu0 %v2347
        %2406 = vmatprep.subr.mxu0 0.0
        %2407 = vmatpush1.msra.mxu0 %v2348
        %2408 = vmatprep.subr.mxu0 0.0
        %2409 = vmatpush1.msra.mxu0 %v2349
        %2410 = vmatprep.subr.mxu0 0.0
        %2411 = vmatpush1.msra.mxu0 %v2350
        %2412 = vmatprep.subr.mxu0 0.0
        %2413 = vmatpush1.msra.mxu0 %v2351
        %2414 = vmatprep.subr.mxu0 0.0
        %2415 = vmatpush1.msra.mxu0 %v2352
        %2416 = vmatprep.subr.mxu0 0.0
        %2417 = vmatpush1.msra.mxu0 %v2353
        %2418 = vmatprep.subr.mxu0 0.0
        %2419 = vmatpush1.msra.mxu0 0.0
        %2420 = vmatprep.subr.mxu0 0.0
        %2421 = vmatpush1.msra.mxu0 0.0
        %2422 = vmatprep.subr.mxu0 0.0
        %2423 = vmatpush1.msra.mxu0 0.0
        %2424 = vmatprep.subr.mxu0 0.0
        %2425 = vmatpush1.msra.mxu0 0.0
        %2426 = vmatprep.subr.mxu0 0.0
        %2427 = vmatpush1.msra.mxu0 0.0
        %2428 = vmatprep.subr.mxu0 0.0
        %2429 = vmatpush1.msra.mxu0 0.0
        %2430 = vmatprep.subr.mxu0 0.0
        %2431 = vmatpush1.msra.mxu0 0.0
        %2432 = vmatprep.subr.mxu0 0.0
        %2433 = vmatpush1.msra.mxu0 0.0
        %2434 = vmatprep.subr.mxu0 0.0
        %2435 = vmatpush1.msra.mxu0 0.0
        %2436 = vmatprep.subr.mxu0 0.0
        %2437 = vmatpush1.msra.mxu0 0.0
        %2438 = vmatprep.subr.mxu0 0.0
        %2439 = vmatpush1.msra.mxu0 0.0
        %2440 = vmatprep.subr.mxu0 0.0
        %2441 = vmatpush1.msra.mxu0 0.0
        %2442 = vmatprep.subr.mxu0 0.0
        %2443 = vmatpush1.msra.mxu0 0.0
        %2444 = vmatprep.subr.mxu0 0.0
        %2445 = vmatpush1.msra.mxu0 0.0
        %2446 = vmatprep.subr.mxu0 0.0
        %2447 = vmatpush1.msra.mxu0 0.0
        %2448 = vmatprep.subr.mxu0 0.0
        %2449 = vmatpush1.msra.mxu0 0.0
        %2450 = vmatprep.subr.mxu0 0.0
        %2451 = vmatpush1.msra.mxu0 0.0
        %2452 = vmatprep.subr.mxu0 0.0
        %2453 = vmatpush1.msra.mxu0 0.0
        %2454 = vmatprep.subr.mxu0 0.0
        %2455 = vmatpush1.msra.mxu0 0.0
        %2456 = vmatprep.subr.mxu0 0.0
        %2457 = vmatpush1.msra.mxu0 0.0
        %2458 = vmatprep.subr.mxu0 0.0
        %2459 = vmatpush1.msra.mxu0 0.0
        %2460 = vmatprep.subr.mxu0 0.0
        %2461 = vmatpush1.msra.mxu0 0.0
        %2462 = vmatprep.subr.mxu0 0.0
        %2463 = vmatpush1.msra.mxu0 0.0
        %2464 = vmatprep.subr.mxu0 0.0
        %2465 = vmatpush1.msra.mxu0 0.0
        %2466 = vmatprep.mubr.f32.mxu0 0.0
        %2467 = vmatmul.mubr.f32.gmra.mrb[0].mxu0 %v2355
        %v2468 = vpop.f32.mrb[0].mxu0
        %v2469 = vadd.f32 0.0, %v2468
        %v2470 = vpop.f32.mrb[0].mxu0
        %2471 = vmatprep.mubr.f32.mxu0 0.0
        %2472 = vmatmul.mubr.f32.gmra.mrb[0].mxu0 %v2358
        %v2473 = vpop.f32.mrb[0].mxu0
        %v2474 = vadd.f32 0.0, %v2473
        %v2475 = vpop.f32.mrb[0].mxu0
        %2476 = vmatprep.mubr.f32.mxu0 0.0
        %2477 = vmatmul.mubr.f32.gmra.mrb[0].mxu0 %v2361
        %v2478 = vpop.f32.mrb[0].mxu0
        %v2479 = vadd.f32 0.0, %v2478
        %v2480 = vpop.f32.mrb[0].mxu0
        %2481 = vmatprep.mubr.f32.mxu0 0.0
        %2482 = vmatmul.mubr.f32.gmra.mrb[0].mxu0 %v2364
        %v2483 = vpop.f32.mrb[0].mxu0
        %v2484 = vadd.f32 0.0, %v2483
        %v2485 = vpop.f32.mrb[0].mxu0
        %2486 = vmatprep.mubr.f32.mxu0 0.0
        %2487 = vmatmul.mubr.f32.gmra.mrb[0].mxu0 %v2367
        %v2488 = vpop.f32.mrb[0].mxu0
        %v2489 = vadd.f32 0.0, %v2488
        %v2490 = vpop.f32.mrb[0].mxu0
        %2491 = vmatprep.mubr.f32.mxu0 0.0
        %2492 = vmatmul.mubr.f32.gmra.mrb[0].mxu0 %v2370
        %v2493 = vpop.f32.mrb[0].mxu0
        %v2494 = vadd.f32 0.0, %v2493
        %v2495 = vpop.f32.mrb[0].mxu0
        %2496 = vmatprep.mubr.f32.mxu0 0.0
        %2497 = vmatmul.mubr.f32.gmra.mrb[0].mxu0 %v2373
        %v2498 = vpop.f32.mrb[0].mxu0
        %v2499 = vadd.f32 0.0, %v2498
        %v2500 = vpop.f32.mrb[0].mxu0
        %2501 = vmatprep.mubr.f32.mxu0 0.0
        %2502 = vmatmul.mubr.f32.gmra.mrb[0].mxu0 %v2376
        %v2503 = vpop.f32.mrb[0].mxu0
        %v2504 = vadd.f32 0.0, %v2503
        %v2505 = vpop.f32.mrb[0].mxu0
        %2506 = vmatprep.mubr.f32.mxu0 0.0
        %2507 = vmatmul.mubr.f32.gmra.mrb[0].mxu0 %v2379
        %v2508 = vpop.f32.mrb[0].mxu0
        %v2509 = vadd.f32 0.0, %v2508
        %v2510 = vpop.f32.mrb[0].mxu0
        %2511 = vmatprep.mubr.f32.mxu0 0.0
        %2512 = vmatmul.mubr.f32.gmra.mrb[0].mxu0 %v2382
        %v2513 = vpop.f32.mrb[0].mxu0
        %v2514 = vadd.f32 0.0, %v2513
        %v2515 = vpop.f32.mrb[0].mxu0
        %2516 = vmatprep.mubr.f32.mxu0 0.0
        %2517 = vmatmul.mubr.f32.gmra.mrb[0].mxu0 %v2385
        %v2518 = vpop.f32.mrb[0].mxu0
        %v2519 = vadd.f32 0.0, %v2518
        %v2520 = vpop.f32.mrb[0].mxu0
        %2521 = vmatprep.mubr.f32.mxu0 0.0
        %2522 = vmatmul.mubr.f32.gmra.mrb[0].mxu0 %v2388
        %v2523 = vpop.f32.mrb[0].mxu0
        %v2524 = vadd.f32 0.0, %v2523
        %v2525 = vpop.f32.mrb[0].mxu0
        %2526 = vmatprep.mubr.f32.mxu0 0.0
        %2527 = vmatmul.mubr.f32.gmra.mrb[0].mxu0 %v2391
        %v2528 = vpop.f32.mrb[0].mxu0
        %v2529 = vadd.f32 0.0, %v2528
        %v2530 = vpop.f32.mrb[0].mxu0
        %2531 = vmatprep.mubr.f32.mxu0 0.0
        %2532 = vmatmul.mubr.f32.gmra.mrb[0].mxu0 %v2394
        %v2533 = vpop.f32.mrb[0].mxu0
        %v2534 = vadd.f32 0.0, %v2533
        %v2535 = vpop.f32.mrb[0].mxu0
        %2536 = vmatprep.mubr.f32.mxu0 0.0
        %2537 = vmatmul.mubr.f32.gmra.mrb[0].mxu0 %v2397
        %v2538 = vpop.f32.mrb[0].mxu0
        %v2539 = vadd.f32 0.0, %v2538
        %v2540 = vpop.f32.mrb[0].mxu0
        %2541 = vmatprep.mubr.f32.mxu0 0.0
        %2542 = vmatmul.mubr.f32.gmra.mrb[0].mxu0 %v2400
        %v2543 = vpop.f32.mrb[0].mxu0
        %v2544 = vadd.f32 0.0, %v2543
        %v2545 = vpop.f32.mrb[0].mxu0
        %2546 = vdwg.mxu0
        %2563 = vrot.lane.b32.xlu0 %v2469, 8
        %v2564 = vpop.permute.xlu0 %2563
        %2565 = vrot.lane.b32.xlu0 %v2474, 8
        %v2566 = vpop.permute.xlu0 %2565
        %2567 = vrot.lane.b32.xlu0 %v2479, 8
        %v2568 = vpop.permute.xlu0 %2567
        %2569 = vrot.lane.b32.xlu0 %v2484, 8
        %v2570 = vpop.permute.xlu0 %2569
        %2571 = vrot.lane.b32.xlu0 %v2489, 8
        %v2572 = vpop.permute.xlu0 %2571
        %2573 = vrot.lane.b32.xlu0 %v2494, 8
        %v2574 = vpop.permute.xlu0 %2573
        %2575 = vrot.lane.b32.xlu0 %v2499, 8
        %v2576 = vpop.permute.xlu0 %2575
        %2577 = vrot.lane.b32.xlu0 %v2504, 8
        %v2578 = vpop.permute.xlu0 %2577
        %2579 = vrot.lane.b32.xlu0 %v2509, 8
        %v2580 = vpop.permute.xlu0 %2579
        %2581 = vrot.lane.b32.xlu0 %v2514, 8
        %v2582 = vpop.permute.xlu0 %2581
        %2583 = vrot.lane.b32.xlu0 %v2519, 8
        %v2584 = vpop.permute.xlu0 %2583
        %2585 = vrot.lane.b32.xlu0 %v2524, 8
        %v2586 = vpop.permute.xlu0 %2585
        %2587 = vrot.lane.b32.xlu0 %v2529, 8
        %v2588 = vpop.permute.xlu0 %2587
        %2589 = vrot.lane.b32.xlu0 %v2534, 8
        %v2590 = vpop.permute.xlu0 %2589
        %2591 = vrot.lane.b32.xlu0 %v2539, 8
        %v2592 = vpop.permute.xlu0 %2591
        %2593 = vrot.lane.b32.xlu0 %v2544, 8
        %v2594 = vpop.permute.xlu0 %2593
        %v2611 = vadd.f32 %v2313, %v2564
        %v2612 = vadd.f32 %v2314, %v2566
        %v2613 = vadd.f32 %v2315, %v2568
        %v2614 = vadd.f32 %v2316, %v2570
        %v2615 = vadd.f32 %v2317, %v2572
        %v2616 = vadd.f32 %v2318, %v2574
        %v2617 = vadd.f32 %v2319, %v2576
        %v2618 = vadd.f32 %v2320, %v2578
        %v2619 = vadd.f32 %v2321, %v2580
        %v2620 = vadd.f32 %v2322, %v2582
        %v2621 = vadd.f32 %v2323, %v2584
        %v2622 = vadd.f32 %v2324, %v2586
        %v2623 = vadd.f32 %v2325, %v2588
        %v2624 = vadd.f32 %v2326, %v2590
        %v2625 = vadd.f32 %v2327, %v2592
        %v2626 = vadd.f32 %v2328, %v2594
        %v2627 = vld [vmem:[%s2030 + $0x4] sm:$0xff]
        %v2628 = vld [vmem:[%s2030 + $0xc] sm:$0xff]
        %v2629 = vld [vmem:[%s2030 + $0x1c] sm:$0xff]
        %v2630 = vld [vmem:[%s2030 + $0x24] sm:$0xff]
        %v2631 = vld [vmem:[%s2030 + $0x34] sm:$0xff]
        %v2632 = vld [vmem:[%s2030 + $0x3c] sm:$0xff]
        %v2633 = vld [vmem:[%s2030 + $0x4c] sm:$0xff]
        %v2634 = vld [vmem:[%s2030 + $0x54] sm:$0xff]
        %v2635 = vld [vmem:[%s2030 + $0x64] sm:$0xff]
        %v2636 = vld [vmem:[%s2030 + $0x6c] sm:$0xff]
        %v2637 = vld [vmem:[%s2030 + $0x7c] sm:$0xff]
        %v2638 = vld [vmem:[%s2030 + $0x84] sm:$0xff]
        %v2639 = vld [vmem:[%s2030 + $0x94] sm:$0xff]
        %v2640 = vld [vmem:[%s2030 + $0x9c] sm:$0xff]
        %v2641 = vld [vmem:[%s2030 + $0xac] sm:$0xff]
        %v2642 = vld [vmem:[%s2030 + $0xb4] sm:$0xff]
        %s2643 = scalar_lea.vmem %s2, 448
        %v2644 = vld [vmem:[%s2643] sm:$0xff]
        %v2645 = vld [vmem:[%s2643 + $0x8] sm:$0xff]
        %v2646 = vld [vmem:[%s2643 + $0x10] sm:$0xff]
        %v2647 = vld [vmem:[%s2643 + $0x18] sm:$0xff]
        %v2648 = vld [vmem:[%s2643 + $0x20] sm:$0xff]
        %v2649 = vld [vmem:[%s2643 + $0x28] sm:$0xff]
        %v2650 = vld [vmem:[%s2643 + $0x30] sm:$0xff]
        %v2651 = vld [vmem:[%s2643 + $0x38] sm:$0xff]
        %v2653 = vsel %vm342, %v2627, 0
        %v2656 = vsel %vm342, %v2628, 0
        %v2659 = vsel %vm342, %v2629, 0
        %v2662 = vsel %vm342, %v2630, 0
        %v2665 = vsel %vm342, %v2631, 0
        %v2668 = vsel %vm342, %v2632, 0
        %v2671 = vsel %vm342, %v2633, 0
        %v2674 = vsel %vm342, %v2634, 0
        %v2677 = vsel %vm342, %v2635, 0
        %v2680 = vsel %vm342, %v2636, 0
        %v2683 = vsel %vm342, %v2637, 0
        %v2686 = vsel %vm342, %v2638, 0
        %v2689 = vsel %vm342, %v2639, 0
        %v2692 = vsel %vm342, %v2640, 0
        %v2695 = vsel %vm342, %v2641, 0
        %v2698 = vsel %vm342, %v2642, 0
        %2700 = vmatprep.subr.mxu0 0.0
        %2701 = vmatpush1.msra.mxu0 %v2644
        %2702 = vmatprep.subr.mxu0 0.0
        %2703 = vmatpush1.msra.mxu0 %v2645
        %2704 = vmatprep.subr.mxu0 0.0
        %2705 = vmatpush1.msra.mxu0 %v2646
        %2706 = vmatprep.subr.mxu0 0.0
        %2707 = vmatpush1.msra.mxu0 %v2647
        %2708 = vmatprep.subr.mxu0 0.0
        %2709 = vmatpush1.msra.mxu0 %v2648
        %2710 = vmatprep.subr.mxu0 0.0
        %2711 = vmatpush1.msra.mxu0 %v2649
        %2712 = vmatprep.subr.mxu0 0.0
        %2713 = vmatpush1.msra.mxu0 %v2650
        %2714 = vmatprep.subr.mxu0 0.0
        %2715 = vmatpush1.msra.mxu0 %v2651
        %2716 = vmatprep.subr.mxu0 0.0
        %2717 = vmatpush1.msra.mxu0 0.0
        %2718 = vmatprep.subr.mxu0 0.0
        %2719 = vmatpush1.msra.mxu0 0.0
        %2720 = vmatprep.subr.mxu0 0.0
        %2721 = vmatpush1.msra.mxu0 0.0
        %2722 = vmatprep.subr.mxu0 0.0
        %2723 = vmatpush1.msra.mxu0 0.0
        %2724 = vmatprep.subr.mxu0 0.0
        %2725 = vmatpush1.msra.mxu0 0.0
        %2726 = vmatprep.subr.mxu0 0.0
        %2727 = vmatpush1.msra.mxu0 0.0
        %2728 = vmatprep.subr.mxu0 0.0
        %2729 = vmatpush1.msra.mxu0 0.0
        %2730 = vmatprep.subr.mxu0 0.0
        %2731 = vmatpush1.msra.mxu0 0.0
        %2732 = vmatprep.subr.mxu0 0.0
        %2733 = vmatpush1.msra.mxu0 0.0
        %2734 = vmatprep.subr.mxu0 0.0
        %2735 = vmatpush1.msra.mxu0 0.0
        %2736 = vmatprep.subr.mxu0 0.0
        %2737 = vmatpush1.msra.mxu0 0.0
        %2738 = vmatprep.subr.mxu0 0.0
        %2739 = vmatpush1.msra.mxu0 0.0
        %2740 = vmatprep.subr.mxu0 0.0
        %2741 = vmatpush1.msra.mxu0 0.0
        %2742 = vmatprep.subr.mxu0 0.0
        %2743 = vmatpush1.msra.mxu0 0.0
        %2744 = vmatprep.subr.mxu0 0.0
        %2745 = vmatpush1.msra.mxu0 0.0
        %2746 = vmatprep.subr.mxu0 0.0
        %2747 = vmatpush1.msra.mxu0 0.0
        %2748 = vmatprep.subr.mxu0 0.0
        %2749 = vmatpush1.msra.mxu0 0.0
        %2750 = vmatprep.subr.mxu0 0.0
        %2751 = vmatpush1.msra.mxu0 0.0
        %2752 = vmatprep.subr.mxu0 0.0
        %2753 = vmatpush1.msra.mxu0 0.0
        %2754 = vmatprep.subr.mxu0 0.0
        %2755 = vmatpush1.msra.mxu0 0.0
        %2756 = vmatprep.subr.mxu0 0.0
        %2757 = vmatpush1.msra.mxu0 0.0
        %2758 = vmatprep.subr.mxu0 0.0
        %2759 = vmatpush1.msra.mxu0 0.0
        %2760 = vmatprep.subr.mxu0 0.0
        %2761 = vmatpush1.msra.mxu0 0.0
        %2762 = vmatprep.subr.mxu0 0.0
        %2763 = vmatpush1.msra.mxu0 0.0
        %2764 = vmatprep.mubr.f32.mxu0 0.0
        %2765 = vmatmul.mubr.f32.gmra.mrb[0].mxu0 %v2653
        %v2766 = vpop.f32.mrb[0].mxu0
        %v2767 = vadd.f32 0.0, %v2766
        %v2768 = vpop.f32.mrb[0].mxu0
        %2769 = vmatprep.mubr.f32.mxu0 0.0
        %2770 = vmatmul.mubr.f32.gmra.mrb[0].mxu0 %v2656
        %v2771 = vpop.f32.mrb[0].mxu0
        %v2772 = vadd.f32 0.0, %v2771
        %v2773 = vpop.f32.mrb[0].mxu0
        %2774 = vmatprep.mubr.f32.mxu0 0.0
        %2775 = vmatmul.mubr.f32.gmra.mrb[0].mxu0 %v2659
        %v2776 = vpop.f32.mrb[0].mxu0
        %v2777 = vadd.f32 0.0, %v2776
        %v2778 = vpop.f32.mrb[0].mxu0
        %2779 = vmatprep.mubr.f32.mxu0 0.0
        %2780 = vmatmul.mubr.f32.gmra.mrb[0].mxu0 %v2662
        %v2781 = vpop.f32.mrb[0].mxu0
        %v2782 = vadd.f32 0.0, %v2781
        %v2783 = vpop.f32.mrb[0].mxu0
        %2784 = vmatprep.mubr.f32.mxu0 0.0
        %2785 = vmatmul.mubr.f32.gmra.mrb[0].mxu0 %v2665
        %v2786 = vpop.f32.mrb[0].mxu0
        %v2787 = vadd.f32 0.0, %v2786
        %v2788 = vpop.f32.mrb[0].mxu0
        %2789 = vmatprep.mubr.f32.mxu0 0.0
        %2790 = vmatmul.mubr.f32.gmra.mrb[0].mxu0 %v2668
        %v2791 = vpop.f32.mrb[0].mxu0
        %v2792 = vadd.f32 0.0, %v2791
        %v2793 = vpop.f32.mrb[0].mxu0
        %2794 = vmatprep.mubr.f32.mxu0 0.0
        %2795 = vmatmul.mubr.f32.gmra.mrb[0].mxu0 %v2671
        %v2796 = vpop.f32.mrb[0].mxu0
        %v2797 = vadd.f32 0.0, %v2796
        %v2798 = vpop.f32.mrb[0].mxu0
        %2799 = vmatprep.mubr.f32.mxu0 0.0
        %2800 = vmatmul.mubr.f32.gmra.mrb[0].mxu0 %v2674
        %v2801 = vpop.f32.mrb[0].mxu0
        %v2802 = vadd.f32 0.0, %v2801
        %v2803 = vpop.f32.mrb[0].mxu0
        %2804 = vmatprep.mubr.f32.mxu0 0.0
        %2805 = vmatmul.mubr.f32.gmra.mrb[0].mxu0 %v2677
        %v2806 = vpop.f32.mrb[0].mxu0
        %v2807 = vadd.f32 0.0, %v2806
        %v2808 = vpop.f32.mrb[0].mxu0
        %2809 = vmatprep.mubr.f32.mxu0 0.0
        %2810 = vmatmul.mubr.f32.gmra.mrb[0].mxu0 %v2680
        %v2811 = vpop.f32.mrb[0].mxu0
        %v2812 = vadd.f32 0.0, %v2811
        %v2813 = vpop.f32.mrb[0].mxu0
        %2814 = vmatprep.mubr.f32.mxu0 0.0
        %2815 = vmatmul.mubr.f32.gmra.mrb[0].mxu0 %v2683
        %v2816 = vpop.f32.mrb[0].mxu0
        %v2817 = vadd.f32 0.0, %v2816
        %v2818 = vpop.f32.mrb[0].mxu0
        %2819 = vmatprep.mubr.f32.mxu0 0.0
        %2820 = vmatmul.mubr.f32.gmra.mrb[0].mxu0 %v2686
        %v2821 = vpop.f32.mrb[0].mxu0
        %v2822 = vadd.f32 0.0, %v2821
        %v2823 = vpop.f32.mrb[0].mxu0
        %2824 = vmatprep.mubr.f32.mxu0 0.0
        %2825 = vmatmul.mubr.f32.gmra.mrb[0].mxu0 %v2689
        %v2826 = vpop.f32.mrb[0].mxu0
        %v2827 = vadd.f32 0.0, %v2826
        %v2828 = vpop.f32.mrb[0].mxu0
        %2829 = vmatprep.mubr.f32.mxu0 0.0
        %2830 = vmatmul.mubr.f32.gmra.mrb[0].mxu0 %v2692
        %v2831 = vpop.f32.mrb[0].mxu0
        %v2832 = vadd.f32 0.0, %v2831
        %v2833 = vpop.f32.mrb[0].mxu0
        %2834 = vmatprep.mubr.f32.mxu0 0.0
        %2835 = vmatmul.mubr.f32.gmra.mrb[0].mxu0 %v2695
        %v2836 = vpop.f32.mrb[0].mxu0
        %v2837 = vadd.f32 0.0, %v2836
        %v2838 = vpop.f32.mrb[0].mxu0
        %2839 = vmatprep.mubr.f32.mxu0 0.0
        %2840 = vmatmul.mubr.f32.gmra.mrb[0].mxu0 %v2698
        %v2841 = vpop.f32.mrb[0].mxu0
        %v2842 = vadd.f32 0.0, %v2841
        %v2843 = vpop.f32.mrb[0].mxu0
        %2844 = vdwg.mxu0
        %2861 = vrot.lane.b32.xlu0 %v2767, 8
        %v2862 = vpop.permute.xlu0 %2861
        %2863 = vrot.lane.b32.xlu0 %v2772, 8
        %v2864 = vpop.permute.xlu0 %2863
        %2865 = vrot.lane.b32.xlu0 %v2777, 8
        %v2866 = vpop.permute.xlu0 %2865
        %2867 = vrot.lane.b32.xlu0 %v2782, 8
        %v2868 = vpop.permute.xlu0 %2867
        %2869 = vrot.lane.b32.xlu0 %v2787, 8
        %v2870 = vpop.permute.xlu0 %2869
        %2871 = vrot.lane.b32.xlu0 %v2792, 8
        %v2872 = vpop.permute.xlu0 %2871
        %2873 = vrot.lane.b32.xlu0 %v2797, 8
        %v2874 = vpop.permute.xlu0 %2873
        %2875 = vrot.lane.b32.xlu0 %v2802, 8
        %v2876 = vpop.permute.xlu0 %2875
        %2877 = vrot.lane.b32.xlu0 %v2807, 8
        %v2878 = vpop.permute.xlu0 %2877
        %2879 = vrot.lane.b32.xlu0 %v2812, 8
        %v2880 = vpop.permute.xlu0 %2879
        %2881 = vrot.lane.b32.xlu0 %v2817, 8
        %v2882 = vpop.permute.xlu0 %2881
        %2883 = vrot.lane.b32.xlu0 %v2822, 8
        %v2884 = vpop.permute.xlu0 %2883
        %2885 = vrot.lane.b32.xlu0 %v2827, 8
        %v2886 = vpop.permute.xlu0 %2885
        %2887 = vrot.lane.b32.xlu0 %v2832, 8
        %v2888 = vpop.permute.xlu0 %2887
        %2889 = vrot.lane.b32.xlu0 %v2837, 8
        %v2890 = vpop.permute.xlu0 %2889
        %2891 = vrot.lane.b32.xlu0 %v2842, 8
        %v2892 = vpop.permute.xlu0 %2891
        %v2909 = vadd.f32 %v2611, %v2862
        %v2910 = vadd.f32 %v2612, %v2864
        %v2911 = vadd.f32 %v2613, %v2866
        %v2912 = vadd.f32 %v2614, %v2868
        %v2913 = vadd.f32 %v2615, %v2870
        %v2914 = vadd.f32 %v2616, %v2872
        %v2915 = vadd.f32 %v2617, %v2874
        %v2916 = vadd.f32 %v2618, %v2876
        %v2917 = vadd.f32 %v2619, %v2878
        %v2918 = vadd.f32 %v2620, %v2880
        %v2919 = vadd.f32 %v2621, %v2882
        %v2920 = vadd.f32 %v2622, %v2884
        %v2921 = vadd.f32 %v2623, %v2886
        %v2922 = vadd.f32 %v2624, %v2888
        %v2923 = vadd.f32 %v2625, %v2890
        %v2924 = vadd.f32 %v2626, %v2892
        %s2925 = sadd.s32 %s314, 1
        %s2926 = smul.u32 %s2925, 24
        %s2927 = scalar_lea.vmem %s302, %s2926
        %v2928 = vld [vmem:[%s2927 + $0x1] sm:$0xff]
        %v2929 = vld [vmem:[%s2927 + $0x9] sm:$0xff]
        %v2930 = vld [vmem:[%s2927 + $0x19] sm:$0xff]
        %v2931 = vld [vmem:[%s2927 + $0x21] sm:$0xff]
        %v2932 = vld [vmem:[%s2927 + $0x31] sm:$0xff]
        %v2933 = vld [vmem:[%s2927 + $0x39] sm:$0xff]
        %v2934 = vld [vmem:[%s2927 + $0x49] sm:$0xff]
        %v2935 = vld [vmem:[%s2927 + $0x51] sm:$0xff]
        %v2936 = vld [vmem:[%s2927 + $0x61] sm:$0xff]
        %v2937 = vld [vmem:[%s2927 + $0x69] sm:$0xff]
        %v2938 = vld [vmem:[%s2927 + $0x79] sm:$0xff]
        %v2939 = vld [vmem:[%s2927 + $0x81] sm:$0xff]
        %v2940 = vld [vmem:[%s2927 + $0x91] sm:$0xff]
        %v2941 = vld [vmem:[%s2927 + $0x99] sm:$0xff]
        %v2942 = vld [vmem:[%s2927 + $0xa9] sm:$0xff]
        %v2943 = vld [vmem:[%s2927 + $0xb1] sm:$0xff]
        %s2944 = scalar_lea.vmem %s2, 512
        %v2945 = vld [vmem:[%s2944] sm:$0xff]
        %v2946 = vld [vmem:[%s2944 + $0x8] sm:$0xff]
        %v2947 = vld [vmem:[%s2944 + $0x10] sm:$0xff]
        %v2948 = vld [vmem:[%s2944 + $0x18] sm:$0xff]
        %v2949 = vld [vmem:[%s2944 + $0x20] sm:$0xff]
        %v2950 = vld [vmem:[%s2944 + $0x28] sm:$0xff]
        %v2951 = vld [vmem:[%s2944 + $0x30] sm:$0xff]
        %v2952 = vld [vmem:[%s2944 + $0x38] sm:$0xff]
        %v2954 = vsel %vm342, %v2928, 0
        %v2957 = vsel %vm342, %v2929, 0
        %v2960 = vsel %vm342, %v2930, 0
        %v2963 = vsel %vm342, %v2931, 0
        %v2966 = vsel %vm342, %v2932, 0
        %v2969 = vsel %vm342, %v2933, 0
        %v2972 = vsel %vm342, %v2934, 0
        %v2975 = vsel %vm342, %v2935, 0
        %v2978 = vsel %vm342, %v2936, 0
        %v2981 = vsel %vm342, %v2937, 0
        %v2984 = vsel %vm342, %v2938, 0
        %v2987 = vsel %vm342, %v2939, 0
        %v2990 = vsel %vm342, %v2940, 0
        %v2993 = vsel %vm342, %v2941, 0
        %v2996 = vsel %vm342, %v2942, 0
        %v2999 = vsel %vm342, %v2943, 0
        %3001 = vmatprep.subr.mxu0 0.0
        %3002 = vmatpush1.msra.mxu0 %v2945
        %3003 = vmatprep.subr.mxu0 0.0
        %3004 = vmatpush1.msra.mxu0 %v2946
        %3005 = vmatprep.subr.mxu0 0.0
        %3006 = vmatpush1.msra.mxu0 %v2947
        %3007 = vmatprep.subr.mxu0 0.0
        %3008 = vmatpush1.msra.mxu0 %v2948
        %3009 = vmatprep.subr.mxu0 0.0
        %3010 = vmatpush1.msra.mxu0 %v2949
        %3011 = vmatprep.subr.mxu0 0.0
        %3012 = vmatpush1.msra.mxu0 %v2950
        %3013 = vmatprep.subr.mxu0 0.0
        %3014 = vmatpush1.msra.mxu0 %v2951
        %3015 = vmatprep.subr.mxu0 0.0
        %3016 = vmatpush1.msra.mxu0 %v2952
        %3017 = vmatprep.subr.mxu0 0.0
        %3018 = vmatpush1.msra.mxu0 0.0
        %3019 = vmatprep.subr.mxu0 0.0
        %3020 = vmatpush1.msra.mxu0 0.0
        %3021 = vmatprep.subr.mxu0 0.0
        %3022 = vmatpush1.msra.mxu0 0.0
        %3023 = vmatprep.subr.mxu0 0.0
        %3024 = vmatpush1.msra.mxu0 0.0
        %3025 = vmatprep.subr.mxu0 0.0
        %3026 = vmatpush1.msra.mxu0 0.0
        %3027 = vmatprep.subr.mxu0 0.0
        %3028 = vmatpush1.msra.mxu0 0.0
        %3029 = vmatprep.subr.mxu0 0.0
        %3030 = vmatpush1.msra.mxu0 0.0
        %3031 = vmatprep.subr.mxu0 0.0
        %3032 = vmatpush1.msra.mxu0 0.0
        %3033 = vmatprep.subr.mxu0 0.0
        %3034 = vmatpush1.msra.mxu0 0.0
        %3035 = vmatprep.subr.mxu0 0.0
        %3036 = vmatpush1.msra.mxu0 0.0
        %3037 = vmatprep.subr.mxu0 0.0
        %3038 = vmatpush1.msra.mxu0 0.0
        %3039 = vmatprep.subr.mxu0 0.0
        %3040 = vmatpush1.msra.mxu0 0.0
        %3041 = vmatprep.subr.mxu0 0.0
        %3042 = vmatpush1.msra.mxu0 0.0
        %3043 = vmatprep.subr.mxu0 0.0
        %3044 = vmatpush1.msra.mxu0 0.0
        %3045 = vmatprep.subr.mxu0 0.0
        %3046 = vmatpush1.msra.mxu0 0.0
        %3047 = vmatprep.subr.mxu0 0.0
        %3048 = vmatpush1.msra.mxu0 0.0
        %3049 = vmatprep.subr.mxu0 0.0
        %3050 = vmatpush1.msra.mxu0 0.0
        %3051 = vmatprep.subr.mxu0 0.0
        %3052 = vmatpush1.msra.mxu0 0.0
        %3053 = vmatprep.subr.mxu0 0.0
        %3054 = vmatpush1.msra.mxu0 0.0
        %3055 = vmatprep.subr.mxu0 0.0
        %3056 = vmatpush1.msra.mxu0 0.0
        %3057 = vmatprep.subr.mxu0 0.0
        %3058 = vmatpush1.msra.mxu0 0.0
        %3059 = vmatprep.subr.mxu0 0.0
        %3060 = vmatpush1.msra.mxu0 0.0
        %3061 = vmatprep.subr.mxu0 0.0
        %3062 = vmatpush1.msra.mxu0 0.0
        %3063 = vmatprep.subr.mxu0 0.0
        %3064 = vmatpush1.msra.mxu0 0.0
        %3065 = vmatprep.mubr.f32.mxu0 0.0
        %3066 = vmatmul.mubr.f32.gmra.mrb[0].mxu0 %v2954
        %v3067 = vpop.f32.mrb[0].mxu0
        %v3068 = vadd.f32 0.0, %v3067
        %v3069 = vpop.f32.mrb[0].mxu0
        %3070 = vmatprep.mubr.f32.mxu0 0.0
        %3071 = vmatmul.mubr.f32.gmra.mrb[0].mxu0 %v2957
        %v3072 = vpop.f32.mrb[0].mxu0
        %v3073 = vadd.f32 0.0, %v3072
        %v3074 = vpop.f32.mrb[0].mxu0
        %3075 = vmatprep.mubr.f32.mxu0 0.0
        %3076 = vmatmul.mubr.f32.gmra.mrb[0].mxu0 %v2960
        %v3077 = vpop.f32.mrb[0].mxu0
        %v3078 = vadd.f32 0.0, %v3077
        %v3079 = vpop.f32.mrb[0].mxu0
        %3080 = vmatprep.mubr.f32.mxu0 0.0
        %3081 = vmatmul.mubr.f32.gmra.mrb[0].mxu0 %v2963
        %v3082 = vpop.f32.mrb[0].mxu0
        %v3083 = vadd.f32 0.0, %v3082
        %v3084 = vpop.f32.mrb[0].mxu0
        %3085 = vmatprep.mubr.f32.mxu0 0.0
        %3086 = vmatmul.mubr.f32.gmra.mrb[0].mxu0 %v2966
        %v3087 = vpop.f32.mrb[0].mxu0
        %v3088 = vadd.f32 0.0, %v3087
        %v3089 = vpop.f32.mrb[0].mxu0
        %3090 = vmatprep.mubr.f32.mxu0 0.0
        %3091 = vmatmul.mubr.f32.gmra.mrb[0].mxu0 %v2969
        %v3092 = vpop.f32.mrb[0].mxu0
        %v3093 = vadd.f32 0.0, %v3092
        %v3094 = vpop.f32.mrb[0].mxu0
        %3095 = vmatprep.mubr.f32.mxu0 0.0
        %3096 = vmatmul.mubr.f32.gmra.mrb[0].mxu0 %v2972
        %v3097 = vpop.f32.mrb[0].mxu0
        %v3098 = vadd.f32 0.0, %v3097
        %v3099 = vpop.f32.mrb[0].mxu0
        %3100 = vmatprep.mubr.f32.mxu0 0.0
        %3101 = vmatmul.mubr.f32.gmra.mrb[0].mxu0 %v2975
        %v3102 = vpop.f32.mrb[0].mxu0
        %v3103 = vadd.f32 0.0, %v3102
        %v3104 = vpop.f32.mrb[0].mxu0
        %3105 = vmatprep.mubr.f32.mxu0 0.0
        %3106 = vmatmul.mubr.f32.gmra.mrb[0].mxu0 %v2978
        %v3107 = vpop.f32.mrb[0].mxu0
        %v3108 = vadd.f32 0.0, %v3107
        %v3109 = vpop.f32.mrb[0].mxu0
        %3110 = vmatprep.mubr.f32.mxu0 0.0
        %3111 = vmatmul.mubr.f32.gmra.mrb[0].mxu0 %v2981
        %v3112 = vpop.f32.mrb[0].mxu0
        %v3113 = vadd.f32 0.0, %v3112
        %v3114 = vpop.f32.mrb[0].mxu0
        %3115 = vmatprep.mubr.f32.mxu0 0.0
        %3116 = vmatmul.mubr.f32.gmra.mrb[0].mxu0 %v2984
        %v3117 = vpop.f32.mrb[0].mxu0
        %v3118 = vadd.f32 0.0, %v3117
        %v3119 = vpop.f32.mrb[0].mxu0
        %3120 = vmatprep.mubr.f32.mxu0 0.0
        %3121 = vmatmul.mubr.f32.gmra.mrb[0].mxu0 %v2987
        %v3122 = vpop.f32.mrb[0].mxu0
        %v3123 = vadd.f32 0.0, %v3122
        %v3124 = vpop.f32.mrb[0].mxu0
        %3125 = vmatprep.mubr.f32.mxu0 0.0
        %3126 = vmatmul.mubr.f32.gmra.mrb[0].mxu0 %v2990
        %v3127 = vpop.f32.mrb[0].mxu0
        %v3128 = vadd.f32 0.0, %v3127
        %v3129 = vpop.f32.mrb[0].mxu0
        %3130 = vmatprep.mubr.f32.mxu0 0.0
        %3131 = vmatmul.mubr.f32.gmra.mrb[0].mxu0 %v2993
        %v3132 = vpop.f32.mrb[0].mxu0
        %v3133 = vadd.f32 0.0, %v3132
        %v3134 = vpop.f32.mrb[0].mxu0
        %3135 = vmatprep.mubr.f32.mxu0 0.0
        %3136 = vmatmul.mubr.f32.gmra.mrb[0].mxu0 %v2996
        %v3137 = vpop.f32.mrb[0].mxu0
        %v3138 = vadd.f32 0.0, %v3137
        %v3139 = vpop.f32.mrb[0].mxu0
        %3140 = vmatprep.mubr.f32.mxu0 0.0
        %3141 = vmatmul.mubr.f32.gmra.mrb[0].mxu0 %v2999
        %v3142 = vpop.f32.mrb[0].mxu0
        %v3143 = vadd.f32 0.0, %v3142
        %v3144 = vpop.f32.mrb[0].mxu0
        %3145 = vdwg.mxu0
        %3162 = vrot.lane.b32.xlu0 %v3068, 16
        %v3163 = vpop.permute.xlu0 %3162
        %3164 = vrot.lane.b32.xlu0 %v3073, 16
        %v3165 = vpop.permute.xlu0 %3164
        %3166 = vrot.lane.b32.xlu0 %v3078, 16
        %v3167 = vpop.permute.xlu0 %3166
        %3168 = vrot.lane.b32.xlu0 %v3083, 16
        %v3169 = vpop.permute.xlu0 %3168
        %3170 = vrot.lane.b32.xlu0 %v3088, 16
        %v3171 = vpop.permute.xlu0 %3170
        %3172 = vrot.lane.b32.xlu0 %v3093, 16
        %v3173 = vpop.permute.xlu0 %3172
        %3174 = vrot.lane.b32.xlu0 %v3098, 16
        %v3175 = vpop.permute.xlu0 %3174
        %3176 = vrot.lane.b32.xlu0 %v3103, 16
        %v3177 = vpop.permute.xlu0 %3176
        %3178 = vrot.lane.b32.xlu0 %v3108, 16
        %v3179 = vpop.permute.xlu0 %3178
        %3180 = vrot.lane.b32.xlu0 %v3113, 16
        %v3181 = vpop.permute.xlu0 %3180
        %3182 = vrot.lane.b32.xlu0 %v3118, 16
        %v3183 = vpop.permute.xlu0 %3182
        %3184 = vrot.lane.b32.xlu0 %v3123, 16
        %v3185 = vpop.permute.xlu0 %3184
        %3186 = vrot.lane.b32.xlu0 %v3128, 16
        %v3187 = vpop.permute.xlu0 %3186
        %3188 = vrot.lane.b32.xlu0 %v3133, 16
        %v3189 = vpop.permute.xlu0 %3188
        %3190 = vrot.lane.b32.xlu0 %v3138, 16
        %v3191 = vpop.permute.xlu0 %3190
        %3192 = vrot.lane.b32.xlu0 %v3143, 16
        %v3193 = vpop.permute.xlu0 %3192
        %v3210 = vadd.f32 %v458, %v3163
        %v3211 = vadd.f32 %v463, %v3165
        %v3212 = vadd.f32 %v468, %v3167
        %v3213 = vadd.f32 %v473, %v3169
        %v3214 = vadd.f32 %v478, %v3171
        %v3215 = vadd.f32 %v483, %v3173
        %v3216 = vadd.f32 %v488, %v3175
        %v3217 = vadd.f32 %v493, %v3177
        %v3218 = vadd.f32 %v498, %v3179
        %v3219 = vadd.f32 %v503, %v3181
        %v3220 = vadd.f32 %v508, %v3183
        %v3221 = vadd.f32 %v513, %v3185
        %v3222 = vadd.f32 %v518, %v3187
        %v3223 = vadd.f32 %v523, %v3189
        %v3224 = vadd.f32 %v528, %v3191
        %v3225 = vadd.f32 %v533, %v3193
        %v3226 = vld [vmem:[%s2927 + $0x3] sm:$0xff]
        %v3227 = vld [vmem:[%s2927 + $0xb] sm:$0xff]
        %v3228 = vld [vmem:[%s2927 + $0x1b] sm:$0xff]
        %v3229 = vld [vmem:[%s2927 + $0x23] sm:$0xff]
        %v3230 = vld [vmem:[%s2927 + $0x33] sm:$0xff]
        %v3231 = vld [vmem:[%s2927 + $0x3b] sm:$0xff]
        %v3232 = vld [vmem:[%s2927 + $0x4b] sm:$0xff]
        %v3233 = vld [vmem:[%s2927 + $0x53] sm:$0xff]
        %v3234 = vld [vmem:[%s2927 + $0x63] sm:$0xff]
        %v3235 = vld [vmem:[%s2927 + $0x6b] sm:$0xff]
        %v3236 = vld [vmem:[%s2927 + $0x7b] sm:$0xff]
        %v3237 = vld [vmem:[%s2927 + $0x83] sm:$0xff]
        %v3238 = vld [vmem:[%s2927 + $0x93] sm:$0xff]
        %v3239 = vld [vmem:[%s2927 + $0x9b] sm:$0xff]
        %v3240 = vld [vmem:[%s2927 + $0xab] sm:$0xff]
        %v3241 = vld [vmem:[%s2927 + $0xb3] sm:$0xff]
        %s3242 = scalar_lea.vmem %s2, 576
        %v3243 = vld [vmem:[%s3242] sm:$0xff]
        %v3244 = vld [vmem:[%s3242 + $0x8] sm:$0xff]
        %v3245 = vld [vmem:[%s3242 + $0x10] sm:$0xff]
        %v3246 = vld [vmem:[%s3242 + $0x18] sm:$0xff]
        %v3247 = vld [vmem:[%s3242 + $0x20] sm:$0xff]
        %v3248 = vld [vmem:[%s3242 + $0x28] sm:$0xff]
        %v3249 = vld [vmem:[%s3242 + $0x30] sm:$0xff]
        %v3250 = vld [vmem:[%s3242 + $0x38] sm:$0xff]
        %v3252 = vsel %vm342, %v3226, 0
        %v3255 = vsel %vm342, %v3227, 0
        %v3258 = vsel %vm342, %v3228, 0
        %v3261 = vsel %vm342, %v3229, 0
        %v3264 = vsel %vm342, %v3230, 0
        %v3267 = vsel %vm342, %v3231, 0
        %v3270 = vsel %vm342, %v3232, 0
        %v3273 = vsel %vm342, %v3233, 0
        %v3276 = vsel %vm342, %v3234, 0
        %v3279 = vsel %vm342, %v3235, 0
        %v3282 = vsel %vm342, %v3236, 0
        %v3285 = vsel %vm342, %v3237, 0
        %v3288 = vsel %vm342, %v3238, 0
        %v3291 = vsel %vm342, %v3239, 0
        %v3294 = vsel %vm342, %v3240, 0
        %v3297 = vsel %vm342, %v3241, 0
        %3299 = vmatprep.subr.mxu0 0.0
        %3300 = vmatpush1.msra.mxu0 %v3243
        %3301 = vmatprep.subr.mxu0 0.0
        %3302 = vmatpush1.msra.mxu0 %v3244
        %3303 = vmatprep.subr.mxu0 0.0
        %3304 = vmatpush1.msra.mxu0 %v3245
        %3305 = vmatprep.subr.mxu0 0.0
        %3306 = vmatpush1.msra.mxu0 %v3246
        %3307 = vmatprep.subr.mxu0 0.0
        %3308 = vmatpush1.msra.mxu0 %v3247
        %3309 = vmatprep.subr.mxu0 0.0
        %3310 = vmatpush1.msra.mxu0 %v3248
        %3311 = vmatprep.subr.mxu0 0.0
        %3312 = vmatpush1.msra.mxu0 %v3249
        %3313 = vmatprep.subr.mxu0 0.0
        %3314 = vmatpush1.msra.mxu0 %v3250
        %3315 = vmatprep.subr.mxu0 0.0
        %3316 = vmatpush1.msra.mxu0 0.0
        %3317 = vmatprep.subr.mxu0 0.0
        %3318 = vmatpush1.msra.mxu0 0.0
        %3319 = vmatprep.subr.mxu0 0.0
        %3320 = vmatpush1.msra.mxu0 0.0
        %3321 = vmatprep.subr.mxu0 0.0
        %3322 = vmatpush1.msra.mxu0 0.0
        %3323 = vmatprep.subr.mxu0 0.0
        %3324 = vmatpush1.msra.mxu0 0.0
        %3325 = vmatprep.subr.mxu0 0.0
        %3326 = vmatpush1.msra.mxu0 0.0
        %3327 = vmatprep.subr.mxu0 0.0
        %3328 = vmatpush1.msra.mxu0 0.0
        %3329 = vmatprep.subr.mxu0 0.0
        %3330 = vmatpush1.msra.mxu0 0.0
        %3331 = vmatprep.subr.mxu0 0.0
        %3332 = vmatpush1.msra.mxu0 0.0
        %3333 = vmatprep.subr.mxu0 0.0
        %3334 = vmatpush1.msra.mxu0 0.0
        %3335 = vmatprep.subr.mxu0 0.0
        %3336 = vmatpush1.msra.mxu0 0.0
        %3337 = vmatprep.subr.mxu0 0.0
        %3338 = vmatpush1.msra.mxu0 0.0
        %3339 = vmatprep.subr.mxu0 0.0
        %3340 = vmatpush1.msra.mxu0 0.0
        %3341 = vmatprep.subr.mxu0 0.0
        %3342 = vmatpush1.msra.mxu0 0.0
        %3343 = vmatprep.subr.mxu0 0.0
        %3344 = vmatpush1.msra.mxu0 0.0
        %3345 = vmatprep.subr.mxu0 0.0
        %3346 = vmatpush1.msra.mxu0 0.0
        %3347 = vmatprep.subr.mxu0 0.0
        %3348 = vmatpush1.msra.mxu0 0.0
        %3349 = vmatprep.subr.mxu0 0.0
        %3350 = vmatpush1.msra.mxu0 0.0
        %3351 = vmatprep.subr.mxu0 0.0
        %3352 = vmatpush1.msra.mxu0 0.0
        %3353 = vmatprep.subr.mxu0 0.0
        %3354 = vmatpush1.msra.mxu0 0.0
        %3355 = vmatprep.subr.mxu0 0.0
        %3356 = vmatpush1.msra.mxu0 0.0
        %3357 = vmatprep.subr.mxu0 0.0
        %3358 = vmatpush1.msra.mxu0 0.0
        %3359 = vmatprep.subr.mxu0 0.0
        %3360 = vmatpush1.msra.mxu0 0.0
        %3361 = vmatprep.subr.mxu0 0.0
        %3362 = vmatpush1.msra.mxu0 0.0
        %3363 = vmatprep.mubr.f32.mxu0 0.0
        %3364 = vmatmul.mubr.f32.gmra.mrb[0].mxu0 %v3252
        %v3365 = vpop.f32.mrb[0].mxu0
        %v3366 = vadd.f32 0.0, %v3365
        %v3367 = vpop.f32.mrb[0].mxu0
        %3368 = vmatprep.mubr.f32.mxu0 0.0
        %3369 = vmatmul.mubr.f32.gmra.mrb[0].mxu0 %v3255
        %v3370 = vpop.f32.mrb[0].mxu0
        %v3371 = vadd.f32 0.0, %v3370
        %v3372 = vpop.f32.mrb[0].mxu0
        %3373 = vmatprep.mubr.f32.mxu0 0.0
        %3374 = vmatmul.mubr.f32.gmra.mrb[0].mxu0 %v3258
        %v3375 = vpop.f32.mrb[0].mxu0
        %v3376 = vadd.f32 0.0, %v3375
        %v3377 = vpop.f32.mrb[0].mxu0
        %3378 = vmatprep.mubr.f32.mxu0 0.0
        %3379 = vmatmul.mubr.f32.gmra.mrb[0].mxu0 %v3261
        %v3380 = vpop.f32.mrb[0].mxu0
        %v3381 = vadd.f32 0.0, %v3380
        %v3382 = vpop.f32.mrb[0].mxu0
        %3383 = vmatprep.mubr.f32.mxu0 0.0
        %3384 = vmatmul.mubr.f32.gmra.mrb[0].mxu0 %v3264
        %v3385 = vpop.f32.mrb[0].mxu0
        %v3386 = vadd.f32 0.0, %v3385
        %v3387 = vpop.f32.mrb[0].mxu0
        %3388 = vmatprep.mubr.f32.mxu0 0.0
        %3389 = vmatmul.mubr.f32.gmra.mrb[0].mxu0 %v3267
        %v3390 = vpop.f32.mrb[0].mxu0
        %v3391 = vadd.f32 0.0, %v3390
        %v3392 = vpop.f32.mrb[0].mxu0
        %3393 = vmatprep.mubr.f32.mxu0 0.0
        %3394 = vmatmul.mubr.f32.gmra.mrb[0].mxu0 %v3270
        %v3395 = vpop.f32.mrb[0].mxu0
        %v3396 = vadd.f32 0.0, %v3395
        %v3397 = vpop.f32.mrb[0].mxu0
        %3398 = vmatprep.mubr.f32.mxu0 0.0
        %3399 = vmatmul.mubr.f32.gmra.mrb[0].mxu0 %v3273
        %v3400 = vpop.f32.mrb[0].mxu0
        %v3401 = vadd.f32 0.0, %v3400
        %v3402 = vpop.f32.mrb[0].mxu0
        %3403 = vmatprep.mubr.f32.mxu0 0.0
        %3404 = vmatmul.mubr.f32.gmra.mrb[0].mxu0 %v3276
        %v3405 = vpop.f32.mrb[0].mxu0
        %v3406 = vadd.f32 0.0, %v3405
        %v3407 = vpop.f32.mrb[0].mxu0
        %3408 = vmatprep.mubr.f32.mxu0 0.0
        %3409 = vmatmul.mubr.f32.gmra.mrb[0].mxu0 %v3279
        %v3410 = vpop.f32.mrb[0].mxu0
        %v3411 = vadd.f32 0.0, %v3410
        %v3412 = vpop.f32.mrb[0].mxu0
        %3413 = vmatprep.mubr.f32.mxu0 0.0
        %3414 = vmatmul.mubr.f32.gmra.mrb[0].mxu0 %v3282
        %v3415 = vpop.f32.mrb[0].mxu0
        %v3416 = vadd.f32 0.0, %v3415
        %v3417 = vpop.f32.mrb[0].mxu0
        %3418 = vmatprep.mubr.f32.mxu0 0.0
        %3419 = vmatmul.mubr.f32.gmra.mrb[0].mxu0 %v3285
        %v3420 = vpop.f32.mrb[0].mxu0
        %v3421 = vadd.f32 0.0, %v3420
        %v3422 = vpop.f32.mrb[0].mxu0
        %3423 = vmatprep.mubr.f32.mxu0 0.0
        %3424 = vmatmul.mubr.f32.gmra.mrb[0].mxu0 %v3288
        %v3425 = vpop.f32.mrb[0].mxu0
        %v3426 = vadd.f32 0.0, %v3425
        %v3427 = vpop.f32.mrb[0].mxu0
        %3428 = vmatprep.mubr.f32.mxu0 0.0
        %3429 = vmatmul.mubr.f32.gmra.mrb[0].mxu0 %v3291
        %v3430 = vpop.f32.mrb[0].mxu0
        %v3431 = vadd.f32 0.0, %v3430
        %v3432 = vpop.f32.mrb[0].mxu0
        %3433 = vmatprep.mubr.f32.mxu0 0.0
        %3434 = vmatmul.mubr.f32.gmra.mrb[0].mxu0 %v3294
        %v3435 = vpop.f32.mrb[0].mxu0
        %v3436 = vadd.f32 0.0, %v3435
        %v3437 = vpop.f32.mrb[0].mxu0
        %3438 = vmatprep.mubr.f32.mxu0 0.0
        %3439 = vmatmul.mubr.f32.gmra.mrb[0].mxu0 %v3297
        %v3440 = vpop.f32.mrb[0].mxu0
        %v3441 = vadd.f32 0.0, %v3440
        %v3442 = vpop.f32.mrb[0].mxu0
        %3443 = vdwg.mxu0
        %3460 = vrot.lane.b32.xlu0 %v3366, 16
        %v3461 = vpop.permute.xlu0 %3460
        %3462 = vrot.lane.b32.xlu0 %v3371, 16
        %v3463 = vpop.permute.xlu0 %3462
        %3464 = vrot.lane.b32.xlu0 %v3376, 16
        %v3465 = vpop.permute.xlu0 %3464
        %3466 = vrot.lane.b32.xlu0 %v3381, 16
        %v3467 = vpop.permute.xlu0 %3466
        %3468 = vrot.lane.b32.xlu0 %v3386, 16
        %v3469 = vpop.permute.xlu0 %3468
        %3470 = vrot.lane.b32.xlu0 %v3391, 16
        %v3471 = vpop.permute.xlu0 %3470
        %3472 = vrot.lane.b32.xlu0 %v3396, 16
        %v3473 = vpop.permute.xlu0 %3472
        %3474 = vrot.lane.b32.xlu0 %v3401, 16
        %v3475 = vpop.permute.xlu0 %3474
        %3476 = vrot.lane.b32.xlu0 %v3406, 16
        %v3477 = vpop.permute.xlu0 %3476
        %3478 = vrot.lane.b32.xlu0 %v3411, 16
        %v3479 = vpop.permute.xlu0 %3478
        %3480 = vrot.lane.b32.xlu0 %v3416, 16
        %v3481 = vpop.permute.xlu0 %3480
        %3482 = vrot.lane.b32.xlu0 %v3421, 16
        %v3483 = vpop.permute.xlu0 %3482
        %3484 = vrot.lane.b32.xlu0 %v3426, 16
        %v3485 = vpop.permute.xlu0 %3484
        %3486 = vrot.lane.b32.xlu0 %v3431, 16
        %v3487 = vpop.permute.xlu0 %3486
        %3488 = vrot.lane.b32.xlu0 %v3436, 16
        %v3489 = vpop.permute.xlu0 %3488
        %3490 = vrot.lane.b32.xlu0 %v3441, 16
        %v3491 = vpop.permute.xlu0 %3490
        %v3508 = vadd.f32 %v3210, %v3461
        %v3509 = vadd.f32 %v3211, %v3463
        %v3510 = vadd.f32 %v3212, %v3465
        %v3511 = vadd.f32 %v3213, %v3467
        %v3512 = vadd.f32 %v3214, %v3469
        %v3513 = vadd.f32 %v3215, %v3471
        %v3514 = vadd.f32 %v3216, %v3473
        %v3515 = vadd.f32 %v3217, %v3475
        %v3516 = vadd.f32 %v3218, %v3477
        %v3517 = vadd.f32 %v3219, %v3479
        %v3518 = vadd.f32 %v3220, %v3481
        %v3519 = vadd.f32 %v3221, %v3483
        %v3520 = vadd.f32 %v3222, %v3485
        %v3521 = vadd.f32 %v3223, %v3487
        %v3522 = vadd.f32 %v3224, %v3489
        %v3523 = vadd.f32 %v3225, %v3491
        %v3524 = vld [vmem:[%s2927 + $0x5] sm:$0xff]
        %v3525 = vld [vmem:[%s2927 + $0xd] sm:$0xff]
        %v3526 = vld [vmem:[%s2927 + $0x1d] sm:$0xff]
        %v3527 = vld [vmem:[%s2927 + $0x25] sm:$0xff]
        %v3528 = vld [vmem:[%s2927 + $0x35] sm:$0xff]
        %v3529 = vld [vmem:[%s2927 + $0x3d] sm:$0xff]
        %v3530 = vld [vmem:[%s2927 + $0x4d] sm:$0xff]
        %v3531 = vld [vmem:[%s2927 + $0x55] sm:$0xff]
        %v3532 = vld [vmem:[%s2927 + $0x65] sm:$0xff]
        %v3533 = vld [vmem:[%s2927 + $0x6d] sm:$0xff]
        %v3534 = vld [vmem:[%s2927 + $0x7d] sm:$0xff]
        %v3535 = vld [vmem:[%s2927 + $0x85] sm:$0xff]
        %v3536 = vld [vmem:[%s2927 + $0x95] sm:$0xff]
        %v3537 = vld [vmem:[%s2927 + $0x9d] sm:$0xff]
        %v3538 = vld [vmem:[%s2927 + $0xad] sm:$0xff]
        %v3539 = vld [vmem:[%s2927 + $0xb5] sm:$0xff]
        %s3540 = scalar_lea.vmem %s2, 640
        %v3541 = vld [vmem:[%s3540] sm:$0xff]
        %v3542 = vld [vmem:[%s3540 + $0x8] sm:$0xff]
        %v3543 = vld [vmem:[%s3540 + $0x10] sm:$0xff]
        %v3544 = vld [vmem:[%s3540 + $0x18] sm:$0xff]
        %v3545 = vld [vmem:[%s3540 + $0x20] sm:$0xff]
        %v3546 = vld [vmem:[%s3540 + $0x28] sm:$0xff]
        %v3547 = vld [vmem:[%s3540 + $0x30] sm:$0xff]
        %v3548 = vld [vmem:[%s3540 + $0x38] sm:$0xff]
        %v3550 = vsel %vm342, %v3524, 0
        %v3553 = vsel %vm342, %v3525, 0
        %v3556 = vsel %vm342, %v3526, 0
        %v3559 = vsel %vm342, %v3527, 0
        %v3562 = vsel %vm342, %v3528, 0
        %v3565 = vsel %vm342, %v3529, 0
        %v3568 = vsel %vm342, %v3530, 0
        %v3571 = vsel %vm342, %v3531, 0
        %v3574 = vsel %vm342, %v3532, 0
        %v3577 = vsel %vm342, %v3533, 0
        %v3580 = vsel %vm342, %v3534, 0
        %v3583 = vsel %vm342, %v3535, 0
        %v3586 = vsel %vm342, %v3536, 0
        %v3589 = vsel %vm342, %v3537, 0
        %v3592 = vsel %vm342, %v3538, 0
        %v3595 = vsel %vm342, %v3539, 0
        %3597 = vmatprep.subr.mxu0 0.0
        %3598 = vmatpush1.msra.mxu0 %v3541
        %3599 = vmatprep.subr.mxu0 0.0
        %3600 = vmatpush1.msra.mxu0 %v3542
        %3601 = vmatprep.subr.mxu0 0.0
        %3602 = vmatpush1.msra.mxu0 %v3543
        %3603 = vmatprep.subr.mxu0 0.0
        %3604 = vmatpush1.msra.mxu0 %v3544
        %3605 = vmatprep.subr.mxu0 0.0
        %3606 = vmatpush1.msra.mxu0 %v3545
        %3607 = vmatprep.subr.mxu0 0.0
        %3608 = vmatpush1.msra.mxu0 %v3546
        %3609 = vmatprep.subr.mxu0 0.0
        %3610 = vmatpush1.msra.mxu0 %v3547
        %3611 = vmatprep.subr.mxu0 0.0
        %3612 = vmatpush1.msra.mxu0 %v3548
        %3613 = vmatprep.subr.mxu0 0.0
        %3614 = vmatpush1.msra.mxu0 0.0
        %3615 = vmatprep.subr.mxu0 0.0
        %3616 = vmatpush1.msra.mxu0 0.0
        %3617 = vmatprep.subr.mxu0 0.0
        %3618 = vmatpush1.msra.mxu0 0.0
        %3619 = vmatprep.subr.mxu0 0.0
        %3620 = vmatpush1.msra.mxu0 0.0
        %3621 = vmatprep.subr.mxu0 0.0
        %3622 = vmatpush1.msra.mxu0 0.0
        %3623 = vmatprep.subr.mxu0 0.0
        %3624 = vmatpush1.msra.mxu0 0.0
        %3625 = vmatprep.subr.mxu0 0.0
        %3626 = vmatpush1.msra.mxu0 0.0
        %3627 = vmatprep.subr.mxu0 0.0
        %3628 = vmatpush1.msra.mxu0 0.0
        %3629 = vmatprep.subr.mxu0 0.0
        %3630 = vmatpush1.msra.mxu0 0.0
        %3631 = vmatprep.subr.mxu0 0.0
        %3632 = vmatpush1.msra.mxu0 0.0
        %3633 = vmatprep.subr.mxu0 0.0
        %3634 = vmatpush1.msra.mxu0 0.0
        %3635 = vmatprep.subr.mxu0 0.0
        %3636 = vmatpush1.msra.mxu0 0.0
        %3637 = vmatprep.subr.mxu0 0.0
        %3638 = vmatpush1.msra.mxu0 0.0
        %3639 = vmatprep.subr.mxu0 0.0
        %3640 = vmatpush1.msra.mxu0 0.0
        %3641 = vmatprep.subr.mxu0 0.0
        %3642 = vmatpush1.msra.mxu0 0.0
        %3643 = vmatprep.subr.mxu0 0.0
        %3644 = vmatpush1.msra.mxu0 0.0
        %3645 = vmatprep.subr.mxu0 0.0
        %3646 = vmatpush1.msra.mxu0 0.0
        %3647 = vmatprep.subr.mxu0 0.0
        %3648 = vmatpush1.msra.mxu0 0.0
        %3649 = vmatprep.subr.mxu0 0.0
        %3650 = vmatpush1.msra.mxu0 0.0
        %3651 = vmatprep.subr.mxu0 0.0
        %3652 = vmatpush1.msra.mxu0 0.0
        %3653 = vmatprep.subr.mxu0 0.0
        %3654 = vmatpush1.msra.mxu0 0.0
        %3655 = vmatprep.subr.mxu0 0.0
        %3656 = vmatpush1.msra.mxu0 0.0
        %3657 = vmatprep.subr.mxu0 0.0
        %3658 = vmatpush1.msra.mxu0 0.0
        %3659 = vmatprep.subr.mxu0 0.0
        %3660 = vmatpush1.msra.mxu0 0.0
        %3661 = vmatprep.mubr.f32.mxu0 0.0
        %3662 = vmatmul.mubr.f32.gmra.mrb[0].mxu0 %v3550
        %v3663 = vpop.f32.mrb[0].mxu0
        %v3664 = vadd.f32 0.0, %v3663
        %v3665 = vpop.f32.mrb[0].mxu0
        %3666 = vmatprep.mubr.f32.mxu0 0.0
        %3667 = vmatmul.mubr.f32.gmra.mrb[0].mxu0 %v3553
        %v3668 = vpop.f32.mrb[0].mxu0
        %v3669 = vadd.f32 0.0, %v3668
        %v3670 = vpop.f32.mrb[0].mxu0
        %3671 = vmatprep.mubr.f32.mxu0 0.0
        %3672 = vmatmul.mubr.f32.gmra.mrb[0].mxu0 %v3556
        %v3673 = vpop.f32.mrb[0].mxu0
        %v3674 = vadd.f32 0.0, %v3673
        %v3675 = vpop.f32.mrb[0].mxu0
        %3676 = vmatprep.mubr.f32.mxu0 0.0
        %3677 = vmatmul.mubr.f32.gmra.mrb[0].mxu0 %v3559
        %v3678 = vpop.f32.mrb[0].mxu0
        %v3679 = vadd.f32 0.0, %v3678
        %v3680 = vpop.f32.mrb[0].mxu0
        %3681 = vmatprep.mubr.f32.mxu0 0.0
        %3682 = vmatmul.mubr.f32.gmra.mrb[0].mxu0 %v3562
        %v3683 = vpop.f32.mrb[0].mxu0
        %v3684 = vadd.f32 0.0, %v3683
        %v3685 = vpop.f32.mrb[0].mxu0
        %3686 = vmatprep.mubr.f32.mxu0 0.0
        %3687 = vmatmul.mubr.f32.gmra.mrb[0].mxu0 %v3565
        %v3688 = vpop.f32.mrb[0].mxu0
        %v3689 = vadd.f32 0.0, %v3688
        %v3690 = vpop.f32.mrb[0].mxu0
        %3691 = vmatprep.mubr.f32.mxu0 0.0
        %3692 = vmatmul.mubr.f32.gmra.mrb[0].mxu0 %v3568
        %v3693 = vpop.f32.mrb[0].mxu0
        %v3694 = vadd.f32 0.0, %v3693
        %v3695 = vpop.f32.mrb[0].mxu0
        %3696 = vmatprep.mubr.f32.mxu0 0.0
        %3697 = vmatmul.mubr.f32.gmra.mrb[0].mxu0 %v3571
        %v3698 = vpop.f32.mrb[0].mxu0
        %v3699 = vadd.f32 0.0, %v3698
        %v3700 = vpop.f32.mrb[0].mxu0
        %3701 = vmatprep.mubr.f32.mxu0 0.0
        %3702 = vmatmul.mubr.f32.gmra.mrb[0].mxu0 %v3574
        %v3703 = vpop.f32.mrb[0].mxu0
        %v3704 = vadd.f32 0.0, %v3703
        %v3705 = vpop.f32.mrb[0].mxu0
        %3706 = vmatprep.mubr.f32.mxu0 0.0
        %3707 = vmatmul.mubr.f32.gmra.mrb[0].mxu0 %v3577
        %v3708 = vpop.f32.mrb[0].mxu0
        %v3709 = vadd.f32 0.0, %v3708
        %v3710 = vpop.f32.mrb[0].mxu0
        %3711 = vmatprep.mubr.f32.mxu0 0.0
        %3712 = vmatmul.mubr.f32.gmra.mrb[0].mxu0 %v3580
        %v3713 = vpop.f32.mrb[0].mxu0
        %v3714 = vadd.f32 0.0, %v3713
        %v3715 = vpop.f32.mrb[0].mxu0
        %3716 = vmatprep.mubr.f32.mxu0 0.0
        %3717 = vmatmul.mubr.f32.gmra.mrb[0].mxu0 %v3583
        %v3718 = vpop.f32.mrb[0].mxu0
        %v3719 = vadd.f32 0.0, %v3718
        %v3720 = vpop.f32.mrb[0].mxu0
        %3721 = vmatprep.mubr.f32.mxu0 0.0
        %3722 = vmatmul.mubr.f32.gmra.mrb[0].mxu0 %v3586
        %v3723 = vpop.f32.mrb[0].mxu0
        %v3724 = vadd.f32 0.0, %v3723
        %v3725 = vpop.f32.mrb[0].mxu0
        %3726 = vmatprep.mubr.f32.mxu0 0.0
        %3727 = vmatmul.mubr.f32.gmra.mrb[0].mxu0 %v3589
        %v3728 = vpop.f32.mrb[0].mxu0
        %v3729 = vadd.f32 0.0, %v3728
        %v3730 = vpop.f32.mrb[0].mxu0
        %3731 = vmatprep.mubr.f32.mxu0 0.0
        %3732 = vmatmul.mubr.f32.gmra.mrb[0].mxu0 %v3592
        %v3733 = vpop.f32.mrb[0].mxu0
        %v3734 = vadd.f32 0.0, %v3733
        %v3735 = vpop.f32.mrb[0].mxu0
        %3736 = vmatprep.mubr.f32.mxu0 0.0
        %3737 = vmatmul.mubr.f32.gmra.mrb[0].mxu0 %v3595
        %v3738 = vpop.f32.mrb[0].mxu0
        %v3739 = vadd.f32 0.0, %v3738
        %v3740 = vpop.f32.mrb[0].mxu0
        %3741 = vdwg.mxu0
        %3758 = vrot.lane.b32.xlu0 %v3664, 16
        %v3759 = vpop.permute.xlu0 %3758
        %3760 = vrot.lane.b32.xlu0 %v3669, 16
        %v3761 = vpop.permute.xlu0 %3760
        %3762 = vrot.lane.b32.xlu0 %v3674, 16
        %v3763 = vpop.permute.xlu0 %3762
        %3764 = vrot.lane.b32.xlu0 %v3679, 16
        %v3765 = vpop.permute.xlu0 %3764
        %3766 = vrot.lane.b32.xlu0 %v3684, 16
        %v3767 = vpop.permute.xlu0 %3766
        %3768 = vrot.lane.b32.xlu0 %v3689, 16
        %v3769 = vpop.permute.xlu0 %3768
        %3770 = vrot.lane.b32.xlu0 %v3694, 16
        %v3771 = vpop.permute.xlu0 %3770
        %3772 = vrot.lane.b32.xlu0 %v3699, 16
        %v3773 = vpop.permute.xlu0 %3772
        %3774 = vrot.lane.b32.xlu0 %v3704, 16
        %v3775 = vpop.permute.xlu0 %3774
        %3776 = vrot.lane.b32.xlu0 %v3709, 16
        %v3777 = vpop.permute.xlu0 %3776
        %3778 = vrot.lane.b32.xlu0 %v3714, 16
        %v3779 = vpop.permute.xlu0 %3778
        %3780 = vrot.lane.b32.xlu0 %v3719, 16
        %v3781 = vpop.permute.xlu0 %3780
        %3782 = vrot.lane.b32.xlu0 %v3724, 16
        %v3783 = vpop.permute.xlu0 %3782
        %3784 = vrot.lane.b32.xlu0 %v3729, 16
        %v3785 = vpop.permute.xlu0 %3784
        %3786 = vrot.lane.b32.xlu0 %v3734, 16
        %v3787 = vpop.permute.xlu0 %3786
        %3788 = vrot.lane.b32.xlu0 %v3739, 16
        %v3789 = vpop.permute.xlu0 %3788
        %v3806 = vadd.f32 %v3508, %v3759
        %v3807 = vadd.f32 %v3509, %v3761
        %v3808 = vadd.f32 %v3510, %v3763
        %v3809 = vadd.f32 %v3511, %v3765
        %v3810 = vadd.f32 %v3512, %v3767
        %v3811 = vadd.f32 %v3513, %v3769
        %v3812 = vadd.f32 %v3514, %v3771
        %v3813 = vadd.f32 %v3515, %v3773
        %v3814 = vadd.f32 %v3516, %v3775
        %v3815 = vadd.f32 %v3517, %v3777
        %v3816 = vadd.f32 %v3518, %v3779
        %v3817 = vadd.f32 %v3519, %v3781
        %v3818 = vadd.f32 %v3520, %v3783
        %v3819 = vadd.f32 %v3521, %v3785
        %v3820 = vadd.f32 %v3522, %v3787
        %v3821 = vadd.f32 %v3523, %v3789
        %v3822 = vld [vmem:[%s317 + $0x1] sm:$0xff]
        %v3823 = vld [vmem:[%s317 + $0x9] sm:$0xff]
        %v3824 = vld [vmem:[%s317 + $0x19] sm:$0xff]
        %v3825 = vld [vmem:[%s317 + $0x21] sm:$0xff]
        %v3826 = vld [vmem:[%s317 + $0x31] sm:$0xff]
        %v3827 = vld [vmem:[%s317 + $0x39] sm:$0xff]
        %v3828 = vld [vmem:[%s317 + $0x49] sm:$0xff]
        %v3829 = vld [vmem:[%s317 + $0x51] sm:$0xff]
        %v3830 = vld [vmem:[%s317 + $0x61] sm:$0xff]
        %v3831 = vld [vmem:[%s317 + $0x69] sm:$0xff]
        %v3832 = vld [vmem:[%s317 + $0x79] sm:$0xff]
        %v3833 = vld [vmem:[%s317 + $0x81] sm:$0xff]
        %v3834 = vld [vmem:[%s317 + $0x91] sm:$0xff]
        %v3835 = vld [vmem:[%s317 + $0x99] sm:$0xff]
        %v3836 = vld [vmem:[%s317 + $0xa9] sm:$0xff]
        %v3837 = vld [vmem:[%s317 + $0xb1] sm:$0xff]
        %s3838 = scalar_lea.vmem %s2, 704
        %v3839 = vld [vmem:[%s3838] sm:$0xff]
        %v3840 = vld [vmem:[%s3838 + $0x8] sm:$0xff]
        %v3841 = vld [vmem:[%s3838 + $0x10] sm:$0xff]
        %v3842 = vld [vmem:[%s3838 + $0x18] sm:$0xff]
        %v3843 = vld [vmem:[%s3838 + $0x20] sm:$0xff]
        %v3844 = vld [vmem:[%s3838 + $0x28] sm:$0xff]
        %v3845 = vld [vmem:[%s3838 + $0x30] sm:$0xff]
        %v3846 = vld [vmem:[%s3838 + $0x38] sm:$0xff]
        %v3848 = vsel %vm342, %v3822, 0
        %v3851 = vsel %vm342, %v3823, 0
        %v3854 = vsel %vm342, %v3824, 0
        %v3857 = vsel %vm342, %v3825, 0
        %v3860 = vsel %vm342, %v3826, 0
        %v3863 = vsel %vm342, %v3827, 0
        %v3866 = vsel %vm342, %v3828, 0
        %v3869 = vsel %vm342, %v3829, 0
        %v3872 = vsel %vm342, %v3830, 0
        %v3875 = vsel %vm342, %v3831, 0
        %v3878 = vsel %vm342, %v3832, 0
        %v3881 = vsel %vm342, %v3833, 0
        %v3884 = vsel %vm342, %v3834, 0
        %v3887 = vsel %vm342, %v3835, 0
        %v3890 = vsel %vm342, %v3836, 0
        %v3893 = vsel %vm342, %v3837, 0
        %3895 = vmatprep.subr.mxu0 0.0
        %3896 = vmatpush1.msra.mxu0 %v3839
        %3897 = vmatprep.subr.mxu0 0.0
        %3898 = vmatpush1.msra.mxu0 %v3840
        %3899 = vmatprep.subr.mxu0 0.0
        %3900 = vmatpush1.msra.mxu0 %v3841
        %3901 = vmatprep.subr.mxu0 0.0
        %3902 = vmatpush1.msra.mxu0 %v3842
        %3903 = vmatprep.subr.mxu0 0.0
        %3904 = vmatpush1.msra.mxu0 %v3843
        %3905 = vmatprep.subr.mxu0 0.0
        %3906 = vmatpush1.msra.mxu0 %v3844
        %3907 = vmatprep.subr.mxu0 0.0
        %3908 = vmatpush1.msra.mxu0 %v3845
        %3909 = vmatprep.subr.mxu0 0.0
        %3910 = vmatpush1.msra.mxu0 %v3846
        %3911 = vmatprep.subr.mxu0 0.0
        %3912 = vmatpush1.msra.mxu0 0.0
        %3913 = vmatprep.subr.mxu0 0.0
        %3914 = vmatpush1.msra.mxu0 0.0
        %3915 = vmatprep.subr.mxu0 0.0
        %3916 = vmatpush1.msra.mxu0 0.0
        %3917 = vmatprep.subr.mxu0 0.0
        %3918 = vmatpush1.msra.mxu0 0.0
        %3919 = vmatprep.subr.mxu0 0.0
        %3920 = vmatpush1.msra.mxu0 0.0
        %3921 = vmatprep.subr.mxu0 0.0
        %3922 = vmatpush1.msra.mxu0 0.0
        %3923 = vmatprep.subr.mxu0 0.0
        %3924 = vmatpush1.msra.mxu0 0.0
        %3925 = vmatprep.subr.mxu0 0.0
        %3926 = vmatpush1.msra.mxu0 0.0
        %3927 = vmatprep.subr.mxu0 0.0
        %3928 = vmatpush1.msra.mxu0 0.0
        %3929 = vmatprep.subr.mxu0 0.0
        %3930 = vmatpush1.msra.mxu0 0.0
        %3931 = vmatprep.subr.mxu0 0.0
        %3932 = vmatpush1.msra.mxu0 0.0
        %3933 = vmatprep.subr.mxu0 0.0
        %3934 = vmatpush1.msra.mxu0 0.0
        %3935 = vmatprep.subr.mxu0 0.0
        %3936 = vmatpush1.msra.mxu0 0.0
        %3937 = vmatprep.subr.mxu0 0.0
        %3938 = vmatpush1.msra.mxu0 0.0
        %3939 = vmatprep.subr.mxu0 0.0
        %3940 = vmatpush1.msra.mxu0 0.0
        %3941 = vmatprep.subr.mxu0 0.0
        %3942 = vmatpush1.msra.mxu0 0.0
        %3943 = vmatprep.subr.mxu0 0.0
        %3944 = vmatpush1.msra.mxu0 0.0
        %3945 = vmatprep.subr.mxu0 0.0
        %3946 = vmatpush1.msra.mxu0 0.0
        %3947 = vmatprep.subr.mxu0 0.0
        %3948 = vmatpush1.msra.mxu0 0.0
        %3949 = vmatprep.subr.mxu0 0.0
        %3950 = vmatpush1.msra.mxu0 0.0
        %3951 = vmatprep.subr.mxu0 0.0
        %3952 = vmatpush1.msra.mxu0 0.0
        %3953 = vmatprep.subr.mxu0 0.0
        %3954 = vmatpush1.msra.mxu0 0.0
        %3955 = vmatprep.subr.mxu0 0.0
        %3956 = vmatpush1.msra.mxu0 0.0
        %3957 = vmatprep.subr.mxu0 0.0
        %3958 = vmatpush1.msra.mxu0 0.0
        %3959 = vmatprep.mubr.f32.mxu0 0.0
        %3960 = vmatmul.mubr.f32.gmra.mrb[0].mxu0 %v3848
        %v3961 = vpop.f32.mrb[0].mxu0
        %v3962 = vadd.f32 0.0, %v3961
        %v3963 = vpop.f32.mrb[0].mxu0
        %3964 = vmatprep.mubr.f32.mxu0 0.0
        %3965 = vmatmul.mubr.f32.gmra.mrb[0].mxu0 %v3851
        %v3966 = vpop.f32.mrb[0].mxu0
        %v3967 = vadd.f32 0.0, %v3966
        %v3968 = vpop.f32.mrb[0].mxu0
        %3969 = vmatprep.mubr.f32.mxu0 0.0
        %3970 = vmatmul.mubr.f32.gmra.mrb[0].mxu0 %v3854
        %v3971 = vpop.f32.mrb[0].mxu0
        %v3972 = vadd.f32 0.0, %v3971
        %v3973 = vpop.f32.mrb[0].mxu0
        %3974 = vmatprep.mubr.f32.mxu0 0.0
        %3975 = vmatmul.mubr.f32.gmra.mrb[0].mxu0 %v3857
        %v3976 = vpop.f32.mrb[0].mxu0
        %v3977 = vadd.f32 0.0, %v3976
        %v3978 = vpop.f32.mrb[0].mxu0
        %3979 = vmatprep.mubr.f32.mxu0 0.0
        %3980 = vmatmul.mubr.f32.gmra.mrb[0].mxu0 %v3860
        %v3981 = vpop.f32.mrb[0].mxu0
        %v3982 = vadd.f32 0.0, %v3981
        %v3983 = vpop.f32.mrb[0].mxu0
        %3984 = vmatprep.mubr.f32.mxu0 0.0
        %3985 = vmatmul.mubr.f32.gmra.mrb[0].mxu0 %v3863
        %v3986 = vpop.f32.mrb[0].mxu0
        %v3987 = vadd.f32 0.0, %v3986
        %v3988 = vpop.f32.mrb[0].mxu0
        %3989 = vmatprep.mubr.f32.mxu0 0.0
        %3990 = vmatmul.mubr.f32.gmra.mrb[0].mxu0 %v3866
        %v3991 = vpop.f32.mrb[0].mxu0
        %v3992 = vadd.f32 0.0, %v3991
        %v3993 = vpop.f32.mrb[0].mxu0
        %3994 = vmatprep.mubr.f32.mxu0 0.0
        %3995 = vmatmul.mubr.f32.gmra.mrb[0].mxu0 %v3869
        %v3996 = vpop.f32.mrb[0].mxu0
        %v3997 = vadd.f32 0.0, %v3996
        %v3998 = vpop.f32.mrb[0].mxu0
        %3999 = vmatprep.mubr.f32.mxu0 0.0
        %4000 = vmatmul.mubr.f32.gmra.mrb[0].mxu0 %v3872
        %v4001 = vpop.f32.mrb[0].mxu0
        %v4002 = vadd.f32 0.0, %v4001
        %v4003 = vpop.f32.mrb[0].mxu0
        %4004 = vmatprep.mubr.f32.mxu0 0.0
        %4005 = vmatmul.mubr.f32.gmra.mrb[0].mxu0 %v3875
        %v4006 = vpop.f32.mrb[0].mxu0
        %v4007 = vadd.f32 0.0, %v4006
        %v4008 = vpop.f32.mrb[0].mxu0
        %4009 = vmatprep.mubr.f32.mxu0 0.0
        %4010 = vmatmul.mubr.f32.gmra.mrb[0].mxu0 %v3878
        %v4011 = vpop.f32.mrb[0].mxu0
        %v4012 = vadd.f32 0.0, %v4011
        %v4013 = vpop.f32.mrb[0].mxu0
        %4014 = vmatprep.mubr.f32.mxu0 0.0
        %4015 = vmatmul.mubr.f32.gmra.mrb[0].mxu0 %v3881
        %v4016 = vpop.f32.mrb[0].mxu0
        %v4017 = vadd.f32 0.0, %v4016
        %v4018 = vpop.f32.mrb[0].mxu0
        %4019 = vmatprep.mubr.f32.mxu0 0.0
        %4020 = vmatmul.mubr.f32.gmra.mrb[0].mxu0 %v3884
        %v4021 = vpop.f32.mrb[0].mxu0
        %v4022 = vadd.f32 0.0, %v4021
        %v4023 = vpop.f32.mrb[0].mxu0
        %4024 = vmatprep.mubr.f32.mxu0 0.0
        %4025 = vmatmul.mubr.f32.gmra.mrb[0].mxu0 %v3887
        %v4026 = vpop.f32.mrb[0].mxu0
        %v4027 = vadd.f32 0.0, %v4026
        %v4028 = vpop.f32.mrb[0].mxu0
        %4029 = vmatprep.mubr.f32.mxu0 0.0
        %4030 = vmatmul.mubr.f32.gmra.mrb[0].mxu0 %v3890
        %v4031 = vpop.f32.mrb[0].mxu0
        %v4032 = vadd.f32 0.0, %v4031
        %v4033 = vpop.f32.mrb[0].mxu0
        %4034 = vmatprep.mubr.f32.mxu0 0.0
        %4035 = vmatmul.mubr.f32.gmra.mrb[0].mxu0 %v3893
        %v4036 = vpop.f32.mrb[0].mxu0
        %v4037 = vadd.f32 0.0, %v4036
        %v4038 = vpop.f32.mrb[0].mxu0
        %4039 = vdwg.mxu0
        %4056 = vrot.lane.b32.xlu0 %v3962, 16
        %v4057 = vpop.permute.xlu0 %4056
        %4058 = vrot.lane.b32.xlu0 %v3967, 16
        %v4059 = vpop.permute.xlu0 %4058
        %4060 = vrot.lane.b32.xlu0 %v3972, 16
        %v4061 = vpop.permute.xlu0 %4060
        %4062 = vrot.lane.b32.xlu0 %v3977, 16
        %v4063 = vpop.permute.xlu0 %4062
        %4064 = vrot.lane.b32.xlu0 %v3982, 16
        %v4065 = vpop.permute.xlu0 %4064
        %4066 = vrot.lane.b32.xlu0 %v3987, 16
        %v4067 = vpop.permute.xlu0 %4066
        %4068 = vrot.lane.b32.xlu0 %v3992, 16
        %v4069 = vpop.permute.xlu0 %4068
        %4070 = vrot.lane.b32.xlu0 %v3997, 16
        %v4071 = vpop.permute.xlu0 %4070
        %4072 = vrot.lane.b32.xlu0 %v4002, 16
        %v4073 = vpop.permute.xlu0 %4072
        %4074 = vrot.lane.b32.xlu0 %v4007, 16
        %v4075 = vpop.permute.xlu0 %4074
        %4076 = vrot.lane.b32.xlu0 %v4012, 16
        %v4077 = vpop.permute.xlu0 %4076
        %4078 = vrot.lane.b32.xlu0 %v4017, 16
        %v4079 = vpop.permute.xlu0 %4078
        %4080 = vrot.lane.b32.xlu0 %v4022, 16
        %v4081 = vpop.permute.xlu0 %4080
        %4082 = vrot.lane.b32.xlu0 %v4027, 16
        %v4083 = vpop.permute.xlu0 %4082
        %4084 = vrot.lane.b32.xlu0 %v4032, 16
        %v4085 = vpop.permute.xlu0 %4084
        %4086 = vrot.lane.b32.xlu0 %v4037, 16
        %v4087 = vpop.permute.xlu0 %4086
        %v4104 = vadd.f32 %v3806, %v4057
        %v4105 = vadd.f32 %v3807, %v4059
        %v4106 = vadd.f32 %v3808, %v4061
        %v4107 = vadd.f32 %v3809, %v4063
        %v4108 = vadd.f32 %v3810, %v4065
        %v4109 = vadd.f32 %v3811, %v4067
        %v4110 = vadd.f32 %v3812, %v4069
        %v4111 = vadd.f32 %v3813, %v4071
        %v4112 = vadd.f32 %v3814, %v4073
        %v4113 = vadd.f32 %v3815, %v4075
        %v4114 = vadd.f32 %v3816, %v4077
        %v4115 = vadd.f32 %v3817, %v4079
        %v4116 = vadd.f32 %v3818, %v4081
        %v4117 = vadd.f32 %v3819, %v4083
        %v4118 = vadd.f32 %v3820, %v4085
        %v4119 = vadd.f32 %v3821, %v4087
        %v4120 = vld [vmem:[%s317 + $0x5] sm:$0xff]
        %v4121 = vld [vmem:[%s317 + $0xd] sm:$0xff]
        %v4122 = vld [vmem:[%s317 + $0x1d] sm:$0xff]
        %v4123 = vld [vmem:[%s317 + $0x25] sm:$0xff]
        %v4124 = vld [vmem:[%s317 + $0x35] sm:$0xff]
        %v4125 = vld [vmem:[%s317 + $0x3d] sm:$0xff]
        %v4126 = vld [vmem:[%s317 + $0x4d] sm:$0xff]
        %v4127 = vld [vmem:[%s317 + $0x55] sm:$0xff]
        %v4128 = vld [vmem:[%s317 + $0x65] sm:$0xff]
        %v4129 = vld [vmem:[%s317 + $0x6d] sm:$0xff]
        %v4130 = vld [vmem:[%s317 + $0x7d] sm:$0xff]
        %v4131 = vld [vmem:[%s317 + $0x85] sm:$0xff]
        %v4132 = vld [vmem:[%s317 + $0x95] sm:$0xff]
        %v4133 = vld [vmem:[%s317 + $0x9d] sm:$0xff]
        %v4134 = vld [vmem:[%s317 + $0xad] sm:$0xff]
        %v4135 = vld [vmem:[%s317 + $0xb5] sm:$0xff]
        %s4136 = scalar_lea.vmem %s2, 768
        %v4137 = vld [vmem:[%s4136] sm:$0xff]
        %v4138 = vld [vmem:[%s4136 + $0x8] sm:$0xff]
        %v4139 = vld [vmem:[%s4136 + $0x10] sm:$0xff]
        %v4140 = vld [vmem:[%s4136 + $0x18] sm:$0xff]
        %v4141 = vld [vmem:[%s4136 + $0x20] sm:$0xff]
        %v4142 = vld [vmem:[%s4136 + $0x28] sm:$0xff]
        %v4143 = vld [vmem:[%s4136 + $0x30] sm:$0xff]
        %v4144 = vld [vmem:[%s4136 + $0x38] sm:$0xff]
        %v4146 = vsel %vm342, %v4120, 0
        %v4149 = vsel %vm342, %v4121, 0
        %v4152 = vsel %vm342, %v4122, 0
        %v4155 = vsel %vm342, %v4123, 0
        %v4158 = vsel %vm342, %v4124, 0
        %v4161 = vsel %vm342, %v4125, 0
        %v4164 = vsel %vm342, %v4126, 0
        %v4167 = vsel %vm342, %v4127, 0
        %v4170 = vsel %vm342, %v4128, 0
        %v4173 = vsel %vm342, %v4129, 0
        %v4176 = vsel %vm342, %v4130, 0
        %v4179 = vsel %vm342, %v4131, 0
        %v4182 = vsel %vm342, %v4132, 0
        %v4185 = vsel %vm342, %v4133, 0
        %v4188 = vsel %vm342, %v4134, 0
        %v4191 = vsel %vm342, %v4135, 0
        %4193 = vmatprep.subr.mxu0 0.0
        %4194 = vmatpush1.msra.mxu0 %v4137
        %4195 = vmatprep.subr.mxu0 0.0
        %4196 = vmatpush1.msra.mxu0 %v4138
        %4197 = vmatprep.subr.mxu0 0.0
        %4198 = vmatpush1.msra.mxu0 %v4139
        %4199 = vmatprep.subr.mxu0 0.0
        %4200 = vmatpush1.msra.mxu0 %v4140
        %4201 = vmatprep.subr.mxu0 0.0
        %4202 = vmatpush1.msra.mxu0 %v4141
        %4203 = vmatprep.subr.mxu0 0.0
        %4204 = vmatpush1.msra.mxu0 %v4142
        %4205 = vmatprep.subr.mxu0 0.0
        %4206 = vmatpush1.msra.mxu0 %v4143
        %4207 = vmatprep.subr.mxu0 0.0
        %4208 = vmatpush1.msra.mxu0 %v4144
        %4209 = vmatprep.subr.mxu0 0.0
        %4210 = vmatpush1.msra.mxu0 0.0
        %4211 = vmatprep.subr.mxu0 0.0
        %4212 = vmatpush1.msra.mxu0 0.0
        %4213 = vmatprep.subr.mxu0 0.0
        %4214 = vmatpush1.msra.mxu0 0.0
        %4215 = vmatprep.subr.mxu0 0.0
        %4216 = vmatpush1.msra.mxu0 0.0
        %4217 = vmatprep.subr.mxu0 0.0
        %4218 = vmatpush1.msra.mxu0 0.0
        %4219 = vmatprep.subr.mxu0 0.0
        %4220 = vmatpush1.msra.mxu0 0.0
        %4221 = vmatprep.subr.mxu0 0.0
        %4222 = vmatpush1.msra.mxu0 0.0
        %4223 = vmatprep.subr.mxu0 0.0
        %4224 = vmatpush1.msra.mxu0 0.0
        %4225 = vmatprep.subr.mxu0 0.0
        %4226 = vmatpush1.msra.mxu0 0.0
        %4227 = vmatprep.subr.mxu0 0.0
        %4228 = vmatpush1.msra.mxu0 0.0
        %4229 = vmatprep.subr.mxu0 0.0
        %4230 = vmatpush1.msra.mxu0 0.0
        %4231 = vmatprep.subr.mxu0 0.0
        %4232 = vmatpush1.msra.mxu0 0.0
        %4233 = vmatprep.subr.mxu0 0.0
        %4234 = vmatpush1.msra.mxu0 0.0
        %4235 = vmatprep.subr.mxu0 0.0
        %4236 = vmatpush1.msra.mxu0 0.0
        %4237 = vmatprep.subr.mxu0 0.0
        %4238 = vmatpush1.msra.mxu0 0.0
        %4239 = vmatprep.subr.mxu0 0.0
        %4240 = vmatpush1.msra.mxu0 0.0
        %4241 = vmatprep.subr.mxu0 0.0
        %4242 = vmatpush1.msra.mxu0 0.0
        %4243 = vmatprep.subr.mxu0 0.0
        %4244 = vmatpush1.msra.mxu0 0.0
        %4245 = vmatprep.subr.mxu0 0.0
        %4246 = vmatpush1.msra.mxu0 0.0
        %4247 = vmatprep.subr.mxu0 0.0
        %4248 = vmatpush1.msra.mxu0 0.0
        %4249 = vmatprep.subr.mxu0 0.0
        %4250 = vmatpush1.msra.mxu0 0.0
        %4251 = vmatprep.subr.mxu0 0.0
        %4252 = vmatpush1.msra.mxu0 0.0
        %4253 = vmatprep.subr.mxu0 0.0
        %4254 = vmatpush1.msra.mxu0 0.0
        %4255 = vmatprep.subr.mxu0 0.0
        %4256 = vmatpush1.msra.mxu0 0.0
        %4257 = vmatprep.mubr.f32.mxu0 0.0
        %4258 = vmatmul.mubr.f32.gmra.mrb[0].mxu0 %v4146
        %v4259 = vpop.f32.mrb[0].mxu0
        %v4260 = vadd.f32 0.0, %v4259
        %v4261 = vpop.f32.mrb[0].mxu0
        %4262 = vmatprep.mubr.f32.mxu0 0.0
        %4263 = vmatmul.mubr.f32.gmra.mrb[0].mxu0 %v4149
        %v4264 = vpop.f32.mrb[0].mxu0
        %v4265 = vadd.f32 0.0, %v4264
        %v4266 = vpop.f32.mrb[0].mxu0
        %4267 = vmatprep.mubr.f32.mxu0 0.0
        %4268 = vmatmul.mubr.f32.gmra.mrb[0].mxu0 %v4152
        %v4269 = vpop.f32.mrb[0].mxu0
        %v4270 = vadd.f32 0.0, %v4269
        %v4271 = vpop.f32.mrb[0].mxu0
        %4272 = vmatprep.mubr.f32.mxu0 0.0
        %4273 = vmatmul.mubr.f32.gmra.mrb[0].mxu0 %v4155
        %v4274 = vpop.f32.mrb[0].mxu0
        %v4275 = vadd.f32 0.0, %v4274
        %v4276 = vpop.f32.mrb[0].mxu0
        %4277 = vmatprep.mubr.f32.mxu0 0.0
        %4278 = vmatmul.mubr.f32.gmra.mrb[0].mxu0 %v4158
        %v4279 = vpop.f32.mrb[0].mxu0
        %v4280 = vadd.f32 0.0, %v4279
        %v4281 = vpop.f32.mrb[0].mxu0
        %4282 = vmatprep.mubr.f32.mxu0 0.0
        %4283 = vmatmul.mubr.f32.gmra.mrb[0].mxu0 %v4161
        %v4284 = vpop.f32.mrb[0].mxu0
        %v4285 = vadd.f32 0.0, %v4284
        %v4286 = vpop.f32.mrb[0].mxu0
        %4287 = vmatprep.mubr.f32.mxu0 0.0
        %4288 = vmatmul.mubr.f32.gmra.mrb[0].mxu0 %v4164
        %v4289 = vpop.f32.mrb[0].mxu0
        %v4290 = vadd.f32 0.0, %v4289
        %v4291 = vpop.f32.mrb[0].mxu0
        %4292 = vmatprep.mubr.f32.mxu0 0.0
        %4293 = vmatmul.mubr.f32.gmra.mrb[0].mxu0 %v4167
        %v4294 = vpop.f32.mrb[0].mxu0
        %v4295 = vadd.f32 0.0, %v4294
        %v4296 = vpop.f32.mrb[0].mxu0
        %4297 = vmatprep.mubr.f32.mxu0 0.0
        %4298 = vmatmul.mubr.f32.gmra.mrb[0].mxu0 %v4170
        %v4299 = vpop.f32.mrb[0].mxu0
        %v4300 = vadd.f32 0.0, %v4299
        %v4301 = vpop.f32.mrb[0].mxu0
        %4302 = vmatprep.mubr.f32.mxu0 0.0
        %4303 = vmatmul.mubr.f32.gmra.mrb[0].mxu0 %v4173
        %v4304 = vpop.f32.mrb[0].mxu0
        %v4305 = vadd.f32 0.0, %v4304
        %v4306 = vpop.f32.mrb[0].mxu0
        %4307 = vmatprep.mubr.f32.mxu0 0.0
        %4308 = vmatmul.mubr.f32.gmra.mrb[0].mxu0 %v4176
        %v4309 = vpop.f32.mrb[0].mxu0
        %v4310 = vadd.f32 0.0, %v4309
        %v4311 = vpop.f32.mrb[0].mxu0
        %4312 = vmatprep.mubr.f32.mxu0 0.0
        %4313 = vmatmul.mubr.f32.gmra.mrb[0].mxu0 %v4179
        %v4314 = vpop.f32.mrb[0].mxu0
        %v4315 = vadd.f32 0.0, %v4314
        %v4316 = vpop.f32.mrb[0].mxu0
        %4317 = vmatprep.mubr.f32.mxu0 0.0
        %4318 = vmatmul.mubr.f32.gmra.mrb[0].mxu0 %v4182
        %v4319 = vpop.f32.mrb[0].mxu0
        %v4320 = vadd.f32 0.0, %v4319
        %v4321 = vpop.f32.mrb[0].mxu0
        %4322 = vmatprep.mubr.f32.mxu0 0.0
        %4323 = vmatmul.mubr.f32.gmra.mrb[0].mxu0 %v4185
        %v4324 = vpop.f32.mrb[0].mxu0
        %v4325 = vadd.f32 0.0, %v4324
        %v4326 = vpop.f32.mrb[0].mxu0
        %4327 = vmatprep.mubr.f32.mxu0 0.0
        %4328 = vmatmul.mubr.f32.gmra.mrb[0].mxu0 %v4188
        %v4329 = vpop.f32.mrb[0].mxu0
        %v4330 = vadd.f32 0.0, %v4329
        %v4331 = vpop.f32.mrb[0].mxu0
        %4332 = vmatprep.mubr.f32.mxu0 0.0
        %4333 = vmatmul.mubr.f32.gmra.mrb[0].mxu0 %v4191
        %v4334 = vpop.f32.mrb[0].mxu0
        %v4335 = vadd.f32 0.0, %v4334
        %v4336 = vpop.f32.mrb[0].mxu0
        %4337 = vdwg.mxu0
        %4354 = vrot.lane.b32.xlu0 %v4260, 16
        %v4355 = vpop.permute.xlu0 %4354
        %4356 = vrot.lane.b32.xlu0 %v4265, 16
        %v4357 = vpop.permute.xlu0 %4356
        %4358 = vrot.lane.b32.xlu0 %v4270, 16
        %v4359 = vpop.permute.xlu0 %4358
        %4360 = vrot.lane.b32.xlu0 %v4275, 16
        %v4361 = vpop.permute.xlu0 %4360
        %4362 = vrot.lane.b32.xlu0 %v4280, 16
        %v4363 = vpop.permute.xlu0 %4362
        %4364 = vrot.lane.b32.xlu0 %v4285, 16
        %v4365 = vpop.permute.xlu0 %4364
        %4366 = vrot.lane.b32.xlu0 %v4290, 16
        %v4367 = vpop.permute.xlu0 %4366
        %4368 = vrot.lane.b32.xlu0 %v4295, 16
        %v4369 = vpop.permute.xlu0 %4368
        %4370 = vrot.lane.b32.xlu0 %v4300, 16
        %v4371 = vpop.permute.xlu0 %4370
        %4372 = vrot.lane.b32.xlu0 %v4305, 16
        %v4373 = vpop.permute.xlu0 %4372
        %4374 = vrot.lane.b32.xlu0 %v4310, 16
        %v4375 = vpop.permute.xlu0 %4374
        %4376 = vrot.lane.b32.xlu0 %v4315, 16
        %v4377 = vpop.permute.xlu0 %4376
        %4378 = vrot.lane.b32.xlu0 %v4320, 16
        %v4379 = vpop.permute.xlu0 %4378
        %4380 = vrot.lane.b32.xlu0 %v4325, 16
        %v4381 = vpop.permute.xlu0 %4380
        %4382 = vrot.lane.b32.xlu0 %v4330, 16
        %v4383 = vpop.permute.xlu0 %4382
        %4384 = vrot.lane.b32.xlu0 %v4335, 16
        %v4385 = vpop.permute.xlu0 %4384
        %v4402 = vadd.f32 %v4104, %v4355
        %v4403 = vadd.f32 %v4105, %v4357
        %v4404 = vadd.f32 %v4106, %v4359
        %v4405 = vadd.f32 %v4107, %v4361
        %v4406 = vadd.f32 %v4108, %v4363
        %v4407 = vadd.f32 %v4109, %v4365
        %v4408 = vadd.f32 %v4110, %v4367
        %v4409 = vadd.f32 %v4111, %v4369
        %v4410 = vadd.f32 %v4112, %v4371
        %v4411 = vadd.f32 %v4113, %v4373
        %v4412 = vadd.f32 %v4114, %v4375
        %v4413 = vadd.f32 %v4115, %v4377
        %v4414 = vadd.f32 %v4116, %v4379
        %v4415 = vadd.f32 %v4117, %v4381
        %v4416 = vadd.f32 %v4118, %v4383
        %v4417 = vadd.f32 %v4119, %v4385
        %s4418 = sadd.s32 %s314, 5
        %s4419 = smul.u32 %s4418, 24
        %s4420 = scalar_lea.vmem %s302, %s4419
        %v4421 = vld [vmem:[%s4420 + $0x1] sm:$0xff]
        %v4422 = vld [vmem:[%s4420 + $0x9] sm:$0xff]
        %v4423 = vld [vmem:[%s4420 + $0x19] sm:$0xff]
        %v4424 = vld [vmem:[%s4420 + $0x21] sm:$0xff]
        %v4425 = vld [vmem:[%s4420 + $0x31] sm:$0xff]
        %v4426 = vld [vmem:[%s4420 + $0x39] sm:$0xff]
        %v4427 = vld [vmem:[%s4420 + $0x49] sm:$0xff]
        %v4428 = vld [vmem:[%s4420 + $0x51] sm:$0xff]
        %v4429 = vld [vmem:[%s4420 + $0x61] sm:$0xff]
        %v4430 = vld [vmem:[%s4420 + $0x69] sm:$0xff]
        %v4431 = vld [vmem:[%s4420 + $0x79] sm:$0xff]
        %v4432 = vld [vmem:[%s4420 + $0x81] sm:$0xff]
        %v4433 = vld [vmem:[%s4420 + $0x91] sm:$0xff]
        %v4434 = vld [vmem:[%s4420 + $0x99] sm:$0xff]
        %v4435 = vld [vmem:[%s4420 + $0xa9] sm:$0xff]
        %v4436 = vld [vmem:[%s4420 + $0xb1] sm:$0xff]
        %s4437 = scalar_lea.vmem %s2, 832
        %v4438 = vld [vmem:[%s4437] sm:$0xff]
        %v4439 = vld [vmem:[%s4437 + $0x8] sm:$0xff]
        %v4440 = vld [vmem:[%s4437 + $0x10] sm:$0xff]
        %v4441 = vld [vmem:[%s4437 + $0x18] sm:$0xff]
        %v4442 = vld [vmem:[%s4437 + $0x20] sm:$0xff]
        %v4443 = vld [vmem:[%s4437 + $0x28] sm:$0xff]
        %v4444 = vld [vmem:[%s4437 + $0x30] sm:$0xff]
        %v4445 = vld [vmem:[%s4437 + $0x38] sm:$0xff]
        %v4447 = vsel %vm342, %v4421, 0
        %v4450 = vsel %vm342, %v4422, 0
        %v4453 = vsel %vm342, %v4423, 0
        %v4456 = vsel %vm342, %v4424, 0
        %v4459 = vsel %vm342, %v4425, 0
        %v4462 = vsel %vm342, %v4426, 0
        %v4465 = vsel %vm342, %v4427, 0
        %v4468 = vsel %vm342, %v4428, 0
        %v4471 = vsel %vm342, %v4429, 0
        %v4474 = vsel %vm342, %v4430, 0
        %v4477 = vsel %vm342, %v4431, 0
        %v4480 = vsel %vm342, %v4432, 0
        %v4483 = vsel %vm342, %v4433, 0
        %v4486 = vsel %vm342, %v4434, 0
        %v4489 = vsel %vm342, %v4435, 0
        %v4492 = vsel %vm342, %v4436, 0
        %4494 = vmatprep.subr.mxu0 0.0
        %4495 = vmatpush1.msra.mxu0 %v4438
        %4496 = vmatprep.subr.mxu0 0.0
        %4497 = vmatpush1.msra.mxu0 %v4439
        %4498 = vmatprep.subr.mxu0 0.0
        %4499 = vmatpush1.msra.mxu0 %v4440
        %4500 = vmatprep.subr.mxu0 0.0
        %4501 = vmatpush1.msra.mxu0 %v4441
        %4502 = vmatprep.subr.mxu0 0.0
        %4503 = vmatpush1.msra.mxu0 %v4442
        %4504 = vmatprep.subr.mxu0 0.0
        %4505 = vmatpush1.msra.mxu0 %v4443
        %4506 = vmatprep.subr.mxu0 0.0
        %4507 = vmatpush1.msra.mxu0 %v4444
        %4508 = vmatprep.subr.mxu0 0.0
        %4509 = vmatpush1.msra.mxu0 %v4445
        %4510 = vmatprep.subr.mxu0 0.0
        %4511 = vmatpush1.msra.mxu0 0.0
        %4512 = vmatprep.subr.mxu0 0.0
        %4513 = vmatpush1.msra.mxu0 0.0
        %4514 = vmatprep.subr.mxu0 0.0
        %4515 = vmatpush1.msra.mxu0 0.0
        %4516 = vmatprep.subr.mxu0 0.0
        %4517 = vmatpush1.msra.mxu0 0.0
        %4518 = vmatprep.subr.mxu0 0.0
        %4519 = vmatpush1.msra.mxu0 0.0
        %4520 = vmatprep.subr.mxu0 0.0
        %4521 = vmatpush1.msra.mxu0 0.0
        %4522 = vmatprep.subr.mxu0 0.0
        %4523 = vmatpush1.msra.mxu0 0.0
        %4524 = vmatprep.subr.mxu0 0.0
        %4525 = vmatpush1.msra.mxu0 0.0
        %4526 = vmatprep.subr.mxu0 0.0
        %4527 = vmatpush1.msra.mxu0 0.0
        %4528 = vmatprep.subr.mxu0 0.0
        %4529 = vmatpush1.msra.mxu0 0.0
        %4530 = vmatprep.subr.mxu0 0.0
        %4531 = vmatpush1.msra.mxu0 0.0
        %4532 = vmatprep.subr.mxu0 0.0
        %4533 = vmatpush1.msra.mxu0 0.0
        %4534 = vmatprep.subr.mxu0 0.0
        %4535 = vmatpush1.msra.mxu0 0.0
        %4536 = vmatprep.subr.mxu0 0.0
        %4537 = vmatpush1.msra.mxu0 0.0
        %4538 = vmatprep.subr.mxu0 0.0
        %4539 = vmatpush1.msra.mxu0 0.0
        %4540 = vmatprep.subr.mxu0 0.0
        %4541 = vmatpush1.msra.mxu0 0.0
        %4542 = vmatprep.subr.mxu0 0.0
        %4543 = vmatpush1.msra.mxu0 0.0
        %4544 = vmatprep.subr.mxu0 0.0
        %4545 = vmatpush1.msra.mxu0 0.0
        %4546 = vmatprep.subr.mxu0 0.0
        %4547 = vmatpush1.msra.mxu0 0.0
        %4548 = vmatprep.subr.mxu0 0.0
        %4549 = vmatpush1.msra.mxu0 0.0
        %4550 = vmatprep.subr.mxu0 0.0
        %4551 = vmatpush1.msra.mxu0 0.0
        %4552 = vmatprep.subr.mxu0 0.0
        %4553 = vmatpush1.msra.mxu0 0.0
        %4554 = vmatprep.subr.mxu0 0.0
        %4555 = vmatpush1.msra.mxu0 0.0
        %4556 = vmatprep.subr.mxu0 0.0
        %4557 = vmatpush1.msra.mxu0 0.0
        %4558 = vmatprep.mubr.f32.mxu0 0.0
        %4559 = vmatmul.mubr.f32.gmra.mrb[0].mxu0 %v4447
        %v4560 = vpop.f32.mrb[0].mxu0
        %v4561 = vadd.f32 0.0, %v4560
        %v4562 = vpop.f32.mrb[0].mxu0
        %4563 = vmatprep.mubr.f32.mxu0 0.0
        %4564 = vmatmul.mubr.f32.gmra.mrb[0].mxu0 %v4450
        %v4565 = vpop.f32.mrb[0].mxu0
        %v4566 = vadd.f32 0.0, %v4565
        %v4567 = vpop.f32.mrb[0].mxu0
        %4568 = vmatprep.mubr.f32.mxu0 0.0
        %4569 = vmatmul.mubr.f32.gmra.mrb[0].mxu0 %v4453
        %v4570 = vpop.f32.mrb[0].mxu0
        %v4571 = vadd.f32 0.0, %v4570
        %v4572 = vpop.f32.mrb[0].mxu0
        %4573 = vmatprep.mubr.f32.mxu0 0.0
        %4574 = vmatmul.mubr.f32.gmra.mrb[0].mxu0 %v4456
        %v4575 = vpop.f32.mrb[0].mxu0
        %v4576 = vadd.f32 0.0, %v4575
        %v4577 = vpop.f32.mrb[0].mxu0
        %4578 = vmatprep.mubr.f32.mxu0 0.0
        %4579 = vmatmul.mubr.f32.gmra.mrb[0].mxu0 %v4459
        %v4580 = vpop.f32.mrb[0].mxu0
        %v4581 = vadd.f32 0.0, %v4580
        %v4582 = vpop.f32.mrb[0].mxu0
        %4583 = vmatprep.mubr.f32.mxu0 0.0
        %4584 = vmatmul.mubr.f32.gmra.mrb[0].mxu0 %v4462
        %v4585 = vpop.f32.mrb[0].mxu0
        %v4586 = vadd.f32 0.0, %v4585
        %v4587 = vpop.f32.mrb[0].mxu0
        %4588 = vmatprep.mubr.f32.mxu0 0.0
        %4589 = vmatmul.mubr.f32.gmra.mrb[0].mxu0 %v4465
        %v4590 = vpop.f32.mrb[0].mxu0
        %v4591 = vadd.f32 0.0, %v4590
        %v4592 = vpop.f32.mrb[0].mxu0
        %4593 = vmatprep.mubr.f32.mxu0 0.0
        %4594 = vmatmul.mubr.f32.gmra.mrb[0].mxu0 %v4468
        %v4595 = vpop.f32.mrb[0].mxu0
        %v4596 = vadd.f32 0.0, %v4595
        %v4597 = vpop.f32.mrb[0].mxu0
        %4598 = vmatprep.mubr.f32.mxu0 0.0
        %4599 = vmatmul.mubr.f32.gmra.mrb[0].mxu0 %v4471
        %v4600 = vpop.f32.mrb[0].mxu0
        %v4601 = vadd.f32 0.0, %v4600
        %v4602 = vpop.f32.mrb[0].mxu0
        %4603 = vmatprep.mubr.f32.mxu0 0.0
        %4604 = vmatmul.mubr.f32.gmra.mrb[0].mxu0 %v4474
        %v4605 = vpop.f32.mrb[0].mxu0
        %v4606 = vadd.f32 0.0, %v4605
        %v4607 = vpop.f32.mrb[0].mxu0
        %4608 = vmatprep.mubr.f32.mxu0 0.0
        %4609 = vmatmul.mubr.f32.gmra.mrb[0].mxu0 %v4477
        %v4610 = vpop.f32.mrb[0].mxu0
        %v4611 = vadd.f32 0.0, %v4610
        %v4612 = vpop.f32.mrb[0].mxu0
        %4613 = vmatprep.mubr.f32.mxu0 0.0
        %4614 = vmatmul.mubr.f32.gmra.mrb[0].mxu0 %v4480
        %v4615 = vpop.f32.mrb[0].mxu0
        %v4616 = vadd.f32 0.0, %v4615
        %v4617 = vpop.f32.mrb[0].mxu0
        %4618 = vmatprep.mubr.f32.mxu0 0.0
        %4619 = vmatmul.mubr.f32.gmra.mrb[0].mxu0 %v4483
        %v4620 = vpop.f32.mrb[0].mxu0
        %v4621 = vadd.f32 0.0, %v4620
        %v4622 = vpop.f32.mrb[0].mxu0
        %4623 = vmatprep.mubr.f32.mxu0 0.0
        %4624 = vmatmul.mubr.f32.gmra.mrb[0].mxu0 %v4486
        %v4625 = vpop.f32.mrb[0].mxu0
        %v4626 = vadd.f32 0.0, %v4625
        %v4627 = vpop.f32.mrb[0].mxu0
        %4628 = vmatprep.mubr.f32.mxu0 0.0
        %4629 = vmatmul.mubr.f32.gmra.mrb[0].mxu0 %v4489
        %v4630 = vpop.f32.mrb[0].mxu0
        %v4631 = vadd.f32 0.0, %v4630
        %v4632 = vpop.f32.mrb[0].mxu0
        %4633 = vmatprep.mubr.f32.mxu0 0.0
        %4634 = vmatmul.mubr.f32.gmra.mrb[0].mxu0 %v4492
        %v4635 = vpop.f32.mrb[0].mxu0
        %v4636 = vadd.f32 0.0, %v4635
        %v4637 = vpop.f32.mrb[0].mxu0
        %4638 = vdwg.mxu0
        %4655 = vrot.lane.b32.xlu0 %v4561, 16
        %v4656 = vpop.permute.xlu0 %4655
        %4657 = vrot.lane.b32.xlu0 %v4566, 16
        %v4658 = vpop.permute.xlu0 %4657
        %4659 = vrot.lane.b32.xlu0 %v4571, 16
        %v4660 = vpop.permute.xlu0 %4659
        %4661 = vrot.lane.b32.xlu0 %v4576, 16
        %v4662 = vpop.permute.xlu0 %4661
        %4663 = vrot.lane.b32.xlu0 %v4581, 16
        %v4664 = vpop.permute.xlu0 %4663
        %4665 = vrot.lane.b32.xlu0 %v4586, 16
        %v4666 = vpop.permute.xlu0 %4665
        %4667 = vrot.lane.b32.xlu0 %v4591, 16
        %v4668 = vpop.permute.xlu0 %4667
        %4669 = vrot.lane.b32.xlu0 %v4596, 16
        %v4670 = vpop.permute.xlu0 %4669
        %4671 = vrot.lane.b32.xlu0 %v4601, 16
        %v4672 = vpop.permute.xlu0 %4671
        %4673 = vrot.lane.b32.xlu0 %v4606, 16
        %v4674 = vpop.permute.xlu0 %4673
        %4675 = vrot.lane.b32.xlu0 %v4611, 16
        %v4676 = vpop.permute.xlu0 %4675
        %4677 = vrot.lane.b32.xlu0 %v4616, 16
        %v4678 = vpop.permute.xlu0 %4677
        %4679 = vrot.lane.b32.xlu0 %v4621, 16
        %v4680 = vpop.permute.xlu0 %4679
        %4681 = vrot.lane.b32.xlu0 %v4626, 16
        %v4682 = vpop.permute.xlu0 %4681
        %4683 = vrot.lane.b32.xlu0 %v4631, 16
        %v4684 = vpop.permute.xlu0 %4683
        %4685 = vrot.lane.b32.xlu0 %v4636, 16
        %v4686 = vpop.permute.xlu0 %4685
        %v4703 = vadd.f32 %v4402, %v4656
        %v4704 = vadd.f32 %v4403, %v4658
        %v4705 = vadd.f32 %v4404, %v4660
        %v4706 = vadd.f32 %v4405, %v4662
        %v4707 = vadd.f32 %v4406, %v4664
        %v4708 = vadd.f32 %v4407, %v4666
        %v4709 = vadd.f32 %v4408, %v4668
        %v4710 = vadd.f32 %v4409, %v4670
        %v4711 = vadd.f32 %v4410, %v4672
        %v4712 = vadd.f32 %v4411, %v4674
        %v4713 = vadd.f32 %v4412, %v4676
        %v4714 = vadd.f32 %v4413, %v4678
        %v4715 = vadd.f32 %v4414, %v4680
        %v4716 = vadd.f32 %v4415, %v4682
        %v4717 = vadd.f32 %v4416, %v4684
        %v4718 = vadd.f32 %v4417, %v4686
        %v4719 = vld [vmem:[%s4420 + $0x3] sm:$0xff]
        %v4720 = vld [vmem:[%s4420 + $0xb] sm:$0xff]
        %v4721 = vld [vmem:[%s4420 + $0x1b] sm:$0xff]
        %v4722 = vld [vmem:[%s4420 + $0x23] sm:$0xff]
        %v4723 = vld [vmem:[%s4420 + $0x33] sm:$0xff]
        %v4724 = vld [vmem:[%s4420 + $0x3b] sm:$0xff]
        %v4725 = vld [vmem:[%s4420 + $0x4b] sm:$0xff]
        %v4726 = vld [vmem:[%s4420 + $0x53] sm:$0xff]
        %v4727 = vld [vmem:[%s4420 + $0x63] sm:$0xff]
        %v4728 = vld [vmem:[%s4420 + $0x6b] sm:$0xff]
        %v4729 = vld [vmem:[%s4420 + $0x7b] sm:$0xff]
        %v4730 = vld [vmem:[%s4420 + $0x83] sm:$0xff]
        %v4731 = vld [vmem:[%s4420 + $0x93] sm:$0xff]
        %v4732 = vld [vmem:[%s4420 + $0x9b] sm:$0xff]
        %v4733 = vld [vmem:[%s4420 + $0xab] sm:$0xff]
        %v4734 = vld [vmem:[%s4420 + $0xb3] sm:$0xff]
        %s4735 = scalar_lea.vmem %s2, 896
        %v4736 = vld [vmem:[%s4735] sm:$0xff]
        %v4737 = vld [vmem:[%s4735 + $0x8] sm:$0xff]
        %v4738 = vld [vmem:[%s4735 + $0x10] sm:$0xff]
        %v4739 = vld [vmem:[%s4735 + $0x18] sm:$0xff]
        %v4740 = vld [vmem:[%s4735 + $0x20] sm:$0xff]
        %v4741 = vld [vmem:[%s4735 + $0x28] sm:$0xff]
        %v4742 = vld [vmem:[%s4735 + $0x30] sm:$0xff]
        %v4743 = vld [vmem:[%s4735 + $0x38] sm:$0xff]
        %v4745 = vsel %vm342, %v4719, 0
        %v4748 = vsel %vm342, %v4720, 0
        %v4751 = vsel %vm342, %v4721, 0
        %v4754 = vsel %vm342, %v4722, 0
        %v4757 = vsel %vm342, %v4723, 0
        %v4760 = vsel %vm342, %v4724, 0
        %v4763 = vsel %vm342, %v4725, 0
        %v4766 = vsel %vm342, %v4726, 0
        %v4769 = vsel %vm342, %v4727, 0
        %v4772 = vsel %vm342, %v4728, 0
        %v4775 = vsel %vm342, %v4729, 0
        %v4778 = vsel %vm342, %v4730, 0
        %v4781 = vsel %vm342, %v4731, 0
        %v4784 = vsel %vm342, %v4732, 0
        %v4787 = vsel %vm342, %v4733, 0
        %v4790 = vsel %vm342, %v4734, 0
        %4792 = vmatprep.subr.mxu0 0.0
        %4793 = vmatpush1.msra.mxu0 %v4736
        %4794 = vmatprep.subr.mxu0 0.0
        %4795 = vmatpush1.msra.mxu0 %v4737
        %4796 = vmatprep.subr.mxu0 0.0
        %4797 = vmatpush1.msra.mxu0 %v4738
        %4798 = vmatprep.subr.mxu0 0.0
        %4799 = vmatpush1.msra.mxu0 %v4739
        %4800 = vmatprep.subr.mxu0 0.0
        %4801 = vmatpush1.msra.mxu0 %v4740
        %4802 = vmatprep.subr.mxu0 0.0
        %4803 = vmatpush1.msra.mxu0 %v4741
        %4804 = vmatprep.subr.mxu0 0.0
        %4805 = vmatpush1.msra.mxu0 %v4742
        %4806 = vmatprep.subr.mxu0 0.0
        %4807 = vmatpush1.msra.mxu0 %v4743
        %4808 = vmatprep.subr.mxu0 0.0
        %4809 = vmatpush1.msra.mxu0 0.0
        %4810 = vmatprep.subr.mxu0 0.0
        %4811 = vmatpush1.msra.mxu0 0.0
        %4812 = vmatprep.subr.mxu0 0.0
        %4813 = vmatpush1.msra.mxu0 0.0
        %4814 = vmatprep.subr.mxu0 0.0
        %4815 = vmatpush1.msra.mxu0 0.0
        %4816 = vmatprep.subr.mxu0 0.0
        %4817 = vmatpush1.msra.mxu0 0.0
        %4818 = vmatprep.subr.mxu0 0.0
        %4819 = vmatpush1.msra.mxu0 0.0
        %4820 = vmatprep.subr.mxu0 0.0
        %4821 = vmatpush1.msra.mxu0 0.0
        %4822 = vmatprep.subr.mxu0 0.0
        %4823 = vmatpush1.msra.mxu0 0.0
        %4824 = vmatprep.subr.mxu0 0.0
        %4825 = vmatpush1.msra.mxu0 0.0
        %4826 = vmatprep.subr.mxu0 0.0
        %4827 = vmatpush1.msra.mxu0 0.0
        %4828 = vmatprep.subr.mxu0 0.0
        %4829 = vmatpush1.msra.mxu0 0.0
        %4830 = vmatprep.subr.mxu0 0.0
        %4831 = vmatpush1.msra.mxu0 0.0
        %4832 = vmatprep.subr.mxu0 0.0
        %4833 = vmatpush1.msra.mxu0 0.0
        %4834 = vmatprep.subr.mxu0 0.0
        %4835 = vmatpush1.msra.mxu0 0.0
        %4836 = vmatprep.subr.mxu0 0.0
        %4837 = vmatpush1.msra.mxu0 0.0
        %4838 = vmatprep.subr.mxu0 0.0
        %4839 = vmatpush1.msra.mxu0 0.0
        %4840 = vmatprep.subr.mxu0 0.0
        %4841 = vmatpush1.msra.mxu0 0.0
        %4842 = vmatprep.subr.mxu0 0.0
        %4843 = vmatpush1.msra.mxu0 0.0
        %4844 = vmatprep.subr.mxu0 0.0
        %4845 = vmatpush1.msra.mxu0 0.0
        %4846 = vmatprep.subr.mxu0 0.0
        %4847 = vmatpush1.msra.mxu0 0.0
        %4848 = vmatprep.subr.mxu0 0.0
        %4849 = vmatpush1.msra.mxu0 0.0
        %4850 = vmatprep.subr.mxu0 0.0
        %4851 = vmatpush1.msra.mxu0 0.0
        %4852 = vmatprep.subr.mxu0 0.0
        %4853 = vmatpush1.msra.mxu0 0.0
        %4854 = vmatprep.subr.mxu0 0.0
        %4855 = vmatpush1.msra.mxu0 0.0
        %4856 = vmatprep.mubr.f32.mxu0 0.0
        %4857 = vmatmul.mubr.f32.gmra.mrb[0].mxu0 %v4745
        %v4858 = vpop.f32.mrb[0].mxu0
        %v4859 = vadd.f32 0.0, %v4858
        %v4860 = vpop.f32.mrb[0].mxu0
        %4861 = vmatprep.mubr.f32.mxu0 0.0
        %4862 = vmatmul.mubr.f32.gmra.mrb[0].mxu0 %v4748
        %v4863 = vpop.f32.mrb[0].mxu0
        %v4864 = vadd.f32 0.0, %v4863
        %v4865 = vpop.f32.mrb[0].mxu0
        %4866 = vmatprep.mubr.f32.mxu0 0.0
        %4867 = vmatmul.mubr.f32.gmra.mrb[0].mxu0 %v4751
        %v4868 = vpop.f32.mrb[0].mxu0
        %v4869 = vadd.f32 0.0, %v4868
        %v4870 = vpop.f32.mrb[0].mxu0
        %4871 = vmatprep.mubr.f32.mxu0 0.0
        %4872 = vmatmul.mubr.f32.gmra.mrb[0].mxu0 %v4754
        %v4873 = vpop.f32.mrb[0].mxu0
        %v4874 = vadd.f32 0.0, %v4873
        %v4875 = vpop.f32.mrb[0].mxu0
        %4876 = vmatprep.mubr.f32.mxu0 0.0
        %4877 = vmatmul.mubr.f32.gmra.mrb[0].mxu0 %v4757
        %v4878 = vpop.f32.mrb[0].mxu0
        %v4879 = vadd.f32 0.0, %v4878
        %v4880 = vpop.f32.mrb[0].mxu0
        %4881 = vmatprep.mubr.f32.mxu0 0.0
        %4882 = vmatmul.mubr.f32.gmra.mrb[0].mxu0 %v4760
        %v4883 = vpop.f32.mrb[0].mxu0
        %v4884 = vadd.f32 0.0, %v4883
        %v4885 = vpop.f32.mrb[0].mxu0
        %4886 = vmatprep.mubr.f32.mxu0 0.0
        %4887 = vmatmul.mubr.f32.gmra.mrb[0].mxu0 %v4763
        %v4888 = vpop.f32.mrb[0].mxu0
        %v4889 = vadd.f32 0.0, %v4888
        %v4890 = vpop.f32.mrb[0].mxu0
        %4891 = vmatprep.mubr.f32.mxu0 0.0
        %4892 = vmatmul.mubr.f32.gmra.mrb[0].mxu0 %v4766
        %v4893 = vpop.f32.mrb[0].mxu0
        %v4894 = vadd.f32 0.0, %v4893
        %v4895 = vpop.f32.mrb[0].mxu0
        %4896 = vmatprep.mubr.f32.mxu0 0.0
        %4897 = vmatmul.mubr.f32.gmra.mrb[0].mxu0 %v4769
        %v4898 = vpop.f32.mrb[0].mxu0
        %v4899 = vadd.f32 0.0, %v4898
        %v4900 = vpop.f32.mrb[0].mxu0
        %4901 = vmatprep.mubr.f32.mxu0 0.0
        %4902 = vmatmul.mubr.f32.gmra.mrb[0].mxu0 %v4772
        %v4903 = vpop.f32.mrb[0].mxu0
        %v4904 = vadd.f32 0.0, %v4903
        %v4905 = vpop.f32.mrb[0].mxu0
        %4906 = vmatprep.mubr.f32.mxu0 0.0
        %4907 = vmatmul.mubr.f32.gmra.mrb[0].mxu0 %v4775
        %v4908 = vpop.f32.mrb[0].mxu0
        %v4909 = vadd.f32 0.0, %v4908
        %v4910 = vpop.f32.mrb[0].mxu0
        %4911 = vmatprep.mubr.f32.mxu0 0.0
        %4912 = vmatmul.mubr.f32.gmra.mrb[0].mxu0 %v4778
        %v4913 = vpop.f32.mrb[0].mxu0
        %v4914 = vadd.f32 0.0, %v4913
        %v4915 = vpop.f32.mrb[0].mxu0
        %4916 = vmatprep.mubr.f32.mxu0 0.0
        %4917 = vmatmul.mubr.f32.gmra.mrb[0].mxu0 %v4781
        %v4918 = vpop.f32.mrb[0].mxu0
        %v4919 = vadd.f32 0.0, %v4918
        %v4920 = vpop.f32.mrb[0].mxu0
        %4921 = vmatprep.mubr.f32.mxu0 0.0
        %4922 = vmatmul.mubr.f32.gmra.mrb[0].mxu0 %v4784
        %v4923 = vpop.f32.mrb[0].mxu0
        %v4924 = vadd.f32 0.0, %v4923
        %v4925 = vpop.f32.mrb[0].mxu0
        %4926 = vmatprep.mubr.f32.mxu0 0.0
        %4927 = vmatmul.mubr.f32.gmra.mrb[0].mxu0 %v4787
        %v4928 = vpop.f32.mrb[0].mxu0
        %v4929 = vadd.f32 0.0, %v4928
        %v4930 = vpop.f32.mrb[0].mxu0
        %4931 = vmatprep.mubr.f32.mxu0 0.0
        %4932 = vmatmul.mubr.f32.gmra.mrb[0].mxu0 %v4790
        %v4933 = vpop.f32.mrb[0].mxu0
        %v4934 = vadd.f32 0.0, %v4933
        %v4935 = vpop.f32.mrb[0].mxu0
        %4936 = vdwg.mxu0
        %4953 = vrot.lane.b32.xlu0 %v4859, 16
        %v4954 = vpop.permute.xlu0 %4953
        %4955 = vrot.lane.b32.xlu0 %v4864, 16
        %v4956 = vpop.permute.xlu0 %4955
        %4957 = vrot.lane.b32.xlu0 %v4869, 16
        %v4958 = vpop.permute.xlu0 %4957
        %4959 = vrot.lane.b32.xlu0 %v4874, 16
        %v4960 = vpop.permute.xlu0 %4959
        %4961 = vrot.lane.b32.xlu0 %v4879, 16
        %v4962 = vpop.permute.xlu0 %4961
        %4963 = vrot.lane.b32.xlu0 %v4884, 16
        %v4964 = vpop.permute.xlu0 %4963
        %4965 = vrot.lane.b32.xlu0 %v4889, 16
        %v4966 = vpop.permute.xlu0 %4965
        %4967 = vrot.lane.b32.xlu0 %v4894, 16
        %v4968 = vpop.permute.xlu0 %4967
        %4969 = vrot.lane.b32.xlu0 %v4899, 16
        %v4970 = vpop.permute.xlu0 %4969
        %4971 = vrot.lane.b32.xlu0 %v4904, 16
        %v4972 = vpop.permute.xlu0 %4971
        %4973 = vrot.lane.b32.xlu0 %v4909, 16
        %v4974 = vpop.permute.xlu0 %4973
        %4975 = vrot.lane.b32.xlu0 %v4914, 16
        %v4976 = vpop.permute.xlu0 %4975
        %4977 = vrot.lane.b32.xlu0 %v4919, 16
        %v4978 = vpop.permute.xlu0 %4977
        %4979 = vrot.lane.b32.xlu0 %v4924, 16
        %v4980 = vpop.permute.xlu0 %4979
        %4981 = vrot.lane.b32.xlu0 %v4929, 16
        %v4982 = vpop.permute.xlu0 %4981
        %4983 = vrot.lane.b32.xlu0 %v4934, 16
        %v4984 = vpop.permute.xlu0 %4983
        %v5001 = vadd.f32 %v4703, %v4954
        %v5002 = vadd.f32 %v4704, %v4956
        %v5003 = vadd.f32 %v4705, %v4958
        %v5004 = vadd.f32 %v4706, %v4960
        %v5005 = vadd.f32 %v4707, %v4962
        %v5006 = vadd.f32 %v4708, %v4964
        %v5007 = vadd.f32 %v4709, %v4966
        %v5008 = vadd.f32 %v4710, %v4968
        %v5009 = vadd.f32 %v4711, %v4970
        %v5010 = vadd.f32 %v4712, %v4972
        %v5011 = vadd.f32 %v4713, %v4974
        %v5012 = vadd.f32 %v4714, %v4976
        %v5013 = vadd.f32 %v4715, %v4978
        %v5014 = vadd.f32 %v4716, %v4980
        %v5015 = vadd.f32 %v4717, %v4982
        %v5016 = vadd.f32 %v4718, %v4984
        %v5017 = vld [vmem:[%s4420 + $0x5] sm:$0xff]
        %v5018 = vld [vmem:[%s4420 + $0xd] sm:$0xff]
        %v5019 = vld [vmem:[%s4420 + $0x1d] sm:$0xff]
        %v5020 = vld [vmem:[%s4420 + $0x25] sm:$0xff]
        %v5021 = vld [vmem:[%s4420 + $0x35] sm:$0xff]
        %v5022 = vld [vmem:[%s4420 + $0x3d] sm:$0xff]
        %v5023 = vld [vmem:[%s4420 + $0x4d] sm:$0xff]
        %v5024 = vld [vmem:[%s4420 + $0x55] sm:$0xff]
        %v5025 = vld [vmem:[%s4420 + $0x65] sm:$0xff]
        %v5026 = vld [vmem:[%s4420 + $0x6d] sm:$0xff]
        %v5027 = vld [vmem:[%s4420 + $0x7d] sm:$0xff]
        %v5028 = vld [vmem:[%s4420 + $0x85] sm:$0xff]
        %v5029 = vld [vmem:[%s4420 + $0x95] sm:$0xff]
        %v5030 = vld [vmem:[%s4420 + $0x9d] sm:$0xff]
        %v5031 = vld [vmem:[%s4420 + $0xad] sm:$0xff]
        %v5032 = vld [vmem:[%s4420 + $0xb5] sm:$0xff]
        %s5033 = scalar_lea.vmem %s2, 960
        %v5034 = vld [vmem:[%s5033] sm:$0xff]
        %v5035 = vld [vmem:[%s5033 + $0x8] sm:$0xff]
        %v5036 = vld [vmem:[%s5033 + $0x10] sm:$0xff]
        %v5037 = vld [vmem:[%s5033 + $0x18] sm:$0xff]
        %v5038 = vld [vmem:[%s5033 + $0x20] sm:$0xff]
        %v5039 = vld [vmem:[%s5033 + $0x28] sm:$0xff]
        %v5040 = vld [vmem:[%s5033 + $0x30] sm:$0xff]
        %v5041 = vld [vmem:[%s5033 + $0x38] sm:$0xff]
        %v5043 = vsel %vm342, %v5017, 0
        %v5046 = vsel %vm342, %v5018, 0
        %v5049 = vsel %vm342, %v5019, 0
        %v5052 = vsel %vm342, %v5020, 0
        %v5055 = vsel %vm342, %v5021, 0
        %v5058 = vsel %vm342, %v5022, 0
        %v5061 = vsel %vm342, %v5023, 0
        %v5064 = vsel %vm342, %v5024, 0
        %v5067 = vsel %vm342, %v5025, 0
        %v5070 = vsel %vm342, %v5026, 0
        %v5073 = vsel %vm342, %v5027, 0
        %v5076 = vsel %vm342, %v5028, 0
        %v5079 = vsel %vm342, %v5029, 0
        %v5082 = vsel %vm342, %v5030, 0
        %v5085 = vsel %vm342, %v5031, 0
        %v5088 = vsel %vm342, %v5032, 0
        %5090 = vmatprep.subr.mxu0 0.0
        %5091 = vmatpush1.msra.mxu0 %v5034
        %5092 = vmatprep.subr.mxu0 0.0
        %5093 = vmatpush1.msra.mxu0 %v5035
        %5094 = vmatprep.subr.mxu0 0.0
        %5095 = vmatpush1.msra.mxu0 %v5036
        %5096 = vmatprep.subr.mxu0 0.0
        %5097 = vmatpush1.msra.mxu0 %v5037
        %5098 = vmatprep.subr.mxu0 0.0
        %5099 = vmatpush1.msra.mxu0 %v5038
        %5100 = vmatprep.subr.mxu0 0.0
        %5101 = vmatpush1.msra.mxu0 %v5039
        %5102 = vmatprep.subr.mxu0 0.0
        %5103 = vmatpush1.msra.mxu0 %v5040
        %5104 = vmatprep.subr.mxu0 0.0
        %5105 = vmatpush1.msra.mxu0 %v5041
        %5106 = vmatprep.subr.mxu0 0.0
        %5107 = vmatpush1.msra.mxu0 0.0
        %5108 = vmatprep.subr.mxu0 0.0
        %5109 = vmatpush1.msra.mxu0 0.0
        %5110 = vmatprep.subr.mxu0 0.0
        %5111 = vmatpush1.msra.mxu0 0.0
        %5112 = vmatprep.subr.mxu0 0.0
        %5113 = vmatpush1.msra.mxu0 0.0
        %5114 = vmatprep.subr.mxu0 0.0
        %5115 = vmatpush1.msra.mxu0 0.0
        %5116 = vmatprep.subr.mxu0 0.0
        %5117 = vmatpush1.msra.mxu0 0.0
        %5118 = vmatprep.subr.mxu0 0.0
        %5119 = vmatpush1.msra.mxu0 0.0
        %5120 = vmatprep.subr.mxu0 0.0
        %5121 = vmatpush1.msra.mxu0 0.0
        %5122 = vmatprep.subr.mxu0 0.0
        %5123 = vmatpush1.msra.mxu0 0.0
        %5124 = vmatprep.subr.mxu0 0.0
        %5125 = vmatpush1.msra.mxu0 0.0
        %5126 = vmatprep.subr.mxu0 0.0
        %5127 = vmatpush1.msra.mxu0 0.0
        %5128 = vmatprep.subr.mxu0 0.0
        %5129 = vmatpush1.msra.mxu0 0.0
        %5130 = vmatprep.subr.mxu0 0.0
        %5131 = vmatpush1.msra.mxu0 0.0
        %5132 = vmatprep.subr.mxu0 0.0
        %5133 = vmatpush1.msra.mxu0 0.0
        %5134 = vmatprep.subr.mxu0 0.0
        %5135 = vmatpush1.msra.mxu0 0.0
        %5136 = vmatprep.subr.mxu0 0.0
        %5137 = vmatpush1.msra.mxu0 0.0
        %5138 = vmatprep.subr.mxu0 0.0
        %5139 = vmatpush1.msra.mxu0 0.0
        %5140 = vmatprep.subr.mxu0 0.0
        %5141 = vmatpush1.msra.mxu0 0.0
        %5142 = vmatprep.subr.mxu0 0.0
        %5143 = vmatpush1.msra.mxu0 0.0
        %5144 = vmatprep.subr.mxu0 0.0
        %5145 = vmatpush1.msra.mxu0 0.0
        %5146 = vmatprep.subr.mxu0 0.0
        %5147 = vmatpush1.msra.mxu0 0.0
        %5148 = vmatprep.subr.mxu0 0.0
        %5149 = vmatpush1.msra.mxu0 0.0
        %5150 = vmatprep.subr.mxu0 0.0
        %5151 = vmatpush1.msra.mxu0 0.0
        %5152 = vmatprep.subr.mxu0 0.0
        %5153 = vmatpush1.msra.mxu0 0.0
        %5154 = vmatprep.mubr.f32.mxu0 0.0
        %5155 = vmatmul.mubr.f32.gmra.mrb[0].mxu0 %v5043
        %v5156 = vpop.f32.mrb[0].mxu0
        %v5157 = vadd.f32 0.0, %v5156
        %v5158 = vpop.f32.mrb[0].mxu0
        %5159 = vmatprep.mubr.f32.mxu0 0.0
        %5160 = vmatmul.mubr.f32.gmra.mrb[0].mxu0 %v5046
        %v5161 = vpop.f32.mrb[0].mxu0
        %v5162 = vadd.f32 0.0, %v5161
        %v5163 = vpop.f32.mrb[0].mxu0
        %5164 = vmatprep.mubr.f32.mxu0 0.0
        %5165 = vmatmul.mubr.f32.gmra.mrb[0].mxu0 %v5049
        %v5166 = vpop.f32.mrb[0].mxu0
        %v5167 = vadd.f32 0.0, %v5166
        %v5168 = vpop.f32.mrb[0].mxu0
        %5169 = vmatprep.mubr.f32.mxu0 0.0
        %5170 = vmatmul.mubr.f32.gmra.mrb[0].mxu0 %v5052
        %v5171 = vpop.f32.mrb[0].mxu0
        %v5172 = vadd.f32 0.0, %v5171
        %v5173 = vpop.f32.mrb[0].mxu0
        %5174 = vmatprep.mubr.f32.mxu0 0.0
        %5175 = vmatmul.mubr.f32.gmra.mrb[0].mxu0 %v5055
        %v5176 = vpop.f32.mrb[0].mxu0
        %v5177 = vadd.f32 0.0, %v5176
        %v5178 = vpop.f32.mrb[0].mxu0
        %5179 = vmatprep.mubr.f32.mxu0 0.0
        %5180 = vmatmul.mubr.f32.gmra.mrb[0].mxu0 %v5058
        %v5181 = vpop.f32.mrb[0].mxu0
        %v5182 = vadd.f32 0.0, %v5181
        %v5183 = vpop.f32.mrb[0].mxu0
        %5184 = vmatprep.mubr.f32.mxu0 0.0
        %5185 = vmatmul.mubr.f32.gmra.mrb[0].mxu0 %v5061
        %v5186 = vpop.f32.mrb[0].mxu0
        %v5187 = vadd.f32 0.0, %v5186
        %v5188 = vpop.f32.mrb[0].mxu0
        %5189 = vmatprep.mubr.f32.mxu0 0.0
        %5190 = vmatmul.mubr.f32.gmra.mrb[0].mxu0 %v5064
        %v5191 = vpop.f32.mrb[0].mxu0
        %v5192 = vadd.f32 0.0, %v5191
        %v5193 = vpop.f32.mrb[0].mxu0
        %5194 = vmatprep.mubr.f32.mxu0 0.0
        %5195 = vmatmul.mubr.f32.gmra.mrb[0].mxu0 %v5067
        %v5196 = vpop.f32.mrb[0].mxu0
        %v5197 = vadd.f32 0.0, %v5196
        %v5198 = vpop.f32.mrb[0].mxu0
        %5199 = vmatprep.mubr.f32.mxu0 0.0
        %5200 = vmatmul.mubr.f32.gmra.mrb[0].mxu0 %v5070
        %v5201 = vpop.f32.mrb[0].mxu0
        %v5202 = vadd.f32 0.0, %v5201
        %v5203 = vpop.f32.mrb[0].mxu0
        %5204 = vmatprep.mubr.f32.mxu0 0.0
        %5205 = vmatmul.mubr.f32.gmra.mrb[0].mxu0 %v5073
        %v5206 = vpop.f32.mrb[0].mxu0
        %v5207 = vadd.f32 0.0, %v5206
        %v5208 = vpop.f32.mrb[0].mxu0
        %5209 = vmatprep.mubr.f32.mxu0 0.0
        %5210 = vmatmul.mubr.f32.gmra.mrb[0].mxu0 %v5076
        %v5211 = vpop.f32.mrb[0].mxu0
        %v5212 = vadd.f32 0.0, %v5211
        %v5213 = vpop.f32.mrb[0].mxu0
        %5214 = vmatprep.mubr.f32.mxu0 0.0
        %5215 = vmatmul.mubr.f32.gmra.mrb[0].mxu0 %v5079
        %v5216 = vpop.f32.mrb[0].mxu0
        %v5217 = vadd.f32 0.0, %v5216
        %v5218 = vpop.f32.mrb[0].mxu0
        %5219 = vmatprep.mubr.f32.mxu0 0.0
        %5220 = vmatmul.mubr.f32.gmra.mrb[0].mxu0 %v5082
        %v5221 = vpop.f32.mrb[0].mxu0
        %v5222 = vadd.f32 0.0, %v5221
        %v5223 = vpop.f32.mrb[0].mxu0
        %5224 = vmatprep.mubr.f32.mxu0 0.0
        %5225 = vmatmul.mubr.f32.gmra.mrb[0].mxu0 %v5085
        %v5226 = vpop.f32.mrb[0].mxu0
        %v5227 = vadd.f32 0.0, %v5226
        %v5228 = vpop.f32.mrb[0].mxu0
        %5229 = vmatprep.mubr.f32.mxu0 0.0
        %5230 = vmatmul.mubr.f32.gmra.mrb[0].mxu0 %v5088
        %v5231 = vpop.f32.mrb[0].mxu0
        %v5232 = vadd.f32 0.0, %v5231
        %v5233 = vpop.f32.mrb[0].mxu0
        %5234 = vdwg.mxu0
        %5251 = vrot.lane.b32.xlu0 %v5157, 16
        %v5252 = vpop.permute.xlu0 %5251
        %5253 = vrot.lane.b32.xlu0 %v5162, 16
        %v5254 = vpop.permute.xlu0 %5253
        %5255 = vrot.lane.b32.xlu0 %v5167, 16
        %v5256 = vpop.permute.xlu0 %5255
        %5257 = vrot.lane.b32.xlu0 %v5172, 16
        %v5258 = vpop.permute.xlu0 %5257
        %5259 = vrot.lane.b32.xlu0 %v5177, 16
        %v5260 = vpop.permute.xlu0 %5259
        %5261 = vrot.lane.b32.xlu0 %v5182, 16
        %v5262 = vpop.permute.xlu0 %5261
        %5263 = vrot.lane.b32.xlu0 %v5187, 16
        %v5264 = vpop.permute.xlu0 %5263
        %5265 = vrot.lane.b32.xlu0 %v5192, 16
        %v5266 = vpop.permute.xlu0 %5265
        %5267 = vrot.lane.b32.xlu0 %v5197, 16
        %v5268 = vpop.permute.xlu0 %5267
        %5269 = vrot.lane.b32.xlu0 %v5202, 16
        %v5270 = vpop.permute.xlu0 %5269
        %5271 = vrot.lane.b32.xlu0 %v5207, 16
        %v5272 = vpop.permute.xlu0 %5271
        %5273 = vrot.lane.b32.xlu0 %v5212, 16
        %v5274 = vpop.permute.xlu0 %5273
        %5275 = vrot.lane.b32.xlu0 %v5217, 16
        %v5276 = vpop.permute.xlu0 %5275
        %5277 = vrot.lane.b32.xlu0 %v5222, 16
        %v5278 = vpop.permute.xlu0 %5277
        %5279 = vrot.lane.b32.xlu0 %v5227, 16
        %v5280 = vpop.permute.xlu0 %5279
        %5281 = vrot.lane.b32.xlu0 %v5232, 16
        %v5282 = vpop.permute.xlu0 %5281
        %v5299 = vadd.f32 %v5001, %v5252
        %v5300 = vadd.f32 %v5002, %v5254
        %v5301 = vadd.f32 %v5003, %v5256
        %v5302 = vadd.f32 %v5004, %v5258
        %v5303 = vadd.f32 %v5005, %v5260
        %v5304 = vadd.f32 %v5006, %v5262
        %v5305 = vadd.f32 %v5007, %v5264
        %v5306 = vadd.f32 %v5008, %v5266
        %v5307 = vadd.f32 %v5009, %v5268
        %v5308 = vadd.f32 %v5010, %v5270
        %v5309 = vadd.f32 %v5011, %v5272
        %v5310 = vadd.f32 %v5012, %v5274
        %v5311 = vadd.f32 %v5013, %v5276
        %v5312 = vadd.f32 %v5014, %v5278
        %v5313 = vadd.f32 %v5015, %v5280
        %v5314 = vadd.f32 %v5016, %v5282
        %s5315 = smul.u32 %s314, 24
        %s5316 = scalar_lea.vmem %s302, %s5315
        %v5317 = vld [vmem:[%s5316] sm:$0xff]
        %v5318 = vld [vmem:[%s5316 + $0x8] sm:$0xff]
        %v5319 = vld [vmem:[%s5316 + $0x18] sm:$0xff]
        %v5320 = vld [vmem:[%s5316 + $0x20] sm:$0xff]
        %v5321 = vld [vmem:[%s5316 + $0x30] sm:$0xff]
        %v5322 = vld [vmem:[%s5316 + $0x38] sm:$0xff]
        %v5323 = vld [vmem:[%s5316 + $0x48] sm:$0xff]
        %v5324 = vld [vmem:[%s5316 + $0x50] sm:$0xff]
        %v5325 = vld [vmem:[%s5316 + $0x60] sm:$0xff]
        %v5326 = vld [vmem:[%s5316 + $0x68] sm:$0xff]
        %v5327 = vld [vmem:[%s5316 + $0x78] sm:$0xff]
        %v5328 = vld [vmem:[%s5316 + $0x80] sm:$0xff]
        %v5329 = vld [vmem:[%s5316 + $0x90] sm:$0xff]
        %v5330 = vld [vmem:[%s5316 + $0x98] sm:$0xff]
        %v5331 = vld [vmem:[%s5316 + $0xa8] sm:$0xff]
        %v5332 = vld [vmem:[%s5316 + $0xb0] sm:$0xff]
        %s5333 = scalar_lea.vmem %s2, 1024
        %v5334 = vld [vmem:[%s5333] sm:$0xff]
        %v5335 = vld [vmem:[%s5333 + $0x8] sm:$0xff]
        %v5336 = vld [vmem:[%s5333 + $0x10] sm:$0xff]
        %v5337 = vld [vmem:[%s5333 + $0x18] sm:$0xff]
        %v5338 = vld [vmem:[%s5333 + $0x20] sm:$0xff]
        %v5339 = vld [vmem:[%s5333 + $0x28] sm:$0xff]
        %v5340 = vld [vmem:[%s5333 + $0x30] sm:$0xff]
        %v5341 = vld [vmem:[%s5333 + $0x38] sm:$0xff]
        %v5343 = vsel %vm342, %v5317, 0
        %v5346 = vsel %vm342, %v5318, 0
        %v5349 = vsel %vm342, %v5319, 0
        %v5352 = vsel %vm342, %v5320, 0
        %v5355 = vsel %vm342, %v5321, 0
        %v5358 = vsel %vm342, %v5322, 0
        %v5361 = vsel %vm342, %v5323, 0
        %v5364 = vsel %vm342, %v5324, 0
        %v5367 = vsel %vm342, %v5325, 0
        %v5370 = vsel %vm342, %v5326, 0
        %v5373 = vsel %vm342, %v5327, 0
        %v5376 = vsel %vm342, %v5328, 0
        %v5379 = vsel %vm342, %v5329, 0
        %v5382 = vsel %vm342, %v5330, 0
        %v5385 = vsel %vm342, %v5331, 0
        %v5388 = vsel %vm342, %v5332, 0
        %5390 = vmatprep.subr.mxu0 0.0
        %5391 = vmatpush1.msra.mxu0 %v5334
        %5392 = vmatprep.subr.mxu0 0.0
        %5393 = vmatpush1.msra.mxu0 %v5335
        %5394 = vmatprep.subr.mxu0 0.0
        %5395 = vmatpush1.msra.mxu0 %v5336
        %5396 = vmatprep.subr.mxu0 0.0
        %5397 = vmatpush1.msra.mxu0 %v5337
        %5398 = vmatprep.subr.mxu0 0.0
        %5399 = vmatpush1.msra.mxu0 %v5338
        %5400 = vmatprep.subr.mxu0 0.0
        %5401 = vmatpush1.msra.mxu0 %v5339
        %5402 = vmatprep.subr.mxu0 0.0
        %5403 = vmatpush1.msra.mxu0 %v5340
        %5404 = vmatprep.subr.mxu0 0.0
        %5405 = vmatpush1.msra.mxu0 %v5341
        %5406 = vmatprep.subr.mxu0 0.0
        %5407 = vmatpush1.msra.mxu0 0.0
        %5408 = vmatprep.subr.mxu0 0.0
        %5409 = vmatpush1.msra.mxu0 0.0
        %5410 = vmatprep.subr.mxu0 0.0
        %5411 = vmatpush1.msra.mxu0 0.0
        %5412 = vmatprep.subr.mxu0 0.0
        %5413 = vmatpush1.msra.mxu0 0.0
        %5414 = vmatprep.subr.mxu0 0.0
        %5415 = vmatpush1.msra.mxu0 0.0
        %5416 = vmatprep.subr.mxu0 0.0
        %5417 = vmatpush1.msra.mxu0 0.0
        %5418 = vmatprep.subr.mxu0 0.0
        %5419 = vmatpush1.msra.mxu0 0.0
        %5420 = vmatprep.subr.mxu0 0.0
        %5421 = vmatpush1.msra.mxu0 0.0
        %5422 = vmatprep.subr.mxu0 0.0
        %5423 = vmatpush1.msra.mxu0 0.0
        %5424 = vmatprep.subr.mxu0 0.0
        %5425 = vmatpush1.msra.mxu0 0.0
        %5426 = vmatprep.subr.mxu0 0.0
        %5427 = vmatpush1.msra.mxu0 0.0
        %5428 = vmatprep.subr.mxu0 0.0
        %5429 = vmatpush1.msra.mxu0 0.0
        %5430 = vmatprep.subr.mxu0 0.0
        %5431 = vmatpush1.msra.mxu0 0.0
        %5432 = vmatprep.subr.mxu0 0.0
        %5433 = vmatpush1.msra.mxu0 0.0
        %5434 = vmatprep.subr.mxu0 0.0
        %5435 = vmatpush1.msra.mxu0 0.0
        %5436 = vmatprep.subr.mxu0 0.0
        %5437 = vmatpush1.msra.mxu0 0.0
        %5438 = vmatprep.subr.mxu0 0.0
        %5439 = vmatpush1.msra.mxu0 0.0
        %5440 = vmatprep.subr.mxu0 0.0
        %5441 = vmatpush1.msra.mxu0 0.0
        %5442 = vmatprep.subr.mxu0 0.0
        %5443 = vmatpush1.msra.mxu0 0.0
        %5444 = vmatprep.subr.mxu0 0.0
        %5445 = vmatpush1.msra.mxu0 0.0
        %5446 = vmatprep.subr.mxu0 0.0
        %5447 = vmatpush1.msra.mxu0 0.0
        %5448 = vmatprep.subr.mxu0 0.0
        %5449 = vmatpush1.msra.mxu0 0.0
        %5450 = vmatprep.subr.mxu0 0.0
        %5451 = vmatpush1.msra.mxu0 0.0
        %5452 = vmatprep.subr.mxu0 0.0
        %5453 = vmatpush1.msra.mxu0 0.0
        %5454 = vmatprep.mubr.f32.mxu0 0.0
        %5455 = vmatmul.mubr.f32.gmra.mrb[0].mxu0 %v5343
        %v5456 = vpop.f32.mrb[0].mxu0
        %v5457 = vadd.f32 0.0, %v5456
        %v5458 = vpop.f32.mrb[0].mxu0
        %5459 = vmatprep.mubr.f32.mxu0 0.0
        %5460 = vmatmul.mubr.f32.gmra.mrb[0].mxu0 %v5346
        %v5461 = vpop.f32.mrb[0].mxu0
        %v5462 = vadd.f32 0.0, %v5461
        %v5463 = vpop.f32.mrb[0].mxu0
        %5464 = vmatprep.mubr.f32.mxu0 0.0
        %5465 = vmatmul.mubr.f32.gmra.mrb[0].mxu0 %v5349
        %v5466 = vpop.f32.mrb[0].mxu0
        %v5467 = vadd.f32 0.0, %v5466
        %v5468 = vpop.f32.mrb[0].mxu0
        %5469 = vmatprep.mubr.f32.mxu0 0.0
        %5470 = vmatmul.mubr.f32.gmra.mrb[0].mxu0 %v5352
        %v5471 = vpop.f32.mrb[0].mxu0
        %v5472 = vadd.f32 0.0, %v5471
        %v5473 = vpop.f32.mrb[0].mxu0
        %5474 = vmatprep.mubr.f32.mxu0 0.0
        %5475 = vmatmul.mubr.f32.gmra.mrb[0].mxu0 %v5355
        %v5476 = vpop.f32.mrb[0].mxu0
        %v5477 = vadd.f32 0.0, %v5476
        %v5478 = vpop.f32.mrb[0].mxu0
        %5479 = vmatprep.mubr.f32.mxu0 0.0
        %5480 = vmatmul.mubr.f32.gmra.mrb[0].mxu0 %v5358
        %v5481 = vpop.f32.mrb[0].mxu0
        %v5482 = vadd.f32 0.0, %v5481
        %v5483 = vpop.f32.mrb[0].mxu0
        %5484 = vmatprep.mubr.f32.mxu0 0.0
        %5485 = vmatmul.mubr.f32.gmra.mrb[0].mxu0 %v5361
        %v5486 = vpop.f32.mrb[0].mxu0
        %v5487 = vadd.f32 0.0, %v5486
        %v5488 = vpop.f32.mrb[0].mxu0
        %5489 = vmatprep.mubr.f32.mxu0 0.0
        %5490 = vmatmul.mubr.f32.gmra.mrb[0].mxu0 %v5364
        %v5491 = vpop.f32.mrb[0].mxu0
        %v5492 = vadd.f32 0.0, %v5491
        %v5493 = vpop.f32.mrb[0].mxu0
        %5494 = vmatprep.mubr.f32.mxu0 0.0
        %5495 = vmatmul.mubr.f32.gmra.mrb[0].mxu0 %v5367
        %v5496 = vpop.f32.mrb[0].mxu0
        %v5497 = vadd.f32 0.0, %v5496
        %v5498 = vpop.f32.mrb[0].mxu0
        %5499 = vmatprep.mubr.f32.mxu0 0.0
        %5500 = vmatmul.mubr.f32.gmra.mrb[0].mxu0 %v5370
        %v5501 = vpop.f32.mrb[0].mxu0
        %v5502 = vadd.f32 0.0, %v5501
        %v5503 = vpop.f32.mrb[0].mxu0
        %5504 = vmatprep.mubr.f32.mxu0 0.0
        %5505 = vmatmul.mubr.f32.gmra.mrb[0].mxu0 %v5373
        %v5506 = vpop.f32.mrb[0].mxu0
        %v5507 = vadd.f32 0.0, %v5506
        %v5508 = vpop.f32.mrb[0].mxu0
        %5509 = vmatprep.mubr.f32.mxu0 0.0
        %5510 = vmatmul.mubr.f32.gmra.mrb[0].mxu0 %v5376
        %v5511 = vpop.f32.mrb[0].mxu0
        %v5512 = vadd.f32 0.0, %v5511
        %v5513 = vpop.f32.mrb[0].mxu0
        %5514 = vmatprep.mubr.f32.mxu0 0.0
        %5515 = vmatmul.mubr.f32.gmra.mrb[0].mxu0 %v5379
        %v5516 = vpop.f32.mrb[0].mxu0
        %v5517 = vadd.f32 0.0, %v5516
        %v5518 = vpop.f32.mrb[0].mxu0
        %5519 = vmatprep.mubr.f32.mxu0 0.0
        %5520 = vmatmul.mubr.f32.gmra.mrb[0].mxu0 %v5382
        %v5521 = vpop.f32.mrb[0].mxu0
        %v5522 = vadd.f32 0.0, %v5521
        %v5523 = vpop.f32.mrb[0].mxu0
        %5524 = vmatprep.mubr.f32.mxu0 0.0
        %5525 = vmatmul.mubr.f32.gmra.mrb[0].mxu0 %v5385
        %v5526 = vpop.f32.mrb[0].mxu0
        %v5527 = vadd.f32 0.0, %v5526
        %v5528 = vpop.f32.mrb[0].mxu0
        %5529 = vmatprep.mubr.f32.mxu0 0.0
        %5530 = vmatmul.mubr.f32.gmra.mrb[0].mxu0 %v5388
        %v5531 = vpop.f32.mrb[0].mxu0
        %v5532 = vadd.f32 0.0, %v5531
        %v5533 = vpop.f32.mrb[0].mxu0
        %5534 = vdwg.mxu0
        %5551 = vrot.lane.b32.xlu0 %v5457, 24
        %v5552 = vpop.permute.xlu0 %5551
        %5553 = vrot.lane.b32.xlu0 %v5462, 24
        %v5554 = vpop.permute.xlu0 %5553
        %5555 = vrot.lane.b32.xlu0 %v5467, 24
        %v5556 = vpop.permute.xlu0 %5555
        %5557 = vrot.lane.b32.xlu0 %v5472, 24
        %v5558 = vpop.permute.xlu0 %5557
        %5559 = vrot.lane.b32.xlu0 %v5477, 24
        %v5560 = vpop.permute.xlu0 %5559
        %5561 = vrot.lane.b32.xlu0 %v5482, 24
        %v5562 = vpop.permute.xlu0 %5561
        %5563 = vrot.lane.b32.xlu0 %v5487, 24
        %v5564 = vpop.permute.xlu0 %5563
        %5565 = vrot.lane.b32.xlu0 %v5492, 24
        %v5566 = vpop.permute.xlu0 %5565
        %5567 = vrot.lane.b32.xlu0 %v5497, 24
        %v5568 = vpop.permute.xlu0 %5567
        %5569 = vrot.lane.b32.xlu0 %v5502, 24
        %v5570 = vpop.permute.xlu0 %5569
        %5571 = vrot.lane.b32.xlu0 %v5507, 24
        %v5572 = vpop.permute.xlu0 %5571
        %5573 = vrot.lane.b32.xlu0 %v5512, 24
        %v5574 = vpop.permute.xlu0 %5573
        %5575 = vrot.lane.b32.xlu0 %v5517, 24
        %v5576 = vpop.permute.xlu0 %5575
        %5577 = vrot.lane.b32.xlu0 %v5522, 24
        %v5578 = vpop.permute.xlu0 %5577
        %5579 = vrot.lane.b32.xlu0 %v5527, 24
        %v5580 = vpop.permute.xlu0 %5579
        %5581 = vrot.lane.b32.xlu0 %v5532, 24
        %v5582 = vpop.permute.xlu0 %5581
        %v5599 = vadd.f32 %v458, %v5552
        %v5600 = vadd.f32 %v463, %v5554
        %v5601 = vadd.f32 %v468, %v5556
        %v5602 = vadd.f32 %v473, %v5558
        %v5603 = vadd.f32 %v478, %v5560
        %v5604 = vadd.f32 %v483, %v5562
        %v5605 = vadd.f32 %v488, %v5564
        %v5606 = vadd.f32 %v493, %v5566
        %v5607 = vadd.f32 %v498, %v5568
        %v5608 = vadd.f32 %v503, %v5570
        %v5609 = vadd.f32 %v508, %v5572
        %v5610 = vadd.f32 %v513, %v5574
        %v5611 = vadd.f32 %v518, %v5576
        %v5612 = vadd.f32 %v523, %v5578
        %v5613 = vadd.f32 %v528, %v5580
        %v5614 = vadd.f32 %v533, %v5582
        %v5615 = vld [vmem:[%s5316 + $0x3] sm:$0xff]
        %v5616 = vld [vmem:[%s5316 + $0xb] sm:$0xff]
        %v5617 = vld [vmem:[%s5316 + $0x1b] sm:$0xff]
        %v5618 = vld [vmem:[%s5316 + $0x23] sm:$0xff]
        %v5619 = vld [vmem:[%s5316 + $0x33] sm:$0xff]
        %v5620 = vld [vmem:[%s5316 + $0x3b] sm:$0xff]
        %v5621 = vld [vmem:[%s5316 + $0x4b] sm:$0xff]
        %v5622 = vld [vmem:[%s5316 + $0x53] sm:$0xff]
        %v5623 = vld [vmem:[%s5316 + $0x63] sm:$0xff]
        %v5624 = vld [vmem:[%s5316 + $0x6b] sm:$0xff]
        %v5625 = vld [vmem:[%s5316 + $0x7b] sm:$0xff]
        %v5626 = vld [vmem:[%s5316 + $0x83] sm:$0xff]
        %v5627 = vld [vmem:[%s5316 + $0x93] sm:$0xff]
        %v5628 = vld [vmem:[%s5316 + $0x9b] sm:$0xff]
        %v5629 = vld [vmem:[%s5316 + $0xab] sm:$0xff]
        %v5630 = vld [vmem:[%s5316 + $0xb3] sm:$0xff]
        %s5631 = scalar_lea.vmem %s2, 1088
        %v5632 = vld [vmem:[%s5631] sm:$0xff]
        %v5633 = vld [vmem:[%s5631 + $0x8] sm:$0xff]
        %v5634 = vld [vmem:[%s5631 + $0x10] sm:$0xff]
        %v5635 = vld [vmem:[%s5631 + $0x18] sm:$0xff]
        %v5636 = vld [vmem:[%s5631 + $0x20] sm:$0xff]
        %v5637 = vld [vmem:[%s5631 + $0x28] sm:$0xff]
        %v5638 = vld [vmem:[%s5631 + $0x30] sm:$0xff]
        %v5639 = vld [vmem:[%s5631 + $0x38] sm:$0xff]
        %v5641 = vsel %vm342, %v5615, 0
        %v5644 = vsel %vm342, %v5616, 0
        %v5647 = vsel %vm342, %v5617, 0
        %v5650 = vsel %vm342, %v5618, 0
        %v5653 = vsel %vm342, %v5619, 0
        %v5656 = vsel %vm342, %v5620, 0
        %v5659 = vsel %vm342, %v5621, 0
        %v5662 = vsel %vm342, %v5622, 0
        %v5665 = vsel %vm342, %v5623, 0
        %v5668 = vsel %vm342, %v5624, 0
        %v5671 = vsel %vm342, %v5625, 0
        %v5674 = vsel %vm342, %v5626, 0
        %v5677 = vsel %vm342, %v5627, 0
        %v5680 = vsel %vm342, %v5628, 0
        %v5683 = vsel %vm342, %v5629, 0
        %v5686 = vsel %vm342, %v5630, 0
        %5688 = vmatprep.subr.mxu0 0.0
        %5689 = vmatpush1.msra.mxu0 %v5632
        %5690 = vmatprep.subr.mxu0 0.0
        %5691 = vmatpush1.msra.mxu0 %v5633
        %5692 = vmatprep.subr.mxu0 0.0
        %5693 = vmatpush1.msra.mxu0 %v5634
        %5694 = vmatprep.subr.mxu0 0.0
        %5695 = vmatpush1.msra.mxu0 %v5635
        %5696 = vmatprep.subr.mxu0 0.0
        %5697 = vmatpush1.msra.mxu0 %v5636
        %5698 = vmatprep.subr.mxu0 0.0
        %5699 = vmatpush1.msra.mxu0 %v5637
        %5700 = vmatprep.subr.mxu0 0.0
        %5701 = vmatpush1.msra.mxu0 %v5638
        %5702 = vmatprep.subr.mxu0 0.0
        %5703 = vmatpush1.msra.mxu0 %v5639
        %5704 = vmatprep.subr.mxu0 0.0
        %5705 = vmatpush1.msra.mxu0 0.0
        %5706 = vmatprep.subr.mxu0 0.0
        %5707 = vmatpush1.msra.mxu0 0.0
        %5708 = vmatprep.subr.mxu0 0.0
        %5709 = vmatpush1.msra.mxu0 0.0
        %5710 = vmatprep.subr.mxu0 0.0
        %5711 = vmatpush1.msra.mxu0 0.0
        %5712 = vmatprep.subr.mxu0 0.0
        %5713 = vmatpush1.msra.mxu0 0.0
        %5714 = vmatprep.subr.mxu0 0.0
        %5715 = vmatpush1.msra.mxu0 0.0
        %5716 = vmatprep.subr.mxu0 0.0
        %5717 = vmatpush1.msra.mxu0 0.0
        %5718 = vmatprep.subr.mxu0 0.0
        %5719 = vmatpush1.msra.mxu0 0.0
        %5720 = vmatprep.subr.mxu0 0.0
        %5721 = vmatpush1.msra.mxu0 0.0
        %5722 = vmatprep.subr.mxu0 0.0
        %5723 = vmatpush1.msra.mxu0 0.0
        %5724 = vmatprep.subr.mxu0 0.0
        %5725 = vmatpush1.msra.mxu0 0.0
        %5726 = vmatprep.subr.mxu0 0.0
        %5727 = vmatpush1.msra.mxu0 0.0
        %5728 = vmatprep.subr.mxu0 0.0
        %5729 = vmatpush1.msra.mxu0 0.0
        %5730 = vmatprep.subr.mxu0 0.0
        %5731 = vmatpush1.msra.mxu0 0.0
        %5732 = vmatprep.subr.mxu0 0.0
        %5733 = vmatpush1.msra.mxu0 0.0
        %5734 = vmatprep.subr.mxu0 0.0
        %5735 = vmatpush1.msra.mxu0 0.0
        %5736 = vmatprep.subr.mxu0 0.0
        %5737 = vmatpush1.msra.mxu0 0.0
        %5738 = vmatprep.subr.mxu0 0.0
        %5739 = vmatpush1.msra.mxu0 0.0
        %5740 = vmatprep.subr.mxu0 0.0
        %5741 = vmatpush1.msra.mxu0 0.0
        %5742 = vmatprep.subr.mxu0 0.0
        %5743 = vmatpush1.msra.mxu0 0.0
        %5744 = vmatprep.subr.mxu0 0.0
        %5745 = vmatpush1.msra.mxu0 0.0
        %5746 = vmatprep.subr.mxu0 0.0
        %5747 = vmatpush1.msra.mxu0 0.0
        %5748 = vmatprep.subr.mxu0 0.0
        %5749 = vmatpush1.msra.mxu0 0.0
        %5750 = vmatprep.subr.mxu0 0.0
        %5751 = vmatpush1.msra.mxu0 0.0
        %5752 = vmatprep.mubr.f32.mxu0 0.0
        %5753 = vmatmul.mubr.f32.gmra.mrb[0].mxu0 %v5641
        %v5754 = vpop.f32.mrb[0].mxu0
        %v5755 = vadd.f32 0.0, %v5754
        %v5756 = vpop.f32.mrb[0].mxu0
        %5757 = vmatprep.mubr.f32.mxu0 0.0
        %5758 = vmatmul.mubr.f32.gmra.mrb[0].mxu0 %v5644
        %v5759 = vpop.f32.mrb[0].mxu0
        %v5760 = vadd.f32 0.0, %v5759
        %v5761 = vpop.f32.mrb[0].mxu0
        %5762 = vmatprep.mubr.f32.mxu0 0.0
        %5763 = vmatmul.mubr.f32.gmra.mrb[0].mxu0 %v5647
        %v5764 = vpop.f32.mrb[0].mxu0
        %v5765 = vadd.f32 0.0, %v5764
        %v5766 = vpop.f32.mrb[0].mxu0
        %5767 = vmatprep.mubr.f32.mxu0 0.0
        %5768 = vmatmul.mubr.f32.gmra.mrb[0].mxu0 %v5650
        %v5769 = vpop.f32.mrb[0].mxu0
        %v5770 = vadd.f32 0.0, %v5769
        %v5771 = vpop.f32.mrb[0].mxu0
        %5772 = vmatprep.mubr.f32.mxu0 0.0
        %5773 = vmatmul.mubr.f32.gmra.mrb[0].mxu0 %v5653
        %v5774 = vpop.f32.mrb[0].mxu0
        %v5775 = vadd.f32 0.0, %v5774
        %v5776 = vpop.f32.mrb[0].mxu0
        %5777 = vmatprep.mubr.f32.mxu0 0.0
        %5778 = vmatmul.mubr.f32.gmra.mrb[0].mxu0 %v5656
        %v5779 = vpop.f32.mrb[0].mxu0
        %v5780 = vadd.f32 0.0, %v5779
        %v5781 = vpop.f32.mrb[0].mxu0
        %5782 = vmatprep.mubr.f32.mxu0 0.0
        %5783 = vmatmul.mubr.f32.gmra.mrb[0].mxu0 %v5659
        %v5784 = vpop.f32.mrb[0].mxu0
        %v5785 = vadd.f32 0.0, %v5784
        %v5786 = vpop.f32.mrb[0].mxu0
        %5787 = vmatprep.mubr.f32.mxu0 0.0
        %5788 = vmatmul.mubr.f32.gmra.mrb[0].mxu0 %v5662
        %v5789 = vpop.f32.mrb[0].mxu0
        %v5790 = vadd.f32 0.0, %v5789
        %v5791 = vpop.f32.mrb[0].mxu0
        %5792 = vmatprep.mubr.f32.mxu0 0.0
        %5793 = vmatmul.mubr.f32.gmra.mrb[0].mxu0 %v5665
        %v5794 = vpop.f32.mrb[0].mxu0
        %v5795 = vadd.f32 0.0, %v5794
        %v5796 = vpop.f32.mrb[0].mxu0
        %5797 = vmatprep.mubr.f32.mxu0 0.0
        %5798 = vmatmul.mubr.f32.gmra.mrb[0].mxu0 %v5668
        %v5799 = vpop.f32.mrb[0].mxu0
        %v5800 = vadd.f32 0.0, %v5799
        %v5801 = vpop.f32.mrb[0].mxu0
        %5802 = vmatprep.mubr.f32.mxu0 0.0
        %5803 = vmatmul.mubr.f32.gmra.mrb[0].mxu0 %v5671
        %v5804 = vpop.f32.mrb[0].mxu0
        %v5805 = vadd.f32 0.0, %v5804
        %v5806 = vpop.f32.mrb[0].mxu0
        %5807 = vmatprep.mubr.f32.mxu0 0.0
        %5808 = vmatmul.mubr.f32.gmra.mrb[0].mxu0 %v5674
        %v5809 = vpop.f32.mrb[0].mxu0
        %v5810 = vadd.f32 0.0, %v5809
        %v5811 = vpop.f32.mrb[0].mxu0
        %5812 = vmatprep.mubr.f32.mxu0 0.0
        %5813 = vmatmul.mubr.f32.gmra.mrb[0].mxu0 %v5677
        %v5814 = vpop.f32.mrb[0].mxu0
        %v5815 = vadd.f32 0.0, %v5814
        %v5816 = vpop.f32.mrb[0].mxu0
        %5817 = vmatprep.mubr.f32.mxu0 0.0
        %5818 = vmatmul.mubr.f32.gmra.mrb[0].mxu0 %v5680
        %v5819 = vpop.f32.mrb[0].mxu0
        %v5820 = vadd.f32 0.0, %v5819
        %v5821 = vpop.f32.mrb[0].mxu0
        %5822 = vmatprep.mubr.f32.mxu0 0.0
        %5823 = vmatmul.mubr.f32.gmra.mrb[0].mxu0 %v5683
        %v5824 = vpop.f32.mrb[0].mxu0
        %v5825 = vadd.f32 0.0, %v5824
        %v5826 = vpop.f32.mrb[0].mxu0
        %5827 = vmatprep.mubr.f32.mxu0 0.0
        %5828 = vmatmul.mubr.f32.gmra.mrb[0].mxu0 %v5686
        %v5829 = vpop.f32.mrb[0].mxu0
        %v5830 = vadd.f32 0.0, %v5829
        %v5831 = vpop.f32.mrb[0].mxu0
        %5832 = vdwg.mxu0
        %5849 = vrot.lane.b32.xlu0 %v5755, 24
        %v5850 = vpop.permute.xlu0 %5849
        %5851 = vrot.lane.b32.xlu0 %v5760, 24
        %v5852 = vpop.permute.xlu0 %5851
        %5853 = vrot.lane.b32.xlu0 %v5765, 24
        %v5854 = vpop.permute.xlu0 %5853
        %5855 = vrot.lane.b32.xlu0 %v5770, 24
        %v5856 = vpop.permute.xlu0 %5855
        %5857 = vrot.lane.b32.xlu0 %v5775, 24
        %v5858 = vpop.permute.xlu0 %5857
        %5859 = vrot.lane.b32.xlu0 %v5780, 24
        %v5860 = vpop.permute.xlu0 %5859
        %5861 = vrot.lane.b32.xlu0 %v5785, 24
        %v5862 = vpop.permute.xlu0 %5861
        %5863 = vrot.lane.b32.xlu0 %v5790, 24
        %v5864 = vpop.permute.xlu0 %5863
        %5865 = vrot.lane.b32.xlu0 %v5795, 24
        %v5866 = vpop.permute.xlu0 %5865
        %5867 = vrot.lane.b32.xlu0 %v5800, 24
        %v5868 = vpop.permute.xlu0 %5867
        %5869 = vrot.lane.b32.xlu0 %v5805, 24
        %v5870 = vpop.permute.xlu0 %5869
        %5871 = vrot.lane.b32.xlu0 %v5810, 24
        %v5872 = vpop.permute.xlu0 %5871
        %5873 = vrot.lane.b32.xlu0 %v5815, 24
        %v5874 = vpop.permute.xlu0 %5873
        %5875 = vrot.lane.b32.xlu0 %v5820, 24
        %v5876 = vpop.permute.xlu0 %5875
        %5877 = vrot.lane.b32.xlu0 %v5825, 24
        %v5878 = vpop.permute.xlu0 %5877
        %5879 = vrot.lane.b32.xlu0 %v5830, 24
        %v5880 = vpop.permute.xlu0 %5879
        %v5897 = vadd.f32 %v5599, %v5850
        %v5898 = vadd.f32 %v5600, %v5852
        %v5899 = vadd.f32 %v5601, %v5854
        %v5900 = vadd.f32 %v5602, %v5856
        %v5901 = vadd.f32 %v5603, %v5858
        %v5902 = vadd.f32 %v5604, %v5860
        %v5903 = vadd.f32 %v5605, %v5862
        %v5904 = vadd.f32 %v5606, %v5864
        %v5905 = vadd.f32 %v5607, %v5866
        %v5906 = vadd.f32 %v5608, %v5868
        %v5907 = vadd.f32 %v5609, %v5870
        %v5908 = vadd.f32 %v5610, %v5872
        %v5909 = vadd.f32 %v5611, %v5874
        %v5910 = vadd.f32 %v5612, %v5876
        %v5911 = vadd.f32 %v5613, %v5878
        %v5912 = vadd.f32 %v5614, %v5880
        %v5913 = vld [vmem:[%s5316 + $0x6] sm:$0xff]
        %v5914 = vld [vmem:[%s5316 + $0xe] sm:$0xff]
        %v5915 = vld [vmem:[%s5316 + $0x1e] sm:$0xff]
        %v5916 = vld [vmem:[%s5316 + $0x26] sm:$0xff]
        %v5917 = vld [vmem:[%s5316 + $0x36] sm:$0xff]
        %v5918 = vld [vmem:[%s5316 + $0x3e] sm:$0xff]
        %v5919 = vld [vmem:[%s5316 + $0x4e] sm:$0xff]
        %v5920 = vld [vmem:[%s5316 + $0x56] sm:$0xff]
        %v5921 = vld [vmem:[%s5316 + $0x66] sm:$0xff]
        %v5922 = vld [vmem:[%s5316 + $0x6e] sm:$0xff]
        %v5923 = vld [vmem:[%s5316 + $0x7e] sm:$0xff]
        %v5924 = vld [vmem:[%s5316 + $0x86] sm:$0xff]
        %v5925 = vld [vmem:[%s5316 + $0x96] sm:$0xff]
        %v5926 = vld [vmem:[%s5316 + $0x9e] sm:$0xff]
        %v5927 = vld [vmem:[%s5316 + $0xae] sm:$0xff]
        %v5928 = vld [vmem:[%s5316 + $0xb6] sm:$0xff]
        %s5929 = scalar_lea.vmem %s2, 1152
        %v5930 = vld [vmem:[%s5929] sm:$0xff]
        %v5931 = vld [vmem:[%s5929 + $0x8] sm:$0xff]
        %v5932 = vld [vmem:[%s5929 + $0x10] sm:$0xff]
        %v5933 = vld [vmem:[%s5929 + $0x18] sm:$0xff]
        %v5934 = vld [vmem:[%s5929 + $0x20] sm:$0xff]
        %v5935 = vld [vmem:[%s5929 + $0x28] sm:$0xff]
        %v5936 = vld [vmem:[%s5929 + $0x30] sm:$0xff]
        %v5937 = vld [vmem:[%s5929 + $0x38] sm:$0xff]
        %v5939 = vsel %vm342, %v5913, 0
        %v5942 = vsel %vm342, %v5914, 0
        %v5945 = vsel %vm342, %v5915, 0
        %v5948 = vsel %vm342, %v5916, 0
        %v5951 = vsel %vm342, %v5917, 0
        %v5954 = vsel %vm342, %v5918, 0
        %v5957 = vsel %vm342, %v5919, 0
        %v5960 = vsel %vm342, %v5920, 0
        %v5963 = vsel %vm342, %v5921, 0
        %v5966 = vsel %vm342, %v5922, 0
        %v5969 = vsel %vm342, %v5923, 0
        %v5972 = vsel %vm342, %v5924, 0
        %v5975 = vsel %vm342, %v5925, 0
        %v5978 = vsel %vm342, %v5926, 0
        %v5981 = vsel %vm342, %v5927, 0
        %v5984 = vsel %vm342, %v5928, 0
        %5986 = vmatprep.subr.mxu0 0.0
        %5987 = vmatpush1.msra.mxu0 %v5930
        %5988 = vmatprep.subr.mxu0 0.0
        %5989 = vmatpush1.msra.mxu0 %v5931
        %5990 = vmatprep.subr.mxu0 0.0
        %5991 = vmatpush1.msra.mxu0 %v5932
        %5992 = vmatprep.subr.mxu0 0.0
        %5993 = vmatpush1.msra.mxu0 %v5933
        %5994 = vmatprep.subr.mxu0 0.0
        %5995 = vmatpush1.msra.mxu0 %v5934
        %5996 = vmatprep.subr.mxu0 0.0
        %5997 = vmatpush1.msra.mxu0 %v5935
        %5998 = vmatprep.subr.mxu0 0.0
        %5999 = vmatpush1.msra.mxu0 %v5936
        %6000 = vmatprep.subr.mxu0 0.0
        %6001 = vmatpush1.msra.mxu0 %v5937
        %6002 = vmatprep.subr.mxu0 0.0
        %6003 = vmatpush1.msra.mxu0 0.0
        %6004 = vmatprep.subr.mxu0 0.0
        %6005 = vmatpush1.msra.mxu0 0.0
        %6006 = vmatprep.subr.mxu0 0.0
        %6007 = vmatpush1.msra.mxu0 0.0
        %6008 = vmatprep.subr.mxu0 0.0
        %6009 = vmatpush1.msra.mxu0 0.0
        %6010 = vmatprep.subr.mxu0 0.0
        %6011 = vmatpush1.msra.mxu0 0.0
        %6012 = vmatprep.subr.mxu0 0.0
        %6013 = vmatpush1.msra.mxu0 0.0
        %6014 = vmatprep.subr.mxu0 0.0
        %6015 = vmatpush1.msra.mxu0 0.0
        %6016 = vmatprep.subr.mxu0 0.0
        %6017 = vmatpush1.msra.mxu0 0.0
        %6018 = vmatprep.subr.mxu0 0.0
        %6019 = vmatpush1.msra.mxu0 0.0
        %6020 = vmatprep.subr.mxu0 0.0
        %6021 = vmatpush1.msra.mxu0 0.0
        %6022 = vmatprep.subr.mxu0 0.0
        %6023 = vmatpush1.msra.mxu0 0.0
        %6024 = vmatprep.subr.mxu0 0.0
        %6025 = vmatpush1.msra.mxu0 0.0
        %6026 = vmatprep.subr.mxu0 0.0
        %6027 = vmatpush1.msra.mxu0 0.0
        %6028 = vmatprep.subr.mxu0 0.0
        %6029 = vmatpush1.msra.mxu0 0.0
        %6030 = vmatprep.subr.mxu0 0.0
        %6031 = vmatpush1.msra.mxu0 0.0
        %6032 = vmatprep.subr.mxu0 0.0
        %6033 = vmatpush1.msra.mxu0 0.0
        %6034 = vmatprep.subr.mxu0 0.0
        %6035 = vmatpush1.msra.mxu0 0.0
        %6036 = vmatprep.subr.mxu0 0.0
        %6037 = vmatpush1.msra.mxu0 0.0
        %6038 = vmatprep.subr.mxu0 0.0
        %6039 = vmatpush1.msra.mxu0 0.0
        %6040 = vmatprep.subr.mxu0 0.0
        %6041 = vmatpush1.msra.mxu0 0.0
        %6042 = vmatprep.subr.mxu0 0.0
        %6043 = vmatpush1.msra.mxu0 0.0
        %6044 = vmatprep.subr.mxu0 0.0
        %6045 = vmatpush1.msra.mxu0 0.0
        %6046 = vmatprep.subr.mxu0 0.0
        %6047 = vmatpush1.msra.mxu0 0.0
        %6048 = vmatprep.subr.mxu0 0.0
        %6049 = vmatpush1.msra.mxu0 0.0
        %6050 = vmatprep.mubr.f32.mxu0 0.0
        %6051 = vmatmul.mubr.f32.gmra.mrb[0].mxu0 %v5939
        %v6052 = vpop.f32.mrb[0].mxu0
        %v6053 = vadd.f32 0.0, %v6052
        %v6054 = vpop.f32.mrb[0].mxu0
        %6055 = vmatprep.mubr.f32.mxu0 0.0
        %6056 = vmatmul.mubr.f32.gmra.mrb[0].mxu0 %v5942
        %v6057 = vpop.f32.mrb[0].mxu0
        %v6058 = vadd.f32 0.0, %v6057
        %v6059 = vpop.f32.mrb[0].mxu0
        %6060 = vmatprep.mubr.f32.mxu0 0.0
        %6061 = vmatmul.mubr.f32.gmra.mrb[0].mxu0 %v5945
        %v6062 = vpop.f32.mrb[0].mxu0
        %v6063 = vadd.f32 0.0, %v6062
        %v6064 = vpop.f32.mrb[0].mxu0
        %6065 = vmatprep.mubr.f32.mxu0 0.0
        %6066 = vmatmul.mubr.f32.gmra.mrb[0].mxu0 %v5948
        %v6067 = vpop.f32.mrb[0].mxu0
        %v6068 = vadd.f32 0.0, %v6067
        %v6069 = vpop.f32.mrb[0].mxu0
        %6070 = vmatprep.mubr.f32.mxu0 0.0
        %6071 = vmatmul.mubr.f32.gmra.mrb[0].mxu0 %v5951
        %v6072 = vpop.f32.mrb[0].mxu0
        %v6073 = vadd.f32 0.0, %v6072
        %v6074 = vpop.f32.mrb[0].mxu0
        %6075 = vmatprep.mubr.f32.mxu0 0.0
        %6076 = vmatmul.mubr.f32.gmra.mrb[0].mxu0 %v5954
        %v6077 = vpop.f32.mrb[0].mxu0
        %v6078 = vadd.f32 0.0, %v6077
        %v6079 = vpop.f32.mrb[0].mxu0
        %6080 = vmatprep.mubr.f32.mxu0 0.0
        %6081 = vmatmul.mubr.f32.gmra.mrb[0].mxu0 %v5957
        %v6082 = vpop.f32.mrb[0].mxu0
        %v6083 = vadd.f32 0.0, %v6082
        %v6084 = vpop.f32.mrb[0].mxu0
        %6085 = vmatprep.mubr.f32.mxu0 0.0
        %6086 = vmatmul.mubr.f32.gmra.mrb[0].mxu0 %v5960
        %v6087 = vpop.f32.mrb[0].mxu0
        %v6088 = vadd.f32 0.0, %v6087
        %v6089 = vpop.f32.mrb[0].mxu0
        %6090 = vmatprep.mubr.f32.mxu0 0.0
        %6091 = vmatmul.mubr.f32.gmra.mrb[0].mxu0 %v5963
        %v6092 = vpop.f32.mrb[0].mxu0
        %v6093 = vadd.f32 0.0, %v6092
        %v6094 = vpop.f32.mrb[0].mxu0
        %6095 = vmatprep.mubr.f32.mxu0 0.0
        %6096 = vmatmul.mubr.f32.gmra.mrb[0].mxu0 %v5966
        %v6097 = vpop.f32.mrb[0].mxu0
        %v6098 = vadd.f32 0.0, %v6097
        %v6099 = vpop.f32.mrb[0].mxu0
        %6100 = vmatprep.mubr.f32.mxu0 0.0
        %6101 = vmatmul.mubr.f32.gmra.mrb[0].mxu0 %v5969
        %v6102 = vpop.f32.mrb[0].mxu0
        %v6103 = vadd.f32 0.0, %v6102
        %v6104 = vpop.f32.mrb[0].mxu0
        %6105 = vmatprep.mubr.f32.mxu0 0.0
        %6106 = vmatmul.mubr.f32.gmra.mrb[0].mxu0 %v5972
        %v6107 = vpop.f32.mrb[0].mxu0
        %v6108 = vadd.f32 0.0, %v6107
        %v6109 = vpop.f32.mrb[0].mxu0
        %6110 = vmatprep.mubr.f32.mxu0 0.0
        %6111 = vmatmul.mubr.f32.gmra.mrb[0].mxu0 %v5975
        %v6112 = vpop.f32.mrb[0].mxu0
        %v6113 = vadd.f32 0.0, %v6112
        %v6114 = vpop.f32.mrb[0].mxu0
        %6115 = vmatprep.mubr.f32.mxu0 0.0
        %6116 = vmatmul.mubr.f32.gmra.mrb[0].mxu0 %v5978
        %v6117 = vpop.f32.mrb[0].mxu0
        %v6118 = vadd.f32 0.0, %v6117
        %v6119 = vpop.f32.mrb[0].mxu0
        %6120 = vmatprep.mubr.f32.mxu0 0.0
        %6121 = vmatmul.mubr.f32.gmra.mrb[0].mxu0 %v5981
        %v6122 = vpop.f32.mrb[0].mxu0
        %v6123 = vadd.f32 0.0, %v6122
        %v6124 = vpop.f32.mrb[0].mxu0
        %6125 = vmatprep.mubr.f32.mxu0 0.0
        %6126 = vmatmul.mubr.f32.gmra.mrb[0].mxu0 %v5984
        %v6127 = vpop.f32.mrb[0].mxu0
        %v6128 = vadd.f32 0.0, %v6127
        %v6129 = vpop.f32.mrb[0].mxu0
        %6130 = vdwg.mxu0
        %6147 = vrot.lane.b32.xlu0 %v6053, 24
        %v6148 = vpop.permute.xlu0 %6147
        %6149 = vrot.lane.b32.xlu0 %v6058, 24
        %v6150 = vpop.permute.xlu0 %6149
        %6151 = vrot.lane.b32.xlu0 %v6063, 24
        %v6152 = vpop.permute.xlu0 %6151
        %6153 = vrot.lane.b32.xlu0 %v6068, 24
        %v6154 = vpop.permute.xlu0 %6153
        %6155 = vrot.lane.b32.xlu0 %v6073, 24
        %v6156 = vpop.permute.xlu0 %6155
        %6157 = vrot.lane.b32.xlu0 %v6078, 24
        %v6158 = vpop.permute.xlu0 %6157
        %6159 = vrot.lane.b32.xlu0 %v6083, 24
        %v6160 = vpop.permute.xlu0 %6159
        %6161 = vrot.lane.b32.xlu0 %v6088, 24
        %v6162 = vpop.permute.xlu0 %6161
        %6163 = vrot.lane.b32.xlu0 %v6093, 24
        %v6164 = vpop.permute.xlu0 %6163
        %6165 = vrot.lane.b32.xlu0 %v6098, 24
        %v6166 = vpop.permute.xlu0 %6165
        %6167 = vrot.lane.b32.xlu0 %v6103, 24
        %v6168 = vpop.permute.xlu0 %6167
        %6169 = vrot.lane.b32.xlu0 %v6108, 24
        %v6170 = vpop.permute.xlu0 %6169
        %6171 = vrot.lane.b32.xlu0 %v6113, 24
        %v6172 = vpop.permute.xlu0 %6171
        %6173 = vrot.lane.b32.xlu0 %v6118, 24
        %v6174 = vpop.permute.xlu0 %6173
        %6175 = vrot.lane.b32.xlu0 %v6123, 24
        %v6176 = vpop.permute.xlu0 %6175
        %6177 = vrot.lane.b32.xlu0 %v6128, 24
        %v6178 = vpop.permute.xlu0 %6177
        %v6195 = vadd.f32 %v5897, %v6148
        %v6196 = vadd.f32 %v5898, %v6150
        %v6197 = vadd.f32 %v5899, %v6152
        %v6198 = vadd.f32 %v5900, %v6154
        %v6199 = vadd.f32 %v5901, %v6156
        %v6200 = vadd.f32 %v5902, %v6158
        %v6201 = vadd.f32 %v5903, %v6160
        %v6202 = vadd.f32 %v5904, %v6162
        %v6203 = vadd.f32 %v5905, %v6164
        %v6204 = vadd.f32 %v5906, %v6166
        %v6205 = vadd.f32 %v5907, %v6168
        %v6206 = vadd.f32 %v5908, %v6170
        %v6207 = vadd.f32 %v5909, %v6172
        %v6208 = vadd.f32 %v5910, %v6174
        %v6209 = vadd.f32 %v5911, %v6176
        %v6210 = vadd.f32 %v5912, %v6178
        %v6211 = vld [vmem:[%s317] sm:$0xff]
        %v6212 = vld [vmem:[%s317 + $0x8] sm:$0xff]
        %v6213 = vld [vmem:[%s317 + $0x18] sm:$0xff]
        %v6214 = vld [vmem:[%s317 + $0x20] sm:$0xff]
        %v6215 = vld [vmem:[%s317 + $0x30] sm:$0xff]
        %v6216 = vld [vmem:[%s317 + $0x38] sm:$0xff]
        %v6217 = vld [vmem:[%s317 + $0x48] sm:$0xff]
        %v6218 = vld [vmem:[%s317 + $0x50] sm:$0xff]
        %v6219 = vld [vmem:[%s317 + $0x60] sm:$0xff]
        %v6220 = vld [vmem:[%s317 + $0x68] sm:$0xff]
        %v6221 = vld [vmem:[%s317 + $0x78] sm:$0xff]
        %v6222 = vld [vmem:[%s317 + $0x80] sm:$0xff]
        %v6223 = vld [vmem:[%s317 + $0x90] sm:$0xff]
        %v6224 = vld [vmem:[%s317 + $0x98] sm:$0xff]
        %v6225 = vld [vmem:[%s317 + $0xa8] sm:$0xff]
        %v6226 = vld [vmem:[%s317 + $0xb0] sm:$0xff]
        %s6227 = scalar_lea.vmem %s2, 1216
        %v6228 = vld [vmem:[%s6227] sm:$0xff]
        %v6229 = vld [vmem:[%s6227 + $0x8] sm:$0xff]
        %v6230 = vld [vmem:[%s6227 + $0x10] sm:$0xff]
        %v6231 = vld [vmem:[%s6227 + $0x18] sm:$0xff]
        %v6232 = vld [vmem:[%s6227 + $0x20] sm:$0xff]
        %v6233 = vld [vmem:[%s6227 + $0x28] sm:$0xff]
        %v6234 = vld [vmem:[%s6227 + $0x30] sm:$0xff]
        %v6235 = vld [vmem:[%s6227 + $0x38] sm:$0xff]
        %v6237 = vsel %vm342, %v6211, 0
        %v6240 = vsel %vm342, %v6212, 0
        %v6243 = vsel %vm342, %v6213, 0
        %v6246 = vsel %vm342, %v6214, 0
        %v6249 = vsel %vm342, %v6215, 0
        %v6252 = vsel %vm342, %v6216, 0
        %v6255 = vsel %vm342, %v6217, 0
        %v6258 = vsel %vm342, %v6218, 0
        %v6261 = vsel %vm342, %v6219, 0
        %v6264 = vsel %vm342, %v6220, 0
        %v6267 = vsel %vm342, %v6221, 0
        %v6270 = vsel %vm342, %v6222, 0
        %v6273 = vsel %vm342, %v6223, 0
        %v6276 = vsel %vm342, %v6224, 0
        %v6279 = vsel %vm342, %v6225, 0
        %v6282 = vsel %vm342, %v6226, 0
        %6284 = vmatprep.subr.mxu0 0.0
        %6285 = vmatpush1.msra.mxu0 %v6228
        %6286 = vmatprep.subr.mxu0 0.0
        %6287 = vmatpush1.msra.mxu0 %v6229
        %6288 = vmatprep.subr.mxu0 0.0
        %6289 = vmatpush1.msra.mxu0 %v6230
        %6290 = vmatprep.subr.mxu0 0.0
        %6291 = vmatpush1.msra.mxu0 %v6231
        %6292 = vmatprep.subr.mxu0 0.0
        %6293 = vmatpush1.msra.mxu0 %v6232
        %6294 = vmatprep.subr.mxu0 0.0
        %6295 = vmatpush1.msra.mxu0 %v6233
        %6296 = vmatprep.subr.mxu0 0.0
        %6297 = vmatpush1.msra.mxu0 %v6234
        %6298 = vmatprep.subr.mxu0 0.0
        %6299 = vmatpush1.msra.mxu0 %v6235
        %6300 = vmatprep.subr.mxu0 0.0
        %6301 = vmatpush1.msra.mxu0 0.0
        %6302 = vmatprep.subr.mxu0 0.0
        %6303 = vmatpush1.msra.mxu0 0.0
        %6304 = vmatprep.subr.mxu0 0.0
        %6305 = vmatpush1.msra.mxu0 0.0
        %6306 = vmatprep.subr.mxu0 0.0
        %6307 = vmatpush1.msra.mxu0 0.0
        %6308 = vmatprep.subr.mxu0 0.0
        %6309 = vmatpush1.msra.mxu0 0.0
        %6310 = vmatprep.subr.mxu0 0.0
        %6311 = vmatpush1.msra.mxu0 0.0
        %6312 = vmatprep.subr.mxu0 0.0
        %6313 = vmatpush1.msra.mxu0 0.0
        %6314 = vmatprep.subr.mxu0 0.0
        %6315 = vmatpush1.msra.mxu0 0.0
        %6316 = vmatprep.subr.mxu0 0.0
        %6317 = vmatpush1.msra.mxu0 0.0
        %6318 = vmatprep.subr.mxu0 0.0
        %6319 = vmatpush1.msra.mxu0 0.0
        %6320 = vmatprep.subr.mxu0 0.0
        %6321 = vmatpush1.msra.mxu0 0.0
        %6322 = vmatprep.subr.mxu0 0.0
        %6323 = vmatpush1.msra.mxu0 0.0
        %6324 = vmatprep.subr.mxu0 0.0
        %6325 = vmatpush1.msra.mxu0 0.0
        %6326 = vmatprep.subr.mxu0 0.0
        %6327 = vmatpush1.msra.mxu0 0.0
        %6328 = vmatprep.subr.mxu0 0.0
        %6329 = vmatpush1.msra.mxu0 0.0
        %6330 = vmatprep.subr.mxu0 0.0
        %6331 = vmatpush1.msra.mxu0 0.0
        %6332 = vmatprep.subr.mxu0 0.0
        %6333 = vmatpush1.msra.mxu0 0.0
        %6334 = vmatprep.subr.mxu0 0.0
        %6335 = vmatpush1.msra.mxu0 0.0
        %6336 = vmatprep.subr.mxu0 0.0
        %6337 = vmatpush1.msra.mxu0 0.0
        %6338 = vmatprep.subr.mxu0 0.0
        %6339 = vmatpush1.msra.mxu0 0.0
        %6340 = vmatprep.subr.mxu0 0.0
        %6341 = vmatpush1.msra.mxu0 0.0
        %6342 = vmatprep.subr.mxu0 0.0
        %6343 = vmatpush1.msra.mxu0 0.0
        %6344 = vmatprep.subr.mxu0 0.0
        %6345 = vmatpush1.msra.mxu0 0.0
        %6346 = vmatprep.subr.mxu0 0.0
        %6347 = vmatpush1.msra.mxu0 0.0
        %6348 = vmatprep.mubr.f32.mxu0 0.0
        %6349 = vmatmul.mubr.f32.gmra.mrb[0].mxu0 %v6237
        %v6350 = vpop.f32.mrb[0].mxu0
        %v6351 = vadd.f32 0.0, %v6350
        %v6352 = vpop.f32.mrb[0].mxu0
        %6353 = vmatprep.mubr.f32.mxu0 0.0
        %6354 = vmatmul.mubr.f32.gmra.mrb[0].mxu0 %v6240
        %v6355 = vpop.f32.mrb[0].mxu0
        %v6356 = vadd.f32 0.0, %v6355
        %v6357 = vpop.f32.mrb[0].mxu0
        %6358 = vmatprep.mubr.f32.mxu0 0.0
        %6359 = vmatmul.mubr.f32.gmra.mrb[0].mxu0 %v6243
        %v6360 = vpop.f32.mrb[0].mxu0
        %v6361 = vadd.f32 0.0, %v6360
        %v6362 = vpop.f32.mrb[0].mxu0
        %6363 = vmatprep.mubr.f32.mxu0 0.0
        %6364 = vmatmul.mubr.f32.gmra.mrb[0].mxu0 %v6246
        %v6365 = vpop.f32.mrb[0].mxu0
        %v6366 = vadd.f32 0.0, %v6365
        %v6367 = vpop.f32.mrb[0].mxu0
        %6368 = vmatprep.mubr.f32.mxu0 0.0
        %6369 = vmatmul.mubr.f32.gmra.mrb[0].mxu0 %v6249
        %v6370 = vpop.f32.mrb[0].mxu0
        %v6371 = vadd.f32 0.0, %v6370
        %v6372 = vpop.f32.mrb[0].mxu0
        %6373 = vmatprep.mubr.f32.mxu0 0.0
        %6374 = vmatmul.mubr.f32.gmra.mrb[0].mxu0 %v6252
        %v6375 = vpop.f32.mrb[0].mxu0
        %v6376 = vadd.f32 0.0, %v6375
        %v6377 = vpop.f32.mrb[0].mxu0
        %6378 = vmatprep.mubr.f32.mxu0 0.0
        %6379 = vmatmul.mubr.f32.gmra.mrb[0].mxu0 %v6255
        %v6380 = vpop.f32.mrb[0].mxu0
        %v6381 = vadd.f32 0.0, %v6380
        %v6382 = vpop.f32.mrb[0].mxu0
        %6383 = vmatprep.mubr.f32.mxu0 0.0
        %6384 = vmatmul.mubr.f32.gmra.mrb[0].mxu0 %v6258
        %v6385 = vpop.f32.mrb[0].mxu0
        %v6386 = vadd.f32 0.0, %v6385
        %v6387 = vpop.f32.mrb[0].mxu0
        %6388 = vmatprep.mubr.f32.mxu0 0.0
        %6389 = vmatmul.mubr.f32.gmra.mrb[0].mxu0 %v6261
        %v6390 = vpop.f32.mrb[0].mxu0
        %v6391 = vadd.f32 0.0, %v6390
        %v6392 = vpop.f32.mrb[0].mxu0
        %6393 = vmatprep.mubr.f32.mxu0 0.0
        %6394 = vmatmul.mubr.f32.gmra.mrb[0].mxu0 %v6264
        %v6395 = vpop.f32.mrb[0].mxu0
        %v6396 = vadd.f32 0.0, %v6395
        %v6397 = vpop.f32.mrb[0].mxu0
        %6398 = vmatprep.mubr.f32.mxu0 0.0
        %6399 = vmatmul.mubr.f32.gmra.mrb[0].mxu0 %v6267
        %v6400 = vpop.f32.mrb[0].mxu0
        %v6401 = vadd.f32 0.0, %v6400
        %v6402 = vpop.f32.mrb[0].mxu0
        %6403 = vmatprep.mubr.f32.mxu0 0.0
        %6404 = vmatmul.mubr.f32.gmra.mrb[0].mxu0 %v6270
        %v6405 = vpop.f32.mrb[0].mxu0
        %v6406 = vadd.f32 0.0, %v6405
        %v6407 = vpop.f32.mrb[0].mxu0
        %6408 = vmatprep.mubr.f32.mxu0 0.0
        %6409 = vmatmul.mubr.f32.gmra.mrb[0].mxu0 %v6273
        %v6410 = vpop.f32.mrb[0].mxu0
        %v6411 = vadd.f32 0.0, %v6410
        %v6412 = vpop.f32.mrb[0].mxu0
        %6413 = vmatprep.mubr.f32.mxu0 0.0
        %6414 = vmatmul.mubr.f32.gmra.mrb[0].mxu0 %v6276
        %v6415 = vpop.f32.mrb[0].mxu0
        %v6416 = vadd.f32 0.0, %v6415
        %v6417 = vpop.f32.mrb[0].mxu0
        %6418 = vmatprep.mubr.f32.mxu0 0.0
        %6419 = vmatmul.mubr.f32.gmra.mrb[0].mxu0 %v6279
        %v6420 = vpop.f32.mrb[0].mxu0
        %v6421 = vadd.f32 0.0, %v6420
        %v6422 = vpop.f32.mrb[0].mxu0
        %6423 = vmatprep.mubr.f32.mxu0 0.0
        %6424 = vmatmul.mubr.f32.gmra.mrb[0].mxu0 %v6282
        %v6425 = vpop.f32.mrb[0].mxu0
        %v6426 = vadd.f32 0.0, %v6425
        %v6427 = vpop.f32.mrb[0].mxu0
        %6428 = vdwg.mxu0
        %6445 = vrot.lane.b32.xlu0 %v6351, 24
        %v6446 = vpop.permute.xlu0 %6445
        %6447 = vrot.lane.b32.xlu0 %v6356, 24
        %v6448 = vpop.permute.xlu0 %6447
        %6449 = vrot.lane.b32.xlu0 %v6361, 24
        %v6450 = vpop.permute.xlu0 %6449
        %6451 = vrot.lane.b32.xlu0 %v6366, 24
        %v6452 = vpop.permute.xlu0 %6451
        %6453 = vrot.lane.b32.xlu0 %v6371, 24
        %v6454 = vpop.permute.xlu0 %6453
        %6455 = vrot.lane.b32.xlu0 %v6376, 24
        %v6456 = vpop.permute.xlu0 %6455
        %6457 = vrot.lane.b32.xlu0 %v6381, 24
        %v6458 = vpop.permute.xlu0 %6457
        %6459 = vrot.lane.b32.xlu0 %v6386, 24
        %v6460 = vpop.permute.xlu0 %6459
        %6461 = vrot.lane.b32.xlu0 %v6391, 24
        %v6462 = vpop.permute.xlu0 %6461
        %6463 = vrot.lane.b32.xlu0 %v6396, 24
        %v6464 = vpop.permute.xlu0 %6463
        %6465 = vrot.lane.b32.xlu0 %v6401, 24
        %v6466 = vpop.permute.xlu0 %6465
        %6467 = vrot.lane.b32.xlu0 %v6406, 24
        %v6468 = vpop.permute.xlu0 %6467
        %6469 = vrot.lane.b32.xlu0 %v6411, 24
        %v6470 = vpop.permute.xlu0 %6469
        %6471 = vrot.lane.b32.xlu0 %v6416, 24
        %v6472 = vpop.permute.xlu0 %6471
        %6473 = vrot.lane.b32.xlu0 %v6421, 24
        %v6474 = vpop.permute.xlu0 %6473
        %6475 = vrot.lane.b32.xlu0 %v6426, 24
        %v6476 = vpop.permute.xlu0 %6475
        %v6493 = vadd.f32 %v6195, %v6446
        %v6494 = vadd.f32 %v6196, %v6448
        %v6495 = vadd.f32 %v6197, %v6450
        %v6496 = vadd.f32 %v6198, %v6452
        %v6497 = vadd.f32 %v6199, %v6454
        %v6498 = vadd.f32 %v6200, %v6456
        %v6499 = vadd.f32 %v6201, %v6458
        %v6500 = vadd.f32 %v6202, %v6460
        %v6501 = vadd.f32 %v6203, %v6462
        %v6502 = vadd.f32 %v6204, %v6464
        %v6503 = vadd.f32 %v6205, %v6466
        %v6504 = vadd.f32 %v6206, %v6468
        %v6505 = vadd.f32 %v6207, %v6470
        %v6506 = vadd.f32 %v6208, %v6472
        %v6507 = vadd.f32 %v6209, %v6474
        %v6508 = vadd.f32 %v6210, %v6476
        %v6509 = vld [vmem:[%s317 + $0x6] sm:$0xff]
        %v6510 = vld [vmem:[%s317 + $0xe] sm:$0xff]
        %v6511 = vld [vmem:[%s317 + $0x1e] sm:$0xff]
        %v6512 = vld [vmem:[%s317 + $0x26] sm:$0xff]
        %v6513 = vld [vmem:[%s317 + $0x36] sm:$0xff]
        %v6514 = vld [vmem:[%s317 + $0x3e] sm:$0xff]
        %v6515 = vld [vmem:[%s317 + $0x4e] sm:$0xff]
        %v6516 = vld [vmem:[%s317 + $0x56] sm:$0xff]
        %v6517 = vld [vmem:[%s317 + $0x66] sm:$0xff]
        %v6518 = vld [vmem:[%s317 + $0x6e] sm:$0xff]
        %v6519 = vld [vmem:[%s317 + $0x7e] sm:$0xff]
        %v6520 = vld [vmem:[%s317 + $0x86] sm:$0xff]
        %v6521 = vld [vmem:[%s317 + $0x96] sm:$0xff]
        %v6522 = vld [vmem:[%s317 + $0x9e] sm:$0xff]
        %v6523 = vld [vmem:[%s317 + $0xae] sm:$0xff]
        %v6524 = vld [vmem:[%s317 + $0xb6] sm:$0xff]
        %s6525 = scalar_lea.vmem %s2, 1280
        %v6526 = vld [vmem:[%s6525] sm:$0xff]
        %v6527 = vld [vmem:[%s6525 + $0x8] sm:$0xff]
        %v6528 = vld [vmem:[%s6525 + $0x10] sm:$0xff]
        %v6529 = vld [vmem:[%s6525 + $0x18] sm:$0xff]
        %v6530 = vld [vmem:[%s6525 + $0x20] sm:$0xff]
        %v6531 = vld [vmem:[%s6525 + $0x28] sm:$0xff]
        %v6532 = vld [vmem:[%s6525 + $0x30] sm:$0xff]
        %v6533 = vld [vmem:[%s6525 + $0x38] sm:$0xff]
        %v6535 = vsel %vm342, %v6509, 0
        %v6538 = vsel %vm342, %v6510, 0
        %v6541 = vsel %vm342, %v6511, 0
        %v6544 = vsel %vm342, %v6512, 0
        %v6547 = vsel %vm342, %v6513, 0
        %v6550 = vsel %vm342, %v6514, 0
        %v6553 = vsel %vm342, %v6515, 0
        %v6556 = vsel %vm342, %v6516, 0
        %v6559 = vsel %vm342, %v6517, 0
        %v6562 = vsel %vm342, %v6518, 0
        %v6565 = vsel %vm342, %v6519, 0
        %v6568 = vsel %vm342, %v6520, 0
        %v6571 = vsel %vm342, %v6521, 0
        %v6574 = vsel %vm342, %v6522, 0
        %v6577 = vsel %vm342, %v6523, 0
        %v6580 = vsel %vm342, %v6524, 0
        %6582 = vmatprep.subr.mxu0 0.0
        %6583 = vmatpush1.msra.mxu0 %v6526
        %6584 = vmatprep.subr.mxu0 0.0
        %6585 = vmatpush1.msra.mxu0 %v6527
        %6586 = vmatprep.subr.mxu0 0.0
        %6587 = vmatpush1.msra.mxu0 %v6528
        %6588 = vmatprep.subr.mxu0 0.0
        %6589 = vmatpush1.msra.mxu0 %v6529
        %6590 = vmatprep.subr.mxu0 0.0
        %6591 = vmatpush1.msra.mxu0 %v6530
        %6592 = vmatprep.subr.mxu0 0.0
        %6593 = vmatpush1.msra.mxu0 %v6531
        %6594 = vmatprep.subr.mxu0 0.0
        %6595 = vmatpush1.msra.mxu0 %v6532
        %6596 = vmatprep.subr.mxu0 0.0
        %6597 = vmatpush1.msra.mxu0 %v6533
        %6598 = vmatprep.subr.mxu0 0.0
        %6599 = vmatpush1.msra.mxu0 0.0
        %6600 = vmatprep.subr.mxu0 0.0
        %6601 = vmatpush1.msra.mxu0 0.0
        %6602 = vmatprep.subr.mxu0 0.0
        %6603 = vmatpush1.msra.mxu0 0.0
        %6604 = vmatprep.subr.mxu0 0.0
        %6605 = vmatpush1.msra.mxu0 0.0
        %6606 = vmatprep.subr.mxu0 0.0
        %6607 = vmatpush1.msra.mxu0 0.0
        %6608 = vmatprep.subr.mxu0 0.0
        %6609 = vmatpush1.msra.mxu0 0.0
        %6610 = vmatprep.subr.mxu0 0.0
        %6611 = vmatpush1.msra.mxu0 0.0
        %6612 = vmatprep.subr.mxu0 0.0
        %6613 = vmatpush1.msra.mxu0 0.0
        %6614 = vmatprep.subr.mxu0 0.0
        %6615 = vmatpush1.msra.mxu0 0.0
        %6616 = vmatprep.subr.mxu0 0.0
        %6617 = vmatpush1.msra.mxu0 0.0
        %6618 = vmatprep.subr.mxu0 0.0
        %6619 = vmatpush1.msra.mxu0 0.0
        %6620 = vmatprep.subr.mxu0 0.0
        %6621 = vmatpush1.msra.mxu0 0.0
        %6622 = vmatprep.subr.mxu0 0.0
        %6623 = vmatpush1.msra.mxu0 0.0
        %6624 = vmatprep.subr.mxu0 0.0
        %6625 = vmatpush1.msra.mxu0 0.0
        %6626 = vmatprep.subr.mxu0 0.0
        %6627 = vmatpush1.msra.mxu0 0.0
        %6628 = vmatprep.subr.mxu0 0.0
        %6629 = vmatpush1.msra.mxu0 0.0
        %6630 = vmatprep.subr.mxu0 0.0
        %6631 = vmatpush1.msra.mxu0 0.0
        %6632 = vmatprep.subr.mxu0 0.0
        %6633 = vmatpush1.msra.mxu0 0.0
        %6634 = vmatprep.subr.mxu0 0.0
        %6635 = vmatpush1.msra.mxu0 0.0
        %6636 = vmatprep.subr.mxu0 0.0
        %6637 = vmatpush1.msra.mxu0 0.0
        %6638 = vmatprep.subr.mxu0 0.0
        %6639 = vmatpush1.msra.mxu0 0.0
        %6640 = vmatprep.subr.mxu0 0.0
        %6641 = vmatpush1.msra.mxu0 0.0
        %6642 = vmatprep.subr.mxu0 0.0
        %6643 = vmatpush1.msra.mxu0 0.0
        %6644 = vmatprep.subr.mxu0 0.0
        %6645 = vmatpush1.msra.mxu0 0.0
        %6646 = vmatprep.mubr.f32.mxu0 0.0
        %6647 = vmatmul.mubr.f32.gmra.mrb[0].mxu0 %v6535
        %v6648 = vpop.f32.mrb[0].mxu0
        %v6649 = vadd.f32 0.0, %v6648
        %v6650 = vpop.f32.mrb[0].mxu0
        %6651 = vmatprep.mubr.f32.mxu0 0.0
        %6652 = vmatmul.mubr.f32.gmra.mrb[0].mxu0 %v6538
        %v6653 = vpop.f32.mrb[0].mxu0
        %v6654 = vadd.f32 0.0, %v6653
        %v6655 = vpop.f32.mrb[0].mxu0
        %6656 = vmatprep.mubr.f32.mxu0 0.0
        %6657 = vmatmul.mubr.f32.gmra.mrb[0].mxu0 %v6541
        %v6658 = vpop.f32.mrb[0].mxu0
        %v6659 = vadd.f32 0.0, %v6658
        %v6660 = vpop.f32.mrb[0].mxu0
        %6661 = vmatprep.mubr.f32.mxu0 0.0
        %6662 = vmatmul.mubr.f32.gmra.mrb[0].mxu0 %v6544
        %v6663 = vpop.f32.mrb[0].mxu0
        %v6664 = vadd.f32 0.0, %v6663
        %v6665 = vpop.f32.mrb[0].mxu0
        %6666 = vmatprep.mubr.f32.mxu0 0.0
        %6667 = vmatmul.mubr.f32.gmra.mrb[0].mxu0 %v6547
        %v6668 = vpop.f32.mrb[0].mxu0
        %v6669 = vadd.f32 0.0, %v6668
        %v6670 = vpop.f32.mrb[0].mxu0
        %6671 = vmatprep.mubr.f32.mxu0 0.0
        %6672 = vmatmul.mubr.f32.gmra.mrb[0].mxu0 %v6550
        %v6673 = vpop.f32.mrb[0].mxu0
        %v6674 = vadd.f32 0.0, %v6673
        %v6675 = vpop.f32.mrb[0].mxu0
        %6676 = vmatprep.mubr.f32.mxu0 0.0
        %6677 = vmatmul.mubr.f32.gmra.mrb[0].mxu0 %v6553
        %v6678 = vpop.f32.mrb[0].mxu0
        %v6679 = vadd.f32 0.0, %v6678
        %v6680 = vpop.f32.mrb[0].mxu0
        %6681 = vmatprep.mubr.f32.mxu0 0.0
        %6682 = vmatmul.mubr.f32.gmra.mrb[0].mxu0 %v6556
        %v6683 = vpop.f32.mrb[0].mxu0
        %v6684 = vadd.f32 0.0, %v6683
        %v6685 = vpop.f32.mrb[0].mxu0
        %6686 = vmatprep.mubr.f32.mxu0 0.0
        %6687 = vmatmul.mubr.f32.gmra.mrb[0].mxu0 %v6559
        %v6688 = vpop.f32.mrb[0].mxu0
        %v6689 = vadd.f32 0.0, %v6688
        %v6690 = vpop.f32.mrb[0].mxu0
        %6691 = vmatprep.mubr.f32.mxu0 0.0
        %6692 = vmatmul.mubr.f32.gmra.mrb[0].mxu0 %v6562
        %v6693 = vpop.f32.mrb[0].mxu0
        %v6694 = vadd.f32 0.0, %v6693
        %v6695 = vpop.f32.mrb[0].mxu0
        %6696 = vmatprep.mubr.f32.mxu0 0.0
        %6697 = vmatmul.mubr.f32.gmra.mrb[0].mxu0 %v6565
        %v6698 = vpop.f32.mrb[0].mxu0
        %v6699 = vadd.f32 0.0, %v6698
        %v6700 = vpop.f32.mrb[0].mxu0
        %6701 = vmatprep.mubr.f32.mxu0 0.0
        %6702 = vmatmul.mubr.f32.gmra.mrb[0].mxu0 %v6568
        %v6703 = vpop.f32.mrb[0].mxu0
        %v6704 = vadd.f32 0.0, %v6703
        %v6705 = vpop.f32.mrb[0].mxu0
        %6706 = vmatprep.mubr.f32.mxu0 0.0
        %6707 = vmatmul.mubr.f32.gmra.mrb[0].mxu0 %v6571
        %v6708 = vpop.f32.mrb[0].mxu0
        %v6709 = vadd.f32 0.0, %v6708
        %v6710 = vpop.f32.mrb[0].mxu0
        %6711 = vmatprep.mubr.f32.mxu0 0.0
        %6712 = vmatmul.mubr.f32.gmra.mrb[0].mxu0 %v6574
        %v6713 = vpop.f32.mrb[0].mxu0
        %v6714 = vadd.f32 0.0, %v6713
        %v6715 = vpop.f32.mrb[0].mxu0
        %6716 = vmatprep.mubr.f32.mxu0 0.0
        %6717 = vmatmul.mubr.f32.gmra.mrb[0].mxu0 %v6577
        %v6718 = vpop.f32.mrb[0].mxu0
        %v6719 = vadd.f32 0.0, %v6718
        %v6720 = vpop.f32.mrb[0].mxu0
        %6721 = vmatprep.mubr.f32.mxu0 0.0
        %6722 = vmatmul.mubr.f32.gmra.mrb[0].mxu0 %v6580
        %v6723 = vpop.f32.mrb[0].mxu0
        %v6724 = vadd.f32 0.0, %v6723
        %v6725 = vpop.f32.mrb[0].mxu0
        %6726 = vdwg.mxu0
        %6743 = vrot.lane.b32.xlu0 %v6649, 24
        %v6744 = vpop.permute.xlu0 %6743
        %6745 = vrot.lane.b32.xlu0 %v6654, 24
        %v6746 = vpop.permute.xlu0 %6745
        %6747 = vrot.lane.b32.xlu0 %v6659, 24
        %v6748 = vpop.permute.xlu0 %6747
        %6749 = vrot.lane.b32.xlu0 %v6664, 24
        %v6750 = vpop.permute.xlu0 %6749
        %6751 = vrot.lane.b32.xlu0 %v6669, 24
        %v6752 = vpop.permute.xlu0 %6751
        %6753 = vrot.lane.b32.xlu0 %v6674, 24
        %v6754 = vpop.permute.xlu0 %6753
        %6755 = vrot.lane.b32.xlu0 %v6679, 24
        %v6756 = vpop.permute.xlu0 %6755
        %6757 = vrot.lane.b32.xlu0 %v6684, 24
        %v6758 = vpop.permute.xlu0 %6757
        %6759 = vrot.lane.b32.xlu0 %v6689, 24
        %v6760 = vpop.permute.xlu0 %6759
        %6761 = vrot.lane.b32.xlu0 %v6694, 24
        %v6762 = vpop.permute.xlu0 %6761
        %6763 = vrot.lane.b32.xlu0 %v6699, 24
        %v6764 = vpop.permute.xlu0 %6763
        %6765 = vrot.lane.b32.xlu0 %v6704, 24
        %v6766 = vpop.permute.xlu0 %6765
        %6767 = vrot.lane.b32.xlu0 %v6709, 24
        %v6768 = vpop.permute.xlu0 %6767
        %6769 = vrot.lane.b32.xlu0 %v6714, 24
        %v6770 = vpop.permute.xlu0 %6769
        %6771 = vrot.lane.b32.xlu0 %v6719, 24
        %v6772 = vpop.permute.xlu0 %6771
        %6773 = vrot.lane.b32.xlu0 %v6724, 24
        %v6774 = vpop.permute.xlu0 %6773
        %v6791 = vadd.f32 %v6493, %v6744
        %v6792 = vadd.f32 %v6494, %v6746
        %v6793 = vadd.f32 %v6495, %v6748
        %v6794 = vadd.f32 %v6496, %v6750
        %v6795 = vadd.f32 %v6497, %v6752
        %v6796 = vadd.f32 %v6498, %v6754
        %v6797 = vadd.f32 %v6499, %v6756
        %v6798 = vadd.f32 %v6500, %v6758
        %v6799 = vadd.f32 %v6501, %v6760
        %v6800 = vadd.f32 %v6502, %v6762
        %v6801 = vadd.f32 %v6503, %v6764
        %v6802 = vadd.f32 %v6504, %v6766
        %v6803 = vadd.f32 %v6505, %v6768
        %v6804 = vadd.f32 %v6506, %v6770
        %v6805 = vadd.f32 %v6507, %v6772
        %v6806 = vadd.f32 %v6508, %v6774
        %s6807 = sadd.s32 %s314, 6
        %s6808 = smul.u32 %s6807, 24
        %s6809 = scalar_lea.vmem %s302, %s6808
        %v6810 = vld [vmem:[%s6809] sm:$0xff]
        %v6811 = vld [vmem:[%s6809 + $0x8] sm:$0xff]
        %v6812 = vld [vmem:[%s6809 + $0x18] sm:$0xff]
        %v6813 = vld [vmem:[%s6809 + $0x20] sm:$0xff]
        %v6814 = vld [vmem:[%s6809 + $0x30] sm:$0xff]
        %v6815 = vld [vmem:[%s6809 + $0x38] sm:$0xff]
        %v6816 = vld [vmem:[%s6809 + $0x48] sm:$0xff]
        %v6817 = vld [vmem:[%s6809 + $0x50] sm:$0xff]
        %v6818 = vld [vmem:[%s6809 + $0x60] sm:$0xff]
        %v6819 = vld [vmem:[%s6809 + $0x68] sm:$0xff]
        %v6820 = vld [vmem:[%s6809 + $0x78] sm:$0xff]
        %v6821 = vld [vmem:[%s6809 + $0x80] sm:$0xff]
        %v6822 = vld [vmem:[%s6809 + $0x90] sm:$0xff]
        %v6823 = vld [vmem:[%s6809 + $0x98] sm:$0xff]
        %v6824 = vld [vmem:[%s6809 + $0xa8] sm:$0xff]
        %v6825 = vld [vmem:[%s6809 + $0xb0] sm:$0xff]
        %s6826 = scalar_lea.vmem %s2, 1344
        %v6827 = vld [vmem:[%s6826] sm:$0xff]
        %v6828 = vld [vmem:[%s6826 + $0x8] sm:$0xff]
        %v6829 = vld [vmem:[%s6826 + $0x10] sm:$0xff]
        %v6830 = vld [vmem:[%s6826 + $0x18] sm:$0xff]
        %v6831 = vld [vmem:[%s6826 + $0x20] sm:$0xff]
        %v6832 = vld [vmem:[%s6826 + $0x28] sm:$0xff]
        %v6833 = vld [vmem:[%s6826 + $0x30] sm:$0xff]
        %v6834 = vld [vmem:[%s6826 + $0x38] sm:$0xff]
        %v6836 = vsel %vm342, %v6810, 0
        %v6839 = vsel %vm342, %v6811, 0
        %v6842 = vsel %vm342, %v6812, 0
        %v6845 = vsel %vm342, %v6813, 0
        %v6848 = vsel %vm342, %v6814, 0
        %v6851 = vsel %vm342, %v6815, 0
        %v6854 = vsel %vm342, %v6816, 0
        %v6857 = vsel %vm342, %v6817, 0
        %v6860 = vsel %vm342, %v6818, 0
        %v6863 = vsel %vm342, %v6819, 0
        %v6866 = vsel %vm342, %v6820, 0
        %v6869 = vsel %vm342, %v6821, 0
        %v6872 = vsel %vm342, %v6822, 0
        %v6875 = vsel %vm342, %v6823, 0
        %v6878 = vsel %vm342, %v6824, 0
        %v6881 = vsel %vm342, %v6825, 0
        %6883 = vmatprep.subr.mxu0 0.0
        %6884 = vmatpush1.msra.mxu0 %v6827
        %6885 = vmatprep.subr.mxu0 0.0
        %6886 = vmatpush1.msra.mxu0 %v6828
        %6887 = vmatprep.subr.mxu0 0.0
        %6888 = vmatpush1.msra.mxu0 %v6829
        %6889 = vmatprep.subr.mxu0 0.0
        %6890 = vmatpush1.msra.mxu0 %v6830
        %6891 = vmatprep.subr.mxu0 0.0
        %6892 = vmatpush1.msra.mxu0 %v6831
        %6893 = vmatprep.subr.mxu0 0.0
        %6894 = vmatpush1.msra.mxu0 %v6832
        %6895 = vmatprep.subr.mxu0 0.0
        %6896 = vmatpush1.msra.mxu0 %v6833
        %6897 = vmatprep.subr.mxu0 0.0
        %6898 = vmatpush1.msra.mxu0 %v6834
        %6899 = vmatprep.subr.mxu0 0.0
        %6900 = vmatpush1.msra.mxu0 0.0
        %6901 = vmatprep.subr.mxu0 0.0
        %6902 = vmatpush1.msra.mxu0 0.0
        %6903 = vmatprep.subr.mxu0 0.0
        %6904 = vmatpush1.msra.mxu0 0.0
        %6905 = vmatprep.subr.mxu0 0.0
        %6906 = vmatpush1.msra.mxu0 0.0
        %6907 = vmatprep.subr.mxu0 0.0
        %6908 = vmatpush1.msra.mxu0 0.0
        %6909 = vmatprep.subr.mxu0 0.0
        %6910 = vmatpush1.msra.mxu0 0.0
        %6911 = vmatprep.subr.mxu0 0.0
        %6912 = vmatpush1.msra.mxu0 0.0
        %6913 = vmatprep.subr.mxu0 0.0
        %6914 = vmatpush1.msra.mxu0 0.0
        %6915 = vmatprep.subr.mxu0 0.0
        %6916 = vmatpush1.msra.mxu0 0.0
        %6917 = vmatprep.subr.mxu0 0.0
        %6918 = vmatpush1.msra.mxu0 0.0
        %6919 = vmatprep.subr.mxu0 0.0
        %6920 = vmatpush1.msra.mxu0 0.0
        %6921 = vmatprep.subr.mxu0 0.0
        %6922 = vmatpush1.msra.mxu0 0.0
        %6923 = vmatprep.subr.mxu0 0.0
        %6924 = vmatpush1.msra.mxu0 0.0
        %6925 = vmatprep.subr.mxu0 0.0
        %6926 = vmatpush1.msra.mxu0 0.0
        %6927 = vmatprep.subr.mxu0 0.0
        %6928 = vmatpush1.msra.mxu0 0.0
        %6929 = vmatprep.subr.mxu0 0.0
        %6930 = vmatpush1.msra.mxu0 0.0
        %6931 = vmatprep.subr.mxu0 0.0
        %6932 = vmatpush1.msra.mxu0 0.0
        %6933 = vmatprep.subr.mxu0 0.0
        %6934 = vmatpush1.msra.mxu0 0.0
        %6935 = vmatprep.subr.mxu0 0.0
        %6936 = vmatpush1.msra.mxu0 0.0
        %6937 = vmatprep.subr.mxu0 0.0
        %6938 = vmatpush1.msra.mxu0 0.0
        %6939 = vmatprep.subr.mxu0 0.0
        %6940 = vmatpush1.msra.mxu0 0.0
        %6941 = vmatprep.subr.mxu0 0.0
        %6942 = vmatpush1.msra.mxu0 0.0
        %6943 = vmatprep.subr.mxu0 0.0
        %6944 = vmatpush1.msra.mxu0 0.0
        %6945 = vmatprep.subr.mxu0 0.0
        %6946 = vmatpush1.msra.mxu0 0.0
        %6947 = vmatprep.mubr.f32.mxu0 0.0
        %6948 = vmatmul.mubr.f32.gmra.mrb[0].mxu0 %v6836
        %v6949 = vpop.f32.mrb[0].mxu0
        %v6950 = vadd.f32 0.0, %v6949
        %v6951 = vpop.f32.mrb[0].mxu0
        %6952 = vmatprep.mubr.f32.mxu0 0.0
        %6953 = vmatmul.mubr.f32.gmra.mrb[0].mxu0 %v6839
        %v6954 = vpop.f32.mrb[0].mxu0
        %v6955 = vadd.f32 0.0, %v6954
        %v6956 = vpop.f32.mrb[0].mxu0
        %6957 = vmatprep.mubr.f32.mxu0 0.0
        %6958 = vmatmul.mubr.f32.gmra.mrb[0].mxu0 %v6842
        %v6959 = vpop.f32.mrb[0].mxu0
        %v6960 = vadd.f32 0.0, %v6959
        %v6961 = vpop.f32.mrb[0].mxu0
        %6962 = vmatprep.mubr.f32.mxu0 0.0
        %6963 = vmatmul.mubr.f32.gmra.mrb[0].mxu0 %v6845
        %v6964 = vpop.f32.mrb[0].mxu0
        %v6965 = vadd.f32 0.0, %v6964
        %v6966 = vpop.f32.mrb[0].mxu0
        %6967 = vmatprep.mubr.f32.mxu0 0.0
        %6968 = vmatmul.mubr.f32.gmra.mrb[0].mxu0 %v6848
        %v6969 = vpop.f32.mrb[0].mxu0
        %v6970 = vadd.f32 0.0, %v6969
        %v6971 = vpop.f32.mrb[0].mxu0
        %6972 = vmatprep.mubr.f32.mxu0 0.0
        %6973 = vmatmul.mubr.f32.gmra.mrb[0].mxu0 %v6851
        %v6974 = vpop.f32.mrb[0].mxu0
        %v6975 = vadd.f32 0.0, %v6974
        %v6976 = vpop.f32.mrb[0].mxu0
        %6977 = vmatprep.mubr.f32.mxu0 0.0
        %6978 = vmatmul.mubr.f32.gmra.mrb[0].mxu0 %v6854
        %v6979 = vpop.f32.mrb[0].mxu0
        %v6980 = vadd.f32 0.0, %v6979
        %v6981 = vpop.f32.mrb[0].mxu0
        %6982 = vmatprep.mubr.f32.mxu0 0.0
        %6983 = vmatmul.mubr.f32.gmra.mrb[0].mxu0 %v6857
        %v6984 = vpop.f32.mrb[0].mxu0
        %v6985 = vadd.f32 0.0, %v6984
        %v6986 = vpop.f32.mrb[0].mxu0
        %6987 = vmatprep.mubr.f32.mxu0 0.0
        %6988 = vmatmul.mubr.f32.gmra.mrb[0].mxu0 %v6860
        %v6989 = vpop.f32.mrb[0].mxu0
        %v6990 = vadd.f32 0.0, %v6989
        %v6991 = vpop.f32.mrb[0].mxu0
        %6992 = vmatprep.mubr.f32.mxu0 0.0
        %6993 = vmatmul.mubr.f32.gmra.mrb[0].mxu0 %v6863
        %v6994 = vpop.f32.mrb[0].mxu0
        %v6995 = vadd.f32 0.0, %v6994
        %v6996 = vpop.f32.mrb[0].mxu0
        %6997 = vmatprep.mubr.f32.mxu0 0.0
        %6998 = vmatmul.mubr.f32.gmra.mrb[0].mxu0 %v6866
        %v6999 = vpop.f32.mrb[0].mxu0
        %v7000 = vadd.f32 0.0, %v6999
        %v7001 = vpop.f32.mrb[0].mxu0
        %7002 = vmatprep.mubr.f32.mxu0 0.0
        %7003 = vmatmul.mubr.f32.gmra.mrb[0].mxu0 %v6869
        %v7004 = vpop.f32.mrb[0].mxu0
        %v7005 = vadd.f32 0.0, %v7004
        %v7006 = vpop.f32.mrb[0].mxu0
        %7007 = vmatprep.mubr.f32.mxu0 0.0
        %7008 = vmatmul.mubr.f32.gmra.mrb[0].mxu0 %v6872
        %v7009 = vpop.f32.mrb[0].mxu0
        %v7010 = vadd.f32 0.0, %v7009
        %v7011 = vpop.f32.mrb[0].mxu0
        %7012 = vmatprep.mubr.f32.mxu0 0.0
        %7013 = vmatmul.mubr.f32.gmra.mrb[0].mxu0 %v6875
        %v7014 = vpop.f32.mrb[0].mxu0
        %v7015 = vadd.f32 0.0, %v7014
        %v7016 = vpop.f32.mrb[0].mxu0
        %7017 = vmatprep.mubr.f32.mxu0 0.0
        %7018 = vmatmul.mubr.f32.gmra.mrb[0].mxu0 %v6878
        %v7019 = vpop.f32.mrb[0].mxu0
        %v7020 = vadd.f32 0.0, %v7019
        %v7021 = vpop.f32.mrb[0].mxu0
        %7022 = vmatprep.mubr.f32.mxu0 0.0
        %7023 = vmatmul.mubr.f32.gmra.mrb[0].mxu0 %v6881
        %v7024 = vpop.f32.mrb[0].mxu0
        %v7025 = vadd.f32 0.0, %v7024
        %v7026 = vpop.f32.mrb[0].mxu0
        %7027 = vdwg.mxu0
        %7044 = vrot.lane.b32.xlu0 %v6950, 24
        %v7045 = vpop.permute.xlu0 %7044
        %7046 = vrot.lane.b32.xlu0 %v6955, 24
        %v7047 = vpop.permute.xlu0 %7046
        %7048 = vrot.lane.b32.xlu0 %v6960, 24
        %v7049 = vpop.permute.xlu0 %7048
        %7050 = vrot.lane.b32.xlu0 %v6965, 24
        %v7051 = vpop.permute.xlu0 %7050
        %7052 = vrot.lane.b32.xlu0 %v6970, 24
        %v7053 = vpop.permute.xlu0 %7052
        %7054 = vrot.lane.b32.xlu0 %v6975, 24
        %v7055 = vpop.permute.xlu0 %7054
        %7056 = vrot.lane.b32.xlu0 %v6980, 24
        %v7057 = vpop.permute.xlu0 %7056
        %7058 = vrot.lane.b32.xlu0 %v6985, 24
        %v7059 = vpop.permute.xlu0 %7058
        %7060 = vrot.lane.b32.xlu0 %v6990, 24
        %v7061 = vpop.permute.xlu0 %7060
        %7062 = vrot.lane.b32.xlu0 %v6995, 24
        %v7063 = vpop.permute.xlu0 %7062
        %7064 = vrot.lane.b32.xlu0 %v7000, 24
        %v7065 = vpop.permute.xlu0 %7064
        %7066 = vrot.lane.b32.xlu0 %v7005, 24
        %v7067 = vpop.permute.xlu0 %7066
        %7068 = vrot.lane.b32.xlu0 %v7010, 24
        %v7069 = vpop.permute.xlu0 %7068
        %7070 = vrot.lane.b32.xlu0 %v7015, 24
        %v7071 = vpop.permute.xlu0 %7070
        %7072 = vrot.lane.b32.xlu0 %v7020, 24
        %v7073 = vpop.permute.xlu0 %7072
        %7074 = vrot.lane.b32.xlu0 %v7025, 24
        %v7075 = vpop.permute.xlu0 %7074
        %v7092 = vadd.f32 %v6791, %v7045
        %v7093 = vadd.f32 %v6792, %v7047
        %v7094 = vadd.f32 %v6793, %v7049
        %v7095 = vadd.f32 %v6794, %v7051
        %v7096 = vadd.f32 %v6795, %v7053
        %v7097 = vadd.f32 %v6796, %v7055
        %v7098 = vadd.f32 %v6797, %v7057
        %v7099 = vadd.f32 %v6798, %v7059
        %v7100 = vadd.f32 %v6799, %v7061
        %v7101 = vadd.f32 %v6800, %v7063
        %v7102 = vadd.f32 %v6801, %v7065
        %v7103 = vadd.f32 %v6802, %v7067
        %v7104 = vadd.f32 %v6803, %v7069
        %v7105 = vadd.f32 %v6804, %v7071
        %v7106 = vadd.f32 %v6805, %v7073
        %v7107 = vadd.f32 %v6806, %v7075
        %v7108 = vld [vmem:[%s6809 + $0x3] sm:$0xff]
        %v7109 = vld [vmem:[%s6809 + $0xb] sm:$0xff]
        %v7110 = vld [vmem:[%s6809 + $0x1b] sm:$0xff]
        %v7111 = vld [vmem:[%s6809 + $0x23] sm:$0xff]
        %v7112 = vld [vmem:[%s6809 + $0x33] sm:$0xff]
        %v7113 = vld [vmem:[%s6809 + $0x3b] sm:$0xff]
        %v7114 = vld [vmem:[%s6809 + $0x4b] sm:$0xff]
        %v7115 = vld [vmem:[%s6809 + $0x53] sm:$0xff]
        %v7116 = vld [vmem:[%s6809 + $0x63] sm:$0xff]
        %v7117 = vld [vmem:[%s6809 + $0x6b] sm:$0xff]
        %v7118 = vld [vmem:[%s6809 + $0x7b] sm:$0xff]
        %v7119 = vld [vmem:[%s6809 + $0x83] sm:$0xff]
        %v7120 = vld [vmem:[%s6809 + $0x93] sm:$0xff]
        %v7121 = vld [vmem:[%s6809 + $0x9b] sm:$0xff]
        %v7122 = vld [vmem:[%s6809 + $0xab] sm:$0xff]
        %v7123 = vld [vmem:[%s6809 + $0xb3] sm:$0xff]
        %s7124 = scalar_lea.vmem %s2, 1408
        %v7125 = vld [vmem:[%s7124] sm:$0xff]
        %v7126 = vld [vmem:[%s7124 + $0x8] sm:$0xff]
        %v7127 = vld [vmem:[%s7124 + $0x10] sm:$0xff]
        %v7128 = vld [vmem:[%s7124 + $0x18] sm:$0xff]
        %v7129 = vld [vmem:[%s7124 + $0x20] sm:$0xff]
        %v7130 = vld [vmem:[%s7124 + $0x28] sm:$0xff]
        %v7131 = vld [vmem:[%s7124 + $0x30] sm:$0xff]
        %v7132 = vld [vmem:[%s7124 + $0x38] sm:$0xff]
        %v7134 = vsel %vm342, %v7108, 0
        %v7137 = vsel %vm342, %v7109, 0
        %v7140 = vsel %vm342, %v7110, 0
        %v7143 = vsel %vm342, %v7111, 0
        %v7146 = vsel %vm342, %v7112, 0
        %v7149 = vsel %vm342, %v7113, 0
        %v7152 = vsel %vm342, %v7114, 0
        %v7155 = vsel %vm342, %v7115, 0
        %v7158 = vsel %vm342, %v7116, 0
        %v7161 = vsel %vm342, %v7117, 0
        %v7164 = vsel %vm342, %v7118, 0
        %v7167 = vsel %vm342, %v7119, 0
        %v7170 = vsel %vm342, %v7120, 0
        %v7173 = vsel %vm342, %v7121, 0
        %v7176 = vsel %vm342, %v7122, 0
        %v7179 = vsel %vm342, %v7123, 0
        %7181 = vmatprep.subr.mxu0 0.0
        %7182 = vmatpush1.msra.mxu0 %v7125
        %7183 = vmatprep.subr.mxu0 0.0
        %7184 = vmatpush1.msra.mxu0 %v7126
        %7185 = vmatprep.subr.mxu0 0.0
        %7186 = vmatpush1.msra.mxu0 %v7127
        %7187 = vmatprep.subr.mxu0 0.0
        %7188 = vmatpush1.msra.mxu0 %v7128
        %7189 = vmatprep.subr.mxu0 0.0
        %7190 = vmatpush1.msra.mxu0 %v7129
        %7191 = vmatprep.subr.mxu0 0.0
        %7192 = vmatpush1.msra.mxu0 %v7130
        %7193 = vmatprep.subr.mxu0 0.0
        %7194 = vmatpush1.msra.mxu0 %v7131
        %7195 = vmatprep.subr.mxu0 0.0
        %7196 = vmatpush1.msra.mxu0 %v7132
        %7197 = vmatprep.subr.mxu0 0.0
        %7198 = vmatpush1.msra.mxu0 0.0
        %7199 = vmatprep.subr.mxu0 0.0
        %7200 = vmatpush1.msra.mxu0 0.0
        %7201 = vmatprep.subr.mxu0 0.0
        %7202 = vmatpush1.msra.mxu0 0.0
        %7203 = vmatprep.subr.mxu0 0.0
        %7204 = vmatpush1.msra.mxu0 0.0
        %7205 = vmatprep.subr.mxu0 0.0
        %7206 = vmatpush1.msra.mxu0 0.0
        %7207 = vmatprep.subr.mxu0 0.0
        %7208 = vmatpush1.msra.mxu0 0.0
        %7209 = vmatprep.subr.mxu0 0.0
        %7210 = vmatpush1.msra.mxu0 0.0
        %7211 = vmatprep.subr.mxu0 0.0
        %7212 = vmatpush1.msra.mxu0 0.0
        %7213 = vmatprep.subr.mxu0 0.0
        %7214 = vmatpush1.msra.mxu0 0.0
        %7215 = vmatprep.subr.mxu0 0.0
        %7216 = vmatpush1.msra.mxu0 0.0
        %7217 = vmatprep.subr.mxu0 0.0
        %7218 = vmatpush1.msra.mxu0 0.0
        %7219 = vmatprep.subr.mxu0 0.0
        %7220 = vmatpush1.msra.mxu0 0.0
        %7221 = vmatprep.subr.mxu0 0.0
        %7222 = vmatpush1.msra.mxu0 0.0
        %7223 = vmatprep.subr.mxu0 0.0
        %7224 = vmatpush1.msra.mxu0 0.0
        %7225 = vmatprep.subr.mxu0 0.0
        %7226 = vmatpush1.msra.mxu0 0.0
        %7227 = vmatprep.subr.mxu0 0.0
        %7228 = vmatpush1.msra.mxu0 0.0
        %7229 = vmatprep.subr.mxu0 0.0
        %7230 = vmatpush1.msra.mxu0 0.0
        %7231 = vmatprep.subr.mxu0 0.0
        %7232 = vmatpush1.msra.mxu0 0.0
        %7233 = vmatprep.subr.mxu0 0.0
        %7234 = vmatpush1.msra.mxu0 0.0
        %7235 = vmatprep.subr.mxu0 0.0
        %7236 = vmatpush1.msra.mxu0 0.0
        %7237 = vmatprep.subr.mxu0 0.0
        %7238 = vmatpush1.msra.mxu0 0.0
        %7239 = vmatprep.subr.mxu0 0.0
        %7240 = vmatpush1.msra.mxu0 0.0
        %7241 = vmatprep.subr.mxu0 0.0
        %7242 = vmatpush1.msra.mxu0 0.0
        %7243 = vmatprep.subr.mxu0 0.0
        %7244 = vmatpush1.msra.mxu0 0.0
        %7245 = vmatprep.mubr.f32.mxu0 0.0
        %7246 = vmatmul.mubr.f32.gmra.mrb[0].mxu0 %v7134
        %v7247 = vpop.f32.mrb[0].mxu0
        %v7248 = vadd.f32 0.0, %v7247
        %v7249 = vpop.f32.mrb[0].mxu0
        %7250 = vmatprep.mubr.f32.mxu0 0.0
        %7251 = vmatmul.mubr.f32.gmra.mrb[0].mxu0 %v7137
        %v7252 = vpop.f32.mrb[0].mxu0
        %v7253 = vadd.f32 0.0, %v7252
        %v7254 = vpop.f32.mrb[0].mxu0
        %7255 = vmatprep.mubr.f32.mxu0 0.0
        %7256 = vmatmul.mubr.f32.gmra.mrb[0].mxu0 %v7140
        %v7257 = vpop.f32.mrb[0].mxu0
        %v7258 = vadd.f32 0.0, %v7257
        %v7259 = vpop.f32.mrb[0].mxu0
        %7260 = vmatprep.mubr.f32.mxu0 0.0
        %7261 = vmatmul.mubr.f32.gmra.mrb[0].mxu0 %v7143
        %v7262 = vpop.f32.mrb[0].mxu0
        %v7263 = vadd.f32 0.0, %v7262
        %v7264 = vpop.f32.mrb[0].mxu0
        %7265 = vmatprep.mubr.f32.mxu0 0.0
        %7266 = vmatmul.mubr.f32.gmra.mrb[0].mxu0 %v7146
        %v7267 = vpop.f32.mrb[0].mxu0
        %v7268 = vadd.f32 0.0, %v7267
        %v7269 = vpop.f32.mrb[0].mxu0
        %7270 = vmatprep.mubr.f32.mxu0 0.0
        %7271 = vmatmul.mubr.f32.gmra.mrb[0].mxu0 %v7149
        %v7272 = vpop.f32.mrb[0].mxu0
        %v7273 = vadd.f32 0.0, %v7272
        %v7274 = vpop.f32.mrb[0].mxu0
        %7275 = vmatprep.mubr.f32.mxu0 0.0
        %7276 = vmatmul.mubr.f32.gmra.mrb[0].mxu0 %v7152
        %v7277 = vpop.f32.mrb[0].mxu0
        %v7278 = vadd.f32 0.0, %v7277
        %v7279 = vpop.f32.mrb[0].mxu0
        %7280 = vmatprep.mubr.f32.mxu0 0.0
        %7281 = vmatmul.mubr.f32.gmra.mrb[0].mxu0 %v7155
        %v7282 = vpop.f32.mrb[0].mxu0
        %v7283 = vadd.f32 0.0, %v7282
        %v7284 = vpop.f32.mrb[0].mxu0
        %7285 = vmatprep.mubr.f32.mxu0 0.0
        %7286 = vmatmul.mubr.f32.gmra.mrb[0].mxu0 %v7158
        %v7287 = vpop.f32.mrb[0].mxu0
        %v7288 = vadd.f32 0.0, %v7287
        %v7289 = vpop.f32.mrb[0].mxu0
        %7290 = vmatprep.mubr.f32.mxu0 0.0
        %7291 = vmatmul.mubr.f32.gmra.mrb[0].mxu0 %v7161
        %v7292 = vpop.f32.mrb[0].mxu0
        %v7293 = vadd.f32 0.0, %v7292
        %v7294 = vpop.f32.mrb[0].mxu0
        %7295 = vmatprep.mubr.f32.mxu0 0.0
        %7296 = vmatmul.mubr.f32.gmra.mrb[0].mxu0 %v7164
        %v7297 = vpop.f32.mrb[0].mxu0
        %v7298 = vadd.f32 0.0, %v7297
        %v7299 = vpop.f32.mrb[0].mxu0
        %7300 = vmatprep.mubr.f32.mxu0 0.0
        %7301 = vmatmul.mubr.f32.gmra.mrb[0].mxu0 %v7167
        %v7302 = vpop.f32.mrb[0].mxu0
        %v7303 = vadd.f32 0.0, %v7302
        %v7304 = vpop.f32.mrb[0].mxu0
        %7305 = vmatprep.mubr.f32.mxu0 0.0
        %7306 = vmatmul.mubr.f32.gmra.mrb[0].mxu0 %v7170
        %v7307 = vpop.f32.mrb[0].mxu0
        %v7308 = vadd.f32 0.0, %v7307
        %v7309 = vpop.f32.mrb[0].mxu0
        %7310 = vmatprep.mubr.f32.mxu0 0.0
        %7311 = vmatmul.mubr.f32.gmra.mrb[0].mxu0 %v7173
        %v7312 = vpop.f32.mrb[0].mxu0
        %v7313 = vadd.f32 0.0, %v7312
        %v7314 = vpop.f32.mrb[0].mxu0
        %7315 = vmatprep.mubr.f32.mxu0 0.0
        %7316 = vmatmul.mubr.f32.gmra.mrb[0].mxu0 %v7176
        %v7317 = vpop.f32.mrb[0].mxu0
        %v7318 = vadd.f32 0.0, %v7317
        %v7319 = vpop.f32.mrb[0].mxu0
        %7320 = vmatprep.mubr.f32.mxu0 0.0
        %7321 = vmatmul.mubr.f32.gmra.mrb[0].mxu0 %v7179
        %v7322 = vpop.f32.mrb[0].mxu0
        %v7323 = vadd.f32 0.0, %v7322
        %v7324 = vpop.f32.mrb[0].mxu0
        %7325 = vdwg.mxu0
        %7342 = vrot.lane.b32.xlu0 %v7248, 24
        %v7343 = vpop.permute.xlu0 %7342
        %7344 = vrot.lane.b32.xlu0 %v7253, 24
        %v7345 = vpop.permute.xlu0 %7344
        %7346 = vrot.lane.b32.xlu0 %v7258, 24
        %v7347 = vpop.permute.xlu0 %7346
        %7348 = vrot.lane.b32.xlu0 %v7263, 24
        %v7349 = vpop.permute.xlu0 %7348
        %7350 = vrot.lane.b32.xlu0 %v7268, 24
        %v7351 = vpop.permute.xlu0 %7350
        %7352 = vrot.lane.b32.xlu0 %v7273, 24
        %v7353 = vpop.permute.xlu0 %7352
        %7354 = vrot.lane.b32.xlu0 %v7278, 24
        %v7355 = vpop.permute.xlu0 %7354
        %7356 = vrot.lane.b32.xlu0 %v7283, 24
        %v7357 = vpop.permute.xlu0 %7356
        %7358 = vrot.lane.b32.xlu0 %v7288, 24
        %v7359 = vpop.permute.xlu0 %7358
        %7360 = vrot.lane.b32.xlu0 %v7293, 24
        %v7361 = vpop.permute.xlu0 %7360
        %7362 = vrot.lane.b32.xlu0 %v7298, 24
        %v7363 = vpop.permute.xlu0 %7362
        %7364 = vrot.lane.b32.xlu0 %v7303, 24
        %v7365 = vpop.permute.xlu0 %7364
        %7366 = vrot.lane.b32.xlu0 %v7308, 24
        %v7367 = vpop.permute.xlu0 %7366
        %7368 = vrot.lane.b32.xlu0 %v7313, 24
        %v7369 = vpop.permute.xlu0 %7368
        %7370 = vrot.lane.b32.xlu0 %v7318, 24
        %v7371 = vpop.permute.xlu0 %7370
        %7372 = vrot.lane.b32.xlu0 %v7323, 24
        %v7373 = vpop.permute.xlu0 %7372
        %v7390 = vadd.f32 %v7092, %v7343
        %v7391 = vadd.f32 %v7093, %v7345
        %v7392 = vadd.f32 %v7094, %v7347
        %v7393 = vadd.f32 %v7095, %v7349
        %v7394 = vadd.f32 %v7096, %v7351
        %v7395 = vadd.f32 %v7097, %v7353
        %v7396 = vadd.f32 %v7098, %v7355
        %v7397 = vadd.f32 %v7099, %v7357
        %v7398 = vadd.f32 %v7100, %v7359
        %v7399 = vadd.f32 %v7101, %v7361
        %v7400 = vadd.f32 %v7102, %v7363
        %v7401 = vadd.f32 %v7103, %v7365
        %v7402 = vadd.f32 %v7104, %v7367
        %v7403 = vadd.f32 %v7105, %v7369
        %v7404 = vadd.f32 %v7106, %v7371
        %v7405 = vadd.f32 %v7107, %v7373
        %v7406 = vld [vmem:[%s6809 + $0x6] sm:$0xff]
        %v7407 = vld [vmem:[%s6809 + $0xe] sm:$0xff]
        %v7408 = vld [vmem:[%s6809 + $0x1e] sm:$0xff]
        %v7409 = vld [vmem:[%s6809 + $0x26] sm:$0xff]
        %v7410 = vld [vmem:[%s6809 + $0x36] sm:$0xff]
        %v7411 = vld [vmem:[%s6809 + $0x3e] sm:$0xff]
        %v7412 = vld [vmem:[%s6809 + $0x4e] sm:$0xff]
        %v7413 = vld [vmem:[%s6809 + $0x56] sm:$0xff]
        %v7414 = vld [vmem:[%s6809 + $0x66] sm:$0xff]
        %v7415 = vld [vmem:[%s6809 + $0x6e] sm:$0xff]
        %v7416 = vld [vmem:[%s6809 + $0x7e] sm:$0xff]
        %v7417 = vld [vmem:[%s6809 + $0x86] sm:$0xff]
        %v7418 = vld [vmem:[%s6809 + $0x96] sm:$0xff]
        %v7419 = vld [vmem:[%s6809 + $0x9e] sm:$0xff]
        %v7420 = vld [vmem:[%s6809 + $0xae] sm:$0xff]
        %v7421 = vld [vmem:[%s6809 + $0xb6] sm:$0xff]
        %s7422 = scalar_lea.vmem %s2, 1472
        %v7423 = vld [vmem:[%s7422] sm:$0xff]
        %v7424 = vld [vmem:[%s7422 + $0x8] sm:$0xff]
        %v7425 = vld [vmem:[%s7422 + $0x10] sm:$0xff]
        %v7426 = vld [vmem:[%s7422 + $0x18] sm:$0xff]
        %v7427 = vld [vmem:[%s7422 + $0x20] sm:$0xff]
        %v7428 = vld [vmem:[%s7422 + $0x28] sm:$0xff]
        %v7429 = vld [vmem:[%s7422 + $0x30] sm:$0xff]
        %v7430 = vld [vmem:[%s7422 + $0x38] sm:$0xff]
        %v7432 = vsel %vm342, %v7406, 0
        %v7435 = vsel %vm342, %v7407, 0
        %v7438 = vsel %vm342, %v7408, 0
        %v7441 = vsel %vm342, %v7409, 0
        %v7444 = vsel %vm342, %v7410, 0
        %v7447 = vsel %vm342, %v7411, 0
        %v7450 = vsel %vm342, %v7412, 0
        %v7453 = vsel %vm342, %v7413, 0
        %v7456 = vsel %vm342, %v7414, 0
        %v7459 = vsel %vm342, %v7415, 0
        %v7462 = vsel %vm342, %v7416, 0
        %v7465 = vsel %vm342, %v7417, 0
        %v7468 = vsel %vm342, %v7418, 0
        %v7471 = vsel %vm342, %v7419, 0
        %v7474 = vsel %vm342, %v7420, 0
        %v7477 = vsel %vm342, %v7421, 0
        %7479 = vmatprep.subr.mxu0 0.0
        %7480 = vmatpush1.msra.mxu0 %v7423
        %7481 = vmatprep.subr.mxu0 0.0
        %7482 = vmatpush1.msra.mxu0 %v7424
        %7483 = vmatprep.subr.mxu0 0.0
        %7484 = vmatpush1.msra.mxu0 %v7425
        %7485 = vmatprep.subr.mxu0 0.0
        %7486 = vmatpush1.msra.mxu0 %v7426
        %7487 = vmatprep.subr.mxu0 0.0
        %7488 = vmatpush1.msra.mxu0 %v7427
        %7489 = vmatprep.subr.mxu0 0.0
        %7490 = vmatpush1.msra.mxu0 %v7428
        %7491 = vmatprep.subr.mxu0 0.0
        %7492 = vmatpush1.msra.mxu0 %v7429
        %7493 = vmatprep.subr.mxu0 0.0
        %7494 = vmatpush1.msra.mxu0 %v7430
        %7495 = vmatprep.subr.mxu0 0.0
        %7496 = vmatpush1.msra.mxu0 0.0
        %7497 = vmatprep.subr.mxu0 0.0
        %7498 = vmatpush1.msra.mxu0 0.0
        %7499 = vmatprep.subr.mxu0 0.0
        %7500 = vmatpush1.msra.mxu0 0.0
        %7501 = vmatprep.subr.mxu0 0.0
        %7502 = vmatpush1.msra.mxu0 0.0
        %7503 = vmatprep.subr.mxu0 0.0
        %7504 = vmatpush1.msra.mxu0 0.0
        %7505 = vmatprep.subr.mxu0 0.0
        %7506 = vmatpush1.msra.mxu0 0.0
        %7507 = vmatprep.subr.mxu0 0.0
        %7508 = vmatpush1.msra.mxu0 0.0
        %7509 = vmatprep.subr.mxu0 0.0
        %7510 = vmatpush1.msra.mxu0 0.0
        %7511 = vmatprep.subr.mxu0 0.0
        %7512 = vmatpush1.msra.mxu0 0.0
        %7513 = vmatprep.subr.mxu0 0.0
        %7514 = vmatpush1.msra.mxu0 0.0
        %7515 = vmatprep.subr.mxu0 0.0
        %7516 = vmatpush1.msra.mxu0 0.0
        %7517 = vmatprep.subr.mxu0 0.0
        %7518 = vmatpush1.msra.mxu0 0.0
        %7519 = vmatprep.subr.mxu0 0.0
        %7520 = vmatpush1.msra.mxu0 0.0
        %7521 = vmatprep.subr.mxu0 0.0
        %7522 = vmatpush1.msra.mxu0 0.0
        %7523 = vmatprep.subr.mxu0 0.0
        %7524 = vmatpush1.msra.mxu0 0.0
        %7525 = vmatprep.subr.mxu0 0.0
        %7526 = vmatpush1.msra.mxu0 0.0
        %7527 = vmatprep.subr.mxu0 0.0
        %7528 = vmatpush1.msra.mxu0 0.0
        %7529 = vmatprep.subr.mxu0 0.0
        %7530 = vmatpush1.msra.mxu0 0.0
        %7531 = vmatprep.subr.mxu0 0.0
        %7532 = vmatpush1.msra.mxu0 0.0
        %7533 = vmatprep.subr.mxu0 0.0
        %7534 = vmatpush1.msra.mxu0 0.0
        %7535 = vmatprep.subr.mxu0 0.0
        %7536 = vmatpush1.msra.mxu0 0.0
        %7537 = vmatprep.subr.mxu0 0.0
        %7538 = vmatpush1.msra.mxu0 0.0
        %7539 = vmatprep.subr.mxu0 0.0
        %7540 = vmatpush1.msra.mxu0 0.0
        %7541 = vmatprep.subr.mxu0 0.0
        %7542 = vmatpush1.msra.mxu0 0.0
        %7543 = vmatprep.mubr.f32.mxu0 0.0
        %7544 = vmatmul.mubr.f32.gmra.mrb[0].mxu0 %v7432
        %v7545 = vpop.f32.mrb[0].mxu0
        %v7546 = vadd.f32 0.0, %v7545
        %v7547 = vpop.f32.mrb[0].mxu0
        %7548 = vmatprep.mubr.f32.mxu0 0.0
        %7549 = vmatmul.mubr.f32.gmra.mrb[0].mxu0 %v7435
        %v7550 = vpop.f32.mrb[0].mxu0
        %v7551 = vadd.f32 0.0, %v7550
        %v7552 = vpop.f32.mrb[0].mxu0
        %7553 = vmatprep.mubr.f32.mxu0 0.0
        %7554 = vmatmul.mubr.f32.gmra.mrb[0].mxu0 %v7438
        %v7555 = vpop.f32.mrb[0].mxu0
        %v7556 = vadd.f32 0.0, %v7555
        %v7557 = vpop.f32.mrb[0].mxu0
        %7558 = vmatprep.mubr.f32.mxu0 0.0
        %7559 = vmatmul.mubr.f32.gmra.mrb[0].mxu0 %v7441
        %v7560 = vpop.f32.mrb[0].mxu0
        %v7561 = vadd.f32 0.0, %v7560
        %v7562 = vpop.f32.mrb[0].mxu0
        %7563 = vmatprep.mubr.f32.mxu0 0.0
        %7564 = vmatmul.mubr.f32.gmra.mrb[0].mxu0 %v7444
        %v7565 = vpop.f32.mrb[0].mxu0
        %v7566 = vadd.f32 0.0, %v7565
        %v7567 = vpop.f32.mrb[0].mxu0
        %7568 = vmatprep.mubr.f32.mxu0 0.0
        %7569 = vmatmul.mubr.f32.gmra.mrb[0].mxu0 %v7447
        %v7570 = vpop.f32.mrb[0].mxu0
        %v7571 = vadd.f32 0.0, %v7570
        %v7572 = vpop.f32.mrb[0].mxu0
        %7573 = vmatprep.mubr.f32.mxu0 0.0
        %7574 = vmatmul.mubr.f32.gmra.mrb[0].mxu0 %v7450
        %v7575 = vpop.f32.mrb[0].mxu0
        %v7576 = vadd.f32 0.0, %v7575
        %v7577 = vpop.f32.mrb[0].mxu0
        %7578 = vmatprep.mubr.f32.mxu0 0.0
        %7579 = vmatmul.mubr.f32.gmra.mrb[0].mxu0 %v7453
        %v7580 = vpop.f32.mrb[0].mxu0
        %v7581 = vadd.f32 0.0, %v7580
        %v7582 = vpop.f32.mrb[0].mxu0
        %7583 = vmatprep.mubr.f32.mxu0 0.0
        %7584 = vmatmul.mubr.f32.gmra.mrb[0].mxu0 %v7456
        %v7585 = vpop.f32.mrb[0].mxu0
        %v7586 = vadd.f32 0.0, %v7585
        %v7587 = vpop.f32.mrb[0].mxu0
        %7588 = vmatprep.mubr.f32.mxu0 0.0
        %7589 = vmatmul.mubr.f32.gmra.mrb[0].mxu0 %v7459
        %v7590 = vpop.f32.mrb[0].mxu0
        %v7591 = vadd.f32 0.0, %v7590
        %v7592 = vpop.f32.mrb[0].mxu0
        %7593 = vmatprep.mubr.f32.mxu0 0.0
        %7594 = vmatmul.mubr.f32.gmra.mrb[0].mxu0 %v7462
        %v7595 = vpop.f32.mrb[0].mxu0
        %v7596 = vadd.f32 0.0, %v7595
        %v7597 = vpop.f32.mrb[0].mxu0
        %7598 = vmatprep.mubr.f32.mxu0 0.0
        %7599 = vmatmul.mubr.f32.gmra.mrb[0].mxu0 %v7465
        %v7600 = vpop.f32.mrb[0].mxu0
        %v7601 = vadd.f32 0.0, %v7600
        %v7602 = vpop.f32.mrb[0].mxu0
        %7603 = vmatprep.mubr.f32.mxu0 0.0
        %7604 = vmatmul.mubr.f32.gmra.mrb[0].mxu0 %v7468
        %v7605 = vpop.f32.mrb[0].mxu0
        %v7606 = vadd.f32 0.0, %v7605
        %v7607 = vpop.f32.mrb[0].mxu0
        %7608 = vmatprep.mubr.f32.mxu0 0.0
        %7609 = vmatmul.mubr.f32.gmra.mrb[0].mxu0 %v7471
        %v7610 = vpop.f32.mrb[0].mxu0
        %v7611 = vadd.f32 0.0, %v7610
        %v7612 = vpop.f32.mrb[0].mxu0
        %7613 = vmatprep.mubr.f32.mxu0 0.0
        %7614 = vmatmul.mubr.f32.gmra.mrb[0].mxu0 %v7474
        %v7615 = vpop.f32.mrb[0].mxu0
        %v7616 = vadd.f32 0.0, %v7615
        %v7617 = vpop.f32.mrb[0].mxu0
        %7618 = vmatprep.mubr.f32.mxu0 0.0
        %7619 = vmatmul.mubr.f32.gmra.mrb[0].mxu0 %v7477
        %v7620 = vpop.f32.mrb[0].mxu0
        %v7621 = vadd.f32 0.0, %v7620
        %v7622 = vpop.f32.mrb[0].mxu0
        %7623 = vdwg.mxu0
        %7640 = vrot.lane.b32.xlu0 %v7546, 24
        %v7641 = vpop.permute.xlu0 %7640
        %7642 = vrot.lane.b32.xlu0 %v7551, 24
        %v7643 = vpop.permute.xlu0 %7642
        %7644 = vrot.lane.b32.xlu0 %v7556, 24
        %v7645 = vpop.permute.xlu0 %7644
        %7646 = vrot.lane.b32.xlu0 %v7561, 24
        %v7647 = vpop.permute.xlu0 %7646
        %7648 = vrot.lane.b32.xlu0 %v7566, 24
        %v7649 = vpop.permute.xlu0 %7648
        %7650 = vrot.lane.b32.xlu0 %v7571, 24
        %v7651 = vpop.permute.xlu0 %7650
        %7652 = vrot.lane.b32.xlu0 %v7576, 24
        %v7653 = vpop.permute.xlu0 %7652
        %7654 = vrot.lane.b32.xlu0 %v7581, 24
        %v7655 = vpop.permute.xlu0 %7654
        %7656 = vrot.lane.b32.xlu0 %v7586, 24
        %v7657 = vpop.permute.xlu0 %7656
        %7658 = vrot.lane.b32.xlu0 %v7591, 24
        %v7659 = vpop.permute.xlu0 %7658
        %7660 = vrot.lane.b32.xlu0 %v7596, 24
        %v7661 = vpop.permute.xlu0 %7660
        %7662 = vrot.lane.b32.xlu0 %v7601, 24
        %v7663 = vpop.permute.xlu0 %7662
        %7664 = vrot.lane.b32.xlu0 %v7606, 24
        %v7665 = vpop.permute.xlu0 %7664
        %7666 = vrot.lane.b32.xlu0 %v7611, 24
        %v7667 = vpop.permute.xlu0 %7666
        %7668 = vrot.lane.b32.xlu0 %v7616, 24
        %v7669 = vpop.permute.xlu0 %7668
        %7670 = vrot.lane.b32.xlu0 %v7621, 24
        %v7671 = vpop.permute.xlu0 %7670
        %v7688 = vadd.f32 %v7390, %v7641
        %v7689 = vadd.f32 %v7391, %v7643
        %v7690 = vadd.f32 %v7392, %v7645
        %v7691 = vadd.f32 %v7393, %v7647
        %v7692 = vadd.f32 %v7394, %v7649
        %v7693 = vadd.f32 %v7395, %v7651
        %v7694 = vadd.f32 %v7396, %v7653
        %v7695 = vadd.f32 %v7397, %v7655
        %v7696 = vadd.f32 %v7398, %v7657
        %v7697 = vadd.f32 %v7399, %v7659
        %v7698 = vadd.f32 %v7400, %v7661
        %v7699 = vadd.f32 %v7401, %v7663
        %v7700 = vadd.f32 %v7402, %v7665
        %v7701 = vadd.f32 %v7403, %v7667
        %v7702 = vadd.f32 %v7404, %v7669
        %v7703 = vadd.f32 %v7405, %v7671
        %vm7704 = vcmask 64512
        %v7705 = vsel %vm7704, %v458, %v2909
        %v7706 = vsel %vm7704, %v463, %v2910
        %v7707 = vsel %vm7704, %v468, %v2911
        %v7708 = vsel %vm7704, %v473, %v2912
        %v7709 = vsel %vm7704, %v478, %v2913
        %v7710 = vsel %vm7704, %v483, %v2914
        %v7711 = vsel %vm7704, %v488, %v2915
        %v7712 = vsel %vm7704, %v493, %v2916
        %v7713 = vsel %vm7704, %v498, %v2917
        %v7714 = vsel %vm7704, %v503, %v2918
        %v7715 = vsel %vm7704, %v508, %v2919
        %v7716 = vsel %vm7704, %v513, %v2920
        %v7717 = vsel %vm7704, %v518, %v2921
        %v7718 = vsel %vm7704, %v523, %v2922
        %v7719 = vsel %vm7704, %v528, %v2923
        %v7720 = vsel %vm7704, %v533, %v2924
        %vm7721 = vcmask 130048
        %v7722 = vsel %vm7721, %v7705, %v5299
        %v7723 = vsel %vm7721, %v7706, %v5300
        %v7724 = vsel %vm7721, %v7707, %v5301
        %v7725 = vsel %vm7721, %v7708, %v5302
        %v7726 = vsel %vm7721, %v7709, %v5303
        %v7727 = vsel %vm7721, %v7710, %v5304
        %v7728 = vsel %vm7721, %v7711, %v5305
        %v7729 = vsel %vm7721, %v7712, %v5306
        %v7730 = vsel %vm7721, %v7713, %v5307
        %v7731 = vsel %vm7721, %v7714, %v5308
        %v7732 = vsel %vm7721, %v7715, %v5309
        %v7733 = vsel %vm7721, %v7716, %v5310
        %v7734 = vsel %vm7721, %v7717, %v5311
        %v7735 = vsel %vm7721, %v7718, %v5312
        %v7736 = vsel %vm7721, %v7719, %v5313
        %v7737 = vsel %vm7721, %v7720, %v5314
        %vm7738 = vcmask 195584
        %v7739 = vsel %vm7738, %v7722, %v7688
        %v7740 = vsel %vm7738, %v7723, %v7689
        %v7741 = vsel %vm7738, %v7724, %v7690
        %v7742 = vsel %vm7738, %v7725, %v7691
        %v7743 = vsel %vm7738, %v7726, %v7692
        %v7744 = vsel %vm7738, %v7727, %v7693
        %v7745 = vsel %vm7738, %v7728, %v7694
        %v7746 = vsel %vm7738, %v7729, %v7695
        %v7747 = vsel %vm7738, %v7730, %v7696
        %v7748 = vsel %vm7738, %v7731, %v7697
        %v7749 = vsel %vm7738, %v7732, %v7698
        %v7750 = vsel %vm7738, %v7733, %v7699
        %v7751 = vsel %vm7738, %v7734, %v7700
        %v7752 = vsel %vm7738, %v7735, %v7701
        %v7753 = vsel %vm7738, %v7736, %v7702
        %v7754 = vsel %vm7738, %v7737, %v7703
        %v7755 = vld [vmem:[#allocation2] sm:$0x1]
        %v7757 = vlaneseq
        %v7758 = vshrl.u32 %v7757, 7
        %v7759 = vsub.s32 0, %v7758
        %v7760 = vrot.slane %v7755, %v7759
        %v7762 = vadd.f32 %v7739, %v7760
        %v7763 = vadd.f32 %v7740, %v7760
        %v7764 = vadd.f32 %v7741, %v7760
        %v7765 = vadd.f32 %v7742, %v7760
        %v7766 = vadd.f32 %v7743, %v7760
        %v7767 = vadd.f32 %v7744, %v7760
        %v7768 = vadd.f32 %v7745, %v7760
        %v7769 = vadd.f32 %v7746, %v7760
        %v7770 = vadd.f32 %v7747, %v7760
        %v7771 = vadd.f32 %v7748, %v7760
        %v7772 = vadd.f32 %v7749, %v7760
        %v7773 = vadd.f32 %v7750, %v7760
        %v7774 = vadd.f32 %v7751, %v7760
        %v7775 = vadd.f32 %v7752, %v7760
        %v7776 = vadd.f32 %v7753, %v7760
        %v7777 = vadd.f32 %v7754, %v7760
        %v7778 = vmax.f32 %v7762, 0.0
        %v7779 = vmax.f32 %v7763, 0.0
        %v7780 = vmax.f32 %v7764, 0.0
        %v7781 = vmax.f32 %v7765, 0.0
        %v7782 = vmax.f32 %v7766, 0.0
        %v7783 = vmax.f32 %v7767, 0.0
        %v7784 = vmax.f32 %v7768, 0.0
        %v7785 = vmax.f32 %v7769, 0.0
        %v7786 = vmax.f32 %v7770, 0.0
        %v7787 = vmax.f32 %v7771, 0.0
        %v7788 = vmax.f32 %v7772, 0.0
        %v7789 = vmax.f32 %v7773, 0.0
        %v7790 = vmax.f32 %v7774, 0.0
        %v7791 = vmax.f32 %v7775, 0.0
        %v7792 = vmax.f32 %v7776, 0.0
        %v7793 = vmax.f32 %v7777, 0.0
        %v7794 = vld [vmem:[#allocation4] sm:$0xff]
        %v7795 = vld [vmem:[#allocation4 + $0x8] sm:$0xff]
        %v7796 = vld [vmem:[#allocation4 + $0x10] sm:$0xff]
        %v7797 = vld [vmem:[#allocation4 + $0x18] sm:$0xff]
        %v7798 = vld [vmem:[%s305] sm:$0x1]
        %v7800 = vlaneseq
        %v7801 = vshrl.u32 %v7800, 7
        %v7802 = vsub.s32 0, %v7801
        %v7803 = vrot.slane %v7798, %v7802
        %vm7805 = vcmask 261120
        %v7807 = vsel %vm7805, %v7778, 0
        %v7810 = vsel %vm7805, %v7779, 0
        %v7813 = vsel %vm7805, %v7780, 0
        %v7816 = vsel %vm7805, %v7781, 0
        %v7819 = vsel %vm7805, %v7782, 0
        %v7822 = vsel %vm7805, %v7783, 0
        %v7825 = vsel %vm7805, %v7784, 0
        %v7828 = vsel %vm7805, %v7785, 0
        %v7831 = vsel %vm7805, %v7786, 0
        %v7834 = vsel %vm7805, %v7787, 0
        %v7837 = vsel %vm7805, %v7788, 0
        %v7840 = vsel %vm7805, %v7789, 0
        %v7843 = vsel %vm7805, %v7790, 0
        %v7846 = vsel %vm7805, %v7791, 0
        %v7849 = vsel %vm7805, %v7792, 0
        %v7852 = vsel %vm7805, %v7793, 0
        %7854 = vmatprep.subr.mxu0 0.0
        %7855 = vmatpush1.msra.mxu0 %v7794
        %7856 = vmatprep.subr.mxu0 0.0
        %7857 = vmatpush1.msra.mxu0 %v7795
        %7858 = vmatprep.subr.mxu0 0.0
        %7859 = vmatpush1.msra.mxu0 %v7796
        %7860 = vmatprep.subr.mxu0 0.0
        %7861 = vmatpush1.msra.mxu0 %v7797
        %7862 = vmatprep.subr.mxu0 0.0
        %7863 = vmatpush1.msra.mxu0 0.0
        %7864 = vmatprep.subr.mxu0 0.0
        %7865 = vmatpush1.msra.mxu0 0.0
        %7866 = vmatprep.subr.mxu0 0.0
        %7867 = vmatpush1.msra.mxu0 0.0
        %7868 = vmatprep.subr.mxu0 0.0
        %7869 = vmatpush1.msra.mxu0 0.0
        %7870 = vmatprep.subr.mxu0 0.0
        %7871 = vmatpush1.msra.mxu0 0.0
        %7872 = vmatprep.subr.mxu0 0.0
        %7873 = vmatpush1.msra.mxu0 0.0
        %7874 = vmatprep.subr.mxu0 0.0
        %7875 = vmatpush1.msra.mxu0 0.0
        %7876 = vmatprep.subr.mxu0 0.0
        %7877 = vmatpush1.msra.mxu0 0.0
        %7878 = vmatprep.subr.mxu0 0.0
        %7879 = vmatpush1.msra.mxu0 0.0
        %7880 = vmatprep.subr.mxu0 0.0
        %7881 = vmatpush1.msra.mxu0 0.0
        %7882 = vmatprep.subr.mxu0 0.0
        %7883 = vmatpush1.msra.mxu0 0.0
        %7884 = vmatprep.subr.mxu0 0.0
        %7885 = vmatpush1.msra.mxu0 0.0
        %7886 = vmatprep.subr.mxu0 0.0
        %7887 = vmatpush1.msra.mxu0 0.0
        %7888 = vmatprep.subr.mxu0 0.0
        %7889 = vmatpush1.msra.mxu0 0.0
        %7890 = vmatprep.subr.mxu0 0.0
        %7891 = vmatpush1.msra.mxu0 0.0
        %7892 = vmatprep.subr.mxu0 0.0
        %7893 = vmatpush1.msra.mxu0 0.0
        %7894 = vmatprep.subr.mxu0 0.0
        %7895 = vmatpush1.msra.mxu0 0.0
        %7896 = vmatprep.subr.mxu0 0.0
        %7897 = vmatpush1.msra.mxu0 0.0
        %7898 = vmatprep.subr.mxu0 0.0
        %7899 = vmatpush1.msra.mxu0 0.0
        %7900 = vmatprep.subr.mxu0 0.0
        %7901 = vmatpush1.msra.mxu0 0.0
        %7902 = vmatprep.subr.mxu0 0.0
        %7903 = vmatpush1.msra.mxu0 0.0
        %7904 = vmatprep.subr.mxu0 0.0
        %7905 = vmatpush1.msra.mxu0 0.0
        %7906 = vmatprep.subr.mxu0 0.0
        %7907 = vmatpush1.msra.mxu0 0.0
        %7908 = vmatprep.subr.mxu0 0.0
        %7909 = vmatpush1.msra.mxu0 0.0
        %7910 = vmatprep.subr.mxu0 0.0
        %7911 = vmatpush1.msra.mxu0 0.0
        %7912 = vmatprep.subr.mxu0 0.0
        %7913 = vmatpush1.msra.mxu0 0.0
        %7914 = vmatprep.subr.mxu0 0.0
        %7915 = vmatpush1.msra.mxu0 0.0
        %7916 = vmatprep.subr.mxu0 0.0
        %7917 = vmatpush1.msra.mxu0 0.0
        %7918 = vmatprep.mubr.f32.mxu0 0.0
        %7919 = vmatmul.mubr.f32.gmra.mrb[0].mxu0 %v7807
        %v7920 = vpop.f32.mrb[0].mxu0
        %v7921 = vadd.f32 %v7803, %v7920
        %v7922 = vpop.f32.mrb[0].mxu0
        %7923 = vmatprep.mubr.f32.mxu0 0.0
        %7924 = vmatmul.mubr.f32.gmra.mrb[0].mxu0 %v7810
        %v7925 = vpop.f32.mrb[0].mxu0
        %v7926 = vadd.f32 %v7803, %v7925
        %v7927 = vpop.f32.mrb[0].mxu0
        %7928 = vmatprep.mubr.f32.mxu0 0.0
        %7929 = vmatmul.mubr.f32.gmra.mrb[0].mxu0 %v7813
        %v7930 = vpop.f32.mrb[0].mxu0
        %v7931 = vadd.f32 %v7803, %v7930
        %v7932 = vpop.f32.mrb[0].mxu0
        %7933 = vmatprep.mubr.f32.mxu0 0.0
        %7934 = vmatmul.mubr.f32.gmra.mrb[0].mxu0 %v7816
        %v7935 = vpop.f32.mrb[0].mxu0
        %v7936 = vadd.f32 %v7803, %v7935
        %v7937 = vpop.f32.mrb[0].mxu0
        %7938 = vmatprep.mubr.f32.mxu0 0.0
        %7939 = vmatmul.mubr.f32.gmra.mrb[0].mxu0 %v7819
        %v7940 = vpop.f32.mrb[0].mxu0
        %v7941 = vadd.f32 %v7803, %v7940
        %v7942 = vpop.f32.mrb[0].mxu0
        %7943 = vmatprep.mubr.f32.mxu0 0.0
        %7944 = vmatmul.mubr.f32.gmra.mrb[0].mxu0 %v7822
        %v7945 = vpop.f32.mrb[0].mxu0
        %v7946 = vadd.f32 %v7803, %v7945
        %v7947 = vpop.f32.mrb[0].mxu0
        %7948 = vmatprep.mubr.f32.mxu0 0.0
        %7949 = vmatmul.mubr.f32.gmra.mrb[0].mxu0 %v7825
        %v7950 = vpop.f32.mrb[0].mxu0
        %v7951 = vadd.f32 %v7803, %v7950
        %v7952 = vpop.f32.mrb[0].mxu0
        %7953 = vmatprep.mubr.f32.mxu0 0.0
        %7954 = vmatmul.mubr.f32.gmra.mrb[0].mxu0 %v7828
        %v7955 = vpop.f32.mrb[0].mxu0
        %v7956 = vadd.f32 %v7803, %v7955
        %v7957 = vpop.f32.mrb[0].mxu0
        %7958 = vmatprep.mubr.f32.mxu0 0.0
        %7959 = vmatmul.mubr.f32.gmra.mrb[0].mxu0 %v7831
        %v7960 = vpop.f32.mrb[0].mxu0
        %v7961 = vadd.f32 %v7803, %v7960
        %v7962 = vpop.f32.mrb[0].mxu0
        %7963 = vmatprep.mubr.f32.mxu0 0.0
        %7964 = vmatmul.mubr.f32.gmra.mrb[0].mxu0 %v7834
        %v7965 = vpop.f32.mrb[0].mxu0
        %v7966 = vadd.f32 %v7803, %v7965
        %v7967 = vpop.f32.mrb[0].mxu0
        %7968 = vmatprep.mubr.f32.mxu0 0.0
        %7969 = vmatmul.mubr.f32.gmra.mrb[0].mxu0 %v7837
        %v7970 = vpop.f32.mrb[0].mxu0
        %v7971 = vadd.f32 %v7803, %v7970
        %v7972 = vpop.f32.mrb[0].mxu0
        %7973 = vmatprep.mubr.f32.mxu0 0.0
        %7974 = vmatmul.mubr.f32.gmra.mrb[0].mxu0 %v7840
        %v7975 = vpop.f32.mrb[0].mxu0
        %v7976 = vadd.f32 %v7803, %v7975
        %v7977 = vpop.f32.mrb[0].mxu0
        %7978 = vmatprep.mubr.f32.mxu0 0.0
        %7979 = vmatmul.mubr.f32.gmra.mrb[0].mxu0 %v7843
        %v7980 = vpop.f32.mrb[0].mxu0
        %v7981 = vadd.f32 %v7803, %v7980
        %v7982 = vpop.f32.mrb[0].mxu0
        %7983 = vmatprep.mubr.f32.mxu0 0.0
        %7984 = vmatmul.mubr.f32.gmra.mrb[0].mxu0 %v7846
        %v7985 = vpop.f32.mrb[0].mxu0
        %v7986 = vadd.f32 %v7803, %v7985
        %v7987 = vpop.f32.mrb[0].mxu0
        %7988 = vmatprep.mubr.f32.mxu0 0.0
        %7989 = vmatmul.mubr.f32.gmra.mrb[0].mxu0 %v7849
        %v7990 = vpop.f32.mrb[0].mxu0
        %v7991 = vadd.f32 %v7803, %v7990
        %v7992 = vpop.f32.mrb[0].mxu0
        %7993 = vmatprep.mubr.f32.mxu0 0.0
        %7994 = vmatmul.mubr.f32.gmra.mrb[0].mxu0 %v7852
        %v7995 = vpop.f32.mrb[0].mxu0
        %v7996 = vadd.f32 %v7803, %v7995
        %v7997 = vpop.f32.mrb[0].mxu0
        %7998 = vdwg.mxu0
        %v7999 = vmax.f32 %v7921, 0.0
        %v8000 = vmax.f32 %v7926, 0.0
        %v8001 = vmax.f32 %v7931, 0.0
        %v8002 = vmax.f32 %v7936, 0.0
        %v8003 = vmax.f32 %v7941, 0.0
        %v8004 = vmax.f32 %v7946, 0.0
        %v8005 = vmax.f32 %v7951, 0.0
        %v8006 = vmax.f32 %v7956, 0.0
        %v8007 = vmax.f32 %v7961, 0.0
        %v8008 = vmax.f32 %v7966, 0.0
        %v8009 = vmax.f32 %v7971, 0.0
        %v8010 = vmax.f32 %v7976, 0.0
        %v8011 = vmax.f32 %v7981, 0.0
        %v8012 = vmax.f32 %v7986, 0.0
        %v8013 = vmax.f32 %v7991, 0.0
        %v8014 = vmax.f32 %v7996, 0.0
        %v8023 = vrot.slane %v8001, 7
        %vm8024 = vcmask 1041409
        %v8025 = vsel %vm8024, %v8023, %v7999
        %v8026 = vrot.slane %v8003, 6
        %vm8027 = vcmask 1042434
        %v8028 = vsel %vm8027, %v8026, %v8025
        %v8029 = vrot.slane %v8005, 5
        %vm8030 = vcmask 1043459
        %v8031 = vsel %vm8030, %v8029, %v8028
        %v8032 = vrot.slane %v8007, 4
        %vm8033 = vcmask 1044484
        %v8034 = vsel %vm8033, %v8032, %v8031
        %v8035 = vrot.slane %v8009, 3
        %vm8036 = vcmask 1045509
        %v8037 = vsel %vm8036, %v8035, %v8034
        %v8038 = vrot.slane %v8011, 2
        %vm8039 = vcmask 1046534
        %v8040 = vsel %vm8039, %v8038, %v8037
        %v8041 = vrot.slane %v8013, 1
        %vm8042 = vcmask 1047559
        %v8043 = vsel %vm8042, %v8041, %v8040
        %v8045 = vrot.slane %v7999, 1
        %v8046 = vsel %vm8024, %v8001, %v8045
        %v8047 = vrot.slane %v8003, 7
        %v8048 = vsel %vm8027, %v8047, %v8046
        %v8049 = vrot.slane %v8005, 6
        %v8050 = vsel %vm8030, %v8049, %v8048
        %v8051 = vrot.slane %v8007, 5
        %v8052 = vsel %vm8033, %v8051, %v8050
        %v8053 = vrot.slane %v8009, 4
        %v8054 = vsel %vm8036, %v8053, %v8052
        %v8055 = vrot.slane %v8011, 3
        %v8056 = vsel %vm8039, %v8055, %v8054
        %v8057 = vrot.slane %v8013, 2
        %v8058 = vsel %vm8042, %v8057, %v8056
        %8059 = vrot.lane.b32.xlu0 %v8058, 8
        %v8060 = vpop.permute.xlu0 %8059
        %v8062 = vrot.slane %v7999, 2
        %v8063 = vrot.slane %v8001, 1
        %v8064 = vsel %vm8024, %v8063, %v8062
        %v8065 = vsel %vm8027, %v8003, %v8064
        %v8066 = vrot.slane %v8005, 7
        %v8067 = vsel %vm8030, %v8066, %v8065
        %v8068 = vrot.slane %v8007, 6
        %v8069 = vsel %vm8033, %v8068, %v8067
        %v8070 = vrot.slane %v8009, 5
        %v8071 = vsel %vm8036, %v8070, %v8069
        %v8072 = vrot.slane %v8011, 4
        %v8073 = vsel %vm8039, %v8072, %v8071
        %v8074 = vrot.slane %v8013, 3
        %v8075 = vsel %vm8042, %v8074, %v8073
        %8076 = vrot.lane.b32.xlu0 %v8075, 16
        %v8077 = vpop.permute.xlu0 %8076
        %v8079 = vrot.slane %v7999, 3
        %v8080 = vrot.slane %v8001, 2
        %v8081 = vsel %vm8024, %v8080, %v8079
        %v8082 = vrot.slane %v8003, 1
        %v8083 = vsel %vm8027, %v8082, %v8081
        %v8084 = vsel %vm8030, %v8005, %v8083
        %v8085 = vrot.slane %v8007, 7
        %v8086 = vsel %vm8033, %v8085, %v8084
        %v8087 = vrot.slane %v8009, 6
        %v8088 = vsel %vm8036, %v8087, %v8086
        %v8089 = vrot.slane %v8011, 5
        %v8090 = vsel %vm8039, %v8089, %v8088
        %v8091 = vrot.slane %v8013, 4
        %v8092 = vsel %vm8042, %v8091, %v8090
        %8093 = vrot.lane.b32.xlu0 %v8092, 24
        %v8094 = vpop.permute.xlu0 %8093
        %v8096 = vrot.slane %v7999, 4
        %v8097 = vrot.slane %v8001, 3
        %v8098 = vsel %vm8024, %v8097, %v8096
        %v8099 = vrot.slane %v8003, 2
        %v8100 = vsel %vm8027, %v8099, %v8098
        %v8101 = vrot.slane %v8005, 1
        %v8102 = vsel %vm8030, %v8101, %v8100
        %v8103 = vsel %vm8033, %v8007, %v8102
        %v8104 = vrot.slane %v8009, 7
        %v8105 = vsel %vm8036, %v8104, %v8103
        %v8106 = vrot.slane %v8011, 6
        %v8107 = vsel %vm8039, %v8106, %v8105
        %v8108 = vrot.slane %v8013, 5
        %v8109 = vsel %vm8042, %v8108, %v8107
        %8110 = vrot.lane.b32.xlu0 %v8109, 32
        %v8111 = vpop.permute.xlu0 %8110
        %v8113 = vrot.slane %v7999, 5
        %v8114 = vrot.slane %v8001, 4
        %v8115 = vsel %vm8024, %v8114, %v8113
        %v8116 = vrot.slane %v8003, 3
        %v8117 = vsel %vm8027, %v8116, %v8115
        %v8118 = vrot.slane %v8005, 2
        %v8119 = vsel %vm8030, %v8118, %v8117
        %v8120 = vrot.slane %v8007, 1
        %v8121 = vsel %vm8033, %v8120, %v8119
        %v8122 = vsel %vm8036, %v8009, %v8121
        %v8123 = vrot.slane %v8011, 7
        %v8124 = vsel %vm8039, %v8123, %v8122
        %v8125 = vrot.slane %v8013, 6
        %v8126 = vsel %vm8042, %v8125, %v8124
        %8127 = vrot.lane.b32.xlu0 %v8126, 40
        %v8128 = vpop.permute.xlu0 %8127
        %v8130 = vrot.slane %v7999, 6
        %v8131 = vrot.slane %v8001, 5
        %v8132 = vsel %vm8024, %v8131, %v8130
        %v8133 = vrot.slane %v8003, 4
        %v8134 = vsel %vm8027, %v8133, %v8132
        %v8135 = vrot.slane %v8005, 3
        %v8136 = vsel %vm8030, %v8135, %v8134
        %v8137 = vrot.slane %v8007, 2
        %v8138 = vsel %vm8033, %v8137, %v8136
        %v8139 = vrot.slane %v8009, 1
        %v8140 = vsel %vm8036, %v8139, %v8138
        %v8141 = vsel %vm8039, %v8011, %v8140
        %v8142 = vrot.slane %v8013, 7
        %v8143 = vsel %vm8042, %v8142, %v8141
        %8144 = vrot.lane.b32.xlu0 %v8143, 48
        %v8145 = vpop.permute.xlu0 %8144
        %v8147 = vrot.slane %v7999, 7
        %v8148 = vrot.slane %v8001, 6
        %v8149 = vsel %vm8024, %v8148, %v8147
        %v8150 = vrot.slane %v8003, 5
        %v8151 = vsel %vm8027, %v8150, %v8149
        %v8152 = vrot.slane %v8005, 4
        %v8153 = vsel %vm8030, %v8152, %v8151
        %v8154 = vrot.slane %v8007, 3
        %v8155 = vsel %vm8033, %v8154, %v8153
        %v8156 = vrot.slane %v8009, 2
        %v8157 = vsel %vm8036, %v8156, %v8155
        %v8158 = vrot.slane %v8011, 1
        %v8159 = vsel %vm8039, %v8158, %v8157
        %v8160 = vsel %vm8042, %v8013, %v8159
        %8161 = vrot.lane.b32.xlu0 %v8160, 56
        %v8162 = vpop.permute.xlu0 %8161
        %v8172 = vrot.slane %v8002, 7
        %v8173 = vsel %vm8024, %v8172, %v8000
        %v8174 = vrot.slane %v8004, 6
        %v8175 = vsel %vm8027, %v8174, %v8173
        %v8176 = vrot.slane %v8006, 5
        %v8177 = vsel %vm8030, %v8176, %v8175
        %v8178 = vrot.slane %v8008, 4
        %v8179 = vsel %vm8033, %v8178, %v8177
        %v8180 = vrot.slane %v8010, 3
        %v8181 = vsel %vm8036, %v8180, %v8179
        %v8182 = vrot.slane %v8012, 2
        %v8183 = vsel %vm8039, %v8182, %v8181
        %v8184 = vrot.slane %v8014, 1
        %v8185 = vsel %vm8042, %v8184, %v8183
        %8186 = vrot.lane.b32.xlu0 %v8185, 64
        %v8187 = vpop.permute.xlu0 %8186
        %v8189 = vrot.slane %v8000, 1
        %v8190 = vsel %vm8024, %v8002, %v8189
        %v8191 = vrot.slane %v8004, 7
        %v8192 = vsel %vm8027, %v8191, %v8190
        %v8193 = vrot.slane %v8006, 6
        %v8194 = vsel %vm8030, %v8193, %v8192
        %v8195 = vrot.slane %v8008, 5
        %v8196 = vsel %vm8033, %v8195, %v8194
        %v8197 = vrot.slane %v8010, 4
        %v8198 = vsel %vm8036, %v8197, %v8196
        %v8199 = vrot.slane %v8012, 3
        %v8200 = vsel %vm8039, %v8199, %v8198
        %v8201 = vrot.slane %v8014, 2
        %v8202 = vsel %vm8042, %v8201, %v8200
        %8203 = vrot.lane.b32.xlu0 %v8202, 72
        %v8204 = vpop.permute.xlu0 %8203
        %v8206 = vrot.slane %v8000, 2
        %v8207 = vrot.slane %v8002, 1
        %v8208 = vsel %vm8024, %v8207, %v8206
        %v8209 = vsel %vm8027, %v8004, %v8208
        %v8210 = vrot.slane %v8006, 7
        %v8211 = vsel %vm8030, %v8210, %v8209
        %v8212 = vrot.slane %v8008, 6
        %v8213 = vsel %vm8033, %v8212, %v8211
        %v8214 = vrot.slane %v8010, 5
        %v8215 = vsel %vm8036, %v8214, %v8213
        %v8216 = vrot.slane %v8012, 4
        %v8217 = vsel %vm8039, %v8216, %v8215
        %v8218 = vrot.slane %v8014, 3
        %v8219 = vsel %vm8042, %v8218, %v8217
        %8220 = vrot.lane.b32.xlu0 %v8219, 80
        %v8221 = vpop.permute.xlu0 %8220
        %v8223 = vrot.slane %v8000, 3
        %v8224 = vrot.slane %v8002, 2
        %v8225 = vsel %vm8024, %v8224, %v8223
        %v8226 = vrot.slane %v8004, 1
        %v8227 = vsel %vm8027, %v8226, %v8225
        %v8228 = vsel %vm8030, %v8006, %v8227
        %v8229 = vrot.slane %v8008, 7
        %v8230 = vsel %vm8033, %v8229, %v8228
        %v8231 = vrot.slane %v8010, 6
        %v8232 = vsel %vm8036, %v8231, %v8230
        %v8233 = vrot.slane %v8012, 5
        %v8234 = vsel %vm8039, %v8233, %v8232
        %v8235 = vrot.slane %v8014, 4
        %v8236 = vsel %vm8042, %v8235, %v8234
        %8237 = vrot.lane.b32.xlu0 %v8236, 88
        %v8238 = vpop.permute.xlu0 %8237
        %v8240 = vrot.slane %v8000, 4
        %v8241 = vrot.slane %v8002, 3
        %v8242 = vsel %vm8024, %v8241, %v8240
        %v8243 = vrot.slane %v8004, 2
        %v8244 = vsel %vm8027, %v8243, %v8242
        %v8245 = vrot.slane %v8006, 1
        %v8246 = vsel %vm8030, %v8245, %v8244
        %v8247 = vsel %vm8033, %v8008, %v8246
        %v8248 = vrot.slane %v8010, 7
        %v8249 = vsel %vm8036, %v8248, %v8247
        %v8250 = vrot.slane %v8012, 6
        %v8251 = vsel %vm8039, %v8250, %v8249
        %v8252 = vrot.slane %v8014, 5
        %v8253 = vsel %vm8042, %v8252, %v8251
        %8254 = vrot.lane.b32.xlu0 %v8253, 96
        %v8255 = vpop.permute.xlu0 %8254
        %v8257 = vrot.slane %v8000, 5
        %v8258 = vrot.slane %v8002, 4
        %v8259 = vsel %vm8024, %v8258, %v8257
        %v8260 = vrot.slane %v8004, 3
        %v8261 = vsel %vm8027, %v8260, %v8259
        %v8262 = vrot.slane %v8006, 2
        %v8263 = vsel %vm8030, %v8262, %v8261
        %v8264 = vrot.slane %v8008, 1
        %v8265 = vsel %vm8033, %v8264, %v8263
        %v8266 = vsel %vm8036, %v8010, %v8265
        %v8267 = vrot.slane %v8012, 7
        %v8268 = vsel %vm8039, %v8267, %v8266
        %v8269 = vrot.slane %v8014, 6
        %v8270 = vsel %vm8042, %v8269, %v8268
        %8271 = vrot.lane.b32.xlu0 %v8270, 104
        %v8272 = vpop.permute.xlu0 %8271
        %v8274 = vrot.slane %v8000, 6
        %v8275 = vrot.slane %v8002, 5
        %v8276 = vsel %vm8024, %v8275, %v8274
        %v8277 = vrot.slane %v8004, 4
        %v8278 = vsel %vm8027, %v8277, %v8276
        %v8279 = vrot.slane %v8006, 3
        %v8280 = vsel %vm8030, %v8279, %v8278
        %v8281 = vrot.slane %v8008, 2
        %v8282 = vsel %vm8033, %v8281, %v8280
        %v8283 = vrot.slane %v8010, 1
        %v8284 = vsel %vm8036, %v8283, %v8282
        %v8285 = vsel %vm8039, %v8012, %v8284
        %v8286 = vrot.slane %v8014, 7
        %v8287 = vsel %vm8042, %v8286, %v8285
        %8288 = vrot.lane.b32.xlu0 %v8287, 112
        %v8289 = vpop.permute.xlu0 %8288
        %v8291 = vrot.slane %v8000, 7
        %v8292 = vrot.slane %v8002, 6
        %v8293 = vsel %vm8024, %v8292, %v8291
        %v8294 = vrot.slane %v8004, 5
        %v8295 = vsel %vm8027, %v8294, %v8293
        %v8296 = vrot.slane %v8006, 4
        %v8297 = vsel %vm8030, %v8296, %v8295
        %v8298 = vrot.slane %v8008, 3
        %v8299 = vsel %vm8033, %v8298, %v8297
        %v8300 = vrot.slane %v8010, 2
        %v8301 = vsel %vm8036, %v8300, %v8299
        %v8302 = vrot.slane %v8012, 1
        %v8303 = vsel %vm8039, %v8302, %v8301
        %v8304 = vsel %vm8042, %v8014, %v8303
        %8305 = vrot.lane.b32.xlu0 %v8304, 120
        %v8306 = vpop.permute.xlu0 %8305
        %v8308 = vsel %vm7704, %v8043, %v8060
        %v8309 = vsel %vm7721, %v8308, %v8077
        %v8310 = vsel %vm7738, %v8309, %v8094
        %v8311 = vsel %vm7805, %v8310, %v8111
        %vm8312 = vcmask 326656
        %v8313 = vsel %vm8312, %v8311, %v8128
        %vm8314 = vcmask 392192
        %v8315 = vsel %vm8314, %v8313, %v8145
        %vm8316 = vcmask 457728
        %v8317 = vsel %vm8316, %v8315, %v8162
        %v8318 = vsel %vm342, %v8317, %v8187
        %vm8319 = vcmask 588800
        %v8320 = vsel %vm8319, %v8318, %v8204
        %vm8321 = vcmask 654336
        %v8322 = vsel %vm8321, %v8320, %v8221
        %vm8323 = vcmask 719872
        %v8324 = vsel %vm8323, %v8322, %v8238
        %vm8325 = vcmask 785408
        %v8326 = vsel %vm8325, %v8324, %v8255
        %vm8327 = vcmask 850944
        %v8328 = vsel %vm8327, %v8326, %v8272
        %vm8329 = vcmask 916480
        %v8330 = vsel %vm8329, %v8328, %v8289
        %vm8331 = vcmask 982016
        %v8332 = vsel %vm8331, %v8330, %v8306
        %8333 = vst [vmem:[%s313] sm:$0xff] %v8332
        %p8334 = scmp.lt.s32.totalorder %s23, 1
        %s8335 = scalar_select %p8334, %s23, 1
        %p8336 = scmp.lt.s32.totalorder %s24, 1
        %s8337 = scalar_select %p8336, %s24, 1
        %s8338 = smul.addr %s8335, 2
        %s8339 = sadd.s32 %s8337, %s8338
        %s8340 = smul.addr %s8339, 8
        %s8341 = scalar_lea.vmem %s6, %s8340
        // Predicated region
        $region53: #{_lambda_.1} parent=43 // pred_check
          %p8342 = pneg %p187
        $region54: #{_lambda_.1} parent=43 // pred_check_branch
          %8344 = sbr.rel (%p8342) target = $region56
        $region55: #{_lambda_.1} parent=43 // pred_region
          _
        $region56: #{_lambda_.1} parent=43 // pred_fallthru
          _
      $region44: #{_lambda_.1} parent=5 // pred_fallthru
        _
      %p8345 = scmp.le.s32.totalorder 2, %s14
      // Predicated region
      $region57: #{_lambda_.1} parent=5 // pred_check
        %p8346 = pneg %p8345
      $region58: #{_lambda_.1} parent=5 // pred_check_branch
        %8348 = sbr.rel (%p8346) target = $region60
      $region59: #{_lambda_.1} parent=5 // pred_region
        %s8349 = ssub.s32 %s14, 2
        // Predicated region
        $region61: #{_lambda_.1} parent=59 // pred_check
          %p8350 = pneg %p193
        $region62: #{_lambda_.1} parent=59 // pred_check_branch
          %8352 = sbr.rel (%p8350) target = $region64
        $region63: #{_lambda_.1} parent=59 // pred_region
          %p8353 = scmp.lt.s32.totalorder %s25, 1
          %s8354 = scalar_select %p8353, %s25, 1
          %p8355 = scmp.lt.s32.totalorder %s26, 1
          %s8356 = scalar_select %p8355, %s26, 1
          %s8357 = smul.addr %s8354, 2
          %s8358 = sadd.s32 %s8356, %s8357
          %s8359 = smul.addr %s8358, 8
          %s8360 = scalar_lea.vmem %s6, %s8359
        $region64: #{_lambda_.1} parent=59 // pred_fallthru
          _
      $region60: #{_lambda_.1} parent=5 // pred_fallthru
        _
    $region6: #{_lambda_.1} parent=1 // loop_footer
      %s18 = sadd.s32 1, %s14
    $region7: #{_lambda_.1} parent=1 // loop_footer_branch
      %13 = sbr.rel target = $region3
    $region8: #{_lambda_.1} parent=1 // loop_exit
      _
    %8361 = vsyncpa [#allocation3], 1
    %s8362 = scalar_lea.sflag [#allocation3], 1
    %8363 = vsyncpa %s8362, 1
    %8364 = vsyncpa [#allocation5], 1

</llo_original>
